<compile_context>
chip_gen: v7x
topology: tpu7x:2x2x1
jax: 0.10.0
libtpu: 0.0.40
codegen_flags: <defaults>
</compile_context>

<pallas_src>
import functools

import jax
import jax.numpy as jnp
from jax import lax
from jax.experimental import pallas as pl
from jax.experimental.pallas import tpu as pltpu

BN_EPS = 1e-5


# ------------------------------------------------------------------ fused matmul kernel

def _mm_kernel(a_ref, w_ref, b_ref, o_ref, *, pre_relu, post_relu):
    a = a_ref[...]
    if pre_relu:
        a = jnp.maximum(a, 0)
    acc = jnp.dot(a, w_ref[...], preferred_element_type=jnp.float32)
    acc = acc + b_ref[...]                      # bias (BN already folded into the weight)
    if post_relu:
        acc = jnp.maximum(acc, 0.0)
    o_ref[...] = acc.astype(o_ref.dtype)


def _pick_tm(m, cap=1024):
    # largest multiple-of-8 divisor of m that is <= cap (exact tiling -> no padding,
    # no post-call slice); fall back to the full extent.
    best = None
    for t in range(8, min(m, cap) + 1, 8):
        if m % t == 0:
            best = t
    return best if best is not None else m


def matmul_fused(a, w, bias, *, pre_relu=False, post_relu=False):
    """(M,K) @ (K,N): BN scale pre-folded into w; fused pre-ReLU / bias / post-ReLU.
    A and W are fed to the MXU in bf16, accumulation in f32."""
    M, K = a.shape
    Kw, N = w.shape
    assert K == Kw
    tm = _pick_tm(M)
    kernel = functools.partial(_mm_kernel, pre_relu=pre_relu, post_relu=post_relu)
    return pl.pallas_call(
        kernel,
        out_shape=jax.ShapeDtypeStruct((M, N), jnp.float32),
        grid=(M // tm,),
        in_specs=[
            pl.BlockSpec((tm, K), lambda i: (i, 0)),
            pl.BlockSpec((K, N), lambda i: (0, 0)),
            pl.BlockSpec((1, N), lambda i: (0, 0)),
        ],
        out_specs=pl.BlockSpec((tm, N), lambda i: (i, 0)),
        compiler_params=pltpu.CompilerParams(dimension_semantics=("parallel",)),
    )(a.astype(jnp.bfloat16), w.astype(jnp.bfloat16),
      bias.reshape(1, N).astype(jnp.float32))


# ------------------------------------------------------------------ fused cell + head kernel

def _tap(d):
    # 3x3/stride-2/pad-1 pooling, one spatial axis, window offset d in {0,1,2}:
    # (source parity, source start, dest start, length) on the 7-wide grids.
    return {0: (1, 0, 1, 6), 1: (0, 0, 0, 7), 2: (1, 0, 0, 7)}[d]


def make_cell_head_kernel(arch, Cc, pool_meta, fr_meta, n_steps):
    # arch is static; this builder handles a reduction cell (ops on states 0/1 have
    # stride 2) with ops in {skip_connect, max_pool_3x3, avg_pool_3x3}.
    def kernel(state_ref, pscale_ref, pbias_ref, frw_ref, frb_ref, cw_ref, cb_ref,
               o_ref, pool_acc, fr_acc):
        # parity blocks of the packed preprocessed states [s0_pre | s1_pre] (7,7,2*Cc)
        pblk = [state_ref[p] for p in range(4)]

        def blocks_of(idx):
            lo = idx * Cc
            return [b[:, :, lo:lo + Cc] for b in pblk]

        pool_cache = {}

        def pooled(mode, idx):
            key = (mode, idx)
            if key in pool_cache:                       # dedup repeated pool ops
                return pool_cache[key]
            blks = blocks_of(idx)
            pool_acc[...] = blks[0]                     # centre tap, always valid
            for dh in (0, 1, 2):
                for dw in (0, 1, 2):
                    if dh == 1 and dw == 1:
                        continue
                    pr, sr, dr, lr = _tap(dh)
                    pc, sc, dc, lc = _tap(dw)
                    v = blks[2 * pr + pc][sr:sr + lr, sc:sc + lc, :]
                    cur = pool_acc[dr:dr + lr, dc:dc + lc, :]
                    if mode == "max":
                        pool_acc[dr:dr + lr, dc:dc + lc, :] = jnp.maximum(cur, v)
                    else:
                        pool_acc[dr:dr + lr, dc:dc + lc, :] = cur + v
            out = pool_acc[...]
            if mode == "avg":                           # count_include_pad=False
                ri = lax.broadcasted_iota(jnp.int32, (7, 7, Cc), 0)
                ci = lax.broadcasted_iota(jnp.int32, (7, 7, Cc), 1)
                inv = (jnp.where(ri == 0, 0.5, 1.0 / 3.0) *
                       jnp.where(ci == 0, 0.5, 1.0 / 3.0))
                out = out * inv
            pool_cache[key] = out
            return out

        def factorized_reduce(idx, row):
            # skip_connect with stride 2: relu -> two 1x1 stride-2 convs (merged into one
            # block-diagonal matmul, BN scale folded) -> bias.
            blks = blocks_of(idx)
            w = frw_ref[row]                            # (2*Cc, Cc)
            b = frb_ref[row:row + 1, :]                 # (1, Cc)
            even, odd = blks[0], blks[3]                # x[::2,::2] and x[1::2,1::2]
            for i in range(7):
                a = jnp.concatenate(
                    [jnp.maximum(even[i], 0.0), jnp.maximum(odd[i], 0.0)], axis=-1)
                fr_acc[i, :, :] = jnp.dot(a, w, preferred_element_type=jnp.float32) + b
            return fr_acc[...]

        states = {}

        def op_value(j, idx):
            name = arch[j][0]
            if name == "skip_connect":
                if idx < 2:
                    return factorized_reduce(idx, fr_meta[j])
                return states[idx]                      # Identity
            mode = "max" if name.startswith("max") else "avg"
            row = pool_meta[j]
            s = pscale_ref[row:row + 1, :]
            b = pbias_ref[row:row + 1, :]
            return pooled(mode, idx) * s + b            # pool op's BatchNorm2d(affine=False)

        for step in range(n_steps):
            i1 = arch[2 * step][1]
            i2 = arch[2 * step + 1][1]
            states[step + 2] = op_value(2 * step, i1) + op_value(2 * step + 1, i2)

        # AvgPool2d(7) folded into the classifier weight (already scaled by 1/49)
        ones = jnp.ones((1, 7), jnp.float32)
        parts = []
        for k in range(2, 2 + n_steps):
            t = jnp.sum(states[k], axis=0)              # (7, Cc)
            parts.append(jnp.dot(ones, t, preferred_element_type=jnp.float32))  # (1, Cc)
        feat = jnp.concatenate(parts, axis=-1)          # (1, n_steps*Cc)
        logits = jnp.dot(feat, cw_ref[...], preferred_element_type=jnp.float32) + cb_ref[...]
        o_ref[0] = logits.astype(o_ref.dtype)

    return kernel


# ------------------------------------------------------------------ JAX glue (layout only)

def _im2col(x, kh, kw, stride, pad):
    if pad:
        x = jnp.pad(x, ((0, 0), (pad, pad), (pad, pad), (0, 0)))
    N, Hp, Wp, C = x.shape
    Ho = (Hp - kh) // stride + 1
    Wo = (Wp - kw) // stride + 1
    patches = []
    for dh in range(kh):
        for dw in range(kw):
            patches.append(x[:, dh:dh + stride * Ho:stride, dw:dw + stride * Wo:stride, :])
    cols = jnp.concatenate(patches, axis=-1)            # (N, Ho, Wo, kh*kw*C)
    return cols.reshape(N * Ho * Wo, kh * kw * C), (N, Ho, Wo)


def conv2d(x, w, scale, bias, *, stride=1, pad=0, pre_relu=False, post_relu=False):
    kh, kw, cin, cout = w.shape
    cols, (N, Ho, Wo) = _im2col(x, kh, kw, stride, pad)
    wf = w.reshape(kh * kw * cin, cout) * scale[None, :]     # fold eval-BN scale into W
    y = matmul_fused(cols, wf, bias, pre_relu=pre_relu, post_relu=post_relu)
    return y.reshape(N, Ho, Wo, cout)


def bn_sb(bn):  # eval-mode BatchNorm folded into per-channel scale/bias
    scale = bn["gamma"] / jnp.sqrt(bn["rv"] + BN_EPS)
    bias = bn["beta"] - bn["rm"] * scale
    return scale, bias


def parity_split(x):
    # (N, H, W, C) -> (N, 4, H//2, W//2, C) with block p=2a+b holding x[2i+a, 2j+b]
    N, H, W, C = x.shape
    x = x.reshape(N, H // 2, 2, W // 2, 2, C)
    x = jnp.transpose(x, (0, 2, 4, 1, 3, 5))
    return x.reshape(N, 4, H // 2, W // 2, C)


def cell_preprocess_merged(cell_p, s0, s1, Cc):
    """FactorizedReduce(s0) and ReLUConvBN(s1) as ONE matmul; output rows are in
    parity-major order of the 14x14 grid and channels are [s0_pre | s1_pre]."""
    if "w1" not in cell_p["pre0"]:
        raise NotImplementedError("fused path assumes reduction_prev=True")  # TODO(synk)
    N, _, _, c0 = s0.shape
    c1 = s1.shape[-1]
    s0_e = s0[:, ::2, ::2, :]                            # conv_1 sampling
    s0_o = s0[:, 1::2, 1::2, :]                          # conv_2 sampling (x[:, :, 1:, 1:])
    a = jnp.concatenate([s0_e, s0_o, s1], axis=-1)       # (N, 14, 14, 2*c0+c1)
    a = parity_split(a)                                  # (N, 4, 7, 7, K)
    Hq, Wq = a.shape[2], a.shape[3]
    K = a.shape[-1]
    a = a.reshape(N * 4 * Hq * Wq, K)

    w1 = cell_p["pre0"]["w1"].reshape(c0, Cc // 2)
    w2 = cell_p["pre0"]["w2"].reshape(c0, Cc // 2)
    wp1 = cell_p["pre1"]["w"].reshape(c1, Cc)
    s_fr, b_fr = bn_sb(cell_p["pre0"]["bn"])
    s_p1, b_p1 = bn_sb(cell_p["pre1"]["bn"])
    wm = jnp.zeros((K, 2 * Cc), jnp.float32)
    wm = wm.at[0:c0, 0:Cc // 2].set(w1)
    wm = wm.at[c0:2 * c0, Cc // 2:Cc].set(w2)
    wm = wm.at[2 * c0:2 * c0 + c1, Cc:2 * Cc].set(wp1)
    scale = jnp.concatenate([s_fr, s_p1])
    biasv = jnp.concatenate([b_fr, b_p1])
    wm = wm * scale[None, :]

    y = matmul_fused(a, wm, biasv, pre_relu=True)        # (N*4*49, 2*Cc)
    return y.reshape(N * 4, Hq, Wq, 2 * Cc)


def fused_reduction_cell_head(cell_p, arch, s0, s1, cls_p, *, Cc, ncls):
    N = s0.shape[0]
    state = cell_preprocess_merged(cell_p, s0, s1, Cc)   # (N*4, 7, 7, 2*Cc)

    pool_meta, pool_scales, pool_biases = {}, [], []
    fr_meta, fr_ws, fr_bs = {}, [], []
    for j, (name, idx) in enumerate(arch):
        stride = 2 if idx < 2 else 1
        opp = cell_p["ops"][j]
        if name in ("max_pool_3x3", "avg_pool_3x3"):
            if stride != 2:
                raise NotImplementedError("stride-1 pools")  # TODO(synk): not in this arch
            sc, bi = bn_sb(opp["bn"])
            pool_meta[j] = len(pool_scales)
            pool_scales.append(sc)
            pool_biases.append(bi)
        elif name == "skip_connect":
            if stride == 2:                              # FactorizedReduce(C, C)
                sc, bi = bn_sb(opp["bn"])
                ch = Cc // 2
                w1 = opp["w1"].reshape(Cc, ch)
                w2 = opp["w2"].reshape(Cc, ch)
                wm = jnp.zeros((2 * Cc, Cc), jnp.float32)
                wm = wm.at[0:Cc, 0:ch].set(w1)
                wm = wm.at[Cc:2 * Cc, ch:Cc].set(w2)
                wm = wm * sc[None, :]
                fr_meta[j] = len(fr_ws)
                fr_ws.append(wm)
                fr_bs.append(bi)
        else:
            raise NotImplementedError(name)

    pool_scale = jnp.stack(pool_scales) if pool_scales else jnp.zeros((1, Cc), jnp.float32)
    pool_bias = jnp.stack(pool_biases) if pool_biases else jnp.zeros((1, Cc), jnp.float32)
    fr_w = jnp.stack(fr_ws) if fr_ws else jnp.zeros((1, 2 * Cc, Cc), jnp.float32)
    fr_b = jnp.stack(fr_bs) if fr_bs else jnp.zeros((1, Cc), jnp.float32)

    n_steps = len(arch) // 2
    cls_w = cls_p["w"] * (1.0 / 49.0)                    # fold global 7x7 mean into W
    cls_b = cls_p["b"].reshape(1, ncls)

    kernel = make_cell_head_kernel(tuple(arch), Cc, pool_meta, fr_meta, n_steps)
    out = pl.pallas_call(
        kernel,
        out_shape=jax.ShapeDtypeStruct((N, 1, ncls), jnp.float32),
        grid=(N,),
        in_specs=[
            pl.BlockSpec((4, 7, 7, 2 * Cc), lambda n: (n, 0, 0, 0)),
            pl.BlockSpec(pool_scale.shape, lambda n: (0, 0)),
            pl.BlockSpec(pool_bias.shape, lambda n: (0, 0)),
            pl.BlockSpec(fr_w.shape, lambda n: (0, 0, 0)),
            pl.BlockSpec(fr_b.shape, lambda n: (0, 0)),
            pl.BlockSpec(cls_w.shape, lambda n: (0, 0)),
            pl.BlockSpec(cls_b.shape, lambda n: (0, 0)),
        ],
        out_specs=pl.BlockSpec((1, 1, ncls), lambda n: (n, 0, 0)),
        scratch_shapes=[pltpu.VMEM((7, 7, Cc), jnp.float32),
                        pltpu.VMEM((7, 7, Cc), jnp.float32)],
        compiler_params=pltpu.CompilerParams(dimension_semantics=("parallel",)),
    )(state, pool_scale, pool_bias, fr_w, fr_b, cls_w, cls_b)
    return out.reshape(N, ncls)


def network_forward(params, arch_list, x_nchw):
    x = jnp.transpose(x_nchw, (0, 2, 3, 1)).astype(jnp.float32)   # NCHW -> NHWC
    st0 = params["stem0"]
    s = conv2d(x, st0["w1"], *bn_sb(st0["bn1"]), stride=2, pad=1, post_relu=True)
    s0 = conv2d(s, st0["w2"], *bn_sb(st0["bn2"]), stride=2, pad=1)
    st1 = params["stem1"]
    s1 = conv2d(s0, st1["w"], *bn_sb(st1["bn"]), stride=2, pad=1, pre_relu=True)

    layers = len(arch_list)
    # In-script config: a single reduction cell (reduction_prev=True) directly feeds the
    # classifier; that whole tail is fused into one Pallas kernel.
    # TODO(synk): multi-cell stacks / non-reduction cells are not exercised by this config.
    if not (layers == 1 and 0 in (layers // 3, 2 * layers // 3)):
        raise NotImplementedError("fused tail supports the single reduction-cell config")
    Cc = params["cells"][0]["pre1"]["w"].shape[-1]
    ncls = params["classifier"]["w"].shape[-1]
    logits = fused_reduction_cell_head(params["cells"][0], arch_list[0], s0, s1,
                                       params["classifier"], Cc=Cc, ncls=ncls)
    return logits, None                                   # eval mode / auxiliary=False


# ------------------------------------------------------------------ deterministic parameter init

def init_params(key, C, num_classes, arch_list):
    key_iter = iter(jax.random.split(key, 256))
    nk = lambda: next(key_iter)

    def conv_w(kh, kw, cin, cout):
        return jax.random.normal(nk(), (kh, kw, cin, cout), jnp.float32) / jnp.sqrt(kh * kw * cin)

    def bn(c, affine=True):
        g = 1.0 + 0.1 * jax.random.normal(nk(), (c,), jnp.float32)
        b = 0.1 * jax.random.normal(nk(), (c,), jnp.float32)
        rm = 0.1 * jax.random.normal(nk(), (c,), jnp.float32)
        rv = 0.8 + 0.4 * jax.random.uniform(nk(), (c,), jnp.float32)
        if not affine:
            g = jnp.ones((c,), jnp.float32)
            b = jnp.zeros((c,), jnp.float32)
        return dict(gamma=g, beta=b, rm=rm, rv=rv)

    def fr(cin, cout):
        return dict(w1=conv_w(1, 1, cin, cout // 2), w2=conv_w(1, 1, cin, cout // 2), bn=bn(cout))

    def rcb(cin, cout):
        return dict(w=conv_w(1, 1, cin, cout), bn=bn(cout))

    params = {
        "stem0": dict(w1=conv_w(3, 3, 3, C // 2), bn1=bn(C // 2),
                      w2=conv_w(3, 3, C // 2, C), bn2=bn(C)),
        "stem1": dict(w=conv_w(3, 3, C, C), bn=bn(C)),
        "cells": [],
    }

    layers = len(arch_list)
    C_pp, C_p, C_curr = C, C, C
    reduction_prev = True
    for i, arch in enumerate(arch_list):
        reduction = i in (layers // 3, 2 * layers // 3)
        if reduction:
            C_curr *= 2
        cell = {
            "pre0": fr(C_pp, C_curr) if reduction_prev else rcb(C_pp, C_curr),
            "pre1": rcb(C_p, C_curr),
            "ops": [],
        }
        for name, idx in arch:
            stride = 2 if (reduction and idx < 2) else 1
            if name == "skip_connect":
                cell["ops"].append(fr(C_curr, C_curr) if stride == 2 else None)
            elif name in ("max_pool_3x3", "avg_pool_3x3"):
                cell["ops"].append(dict(bn=bn(C_curr, affine=False)))
            else:
                raise NotImplementedError(name)
        params["cells"].append(cell)
        reduction_prev = reduction
        C_pp, C_p = C_p, 4 * C_curr                        # multiplier = len(range(2, 6)) = 4

    params["classifier"] = dict(
        w=0.1 * jax.random.normal(nk(), (C_p, num_classes), jnp.float32),
        b=0.1 * jax.random.normal(nk(), (num_classes,), jnp.float32),
    )
    return params


# ------------------------------------------------------------------ main

if __name__ == "__main__":
    C = 16
    NUM_CLASSES = 10
    ARCH_CELL = [                                          # 4 steps x 2 ops (DARTS genotype style)
        ("max_pool_3x3", 0), ("avg_pool_3x3", 1),
        ("skip_connect", 0), ("max_pool_3x3", 1),
        ("skip_connect", 2), ("avg_pool_3x3", 1),
        ("skip_connect", 3), ("max_pool_3x3", 0),
    ]
    ARCH = [ARCH_CELL]                                     # layers = 1 (reduction cell at i = 0)

    root = jax.random.PRNGKey(0)
    kx, kp = jax.random.split(root)
    x = jax.random.normal(kx, (2, 3, 112, 112), jnp.float32)   # NCHW, like the PyTorch module
    params = init_params(kp, C, NUM_CLASSES, ARCH)

    fwd = jax.jit(lambda p, inp: network_forward(p, ARCH, inp))
    logits, logits_aux = fwd(params, x)
    jax.block_until_ready(logits)

    assert logits.shape == (2, NUM_CLASSES), logits.shape
    assert logits_aux is None
    print("KERNEL_OK")
</pallas_src>

<mosaic_0001>
module attributes {stable_mosaic.version = 11 : i64} {
  func.func @_mm_kernel(%arg0: i32, %arg1: memref<896x27xbf16, #tpu.memory_space<vmem>>, %arg2: memref<27x8xbf16, #tpu.memory_space<vmem>>, %arg3: memref<1x8xf32, #tpu.memory_space<vmem>>, %arg4: memref<896x8xf32, #tpu.memory_space<vmem>>) attributes {dimension_semantics = [#tpu.dimension_semantics<parallel>], iteration_bounds = array<i64: 7>, scalar_prefetch = 0 : i64, scratch_operands = 0 : i64, tpu.core_type = #tpu.core_type<tc>, window_params = [{transform_indices = @transform_0, window_bounds = array<i64: 896, 27>}, {pipeline_mode = #tpu.pipeline_mode<synchronous>, transform_indices = @transform_1, window_bounds = array<i64: 27, 8>}, {pipeline_mode = #tpu.pipeline_mode<synchronous>, transform_indices = @transform_2, window_bounds = array<i64: 1, 8>}, {transform_indices = @transform_3, window_bounds = array<i64: 896, 8>}]} {
    %c0 = arith.constant 0 : index
    %c0_0 = arith.constant 0 : index
    %0 = vector.load %arg1[%c0, %c0_0] : memref<896x27xbf16, #tpu.memory_space<vmem>>, vector<896x27xbf16>
    %c0_1 = arith.constant 0 : index
    %c0_2 = arith.constant 0 : index
    %1 = vector.load %arg2[%c0_1, %c0_2] : memref<27x8xbf16, #tpu.memory_space<vmem>>, vector<27x8xbf16>
    %cst = arith.constant dense<0.000000e+00> : vector<896x8xf32>
    %2 = tpu.matmul %0, %1, %cst {dimension_numbers = #tpu.dot_dimension_numbers<[1], [0], [0], [1], [0, 0, 1, 1], [], []>} : vector<896x27xbf16>, vector<27x8xbf16>, vector<896x8xf32> -> vector<896x8xf32>
    %c0_3 = arith.constant 0 : index
    %c0_4 = arith.constant 0 : index
    %3 = vector.load %arg3[%c0_3, %c0_4] : memref<1x8xf32, #tpu.memory_space<vmem>>, vector<1x8xf32>
    %4 = vector.broadcast %3 : vector<1x8xf32> to vector<896x8xf32>
    %5 = arith.addf %2, %4 : vector<896x8xf32>
    %cst_5 = arith.constant 0.000000e+00 : f32
    %6 = vector.broadcast %cst_5 : f32 to vector<896x8xf32>
    %7 = arith.maximumf %5, %6 : vector<896x8xf32>
    %c0_6 = arith.constant 0 : index
    %c0_7 = arith.constant 0 : index
    %8 = vector.load %arg4[%c0_6, %c0_7] : memref<896x8xf32, #tpu.memory_space<vmem>>, vector<896x8xf32>
    tpu.vector_store %arg4[%c0_6, %c0_7], %7 {strides = array<i32>} : memref<896x8xf32, #tpu.memory_space<vmem>>, vector<896x8xf32>,
    return
  }
  func.func @transform_0(%arg0: i32) -> (i32, i32) {
    %c0_i32 = arith.constant 0 : i32
    %c0_i32_0 = arith.constant 0 : i32
    return %arg0, %c0_i32 : i32, i32
  }
  func.func @transform_1(%arg0: i32) -> (i32, i32) {
    %c0_i32 = arith.constant 0 : i32
    %c0_i32_0 = arith.constant 0 : i32
    %c0_i32_1 = arith.constant 0 : i32
    return %c0_i32, %c0_i32_0 : i32, i32
  }
  func.func @transform_2(%arg0: i32) -> (i32, i32) {
    %c0_i32 = arith.constant 0 : i32
    %c0_i32_0 = arith.constant 0 : i32
    %c0_i32_1 = arith.constant 0 : i32
    return %c0_i32, %c0_i32_0 : i32, i32
  }
  func.func @transform_3(%arg0: i32) -> (i32, i32) {
    %c0_i32 = arith.constant 0 : i32
    %c0_i32_0 = arith.constant 0 : i32
    return %arg0, %c0_i32 : i32, i32
  }
}

module attributes {stable_mosaic.version = 11 : i64} {
  func.func @_mm_kernel(%arg0: i32, %arg1: memref<784x72xbf16, #tpu.memory_space<vmem>>, %arg2: memref<72x16xbf16, #tpu.memory_space<vmem>>, %arg3: memref<1x16xf32, #tpu.memory_space<vmem>>, %arg4: memref<784x16xf32, #tpu.memory_space<vmem>>) attributes {dimension_semantics = [#tpu.dimension_semantics<parallel>], iteration_bounds = array<i64: 2>, scalar_prefetch = 0 : i64, scratch_operands = 0 : i64, tpu.core_type = #tpu.core_type<tc>, window_params = [{transform_indices = @transform_0, window_bounds = array<i64: 784, 72>}, {pipeline_mode = #tpu.pipeline_mode<synchronous>, transform_indices = @transform_1, window_bounds = array<i64: 72, 16>}, {pipeline_mode = #tpu.pipeline_mode<synchronous>, transform_indices = @transform_2, window_bounds = array<i64: 1, 16>}, {transform_indices = @transform_3, window_bounds = array<i64: 784, 16>}]} {
    %c0 = arith.constant 0 : index
    %c0_0 = arith.constant 0 : index
    %0 = vector.load %arg1[%c0, %c0_0] : memref<784x72xbf16, #tpu.memory_space<vmem>>, vector<784x72xbf16>
    %c0_1 = arith.constant 0 : index
    %c0_2 = arith.constant 0 : index
    %1 = vector.load %arg2[%c0_1, %c0_2] : memref<72x16xbf16, #tpu.memory_space<vmem>>, vector<72x16xbf16>
    %cst = arith.constant dense<0.000000e+00> : vector<784x16xf32>
    %2 = tpu.matmul %0, %1, %cst {dimension_numbers = #tpu.dot_dimension_numbers<[1], [0], [0], [1], [0, 0, 1, 1], [], []>} : vector<784x72xbf16>, vector<72x16xbf16>, vector<784x16xf32> -> vector<784x16xf32>
    %c0_3 = arith.constant 0 : index
    %c0_4 = arith.constant 0 : index
    %3 = vector.load %arg3[%c0_3, %c0_4] : memref<1x16xf32, #tpu.memory_space<vmem>>, vector<1x16xf32>
    %4 = vector.broadcast %3 : vector<1x16xf32> to vector<784x16xf32>
    %5 = arith.addf %2, %4 : vector<784x16xf32>
    %c0_5 = arith.constant 0 : index
    %c0_6 = arith.constant 0 : index
    %6 = vector.load %arg4[%c0_5, %c0_6] : memref<784x16xf32, #tpu.memory_space<vmem>>, vector<784x16xf32>
    tpu.vector_store %arg4[%c0_5, %c0_6], %5 {strides = array<i32>} : memref<784x16xf32, #tpu.memory_space<vmem>>, vector<784x16xf32>,
    return
  }
  func.func @transform_0(%arg0: i32) -> (i32, i32) {
    %c0_i32 = arith.constant 0 : i32
    %c0_i32_0 = arith.constant 0 : i32
    return %arg0, %c0_i32 : i32, i32
  }
  func.func @transform_1(%arg0: i32) -> (i32, i32) {
    %c0_i32 = arith.constant 0 : i32
    %c0_i32_0 = arith.constant 0 : i32
    %c0_i32_1 = arith.constant 0 : i32
    return %c0_i32, %c0_i32_0 : i32, i32
  }
  func.func @transform_2(%arg0: i32) -> (i32, i32) {
    %c0_i32 = arith.constant 0 : i32
    %c0_i32_0 = arith.constant 0 : i32
    %c0_i32_1 = arith.constant 0 : i32
    return %c0_i32, %c0_i32_0 : i32, i32
  }
  func.func @transform_3(%arg0: i32) -> (i32, i32) {
    %c0_i32 = arith.constant 0 : i32
    %c0_i32_0 = arith.constant 0 : i32
    return %arg0, %c0_i32 : i32, i32
  }
}

module attributes {stable_mosaic.version = 11 : i64} {
  func.func @_mm_kernel(%arg0: i32, %arg1: memref<392x144xbf16, #tpu.memory_space<vmem>>, %arg2: memref<144x16xbf16, #tpu.memory_space<vmem>>, %arg3: memref<1x16xf32, #tpu.memory_space<vmem>>, %arg4: memref<392x16xf32, #tpu.memory_space<vmem>>) attributes {dimension_semantics = [#tpu.dimension_semantics<parallel>], iteration_bounds = array<i64: 1>, scalar_prefetch = 0 : i64, scratch_operands = 0 : i64, tpu.core_type = #tpu.core_type<tc>, window_params = [{transform_indices = @transform_0, window_bounds = array<i64: 392, 144>}, {pipeline_mode = #tpu.pipeline_mode<synchronous>, transform_indices = @transform_1, window_bounds = array<i64: 144, 16>}, {pipeline_mode = #tpu.pipeline_mode<synchronous>, transform_indices = @transform_2, window_bounds = array<i64: 1, 16>}, {transform_indices = @transform_3, window_bounds = array<i64: 392, 16>}]} {
    %c0 = arith.constant 0 : index
    %c0_0 = arith.constant 0 : index
    %0 = vector.load %arg1[%c0, %c0_0] : memref<392x144xbf16, #tpu.memory_space<vmem>>, vector<392x144xbf16>
    %cst = arith.constant 0.000000e+00 : bf16
    %1 = vector.broadcast %cst : bf16 to vector<392x144xbf16>
    %2 = arith.maximumf %0, %1 : vector<392x144xbf16>
    %c0_1 = arith.constant 0 : index
    %c0_2 = arith.constant 0 : index
    %3 = vector.load %arg2[%c0_1, %c0_2] : memref<144x16xbf16, #tpu.memory_space<vmem>>, vector<144x16xbf16>
    %cst_3 = arith.constant dense<0.000000e+00> : vector<392x16xf32>
    %4 = tpu.matmul %2, %3, %cst_3 {dimension_numbers = #tpu.dot_dimension_numbers<[1], [0], [0], [1], [0, 0, 1, 1], [], []>} : vector<392x144xbf16>, vector<144x16xbf16>, vector<392x16xf32> -> vector<392x16xf32>
    %c0_4 = arith.constant 0 : index
    %c0_5 = arith.constant 0 : index
    %5 = vector.load %arg3[%c0_4, %c0_5] : memref<1x16xf32, #tpu.memory_space<vmem>>, vector<1x16xf32>
    %6 = vector.broadcast %5 : vector<1x16xf32> to vector<392x16xf32>
    %7 = arith.addf %4, %6 : vector<392x16xf32>
    %c0_6 = arith.constant 0 : index
    %c0_7 = arith.constant 0 : index
    %8 = vector.load %arg4[%c0_6, %c0_7] : memref<392x16xf32, #tpu.memory_space<vmem>>, vector<392x16xf32>
    tpu.vector_store %arg4[%c0_6, %c0_7], %7 {strides = array<i32>} : memref<392x16xf32, #tpu.memory_space<vmem>>, vector<392x16xf32>,
    return
  }
  func.func @transform_0(%arg0: i32) -> (i32, i32) {
    %c0_i32 = arith.constant 0 : i32
    %c0_i32_0 = arith.constant 0 : i32
    return %arg0, %c0_i32 : i32, i32
  }
  func.func @transform_1(%arg0: i32) -> (i32, i32) {
    %c0_i32 = arith.constant 0 : i32
    %c0_i32_0 = arith.constant 0 : i32
    %c0_i32_1 = arith.constant 0 : i32
    return %c0_i32, %c0_i32_0 : i32, i32
  }
  func.func @transform_2(%arg0: i32) -> (i32, i32) {
    %c0_i32 = arith.constant 0 : i32
    %c0_i32_0 = arith.constant 0 : i32
    %c0_i32_1 = arith.constant 0 : i32
    return %c0_i32, %c0_i32_0 : i32, i32
  }
  func.func @transform_3(%arg0: i32) -> (i32, i32) {
    %c0_i32 = arith.constant 0 : i32
    %c0_i32_0 = arith.constant 0 : i32
    return %arg0, %c0_i32 : i32, i32
  }
}

module attributes {stable_mosaic.version = 11 : i64} {
  func.func @_mm_kernel(%arg0: i32, %arg1: memref<392x48xbf16, #tpu.memory_space<vmem>>, %arg2: memref<48x64xbf16, #tpu.memory_space<vmem>>, %arg3: memref<1x64xf32, #tpu.memory_space<vmem>>, %arg4: memref<392x64xf32, #tpu.memory_space<vmem>>) attributes {dimension_semantics = [#tpu.dimension_semantics<parallel>], iteration_bounds = array<i64: 1>, scalar_prefetch = 0 : i64, scratch_operands = 0 : i64, tpu.core_type = #tpu.core_type<tc>, window_params = [{transform_indices = @transform_0, window_bounds = array<i64: 392, 48>}, {pipeline_mode = #tpu.pipeline_mode<synchronous>, transform_indices = @transform_1, window_bounds = array<i64: 48, 64>}, {pipeline_mode = #tpu.pipeline_mode<synchronous>, transform_indices = @transform_2, window_bounds = array<i64: 1, 64>}, {transform_indices = @transform_3, window_bounds = array<i64: 392, 64>}]} {
    %c0 = arith.constant 0 : index
    %c0_0 = arith.constant 0 : index
    %0 = vector.load %arg1[%c0, %c0_0] : memref<392x48xbf16, #tpu.memory_space<vmem>>, vector<392x48xbf16>
    %cst = arith.constant 0.000000e+00 : bf16
    %1 = vector.broadcast %cst : bf16 to vector<392x48xbf16>
    %2 = arith.maximumf %0, %1 : vector<392x48xbf16>
    %c0_1 = arith.constant 0 : index
    %c0_2 = arith.constant 0 : index
    %3 = vector.load %arg2[%c0_1, %c0_2] : memref<48x64xbf16, #tpu.memory_space<vmem>>, vector<48x64xbf16>
    %cst_3 = arith.constant dense<0.000000e+00> : vector<392x64xf32>
    %4 = tpu.matmul %2, %3, %cst_3 {dimension_numbers = #tpu.dot_dimension_numbers<[1], [0], [0], [1], [0, 0, 1, 1], [], []>} : vector<392x48xbf16>, vector<48x64xbf16>, vector<392x64xf32> -> vector<392x64xf32>
    %c0_4 = arith.constant 0 : index
    %c0_5 = arith.constant 0 : index
    %5 = vector.load %arg3[%c0_4, %c0_5] : memref<1x64xf32, #tpu.memory_space<vmem>>, vector<1x64xf32>
    %6 = vector.broadcast %5 : vector<1x64xf32> to vector<392x64xf32>
    %7 = arith.addf %4, %6 : vector<392x64xf32>
    %c0_6 = arith.constant 0 : index
    %c0_7 = arith.constant 0 : index
    %8 = vector.load %arg4[%c0_6, %c0_7] : memref<392x64xf32, #tpu.memory_space<vmem>>, vector<392x64xf32>
    tpu.vector_store %arg4[%c0_6, %c0_7], %7 {strides = array<i32>} : memref<392x64xf32, #tpu.memory_space<vmem>>, vector<392x64xf32>,
    return
  }
  func.func @transform_0(%arg0: i32) -> (i32, i32) {
    %c0_i32 = arith.constant 0 : i32
    %c0_i32_0 = arith.constant 0 : i32
    return %arg0, %c0_i32 : i32, i32
  }
  func.func @transform_1(%arg0: i32) -> (i32, i32) {
    %c0_i32 = arith.constant 0 : i32
    %c0_i32_0 = arith.constant 0 : i32
    %c0_i32_1 = arith.constant 0 : i32
    return %c0_i32, %c0_i32_0 : i32, i32
  }
  func.func @transform_2(%arg0: i32) -> (i32, i32) {
    %c0_i32 = arith.constant 0 : i32
    %c0_i32_0 = arith.constant 0 : i32
    %c0_i32_1 = arith.constant 0 : i32
    return %c0_i32, %c0_i32_0 : i32, i32
  }
  func.func @transform_3(%arg0: i32) -> (i32, i32) {
    %c0_i32 = arith.constant 0 : i32
    %c0_i32_0 = arith.constant 0 : i32
    return %arg0, %c0_i32 : i32, i32
  }
}

module attributes {stable_mosaic.version = 11 : i64} {
  func.func @kernel(%arg0: i32, %arg1: memref<4x7x7x64xf32, #tpu.memory_space<vmem>>, %arg2: memref<5x32xf32, #tpu.memory_space<vmem>>, %arg3: memref<5x32xf32, #tpu.memory_space<vmem>>, %arg4: memref<1x64x32xf32, #tpu.memory_space<vmem>>, %arg5: memref<1x32xf32, #tpu.memory_space<vmem>>, %arg6: memref<128x10xf32, #tpu.memory_space<vmem>>, %arg7: memref<1x10xf32, #tpu.memory_space<vmem>>, %arg8: memref<1x1x10xf32, #tpu.memory_space<vmem>>, %arg9: memref<7x7x32xf32, #tpu.memory_space<vmem>>, %arg10: memref<7x7x32xf32, #tpu.memory_space<vmem>>) attributes {dimension_semantics = [#tpu.dimension_semantics<parallel>], iteration_bounds = array<i64: 2>, scalar_prefetch = 0 : i64, scratch_operands = 2 : i64, tpu.core_type = #tpu.core_type<tc>, window_params = [{transform_indices = @transform_0, window_bounds = array<i64: 4, 7, 7, 64>}, {pipeline_mode = #tpu.pipeline_mode<synchronous>, transform_indices = @transform_1, window_bounds = array<i64: 5, 32>}, {pipeline_mode = #tpu.pipeline_mode<synchronous>, transform_indices = @transform_2, window_bounds = array<i64: 5, 32>}, {pipeline_mode = #tpu.pipeline_mode<synchronous>, transform_indices = @transform_3, window_bounds = array<i64: 1, 64, 32>}, {pipeline_mode = #tpu.pipeline_mode<synchronous>, transform_indices = @transform_4, window_bounds = array<i64: 1, 32>}, {pipeline_mode = #tpu.pipeline_mode<synchronous>, transform_indices = @transform_5, window_bounds = array<i64: 128, 10>}, {pipeline_mode = #tpu.pipeline_mode<synchronous>, transform_indices = @transform_6, window_bounds = array<i64: 1, 10>}, {transform_indices = @transform_7, window_bounds = array<i64: 1, 1, 10>}]} {
    %c0 = arith.constant 0 : index
    %c0_0 = arith.constant 0 : index
    %c0_1 = arith.constant 0 : index
    %c0_2 = arith.constant 0 : index
    %0 = vector.load %arg1[%c0, %c0_0, %c0_1, %c0_2] : memref<4x7x7x64xf32, #tpu.memory_space<vmem>>, vector<1x7x7x64xf32>
    %1 = vector.shape_cast %0 : vector<1x7x7x64xf32> to vector<7x7x64xf32>
    %c1 = arith.constant 1 : index
    %c0_3 = arith.constant 0 : index
    %c0_4 = arith.constant 0 : index
    %c0_5 = arith.constant 0 : index
    %2 = vector.load %arg1[%c1, %c0_3, %c0_4, %c0_5] : memref<4x7x7x64xf32, #tpu.memory_space<vmem>>, vector<1x7x7x64xf32>
    %3 = vector.shape_cast %2 : vector<1x7x7x64xf32> to vector<7x7x64xf32>
    %c2 = arith.constant 2 : index
    %c0_6 = arith.constant 0 : index
    %c0_7 = arith.constant 0 : index
    %c0_8 = arith.constant 0 : index
    %4 = vector.load %arg1[%c2, %c0_6, %c0_7, %c0_8] : memref<4x7x7x64xf32, #tpu.memory_space<vmem>>, vector<1x7x7x64xf32>
    %5 = vector.shape_cast %4 : vector<1x7x7x64xf32> to vector<7x7x64xf32>
    %c3 = arith.constant 3 : index
    %c0_9 = arith.constant 0 : index
    %c0_10 = arith.constant 0 : index
    %c0_11 = arith.constant 0 : index
    %6 = vector.load %arg1[%c3, %c0_9, %c0_10, %c0_11] : memref<4x7x7x64xf32, #tpu.memory_space<vmem>>, vector<1x7x7x64xf32>
    %7 = vector.shape_cast %6 : vector<1x7x7x64xf32> to vector<7x7x64xf32>
    %c0_12 = arith.constant 0 : index
    %c0_13 = arith.constant 0 : index
    %8 = vector.load %arg2[%c0_12, %c0_13] : memref<5x32xf32, #tpu.memory_space<vmem>>, vector<1x32xf32>
    %c0_14 = arith.constant 0 : index
    %c0_15 = arith.constant 0 : index
    %9 = vector.load %arg3[%c0_14, %c0_15] : memref<5x32xf32, #tpu.memory_space<vmem>>, vector<1x32xf32>
    %10 = vector.extract_strided_slice %1 {offsets = [0, 0, 0], sizes = [7, 7, 32], strides = [1, 1, 1]} : vector<7x7x64xf32> to vector<7x7x32xf32>
    %11 = vector.extract_strided_slice %3 {offsets = [0, 0, 0], sizes = [7, 7, 32], strides = [1, 1, 1]} : vector<7x7x64xf32> to vector<7x7x32xf32>
    %12 = vector.extract_strided_slice %5 {offsets = [0, 0, 0], sizes = [7, 7, 32], strides = [1, 1, 1]} : vector<7x7x64xf32> to vector<7x7x32xf32>
    %13 = vector.extract_strided_slice %7 {offsets = [0, 0, 0], sizes = [7, 7, 32], strides = [1, 1, 1]} : vector<7x7x64xf32> to vector<7x7x32xf32>
    %c0_16 = arith.constant 0 : index
    %c0_17 = arith.constant 0 : index
    %c0_18 = arith.constant 0 : index
    %14 = vector.load %arg9[%c0_16, %c0_17, %c0_18] : memref<7x7x32xf32, #tpu.memory_space<vmem>>, vector<7x7x32xf32>
    tpu.vector_store %arg9[%c0_16, %c0_17, %c0_18], %10 {strides = array<i32>} : memref<7x7x32xf32, #tpu.memory_space<vmem>>, vector<7x7x32xf32>,
    %15 = vector.extract_strided_slice %13 {offsets = [0, 0, 0], sizes = [6, 6, 32], strides = [1, 1, 1]} : vector<7x7x32xf32> to vector<6x6x32xf32>
    %c1_19 = arith.constant 1 : index
    %c1_20 = arith.constant 1 : index
    %c0_21 = arith.constant 0 : index
    %16 = vector.load %arg9[%c1_19, %c1_20, %c0_21] : memref<7x7x32xf32, #tpu.memory_space<vmem>>, vector<6x6x32xf32>
    %17 = arith.maximumf %16, %15 : vector<6x6x32xf32>
    %c1_22 = arith.constant 1 : index
    %c1_23 = arith.constant 1 : index
    %c0_24 = arith.constant 0 : index
    %18 = vector.load %arg9[%c1_22, %c1_23, %c0_24] : memref<7x7x32xf32, #tpu.memory_space<vmem>>, vector<6x6x32xf32>
    tpu.vector_store %arg9[%c1_22, %c1_23, %c0_24], %17 {strides = array<i32>} : memref<7x7x32xf32, #tpu.memory_space<vmem>>, vector<6x6x32xf32>,
    %19 = vector.extract_strided_slice %12 {offsets = [0, 0, 0], sizes = [6, 7, 32], strides = [1, 1, 1]} : vector<7x7x32xf32> to vector<6x7x32xf32>
    %c1_25 = arith.constant 1 : index
    %c0_26 = arith.constant 0 : index
    %c0_27 = arith.constant 0 : index
    %20 = vector.load %arg9[%c1_25, %c0_26, %c0_27] : memref<7x7x32xf32, #tpu.memory_space<vmem>>, vector<6x7x32xf32>
    %21 = arith.maximumf %20, %19 : vector<6x7x32xf32>
    %c1_28 = arith.constant 1 : index
    %c0_29 = arith.constant 0 : index
    %c0_30 = arith.constant 0 : index
    %22 = vector.load %arg9[%c1_28, %c0_29, %c0_30] : memref<7x7x32xf32, #tpu.memory_space<vmem>>, vector<6x7x32xf32>
    tpu.vector_store %arg9[%c1_28, %c0_29, %c0_30], %21 {strides = array<i32>} : memref<7x7x32xf32, #tpu.memory_space<vmem>>, vector<6x7x32xf32>,
    %23 = vector.extract_strided_slice %13 {offsets = [0, 0, 0], sizes = [6, 7, 32], strides = [1, 1, 1]} : vector<7x7x32xf32> to vector<6x7x32xf32>
    %c1_31 = arith.constant 1 : index
    %c0_32 = arith.constant 0 : index
    %c0_33 = arith.constant 0 : index
    %24 = vector.load %arg9[%c1_31, %c0_32, %c0_33] : memref<7x7x32xf32, #tpu.memory_space<vmem>>, vector<6x7x32xf32>
    %25 = arith.maximumf %24, %23 : vector<6x7x32xf32>
    %c1_34 = arith.constant 1 : index
    %c0_35 = arith.constant 0 : index
    %c0_36 = arith.constant 0 : index
    %26 = vector.load %arg9[%c1_34, %c0_35, %c0_36] : memref<7x7x32xf32, #tpu.memory_space<vmem>>, vector<6x7x32xf32>
    tpu.vector_store %arg9[%c1_34, %c0_35, %c0_36], %25 {strides = array<i32>} : memref<7x7x32xf32, #tpu.memory_space<vmem>>, vector<6x7x32xf32>,
    %27 = vector.extract_strided_slice %11 {offsets = [0, 0, 0], sizes = [7, 6, 32], strides = [1, 1, 1]} : vector<7x7x32xf32> to vector<7x6x32xf32>
    %c0_37 = arith.constant 0 : index
    %c1_38 = arith.constant 1 : index
    %c0_39 = arith.constant 0 : index
    %28 = vector.load %arg9[%c0_37, %c1_38, %c0_39] : memref<7x7x32xf32, #tpu.memory_space<vmem>>, vector<7x6x32xf32>
    %29 = arith.maximumf %28, %27 : vector<7x6x32xf32>
    %c0_40 = arith.constant 0 : index
    %c1_41 = arith.constant 1 : index
    %c0_42 = arith.constant 0 : index
    %30 = vector.load %arg9[%c0_40, %c1_41, %c0_42] : memref<7x7x32xf32, #tpu.memory_space<vmem>>, vector<7x6x32xf32>
    tpu.vector_store %arg9[%c0_40, %c1_41, %c0_42], %29 {strides = array<i32>} : memref<7x7x32xf32, #tpu.memory_space<vmem>>, vector<7x6x32xf32>,
    %c0_43 = arith.constant 0 : index
    %c0_44 = arith.constant 0 : index
    %c0_45 = arith.constant 0 : index
    %31 = vector.load %arg9[%c0_43, %c0_44, %c0_45] : memref<7x7x32xf32, #tpu.memory_space<vmem>>, vector<7x7x32xf32>
    %32 = arith.maximumf %31, %11 : vector<7x7x32xf32>
    %c0_46 = arith.constant 0 : index
    %c0_47 = arith.constant 0 : index
    %c0_48 = arith.constant 0 : index
    %33 = vector.load %arg9[%c0_46, %c0_47, %c0_48] : memref<7x7x32xf32, #tpu.memory_space<vmem>>, vector<7x7x32xf32>
    tpu.vector_store %arg9[%c0_46, %c0_47, %c0_48], %32 {strides = array<i32>} : memref<7x7x32xf32, #tpu.memory_space<vmem>>, vector<7x7x32xf32>,
    %34 = vector.extract_strided_slice %13 {offsets = [0, 0, 0], sizes = [7, 6, 32], strides = [1, 1, 1]} : vector<7x7x32xf32> to vector<7x6x32xf32>
    %c0_49 = arith.constant 0 : index
    %c1_50 = arith.constant 1 : index
    %c0_51 = arith.constant 0 : index
    %35 = vector.load %arg9[%c0_49, %c1_50, %c0_51] : memref<7x7x32xf32, #tpu.memory_space<vmem>>, vector<7x6x32xf32>
    %36 = arith.maximumf %35, %34 : vector<7x6x32xf32>
    %c0_52 = arith.constant 0 : index
    %c1_53 = arith.constant 1 : index
    %c0_54 = arith.constant 0 : index
    %37 = vector.load %arg9[%c0_52, %c1_53, %c0_54] : memref<7x7x32xf32, #tpu.memory_space<vmem>>, vector<7x6x32xf32>
    tpu.vector_store %arg9[%c0_52, %c1_53, %c0_54], %36 {strides = array<i32>} : memref<7x7x32xf32, #tpu.memory_space<vmem>>, vector<7x6x32xf32>,
    %c0_55 = arith.constant 0 : index
    %c0_56 = arith.constant 0 : index
    %c0_57 = arith.constant 0 : index
    %38 = vector.load %arg9[%c0_55, %c0_56, %c0_57] : memref<7x7x32xf32, #tpu.memory_space<vmem>>, vector<7x7x32xf32>
    %39 = arith.maximumf %38, %12 : vector<7x7x32xf32>
    %c0_58 = arith.constant 0 : index
    %c0_59 = arith.constant 0 : index
    %c0_60 = arith.constant 0 : index
    %40 = vector.load %arg9[%c0_58, %c0_59, %c0_60] : memref<7x7x32xf32, #tpu.memory_space<vmem>>, vector<7x7x32xf32>
    tpu.vector_store %arg9[%c0_58, %c0_59, %c0_60], %39 {strides = array<i32>} : memref<7x7x32xf32, #tpu.memory_space<vmem>>, vector<7x7x32xf32>,
    %c0_61 = arith.constant 0 : index
    %c0_62 = arith.constant 0 : index
    %c0_63 = arith.constant 0 : index
    %41 = vector.load %arg9[%c0_61, %c0_62, %c0_63] : memref<7x7x32xf32, #tpu.memory_space<vmem>>, vector<7x7x32xf32>
    %42 = arith.maximumf %41, %13 : vector<7x7x32xf32>
    %c0_64 = arith.constant 0 : index
    %c0_65 = arith.constant 0 : index
    %c0_66 = arith.constant 0 : index
    %43 = vector.load %arg9[%c0_64, %c0_65, %c0_66] : memref<7x7x32xf32, #tpu.memory_space<vmem>>, vector<7x7x32xf32>
    tpu.vector_store %arg9[%c0_64, %c0_65, %c0_66], %42 {strides = array<i32>} : memref<7x7x32xf32, #tpu.memory_space<vmem>>, vector<7x7x32xf32>,
    %c0_67 = arith.constant 0 : index
    %c0_68 = arith.constant 0 : index
    %c0_69 = arith.constant 0 : index
    %44 = vector.load %arg9[%c0_67, %c0_68, %c0_69] : memref<7x7x32xf32, #tpu.memory_space<vmem>>, vector<7x7x32xf32>
    %45 = vector.shape_cast %8 : vector<1x32xf32> to vector<1x1x32xf32>
    %46 = vector.broadcast %45 : vector<1x1x32xf32> to vector<7x7x32xf32>
    %47 = arith.mulf %44, %46 : vector<7x7x32xf32>
    %48 = vector.shape_cast %9 : vector<1x32xf32> to vector<1x1x32xf32>
    %49 = vector.broadcast %48 : vector<1x1x32xf32> to vector<7x7x32xf32>
    %50 = arith.addf %47, %49 : vector<7x7x32xf32>
    %c1_70 = arith.constant 1 : index
    %c0_71 = arith.constant 0 : index
    %51 = vector.load %arg2[%c1_70, %c0_71] : memref<5x32xf32, #tpu.memory_space<vmem>>, vector<1x32xf32>
    %c1_72 = arith.constant 1 : index
    %c0_73 = arith.constant 0 : index
    %52 = vector.load %arg3[%c1_72, %c0_73] : memref<5x32xf32, #tpu.memory_space<vmem>>, vector<1x32xf32>
    %53 = vector.extract_strided_slice %1 {offsets = [0, 0, 32], sizes = [7, 7, 32], strides = [1, 1, 1]} : vector<7x7x64xf32> to vector<7x7x32xf32>
    %54 = vector.extract_strided_slice %3 {offsets = [0, 0, 32], sizes = [7, 7, 32], strides = [1, 1, 1]} : vector<7x7x64xf32> to vector<7x7x32xf32>
    %55 = vector.extract_strided_slice %5 {offsets = [0, 0, 32], sizes = [7, 7, 32], strides = [1, 1, 1]} : vector<7x7x64xf32> to vector<7x7x32xf32>
    %56 = vector.extract_strided_slice %7 {offsets = [0, 0, 32], sizes = [7, 7, 32], strides = [1, 1, 1]} : vector<7x7x64xf32> to vector<7x7x32xf32>
    %c0_74 = arith.constant 0 : index
    %c0_75 = arith.constant 0 : index
    %c0_76 = arith.constant 0 : index
    %57 = vector.load %arg9[%c0_74, %c0_75, %c0_76] : memref<7x7x32xf32, #tpu.memory_space<vmem>>, vector<7x7x32xf32>
    tpu.vector_store %arg9[%c0_74, %c0_75, %c0_76], %53 {strides = array<i32>} : memref<7x7x32xf32, #tpu.memory_space<vmem>>, vector<7x7x32xf32>,
    %58 = vector.extract_strided_slice %56 {offsets = [0, 0, 0], sizes = [6, 6, 32], strides = [1, 1, 1]} : vector<7x7x32xf32> to vector<6x6x32xf32>
    %c1_77 = arith.constant 1 : index
    %c1_78 = arith.constant 1 : index
    %c0_79 = arith.constant 0 : index
    %59 = vector.load %arg9[%c1_77, %c1_78, %c0_79] : memref<7x7x32xf32, #tpu.memory_space<vmem>>, vector<6x6x32xf32>
    %60 = arith.addf %59, %58 : vector<6x6x32xf32>
    %c1_80 = arith.constant 1 : index
    %c1_81 = arith.constant 1 : index
    %c0_82 = arith.constant 0 : index
    %61 = vector.load %arg9[%c1_80, %c1_81, %c0_82] : memref<7x7x32xf32, #tpu.memory_space<vmem>>, vector<6x6x32xf32>
    tpu.vector_store %arg9[%c1_80, %c1_81, %c0_82], %60 {strides = array<i32>} : memref<7x7x32xf32, #tpu.memory_space<vmem>>, vector<6x6x32xf32>,
    %62 = vector.extract_strided_slice %55 {offsets = [0, 0, 0], sizes = [6, 7, 32], strides = [1, 1, 1]} : vector<7x7x32xf32> to vector<6x7x32xf32>
    %c1_83 = arith.constant 1 : index
    %c0_84 = arith.constant 0 : index
    %c0_85 = arith.constant 0 : index
    %63 = vector.load %arg9[%c1_83, %c0_84, %c0_85] : memref<7x7x32xf32, #tpu.memory_space<vmem>>, vector<6x7x32xf32>
    %64 = arith.addf %63, %62 : vector<6x7x32xf32>
    %c1_86 = arith.constant 1 : index
    %c0_87 = arith.constant 0 : index
    %c0_88 = arith.constant 0 : index
    %65 = vector.load %arg9[%c1_86, %c0_87, %c0_88] : memref<7x7x32xf32, #tpu.memory_space<vmem>>, vector<6x7x32xf32>
    tpu.vector_store %arg9[%c1_86, %c0_87, %c0_88], %64 {strides = array<i32>} : memref<7x7x32xf32, #tpu.memory_space<vmem>>, vector<6x7x32xf32>,
    %66 = vector.extract_strided_slice %56 {offsets = [0, 0, 0], sizes = [6, 7, 32], strides = [1, 1, 1]} : vector<7x7x32xf32> to vector<6x7x32xf32>
    %c1_89 = arith.constant 1 : index
    %c0_90 = arith.constant 0 : index
    %c0_91 = arith.constant 0 : index
    %67 = vector.load %arg9[%c1_89, %c0_90, %c0_91] : memref<7x7x32xf32, #tpu.memory_space<vmem>>, vector<6x7x32xf32>
    %68 = arith.addf %67, %66 : vector<6x7x32xf32>
    %c1_92 = arith.constant 1 : index
    %c0_93 = arith.constant 0 : index
    %c0_94 = arith.constant 0 : index
    %69 = vector.load %arg9[%c1_92, %c0_93, %c0_94] : memref<7x7x32xf32, #tpu.memory_space<vmem>>, vector<6x7x32xf32>
    tpu.vector_store %arg9[%c1_92, %c0_93, %c0_94], %68 {strides = array<i32>} : memref<7x7x32xf32, #tpu.memory_space<vmem>>, vector<6x7x32xf32>,
    %70 = vector.extract_strided_slice %54 {offsets = [0, 0, 0], sizes = [7, 6, 32], strides = [1, 1, 1]} : vector<7x7x32xf32> to vector<7x6x32xf32>
    %c0_95 = arith.constant 0 : index
    %c1_96 = arith.constant 1 : index
    %c0_97 = arith.constant 0 : index
    %71 = vector.load %arg9[%c0_95, %c1_96, %c0_97] : memref<7x7x32xf32, #tpu.memory_space<vmem>>, vector<7x6x32xf32>
    %72 = arith.addf %71, %70 : vector<7x6x32xf32>
    %c0_98 = arith.constant 0 : index
    %c1_99 = arith.constant 1 : index
    %c0_100 = arith.constant 0 : index
    %73 = vector.load %arg9[%c0_98, %c1_99, %c0_100] : memref<7x7x32xf32, #tpu.memory_space<vmem>>, vector<7x6x32xf32>
    tpu.vector_store %arg9[%c0_98, %c1_99, %c0_100], %72 {strides = array<i32>} : memref<7x7x32xf32, #tpu.memory_space<vmem>>, vector<7x6x32xf32>,
    %c0_101 = arith.constant 0 : index
    %c0_102 = arith.constant 0 : index
    %c0_103 = arith.constant 0 : index
    %74 = vector.load %arg9[%c0_101, %c0_102, %c0_103] : memref<7x7x32xf32, #tpu.memory_space<vmem>>, vector<7x7x32xf32>
    %75 = arith.addf %74, %54 : vector<7x7x32xf32>
    %c0_104 = arith.constant 0 : index
    %c0_105 = arith.constant 0 : index
    %c0_106 = arith.constant 0 : index
    %76 = vector.load %arg9[%c0_104, %c0_105, %c0_106] : memref<7x7x32xf32, #tpu.memory_space<vmem>>, vector<7x7x32xf32>
    tpu.vector_store %arg9[%c0_104, %c0_105, %c0_106], %75 {strides = array<i32>} : memref<7x7x32xf32, #tpu.memory_space<vmem>>, vector<7x7x32xf32>,
    %77 = vector.extract_strided_slice %56 {offsets = [0, 0, 0], sizes = [7, 6, 32], strides = [1, 1, 1]} : vector<7x7x32xf32> to vector<7x6x32xf32>
    %c0_107 = arith.constant 0 : index
    %c1_108 = arith.constant 1 : index
    %c0_109 = arith.constant 0 : index
    %78 = vector.load %arg9[%c0_107, %c1_108, %c0_109] : memref<7x7x32xf32, #tpu.memory_space<vmem>>, vector<7x6x32xf32>
    %79 = arith.addf %78, %77 : vector<7x6x32xf32>
    %c0_110 = arith.constant 0 : index
    %c1_111 = arith.constant 1 : index
    %c0_112 = arith.constant 0 : index
    %80 = vector.load %arg9[%c0_110, %c1_111, %c0_112] : memref<7x7x32xf32, #tpu.memory_space<vmem>>, vector<7x6x32xf32>
    tpu.vector_store %arg9[%c0_110, %c1_111, %c0_112], %79 {strides = array<i32>} : memref<7x7x32xf32, #tpu.memory_space<vmem>>, vector<7x6x32xf32>,
    %c0_113 = arith.constant 0 : index
    %c0_114 = arith.constant 0 : index
    %c0_115 = arith.constant 0 : index
    %81 = vector.load %arg9[%c0_113, %c0_114, %c0_115] : memref<7x7x32xf32, #tpu.memory_space<vmem>>, vector<7x7x32xf32>
    %82 = arith.addf %81, %55 : vector<7x7x32xf32>
    %c0_116 = arith.constant 0 : index
    %c0_117 = arith.constant 0 : index
    %c0_118 = arith.constant 0 : index
    %83 = vector.load %arg9[%c0_116, %c0_117, %c0_118] : memref<7x7x32xf32, #tpu.memory_space<vmem>>, vector<7x7x32xf32>
    tpu.vector_store %arg9[%c0_116, %c0_117, %c0_118], %82 {strides = array<i32>} : memref<7x7x32xf32, #tpu.memory_space<vmem>>, vector<7x7x32xf32>,
    %c0_119 = arith.constant 0 : index
    %c0_120 = arith.constant 0 : index
    %c0_121 = arith.constant 0 : index
    %84 = vector.load %arg9[%c0_119, %c0_120, %c0_121] : memref<7x7x32xf32, #tpu.memory_space<vmem>>, vector<7x7x32xf32>
    %85 = arith.addf %84, %56 : vector<7x7x32xf32>
    %c0_122 = arith.constant 0 : index
    %c0_123 = arith.constant 0 : index
    %c0_124 = arith.constant 0 : index
    %86 = vector.load %arg9[%c0_122, %c0_123, %c0_124] : memref<7x7x32xf32, #tpu.memory_space<vmem>>, vector<7x7x32xf32>
    tpu.vector_store %arg9[%c0_122, %c0_123, %c0_124], %85 {strides = array<i32>} : memref<7x7x32xf32, #tpu.memory_space<vmem>>, vector<7x7x32xf32>,
    %c0_125 = arith.constant 0 : index
    %c0_126 = arith.constant 0 : index
    %c0_127 = arith.constant 0 : index
    %87 = vector.load %arg9[%c0_125, %c0_126, %c0_127] : memref<7x7x32xf32, #tpu.memory_space<vmem>>, vector<7x7x32xf32>
    %88 = tpu.iota {dimensions = array<i32: 0>} : vector<7x7x32xi32>
    %89 = tpu.iota {dimensions = array<i32: 1>} : vector<7x7x32xi32>
    %c0_i32 = arith.constant 0 : i32
    %90 = vector.broadcast %c0_i32 : i32 to vector<7x7x32xi32>
    %91 = arith.cmpi eq, %88, %90 : vector<7x7x32xi32>
    %cst = arith.constant 5.000000e-01 : f32
    %cst_128 = arith.constant 0.333333343 : f32
    %92 = vector.broadcast %cst : f32 to vector<7x7x32xf32>
    %93 = vector.broadcast %cst_128 : f32 to vector<7x7x32xf32>
    %94 = arith.select %91, %92, %93 : vector<7x7x32xi1>, vector<7x7x32xf32>
    %c0_i32_129 = arith.constant 0 : i32
    %95 = vector.broadcast %c0_i32_129 : i32 to vector<7x7x32xi32>
    %96 = arith.cmpi eq, %89, %95 : vector<7x7x32xi32>
    %cst_130 = arith.constant 5.000000e-01 : f32
    %cst_131 = arith.constant 0.333333343 : f32
    %97 = vector.broadcast %cst_130 : f32 to vector<7x7x32xf32>
    %98 = vector.broadcast %cst_131 : f32 to vector<7x7x32xf32>
    %99 = arith.select %96, %97, %98 : vector<7x7x32xi1>, vector<7x7x32xf32>
    %100 = arith.mulf %94, %99 : vector<7x7x32xf32>
    %101 = arith.mulf %87, %100 : vector<7x7x32xf32>
    %102 = vector.shape_cast %51 : vector<1x32xf32> to vector<1x1x32xf32>
    %103 = vector.broadcast %102 : vector<1x1x32xf32> to vector<7x7x32xf32>
    %104 = arith.mulf %101, %103 : vector<7x7x32xf32>
    %105 = vector.shape_cast %52 : vector<1x32xf32> to vector<1x1x32xf32>
    %106 = vector.broadcast %105 : vector<1x1x32xf32> to vector<7x7x32xf32>
    %107 = arith.addf %104, %106 : vector<7x7x32xf32>
    %108 = arith.addf %50, %107 : vector<7x7x32xf32>
    %109 = vector.extract_strided_slice %1 {offsets = [0, 0, 0], sizes = [7, 7, 32], strides = [1, 1, 1]} : vector<7x7x64xf32> to vector<7x7x32xf32>
    %110 = vector.extract_strided_slice %7 {offsets = [0, 0, 0], sizes = [7, 7, 32], strides = [1, 1, 1]} : vector<7x7x64xf32> to vector<7x7x32xf32>
    %c0_132 = arith.constant 0 : index
    %c0_133 = arith.constant 0 : index
    %c0_134 = arith.constant 0 : index
    %111 = vector.load %arg4[%c0_132, %c0_133, %c0_134] : memref<1x64x32xf32, #tpu.memory_space<vmem>>, vector<1x64x32xf32>
    %112 = vector.shape_cast %111 : vector<1x64x32xf32> to vector<64x32xf32>
    %c0_135 = arith.constant 0 : index
    %c0_136 = arith.constant 0 : index
    %113 = vector.load %arg5[%c0_135, %c0_136] : memref<1x32xf32, #tpu.memory_space<vmem>>, vector<1x32xf32>
    %114 = vector.extract_strided_slice %109 {offsets = [0, 0, 0], sizes = [1, 7, 32], strides = [1, 1, 1]} : vector<7x7x32xf32> to vector<1x7x32xf32>
    %115 = vector.shape_cast %114 : vector<1x7x32xf32> to vector<7x32xf32>
    %cst_137 = arith.constant 0.000000e+00 : f32
    %116 = vector.broadcast %cst_137 : f32 to vector<7x32xf32>
    %117 = arith.maximumf %115, %116 : vector<7x32xf32>
    %118 = vector.extract_strided_slice %110 {offsets = [0, 0, 0], sizes = [1, 7, 32], strides = [1, 1, 1]} : vector<7x7x32xf32> to vector<1x7x32xf32>
    %119 = vector.shape_cast %118 : vector<1x7x32xf32> to vector<7x32xf32>
    %cst_138 = arith.constant 0.000000e+00 : f32
    %120 = vector.broadcast %cst_138 : f32 to vector<7x32xf32>
    %121 = arith.maximumf %119, %120 : vector<7x32xf32>
    %122 = tpu.concatenate %117, %121 in 1 : vector<7x32xf32>, vector<7x32xf32> -> vector<7x64xf32>
    %cst_139 = arith.constant dense<0.000000e+00> : vector<7x32xf32>
    %123 = tpu.matmul %122, %112, %cst_139 {dimension_numbers = #tpu.dot_dimension_numbers<[1], [0], [0], [1], [0, 0, 1, 1], [], []>} : vector<7x64xf32>, vector<64x32xf32>, vector<7x32xf32> -> vector<7x32xf32>
    %124 = vector.broadcast %113 : vector<1x32xf32> to vector<7x32xf32>
    %125 = arith.addf %123, %124 : vector<7x32xf32>
    %c0_140 = arith.constant 0 : index
    %c0_141 = arith.constant 0 : index
    %c0_142 = arith.constant 0 : index
    %126 = vector.load %arg10[%c0_140, %c0_141, %c0_142] : memref<7x7x32xf32, #tpu.memory_space<vmem>>, vector<1x7x32xf32>
    %127 = vector.shape_cast %126 : vector<1x7x32xf32> to vector<7x32xf32>
    %128 = vector.shape_cast %125 : vector<7x32xf32> to vector<1x7x32xf32>
    tpu.vector_store %arg10[%c0_140, %c0_141, %c0_142], %128 {strides = array<i32>} : memref<7x7x32xf32, #tpu.memory_space<vmem>>, vector<1x7x32xf32>,
    %129 = vector.extract_strided_slice %109 {offsets = [1, 0, 0], sizes = [1, 7, 32], strides = [1, 1, 1]} : vector<7x7x32xf32> to vector<1x7x32xf32>
    %130 = vector.shape_cast %129 : vector<1x7x32xf32> to vector<7x32xf32>
    %cst_143 = arith.constant 0.000000e+00 : f32
    %131 = vector.broadcast %cst_143 : f32 to vector<7x32xf32>
    %132 = arith.maximumf %130, %131 : vector<7x32xf32>
    %133 = vector.extract_strided_slice %110 {offsets = [1, 0, 0], sizes = [1, 7, 32], strides = [1, 1, 1]} : vector<7x7x32xf32> to vector<1x7x32xf32>
    %134 = vector.shape_cast %133 : vector<1x7x32xf32> to vector<7x32xf32>
    %cst_144 = arith.constant 0.000000e+00 : f32
    %135 = vector.broadcast %cst_144 : f32 to vector<7x32xf32>
    %136 = arith.maximumf %134, %135 : vector<7x32xf32>
    %137 = tpu.concatenate %132, %136 in 1 : vector<7x32xf32>, vector<7x32xf32> -> vector<7x64xf32>
    %cst_145 = arith.constant dense<0.000000e+00> : vector<7x32xf32>
    %138 = tpu.matmul %137, %112, %cst_145 {dimension_numbers = #tpu.dot_dimension_numbers<[1], [0], [0], [1], [0, 0, 1, 1], [], []>} : vector<7x64xf32>, vector<64x32xf32>, vector<7x32xf32> -> vector<7x32xf32>
    %139 = vector.broadcast %113 : vector<1x32xf32> to vector<7x32xf32>
    %140 = arith.addf %138, %139 : vector<7x32xf32>
    %c1_146 = arith.constant 1 : index
    %c0_147 = arith.constant 0 : index
    %c0_148 = arith.constant 0 : index
    %141 = vector.load %arg10[%c1_146, %c0_147, %c0_148] : memref<7x7x32xf32, #tpu.memory_space<vmem>>, vector<1x7x32xf32>
    %142 = vector.shape_cast %141 : vector<1x7x32xf32> to vector<7x32xf32>
    %143 = vector.shape_cast %140 : vector<7x32xf32> to vector<1x7x32xf32>
    tpu.vector_store %arg10[%c1_146, %c0_147, %c0_148], %143 {strides = array<i32>} : memref<7x7x32xf32, #tpu.memory_space<vmem>>, vector<1x7x32xf32>,
    %144 = vector.extract_strided_slice %109 {offsets = [2, 0, 0], sizes = [1, 7, 32], strides = [1, 1, 1]} : vector<7x7x32xf32> to vector<1x7x32xf32>
    %145 = vector.shape_cast %144 : vector<1x7x32xf32> to vector<7x32xf32>
    %cst_149 = arith.constant 0.000000e+00 : f32
    %146 = vector.broadcast %cst_149 : f32 to vector<7x32xf32>
    %147 = arith.maximumf %145, %146 : vector<7x32xf32>
    %148 = vector.extract_strided_slice %110 {offsets = [2, 0, 0], sizes = [1, 7, 32], strides = [1, 1, 1]} : vector<7x7x32xf32> to vector<1x7x32xf32>
    %149 = vector.shape_cast %148 : vector<1x7x32xf32> to vector<7x32xf32>
    %cst_150 = arith.constant 0.000000e+00 : f32
    %150 = vector.broadcast %cst_150 : f32 to vector<7x32xf32>
    %151 = arith.maximumf %149, %150 : vector<7x32xf32>
    %152 = tpu.concatenate %147, %151 in 1 : vector<7x32xf32>, vector<7x32xf32> -> vector<7x64xf32>
    %cst_151 = arith.constant dense<0.000000e+00> : vector<7x32xf32>
    %153 = tpu.matmul %152, %112, %cst_151 {dimension_numbers = #tpu.dot_dimension_numbers<[1], [0], [0], [1], [0, 0, 1, 1], [], []>} : vector<7x64xf32>, vector<64x32xf32>, vector<7x32xf32> -> vector<7x32xf32>
    %154 = vector.broadcast %113 : vector<1x32xf32> to vector<7x32xf32>
    %155 = arith.addf %153, %154 : vector<7x32xf32>
    %c2_152 = arith.constant 2 : index
    %c0_153 = arith.constant 0 : index
    %c0_154 = arith.constant 0 : index
    %156 = vector.load %arg10[%c2_152, %c0_153, %c0_154] : memref<7x7x32xf32, #tpu.memory_space<vmem>>, vector<1x7x32xf32>
    %157 = vector.shape_cast %156 : vector<1x7x32xf32> to vector<7x32xf32>
    %158 = vector.shape_cast %155 : vector<7x32xf32> to vector<1x7x32xf32>
    tpu.vector_store %arg10[%c2_152, %c0_153, %c0_154], %158 {strides = array<i32>} : memref<7x7x32xf32, #tpu.memory_space<vmem>>, vector<1x7x32xf32>,
    %159 = vector.extract_strided_slice %109 {offsets = [3, 0, 0], sizes = [1, 7, 32], strides = [1, 1, 1]} : vector<7x7x32xf32> to vector<1x7x32xf32>
    %160 = vector.shape_cast %159 : vector<1x7x32xf32> to vector<7x32xf32>
    %cst_155 = arith.constant 0.000000e+00 : f32
    %161 = vector.broadcast %cst_155 : f32 to vector<7x32xf32>
    %162 = arith.maximumf %160, %161 : vector<7x32xf32>
    %163 = vector.extract_strided_slice %110 {offsets = [3, 0, 0], sizes = [1, 7, 32], strides = [1, 1, 1]} : vector<7x7x32xf32> to vector<1x7x32xf32>
    %164 = vector.shape_cast %163 : vector<1x7x32xf32> to vector<7x32xf32>
    %cst_156 = arith.constant 0.000000e+00 : f32
    %165 = vector.broadcast %cst_156 : f32 to vector<7x32xf32>
    %166 = arith.maximumf %164, %165 : vector<7x32xf32>
    %167 = tpu.concatenate %162, %166 in 1 : vector<7x32xf32>, vector<7x32xf32> -> vector<7x64xf32>
    %cst_157 = arith.constant dense<0.000000e+00> : vector<7x32xf32>
    %168 = tpu.matmul %167, %112, %cst_157 {dimension_numbers = #tpu.dot_dimension_numbers<[1], [0], [0], [1], [0, 0, 1, 1], [], []>} : vector<7x64xf32>, vector<64x32xf32>, vector<7x32xf32> -> vector<7x32xf32>
    %169 = vector.broadcast %113 : vector<1x32xf32> to vector<7x32xf32>
    %170 = arith.addf %168, %169 : vector<7x32xf32>
    %c3_158 = arith.constant 3 : index
    %c0_159 = arith.constant 0 : index
    %c0_160 = arith.constant 0 : index
    %171 = vector.load %arg10[%c3_158, %c0_159, %c0_160] : memref<7x7x32xf32, #tpu.memory_space<vmem>>, vector<1x7x32xf32>
    %172 = vector.shape_cast %171 : vector<1x7x32xf32> to vector<7x32xf32>
    %173 = vector.shape_cast %170 : vector<7x32xf32> to vector<1x7x32xf32>
    tpu.vector_store %arg10[%c3_158, %c0_159, %c0_160], %173 {strides = array<i32>} : memref<7x7x32xf32, #tpu.memory_space<vmem>>, vector<1x7x32xf32>,
    %174 = vector.extract_strided_slice %109 {offsets = [4, 0, 0], sizes = [1, 7, 32], strides = [1, 1, 1]} : vector<7x7x32xf32> to vector<1x7x32xf32>
    %175 = vector.shape_cast %174 : vector<1x7x32xf32> to vector<7x32xf32>
    %cst_161 = arith.constant 0.000000e+00 : f32
    %176 = vector.broadcast %cst_161 : f32 to vector<7x32xf32>
    %177 = arith.maximumf %175, %176 : vector<7x32xf32>
    %178 = vector.extract_strided_slice %110 {offsets = [4, 0, 0], sizes = [1, 7, 32], strides = [1, 1, 1]} : vector<7x7x32xf32> to vector<1x7x32xf32>
    %179 = vector.shape_cast %178 : vector<1x7x32xf32> to vector<7x32xf32>
    %cst_162 = arith.constant 0.000000e+00 : f32
    %180 = vector.broadcast %cst_162 : f32 to vector<7x32xf32>
    %181 = arith.maximumf %179, %180 : vector<7x32xf32>
    %182 = tpu.concatenate %177, %181 in 1 : vector<7x32xf32>, vector<7x32xf32> -> vector<7x64xf32>
    %cst_163 = arith.constant dense<0.000000e+00> : vector<7x32xf32>
    %183 = tpu.matmul %182, %112, %cst_163 {dimension_numbers = #tpu.dot_dimension_numbers<[1], [0], [0], [1], [0, 0, 1, 1], [], []>} : vector<7x64xf32>, vector<64x32xf32>, vector<7x32xf32> -> vector<7x32xf32>
    %184 = vector.broadcast %113 : vector<1x32xf32> to vector<7x32xf32>
    %185 = arith.addf %183, %184 : vector<7x32xf32>
    %c4 = arith.constant 4 : index
    %c0_164 = arith.constant 0 : index
    %c0_165 = arith.constant 0 : index
    %186 = vector.load %arg10[%c4, %c0_164, %c0_165] : memref<7x7x32xf32, #tpu.memory_space<vmem>>, vector<1x7x32xf32>
    %187 = vector.shape_cast %186 : vector<1x7x32xf32> to vector<7x32xf32>
    %188 = vector.shape_cast %185 : vector<7x32xf32> to vector<1x7x32xf32>
    tpu.vector_store %arg10[%c4, %c0_164, %c0_165], %188 {strides = array<i32>} : memref<7x7x32xf32, #tpu.memory_space<vmem>>, vector<1x7x32xf32>,
    %189 = vector.extract_strided_slice %109 {offsets = [5, 0, 0], sizes = [1, 7, 32], strides = [1, 1, 1]} : vector<7x7x32xf32> to vector<1x7x32xf32>
    %190 = vector.shape_cast %189 : vector<1x7x32xf32> to vector<7x32xf32>
    %cst_166 = arith.constant 0.000000e+00 : f32
    %191 = vector.broadcast %cst_166 : f32 to vector<7x32xf32>
    %192 = arith.maximumf %190, %191 : vector<7x32xf32>
    %193 = vector.extract_strided_slice %110 {offsets = [5, 0, 0], sizes = [1, 7, 32], strides = [1, 1, 1]} : vector<7x7x32xf32> to vector<1x7x32xf32>
    %194 = vector.shape_cast %193 : vector<1x7x32xf32> to vector<7x32xf32>
    %cst_167 = arith.constant 0.000000e+00 : f32
    %195 = vector.broadcast %cst_167 : f32 to vector<7x32xf32>
    %196 = arith.maximumf %194, %195 : vector<7x32xf32>
    %197 = tpu.concatenate %192, %196 in 1 : vector<7x32xf32>, vector<7x32xf32> -> vector<7x64xf32>
    %cst_168 = arith.constant dense<0.000000e+00> : vector<7x32xf32>
    %198 = tpu.matmul %197, %112, %cst_168 {dimension_numbers = #tpu.dot_dimension_numbers<[1], [0], [0], [1], [0, 0, 1, 1], [], []>} : vector<7x64xf32>, vector<64x32xf32>, vector<7x32xf32> -> vector<7x32xf32>
    %199 = vector.broadcast %113 : vector<1x32xf32> to vector<7x32xf32>
    %200 = arith.addf %198, %199 : vector<7x32xf32>
    %c5 = arith.constant 5 : index
    %c0_169 = arith.constant 0 : index
    %c0_170 = arith.constant 0 : index
    %201 = vector.load %arg10[%c5, %c0_169, %c0_170] : memref<7x7x32xf32, #tpu.memory_space<vmem>>, vector<1x7x32xf32>
    %202 = vector.shape_cast %201 : vector<1x7x32xf32> to vector<7x32xf32>
    %203 = vector.shape_cast %200 : vector<7x32xf32> to vector<1x7x32xf32>
    tpu.vector_store %arg10[%c5, %c0_169, %c0_170], %203 {strides = array<i32>} : memref<7x7x32xf32, #tpu.memory_space<vmem>>, vector<1x7x32xf32>,
    %204 = vector.extract_strided_slice %109 {offsets = [6, 0, 0], sizes = [1, 7, 32], strides = [1, 1, 1]} : vector<7x7x32xf32> to vector<1x7x32xf32>
    %205 = vector.shape_cast %204 : vector<1x7x32xf32> to vector<7x32xf32>
    %cst_171 = arith.constant 0.000000e+00 : f32
    %206 = vector.broadcast %cst_171 : f32 to vector<7x32xf32>
    %207 = arith.maximumf %205, %206 : vector<7x32xf32>
    %208 = vector.extract_strided_slice %110 {offsets = [6, 0, 0], sizes = [1, 7, 32], strides = [1, 1, 1]} : vector<7x7x32xf32> to vector<1x7x32xf32>
    %209 = vector.shape_cast %208 : vector<1x7x32xf32> to vector<7x32xf32>
    %cst_172 = arith.constant 0.000000e+00 : f32
    %210 = vector.broadcast %cst_172 : f32 to vector<7x32xf32>
    %211 = arith.maximumf %209, %210 : vector<7x32xf32>
    %212 = tpu.concatenate %207, %211 in 1 : vector<7x32xf32>, vector<7x32xf32> -> vector<7x64xf32>
    %cst_173 = arith.constant dense<0.000000e+00> : vector<7x32xf32>
    %213 = tpu.matmul %212, %112, %cst_173 {dimension_numbers = #tpu.dot_dimension_numbers<[1], [0], [0], [1], [0, 0, 1, 1], [], []>} : vector<7x64xf32>, vector<64x32xf32>, vector<7x32xf32> -> vector<7x32xf32>
    %214 = vector.broadcast %113 : vector<1x32xf32> to vector<7x32xf32>
    %215 = arith.addf %213, %214 : vector<7x32xf32>
    %c6 = arith.constant 6 : index
    %c0_174 = arith.constant 0 : index
    %c0_175 = arith.constant 0 : index
    %216 = vector.load %arg10[%c6, %c0_174, %c0_175] : memref<7x7x32xf32, #tpu.memory_space<vmem>>, vector<1x7x32xf32>
    %217 = vector.shape_cast %216 : vector<1x7x32xf32> to vector<7x32xf32>
    %218 = vector.shape_cast %215 : vector<7x32xf32> to vector<1x7x32xf32>
    tpu.vector_store %arg10[%c6, %c0_174, %c0_175], %218 {strides = array<i32>} : memref<7x7x32xf32, #tpu.memory_space<vmem>>, vector<1x7x32xf32>,
    %c0_176 = arith.constant 0 : index
    %c0_177 = arith.constant 0 : index
    %c0_178 = arith.constant 0 : index
    %219 = vector.load %arg10[%c0_176, %c0_177, %c0_178] : memref<7x7x32xf32, #tpu.memory_space<vmem>>, vector<7x7x32xf32>
    %c2_179 = arith.constant 2 : index
    %c0_180 = arith.constant 0 : index
    %220 = vector.load %arg2[%c2_179, %c0_180] : memref<5x32xf32, #tpu.memory_space<vmem>>, vector<1x32xf32>
    %c2_181 = arith.constant 2 : index
    %c0_182 = arith.constant 0 : index
    %221 = vector.load %arg3[%c2_181, %c0_182] : memref<5x32xf32, #tpu.memory_space<vmem>>, vector<1x32xf32>
    %222 = vector.extract_strided_slice %1 {offsets = [0, 0, 32], sizes = [7, 7, 32], strides = [1, 1, 1]} : vector<7x7x64xf32> to vector<7x7x32xf32>
    %223 = vector.extract_strided_slice %3 {offsets = [0, 0, 32], sizes = [7, 7, 32], strides = [1, 1, 1]} : vector<7x7x64xf32> to vector<7x7x32xf32>
    %224 = vector.extract_strided_slice %5 {offsets = [0, 0, 32], sizes = [7, 7, 32], strides = [1, 1, 1]} : vector<7x7x64xf32> to vector<7x7x32xf32>
    %225 = vector.extract_strided_slice %7 {offsets = [0, 0, 32], sizes = [7, 7, 32], strides = [1, 1, 1]} : vector<7x7x64xf32> to vector<7x7x32xf32>
    %c0_183 = arith.constant 0 : index
    %c0_184 = arith.constant 0 : index
    %c0_185 = arith.constant 0 : index
    %226 = vector.load %arg9[%c0_183, %c0_184, %c0_185] : memref<7x7x32xf32, #tpu.memory_space<vmem>>, vector<7x7x32xf32>
    tpu.vector_store %arg9[%c0_183, %c0_184, %c0_185], %222 {strides = array<i32>} : memref<7x7x32xf32, #tpu.memory_space<vmem>>, vector<7x7x32xf32>,
    %227 = vector.extract_strided_slice %225 {offsets = [0, 0, 0], sizes = [6, 6, 32], strides = [1, 1, 1]} : vector<7x7x32xf32> to vector<6x6x32xf32>
    %c1_186 = arith.constant 1 : index
    %c1_187 = arith.constant 1 : index
    %c0_188 = arith.constant 0 : index
    %228 = vector.load %arg9[%c1_186, %c1_187, %c0_188] : memref<7x7x32xf32, #tpu.memory_space<vmem>>, vector<6x6x32xf32>
    %229 = arith.maximumf %228, %227 : vector<6x6x32xf32>
    %c1_189 = arith.constant 1 : index
    %c1_190 = arith.constant 1 : index
    %c0_191 = arith.constant 0 : index
    %230 = vector.load %arg9[%c1_189, %c1_190, %c0_191] : memref<7x7x32xf32, #tpu.memory_space<vmem>>, vector<6x6x32xf32>
    tpu.vector_store %arg9[%c1_189, %c1_190, %c0_191], %229 {strides = array<i32>} : memref<7x7x32xf32, #tpu.memory_space<vmem>>, vector<6x6x32xf32>,
    %231 = vector.extract_strided_slice %224 {offsets = [0, 0, 0], sizes = [6, 7, 32], strides = [1, 1, 1]} : vector<7x7x32xf32> to vector<6x7x32xf32>
    %c1_192 = arith.constant 1 : index
    %c0_193 = arith.constant 0 : index
    %c0_194 = arith.constant 0 : index
    %232 = vector.load %arg9[%c1_192, %c0_193, %c0_194] : memref<7x7x32xf32, #tpu.memory_space<vmem>>, vector<6x7x32xf32>
    %233 = arith.maximumf %232, %231 : vector<6x7x32xf32>
    %c1_195 = arith.constant 1 : index
    %c0_196 = arith.constant 0 : index
    %c0_197 = arith.constant 0 : index
    %234 = vector.load %arg9[%c1_195, %c0_196, %c0_197] : memref<7x7x32xf32, #tpu.memory_space<vmem>>, vector<6x7x32xf32>
    tpu.vector_store %arg9[%c1_195, %c0_196, %c0_197], %233 {strides = array<i32>} : memref<7x7x32xf32, #tpu.memory_space<vmem>>, vector<6x7x32xf32>,
    %235 = vector.extract_strided_slice %225 {offsets = [0, 0, 0], sizes = [6, 7, 32], strides = [1, 1, 1]} : vector<7x7x32xf32> to vector<6x7x32xf32>
    %c1_198 = arith.constant 1 : index
    %c0_199 = arith.constant 0 : index
    %c0_200 = arith.constant 0 : index
    %236 = vector.load %arg9[%c1_198, %c0_199, %c0_200] : memref<7x7x32xf32, #tpu.memory_space<vmem>>, vector<6x7x32xf32>
    %237 = arith.maximumf %236, %235 : vector<6x7x32xf32>
    %c1_201 = arith.constant 1 : index
    %c0_202 = arith.constant 0 : index
    %c0_203 = arith.constant 0 : index
    %238 = vector.load %arg9[%c1_201, %c0_202, %c0_203] : memref<7x7x32xf32, #tpu.memory_space<vmem>>, vector<6x7x32xf32>
    tpu.vector_store %arg9[%c1_201, %c0_202, %c0_203], %237 {strides = array<i32>} : memref<7x7x32xf32, #tpu.memory_space<vmem>>, vector<6x7x32xf32>,
    %239 = vector.extract_strided_slice %223 {offsets = [0, 0, 0], sizes = [7, 6, 32], strides = [1, 1, 1]} : vector<7x7x32xf32> to vector<7x6x32xf32>
    %c0_204 = arith.constant 0 : index
    %c1_205 = arith.constant 1 : index
    %c0_206 = arith.constant 0 : index
    %240 = vector.load %arg9[%c0_204, %c1_205, %c0_206] : memref<7x7x32xf32, #tpu.memory_space<vmem>>, vector<7x6x32xf32>
    %241 = arith.maximumf %240, %239 : vector<7x6x32xf32>
    %c0_207 = arith.constant 0 : index
    %c1_208 = arith.constant 1 : index
    %c0_209 = arith.constant 0 : index
    %242 = vector.load %arg9[%c0_207, %c1_208, %c0_209] : memref<7x7x32xf32, #tpu.memory_space<vmem>>, vector<7x6x32xf32>
    tpu.vector_store %arg9[%c0_207, %c1_208, %c0_209], %241 {strides = array<i32>} : memref<7x7x32xf32, #tpu.memory_space<vmem>>, vector<7x6x32xf32>,
    %c0_210 = arith.constant 0 : index
    %c0_211 = arith.constant 0 : index
    %c0_212 = arith.constant 0 : index
    %243 = vector.load %arg9[%c0_210, %c0_211, %c0_212] : memref<7x7x32xf32, #tpu.memory_space<vmem>>, vector<7x7x32xf32>
    %244 = arith.maximumf %243, %223 : vector<7x7x32xf32>
    %c0_213 = arith.constant 0 : index
    %c0_214 = arith.constant 0 : index
    %c0_215 = arith.constant 0 : index
    %245 = vector.load %arg9[%c0_213, %c0_214, %c0_215] : memref<7x7x32xf32, #tpu.memory_space<vmem>>, vector<7x7x32xf32>
    tpu.vector_store %arg9[%c0_213, %c0_214, %c0_215], %244 {strides = array<i32>} : memref<7x7x32xf32, #tpu.memory_space<vmem>>, vector<7x7x32xf32>,
    %246 = vector.extract_strided_slice %225 {offsets = [0, 0, 0], sizes = [7, 6, 32], strides = [1, 1, 1]} : vector<7x7x32xf32> to vector<7x6x32xf32>
    %c0_216 = arith.constant 0 : index
    %c1_217 = arith.constant 1 : index
    %c0_218 = arith.constant 0 : index
    %247 = vector.load %arg9[%c0_216, %c1_217, %c0_218] : memref<7x7x32xf32, #tpu.memory_space<vmem>>, vector<7x6x32xf32>
    %248 = arith.maximumf %247, %246 : vector<7x6x32xf32>
    %c0_219 = arith.constant 0 : index
    %c1_220 = arith.constant 1 : index
    %c0_221 = arith.constant 0 : index
    %249 = vector.load %arg9[%c0_219, %c1_220, %c0_221] : memref<7x7x32xf32, #tpu.memory_space<vmem>>, vector<7x6x32xf32>
    tpu.vector_store %arg9[%c0_219, %c1_220, %c0_221], %248 {strides = array<i32>} : memref<7x7x32xf32, #tpu.memory_space<vmem>>, vector<7x6x32xf32>,
    %c0_222 = arith.constant 0 : index
    %c0_223 = arith.constant 0 : index
    %c0_224 = arith.constant 0 : index
    %250 = vector.load %arg9[%c0_222, %c0_223, %c0_224] : memref<7x7x32xf32, #tpu.memory_space<vmem>>, vector<7x7x32xf32>
    %251 = arith.maximumf %250, %224 : vector<7x7x32xf32>
    %c0_225 = arith.constant 0 : index
    %c0_226 = arith.constant 0 : index
    %c0_227 = arith.constant 0 : index
    %252 = vector.load %arg9[%c0_225, %c0_226, %c0_227] : memref<7x7x32xf32, #tpu.memory_space<vmem>>, vector<7x7x32xf32>
    tpu.vector_store %arg9[%c0_225, %c0_226, %c0_227], %251 {strides = array<i32>} : memref<7x7x32xf32, #tpu.memory_space<vmem>>, vector<7x7x32xf32>,
    %c0_228 = arith.constant 0 : index
    %c0_229 = arith.constant 0 : index
    %c0_230 = arith.constant 0 : index
    %253 = vector.load %arg9[%c0_228, %c0_229, %c0_230] : memref<7x7x32xf32, #tpu.memory_space<vmem>>, vector<7x7x32xf32>
    %254 = arith.maximumf %253, %225 : vector<7x7x32xf32>
    %c0_231 = arith.constant 0 : index
    %c0_232 = arith.constant 0 : index
    %c0_233 = arith.constant 0 : index
    %255 = vector.load %arg9[%c0_231, %c0_232, %c0_233] : memref<7x7x32xf32, #tpu.memory_space<vmem>>, vector<7x7x32xf32>
    tpu.vector_store %arg9[%c0_231, %c0_232, %c0_233], %254 {strides = array<i32>} : memref<7x7x32xf32, #tpu.memory_space<vmem>>, vector<7x7x32xf32>,
    %c0_234 = arith.constant 0 : index
    %c0_235 = arith.constant 0 : index
    %c0_236 = arith.constant 0 : index
    %256 = vector.load %arg9[%c0_234, %c0_235, %c0_236] : memref<7x7x32xf32, #tpu.memory_space<vmem>>, vector<7x7x32xf32>
    %257 = vector.shape_cast %220 : vector<1x32xf32> to vector<1x1x32xf32>
    %258 = vector.broadcast %257 : vector<1x1x32xf32> to vector<7x7x32xf32>
    %259 = arith.mulf %256, %258 : vector<7x7x32xf32>
    %260 = vector.shape_cast %221 : vector<1x32xf32> to vector<1x1x32xf32>
    %261 = vector.broadcast %260 : vector<1x1x32xf32> to vector<7x7x32xf32>
    %262 = arith.addf %259, %261 : vector<7x7x32xf32>
    %263 = arith.addf %219, %262 : vector<7x7x32xf32>
    %c3_237 = arith.constant 3 : index
    %c0_238 = arith.constant 0 : index
    %264 = vector.load %arg2[%c3_237, %c0_238] : memref<5x32xf32, #tpu.memory_space<vmem>>, vector<1x32xf32>
    %c3_239 = arith.constant 3 : index
    %c0_240 = arith.constant 0 : index
    %265 = vector.load %arg3[%c3_239, %c0_240] : memref<5x32xf32, #tpu.memory_space<vmem>>, vector<1x32xf32>
    %266 = vector.shape_cast %264 : vector<1x32xf32> to vector<1x1x32xf32>
    %267 = vector.broadcast %266 : vector<1x1x32xf32> to vector<7x7x32xf32>
    %268 = arith.mulf %101, %267 : vector<7x7x32xf32>
    %269 = vector.shape_cast %265 : vector<1x32xf32> to vector<1x1x32xf32>
    %270 = vector.broadcast %269 : vector<1x1x32xf32> to vector<7x7x32xf32>
    %271 = arith.addf %268, %270 : vector<7x7x32xf32>
    %272 = arith.addf %108, %271 : vector<7x7x32xf32>
    %c4_241 = arith.constant 4 : index
    %c0_242 = arith.constant 0 : index
    %273 = vector.load %arg2[%c4_241, %c0_242] : memref<5x32xf32, #tpu.memory_space<vmem>>, vector<1x32xf32>
    %c4_243 = arith.constant 4 : index
    %c0_244 = arith.constant 0 : index
    %274 = vector.load %arg3[%c4_243, %c0_244] : memref<5x32xf32, #tpu.memory_space<vmem>>, vector<1x32xf32>
    %275 = vector.shape_cast %273 : vector<1x32xf32> to vector<1x1x32xf32>
    %276 = vector.broadcast %275 : vector<1x1x32xf32> to vector<7x7x32xf32>
    %277 = arith.mulf %44, %276 : vector<7x7x32xf32>
    %278 = vector.shape_cast %274 : vector<1x32xf32> to vector<1x1x32xf32>
    %279 = vector.broadcast %278 : vector<1x1x32xf32> to vector<7x7x32xf32>
    %280 = arith.addf %277, %279 : vector<7x7x32xf32>
    %281 = arith.addf %263, %280 : vector<7x7x32xf32>
    %cst_245 = arith.constant 1.000000e+00 : f32
    %282 = vector.broadcast %cst_245 : f32 to vector<1x7xf32>
    %cst_246 = arith.constant dense<0.000000e+00> : vector<7x32xf32>
    %283 = vector.multi_reduction <add>, %108, %cst_246 [0] : vector<7x7x32xf32> to vector<7x32xf32>
    %cst_247 = arith.constant dense<0.000000e+00> : vector<1x32xf32>
    %284 = tpu.matmul %282, %283, %cst_247 {dimension_numbers = #tpu.dot_dimension_numbers<[1], [0], [0], [1], [0, 0, 1, 1], [], []>} : vector<1x7xf32>, vector<7x32xf32>, vector<1x32xf32> -> vector<1x32xf32>
    %cst_248 = arith.constant dense<0.000000e+00> : vector<7x32xf32>
    %285 = vector.multi_reduction <add>, %263, %cst_248 [0] : vector<7x7x32xf32> to vector<7x32xf32>
    %cst_249 = arith.constant dense<0.000000e+00> : vector<1x32xf32>
    %286 = tpu.matmul %282, %285, %cst_249 {dimension_numbers = #tpu.dot_dimension_numbers<[1], [0], [0], [1], [0, 0, 1, 1], [], []>} : vector<1x7xf32>, vector<7x32xf32>, vector<1x32xf32> -> vector<1x32xf32>
    %cst_250 = arith.constant dense<0.000000e+00> : vector<7x32xf32>
    %287 = vector.multi_reduction <add>, %272, %cst_250 [0] : vector<7x7x32xf32> to vector<7x32xf32>
    %cst_251 = arith.constant dense<0.000000e+00> : vector<1x32xf32>
    %288 = tpu.matmul %282, %287, %cst_251 {dimension_numbers = #tpu.dot_dimension_numbers<[1], [0], [0], [1], [0, 0, 1, 1], [], []>} : vector<1x7xf32>, vector<7x32xf32>, vector<1x32xf32> -> vector<1x32xf32>
    %cst_252 = arith.constant dense<0.000000e+00> : vector<7x32xf32>
    %289 = vector.multi_reduction <add>, %281, %cst_252 [0] : vector<7x7x32xf32> to vector<7x32xf32>
    %cst_253 = arith.constant dense<0.000000e+00> : vector<1x32xf32>
    %290 = tpu.matmul %282, %289, %cst_253 {dimension_numbers = #tpu.dot_dimension_numbers<[1], [0], [0], [1], [0, 0, 1, 1], [], []>} : vector<1x7xf32>, vector<7x32xf32>, vector<1x32xf32> -> vector<1x32xf32>
    %291 = tpu.concatenate %284, %286, %288, %290 in 1 : vector<1x32xf32>, vector<1x32xf32>, vector<1x32xf32>, vector<1x32xf32> -> vector<1x128xf32>
    %c0_254 = arith.constant 0 : index
    %c0_255 = arith.constant 0 : index
    %292 = vector.load %arg6[%c0_254, %c0_255] : memref<128x10xf32, #tpu.memory_space<vmem>>, vector<128x10xf32>
    %cst_256 = arith.constant dense<0.000000e+00> : vector<1x10xf32>
    %293 = tpu.matmul %291, %292, %cst_256 {dimension_numbers = #tpu.dot_dimension_numbers<[1], [0], [0], [1], [0, 0, 1, 1], [], []>} : vector<1x128xf32>, vector<128x10xf32>, vector<1x10xf32> -> vector<1x10xf32>
    %c0_257 = arith.constant 0 : index
    %c0_258 = arith.constant 0 : index
    %294 = vector.load %arg7[%c0_257, %c0_258] : memref<1x10xf32, #tpu.memory_space<vmem>>, vector<1x10xf32>
    %295 = arith.addf %293, %294 : vector<1x10xf32>
    %c0_259 = arith.constant 0 : index
    %c0_260 = arith.constant 0 : index
    %c0_261 = arith.constant 0 : index
    %296 = vector.load %arg8[%c0_259, %c0_260, %c0_261] : memref<1x1x10xf32, #tpu.memory_space<vmem>>, vector<1x1x10xf32>
    %297 = vector.shape_cast %296 : vector<1x1x10xf32> to vector<1x10xf32>
    %298 = vector.shape_cast %295 : vector<1x10xf32> to vector<1x1x10xf32>
    tpu.vector_store %arg8[%c0_259, %c0_260, %c0_261], %298 {strides = array<i32>} : memref<1x1x10xf32, #tpu.memory_space<vmem>>, vector<1x1x10xf32>,
    return
  }
  func.func @transform_0(%arg0: i32) -> (i32, i32, i32, i32) {
    %c0_i32 = arith.constant 0 : i32
    %c0_i32_0 = arith.constant 0 : i32
    %c0_i32_1 = arith.constant 0 : i32
    %c0_i32_2 = arith.constant 0 : i32
    return %arg0, %c0_i32, %c0_i32_0, %c0_i32_1 : i32, i32, i32, i32
  }
  func.func @transform_1(%arg0: i32) -> (i32, i32) {
    %c0_i32 = arith.constant 0 : i32
    %c0_i32_0 = arith.constant 0 : i32
    %c0_i32_1 = arith.constant 0 : i32
    return %c0_i32, %c0_i32_0 : i32, i32
  }
  func.func @transform_2(%arg0: i32) -> (i32, i32) {
    %c0_i32 = arith.constant 0 : i32
    %c0_i32_0 = arith.constant 0 : i32
    %c0_i32_1 = arith.constant 0 : i32
    return %c0_i32, %c0_i32_0 : i32, i32
  }
  func.func @transform_3(%arg0: i32) -> (i32, i32, i32) {
    %c0_i32 = arith.constant 0 : i32
    %c0_i32_0 = arith.constant 0 : i32
    %c0_i32_1 = arith.constant 0 : i32
    %c0_i32_2 = arith.constant 0 : i32
    return %c0_i32, %c0_i32_0, %c0_i32_1 : i32, i32, i32
  }
  func.func @transform_4(%arg0: i32) -> (i32, i32) {
    %c0_i32 = arith.constant 0 : i32
    %c0_i32_0 = arith.constant 0 : i32
    %c0_i32_1 = arith.constant 0 : i32
    return %c0_i32, %c0_i32_0 : i32, i32
  }
  func.func @transform_5(%arg0: i32) -> (i32, i32) {
    %c0_i32 = arith.constant 0 : i32
    %c0_i32_0 = arith.constant 0 : i32
    %c0_i32_1 = arith.constant 0 : i32
    return %c0_i32, %c0_i32_0 : i32, i32
  }
  func.func @transform_6(%arg0: i32) -> (i32, i32) {
    %c0_i32 = arith.constant 0 : i32
    %c0_i32_0 = arith.constant 0 : i32
    %c0_i32_1 = arith.constant 0 : i32
    return %c0_i32, %c0_i32_0 : i32, i32
  }
  func.func @transform_7(%arg0: i32) -> (i32, i32, i32) {
    %c0_i32 = arith.constant 0 : i32
    %c0_i32_0 = arith.constant 0 : i32
    %c0_i32_1 = arith.constant 0 : i32
    return %arg0, %c0_i32, %c0_i32_0 : i32, i32, i32
  }
}

</mosaic_0001>

<llo_original>
// kernel: _lambda_.5
$region0: #{_lambda_.5}
  #allocation0 [shape = 'u32[]', space=smem, size = 0x4, offset = 0x4, fixed_abs, tag = 'smem constant byte address 0x4 - core index']
  #allocation1 [shape = 'u32[144,128]{1,0:T(1,128)}', space=vmem, size = 0x12000, scoped, tag = 'internal scratch']
  %s0 = inlined_call_operand.vmem [shape: bf16[6272,27], index: 0, kind: input, shape index: {}]
  %s1 = inlined_call_operand.vmem [shape: bf16[27,8], index: 1, kind: input, shape index: {}]
  %s2 = inlined_call_operand.vmem [shape: f32[1,8], index: 2, kind: input, shape index: {}]
  %s3 = inlined_call_operand.vmem [shape: f32[6272,8], index: 3, kind: output, shape index: {}]
  %s4 = sld [smem:[#allocation0]]
  $region45: #{_lambda_.5} parent=0
    _
  %s6 = ssub.s32 1, %s4
  %s7 = scalar_select 0, %s6, %s4
  loop: start=0, step=1, limit=9
  $region2: #{_lambda_.5} parent=0 // loop_pre_header
    _
  $region3: #{_lambda_.5} parent=0 // loop_header
    %s9 = sphi 0, %s13
    %p10 = scmp.ge.s32.totalorder %s9, 9
    %s19 = sphi 0, %s21
    %s22 = sphi 0, %s19
    %s23 = sphi 0, %s22
    %s39 = sphi 0, %s23
    %s43 = sphi 0, %s43
    %s45 = sphi 0, %s43
    %s46 = sphi 0, %s45
    %s60 = sphi 0, %s46
    %s64 = sphi 0, %s64
    %s66 = sphi 0, %s64
    %s67 = sphi 0, %s66
    %s81 = sphi 0, %s67
    %s87 = sphi 0, %s89
    %s90 = sphi 0, %s87
    %s91 = sphi 0, %s90
    %s107 = sphi 0, %s91
  $region4: #{_lambda_.5} parent=0 // loop_header_branch
    %12 = sbr.rel (%p10) target = $region8
  $region5: #{_lambda_.5} parent=0 // loop_body
    %s14 = ssub.s32 %s9, 1
    %s15 = ssub.s32 %s9, 2
    %s16 = sadd.s32 %s9, 1
    %s17 = ssub.s32 %s9, %s16
    %p18 = scmp.eq.s32.totalorder %s17, 0
    %s20 = sadd.s32 %s19, 1
    %s21 = scalar_select %p18, %s19, %s20
    %p24 = pneg %p18
    %p25 = scmp.eq.s32.totalorder %s9, 6
    %p26 = por %p24, %p25
    %p27 = scmp.ne.s32.totalorder %s19, %s22
    %p28 = scmp.eq.s32.totalorder %s9, 0
    %p29 = por %p27, %p28
    %p30 = scmp.ne.s32.totalorder %s19, %s22
    %p31 = scmp.eq.s32.totalorder %s14, 6
    %p32 = por %p30, %p31
    %p33 = scmp.ne.s32.totalorder %s22, %s23
    %p34 = scmp.eq.s32.totalorder %s14, 0
    %p35 = por %p33, %p34
    %p36 = scmp.ne.s32.totalorder %s22, %s23
    %p37 = scmp.eq.s32.totalorder %s15, 6
    %p38 = por %p36, %p37
    %p40 = scmp.ne.s32.totalorder %s23, %s39
    %p41 = scmp.eq.s32.totalorder %s15, 0
    %p42 = por %p40, %p41
    %s44 = sadd.s32 %s43, 1
    %p47 = scmp.eq.s32.totalorder %s9, 6
    %p48 = scmp.ne.s32.totalorder %s43, %s45
    %p49 = scmp.eq.s32.totalorder %s9, 0
    %p50 = por %p48, %p49
    %p51 = scmp.ne.s32.totalorder %s43, %s45
    %p52 = scmp.eq.s32.totalorder %s14, 6
    %p53 = por %p51, %p52
    %p54 = scmp.ne.s32.totalorder %s45, %s46
    %p55 = scmp.eq.s32.totalorder %s14, 0
    %p56 = por %p54, %p55
    %p57 = scmp.ne.s32.totalorder %s45, %s46
    %p58 = scmp.eq.s32.totalorder %s15, 6
    %p59 = por %p57, %p58
    %p61 = scmp.ne.s32.totalorder %s46, %s60
    %p62 = scmp.eq.s32.totalorder %s15, 0
    %p63 = por %p61, %p62
    %s65 = sadd.s32 %s64, 1
    %p68 = scmp.eq.s32.totalorder %s9, 6
    %p69 = scmp.ne.s32.totalorder %s64, %s66
    %p70 = scmp.eq.s32.totalorder %s9, 0
    %p71 = por %p69, %p70
    %p72 = scmp.ne.s32.totalorder %s64, %s66
    %p73 = scmp.eq.s32.totalorder %s14, 6
    %p74 = por %p72, %p73
    %p75 = scmp.ne.s32.totalorder %s66, %s67
    %p76 = scmp.eq.s32.totalorder %s14, 0
    %p77 = por %p75, %p76
    %p78 = scmp.ne.s32.totalorder %s66, %s67
    %p79 = scmp.eq.s32.totalorder %s15, 6
    %p80 = por %p78, %p79
    %p82 = scmp.ne.s32.totalorder %s67, %s81
    %p83 = scmp.eq.s32.totalorder %s15, 0
    %p84 = por %p82, %p83
    %s85 = ssub.s32 %s9, %s16
    %p86 = scmp.eq.s32.totalorder %s85, 0
    %s88 = sadd.s32 %s87, 1
    %s89 = scalar_select %p86, %s87, %s88
    %p92 = pneg %p86
    %p93 = scmp.eq.s32.totalorder %s9, 6
    %p94 = por %p92, %p93
    %p95 = scmp.ne.s32.totalorder %s87, %s90
    %p96 = scmp.eq.s32.totalorder %s9, 0
    %p97 = por %p95, %p96
    %p98 = scmp.ne.s32.totalorder %s87, %s90
    %p99 = scmp.eq.s32.totalorder %s14, 6
    %p100 = por %p98, %p99
    %p101 = scmp.ne.s32.totalorder %s90, %s91
    %p102 = scmp.eq.s32.totalorder %s14, 0
    %p103 = por %p101, %p102
    %p104 = scmp.ne.s32.totalorder %s90, %s91
    %p105 = scmp.eq.s32.totalorder %s15, 6
    %p106 = por %p104, %p105
    %p108 = scmp.ne.s32.totalorder %s91, %s107
    %p109 = scmp.eq.s32.totalorder %s15, 0
    %p110 = por %p108, %p109
    %p111 = scmp.le.s32.totalorder 1, %s9
    %p112 = scmp.lt.s32.totalorder %s9, 8
    %p113 = pnand %p111, %p112
    %p114 = pneg %p113
    // Predicated region
    $region9: #{_lambda_.5} parent=5 // pred_check
      _
    $region10: #{_lambda_.5} parent=5 // pred_check_branch
      %116 = sbr.rel (%p113) target = $region12
    $region11: #{_lambda_.5} parent=5 // pred_region
      %s117 = ssub.s32 %s9, 1
      // Predicated region
      $region13: #{_lambda_.5} parent=11 // pred_check
        %p118 = pneg %p56
      $region14: #{_lambda_.5} parent=11 // pred_check_branch
        %120 = sbr.rel (%p118) target = $region16
      $region15: #{_lambda_.5} parent=11 // pred_region
        _
      $region16: #{_lambda_.5} parent=11 // pred_fallthru
        _
      // Predicated region
      $region17: #{_lambda_.5} parent=11 // pred_check
        %p121 = pneg %p77
      $region18: #{_lambda_.5} parent=11 // pred_check_branch
        %123 = sbr.rel (%p121) target = $region20
      $region19: #{_lambda_.5} parent=11 // pred_region
        _
      $region20: #{_lambda_.5} parent=11 // pred_fallthru
        _
    $region12: #{_lambda_.5} parent=5 // pred_fallthru
      _
    %p124 = scmp.lt.s32.totalorder %s9, 7
    // Predicated region
    $region21: #{_lambda_.5} parent=5 // pred_check
      %p125 = pneg %p124
    $region22: #{_lambda_.5} parent=5 // pred_check_branch
      %127 = sbr.rel (%p125) target = $region24
    $region23: #{_lambda_.5} parent=5 // pred_region
      // Predicated region
      $region25: #{_lambda_.5} parent=23 // pred_check
        %p128 = pneg %p29
      $region26: #{_lambda_.5} parent=23 // pred_check_branch
        %130 = sbr.rel (%p128) target = $region28
      $region27: #{_lambda_.5} parent=23 // pred_region
        %s131 = smul.u32 112, %s9
        %p132 = scmp.lt.s32.totalorder %s131, 783
        %s133 = scalar_select %p132, %s131, 783
        %s134 = smul.addr %s133, 4
        %s135 = scalar_lea.vmem %s0, %s134
        %s136 = smul.u32 112, %s9
      $region28: #{_lambda_.5} parent=23 // pred_fallthru
        _
    $region24: #{_lambda_.5} parent=5 // pred_fallthru
      _
    %p137 = scmp.le.s32.totalorder 1, %s9
    %p138 = scmp.lt.s32.totalorder %s9, 8
    %p139 = pnand %p137, %p138
    %p140 = pneg %p139
    // Predicated region
    $region29: #{_lambda_.5} parent=5 // pred_check
      _
    $region30: #{_lambda_.5} parent=5 // pred_check_branch
      %142 = sbr.rel (%p139) target = $region32
    $region31: #{_lambda_.5} parent=5 // pred_region
      %s143 = ssub.s32 %s9, 1
      %s144 = smul.u32 112, %s14
      %p145 = scmp.lt.s32.totalorder %s144, 783
      %s146 = scalar_select %p145, %s144, 783
      %s147 = smul.addr %s146, 4
      %s148 = scalar_lea.vmem %s0, %s147
      %p149 = pneg %p35
      %p150 = pneg %p32
      %p151 = pneg %p56
      %p152 = pneg %p53
      %p153 = pneg %p77
      %p154 = pneg %p74
      %p155 = pneg %p103
      %p156 = pneg %p100
      %s157 = smul.u32 112, %s14
      %p158 = scmp.lt.s32.totalorder %s157, 783
      %s159 = scalar_select %p158, %s157, 783
      %s160 = smul.addr %s159, 8
      %s161 = scalar_lea.vmem %s3, %s160
      %s162 = smul.u32 112, %s14
      %p163 = scmp.lt.s32.totalorder %s162, 783
      %s164 = scalar_select %p163, %s162, 783
      %s165 = smul.addr %s164, 4
      %s166 = scalar_lea.vmem %s0, %s165
      %s167 = smul.u32 112, %s14
      %s168 = smul.u32 112, %s14
      %p169 = scmp.lt.s32.totalorder %s168, 783
      %s170 = scalar_select %p169, %s168, 783
      %s171 = smul.addr %s170, 8
      %s172 = scalar_lea.vmem %s3, %s171
      %s173 = smul.u32 112, %s14
      %v175 = vld [vmem:[%s166] sm:$0xf]
      %v176 = vld [vmem:[%s166 + $0x4] sm:$0xf]
      %v177 = vld [vmem:[%s166 + $0x8] sm:$0xf]
      %v178 = vld [vmem:[%s166 + $0xc] sm:$0xf]
      %v179 = vld [vmem:[%s166 + $0x10] sm:$0xf]
      %v180 = vld [vmem:[%s166 + $0x14] sm:$0xf]
      %v181 = vld [vmem:[%s166 + $0x18] sm:$0xf]
      %v182 = vld [vmem:[%s166 + $0x1c] sm:$0xf]
      %v183 = vld [vmem:[%s166 + $0x20] sm:$0xf]
      %v184 = vld [vmem:[%s166 + $0x24] sm:$0xf]
      %v185 = vld [vmem:[%s166 + $0x28] sm:$0xf]
      %v186 = vld [vmem:[%s166 + $0x2c] sm:$0xf]
      %v187 = vld [vmem:[%s166 + $0x30] sm:$0xf]
      %v188 = vld [vmem:[%s166 + $0x34] sm:$0xf]
      %v189 = vld [vmem:[%s166 + $0x38] sm:$0xf]
      %v190 = vld [vmem:[%s166 + $0x3c] sm:$0xf]
      %v191 = vld [vmem:[%s166 + $0x40] sm:$0xf]
      %v192 = vld [vmem:[%s166 + $0x44] sm:$0xf]
      %v193 = vld [vmem:[%s166 + $0x48] sm:$0xf]
      %v194 = vld [vmem:[%s166 + $0x4c] sm:$0xf]
      %v195 = vld [vmem:[%s166 + $0x50] sm:$0xf]
      %v196 = vld [vmem:[%s166 + $0x54] sm:$0xf]
      %v197 = vld [vmem:[%s166 + $0x58] sm:$0xf]
      %v198 = vld [vmem:[%s166 + $0x5c] sm:$0xf]
      %v199 = vld [vmem:[%s166 + $0x60] sm:$0xf]
      %v200 = vld [vmem:[%s166 + $0x64] sm:$0xf]
      %v201 = vld [vmem:[%s166 + $0x68] sm:$0xf]
      %v202 = vld [vmem:[%s166 + $0x6c] sm:$0xf]
      %v203 = vld [vmem:[%s166 + $0x70] sm:$0xf]
      %v204 = vld [vmem:[%s166 + $0x74] sm:$0xf]
      %v205 = vld [vmem:[%s166 + $0x78] sm:$0xf]
      %v206 = vld [vmem:[%s166 + $0x7c] sm:$0xf]
      %v207 = vld [vmem:[%s166 + $0x80] sm:$0xf]
      %v208 = vld [vmem:[%s166 + $0x84] sm:$0xf]
      %v209 = vld [vmem:[%s166 + $0x88] sm:$0xf]
      %v210 = vld [vmem:[%s166 + $0x8c] sm:$0xf]
      %v211 = vld [vmem:[%s166 + $0x90] sm:$0xf]
      %v212 = vld [vmem:[%s166 + $0x94] sm:$0xf]
      %v213 = vld [vmem:[%s166 + $0x98] sm:$0xf]
      %v214 = vld [vmem:[%s166 + $0x9c] sm:$0xf]
      %v215 = vld [vmem:[%s166 + $0xa0] sm:$0xf]
      %v216 = vld [vmem:[%s166 + $0xa4] sm:$0xf]
      %v217 = vld [vmem:[%s166 + $0xa8] sm:$0xf]
      %v218 = vld [vmem:[%s166 + $0xac] sm:$0xf]
      %v219 = vld [vmem:[%s166 + $0xb0] sm:$0xf]
      %v220 = vld [vmem:[%s166 + $0xb4] sm:$0xf]
      %v221 = vld [vmem:[%s166 + $0xb8] sm:$0xf]
      %v222 = vld [vmem:[%s166 + $0xbc] sm:$0xf]
      %v223 = vld [vmem:[%s166 + $0xc0] sm:$0xf]
      %v224 = vld [vmem:[%s166 + $0xc4] sm:$0xf]
      %v225 = vld [vmem:[%s166 + $0xc8] sm:$0xf]
      %v226 = vld [vmem:[%s166 + $0xcc] sm:$0xf]
      %v227 = vld [vmem:[%s166 + $0xd0] sm:$0xf]
      %v228 = vld [vmem:[%s166 + $0xd4] sm:$0xf]
      %v229 = vld [vmem:[%s166 + $0xd8] sm:$0xf]
      %v230 = vld [vmem:[%s166 + $0xdc] sm:$0xf]
      %v231 = vld [vmem:[%s166 + $0xe0] sm:$0xf]
      %v232 = vld [vmem:[%s166 + $0xe4] sm:$0xf]
      %v233 = vld [vmem:[%s166 + $0xe8] sm:$0xf]
      %v234 = vld [vmem:[%s166 + $0xec] sm:$0xf]
      %v235 = vld [vmem:[%s166 + $0xf0] sm:$0xf]
      %v236 = vld [vmem:[%s166 + $0xf4] sm:$0xf]
      %v237 = vld [vmem:[%s166 + $0xf8] sm:$0xf]
      %v238 = vld [vmem:[%s166 + $0xfc] sm:$0xf]
      %v239 = vld [vmem:[%s166 + $0x100] sm:$0xf]
      %v240 = vld [vmem:[%s166 + $0x104] sm:$0xf]
      %v241 = vld [vmem:[%s166 + $0x108] sm:$0xf]
      %v242 = vld [vmem:[%s166 + $0x10c] sm:$0xf]
      %v243 = vld [vmem:[%s166 + $0x110] sm:$0xf]
      %v244 = vld [vmem:[%s166 + $0x114] sm:$0xf]
      %v245 = vld [vmem:[%s166 + $0x118] sm:$0xf]
      %v246 = vld [vmem:[%s166 + $0x11c] sm:$0xf]
      %v247 = vld [vmem:[%s166 + $0x120] sm:$0xf]
      %v248 = vld [vmem:[%s166 + $0x124] sm:$0xf]
      %v249 = vld [vmem:[%s166 + $0x128] sm:$0xf]
      %v250 = vld [vmem:[%s166 + $0x12c] sm:$0xf]
      %v251 = vld [vmem:[%s166 + $0x130] sm:$0xf]
      %v252 = vld [vmem:[%s166 + $0x134] sm:$0xf]
      %v253 = vld [vmem:[%s166 + $0x138] sm:$0xf]
      %v254 = vld [vmem:[%s166 + $0x13c] sm:$0xf]
      %v255 = vld [vmem:[%s166 + $0x140] sm:$0xf]
      %v256 = vld [vmem:[%s166 + $0x144] sm:$0xf]
      %v257 = vld [vmem:[%s166 + $0x148] sm:$0xf]
      %v258 = vld [vmem:[%s166 + $0x14c] sm:$0xf]
      %v259 = vld [vmem:[%s166 + $0x150] sm:$0xf]
      %v260 = vld [vmem:[%s166 + $0x154] sm:$0xf]
      %v261 = vld [vmem:[%s166 + $0x158] sm:$0xf]
      %v262 = vld [vmem:[%s166 + $0x15c] sm:$0xf]
      %v263 = vld [vmem:[%s166 + $0x160] sm:$0xf]
      %v264 = vld [vmem:[%s166 + $0x164] sm:$0xf]
      %v265 = vld [vmem:[%s166 + $0x168] sm:$0xf]
      %v266 = vld [vmem:[%s166 + $0x16c] sm:$0xf]
      %v267 = vld [vmem:[%s166 + $0x170] sm:$0xf]
      %v268 = vld [vmem:[%s166 + $0x174] sm:$0xf]
      %v269 = vld [vmem:[%s166 + $0x178] sm:$0xf]
      %v270 = vld [vmem:[%s166 + $0x17c] sm:$0xf]
      %v271 = vld [vmem:[%s166 + $0x180] sm:$0xf]
      %v272 = vld [vmem:[%s166 + $0x184] sm:$0xf]
      %v273 = vld [vmem:[%s166 + $0x188] sm:$0xf]
      %v274 = vld [vmem:[%s166 + $0x18c] sm:$0xf]
      %v275 = vld [vmem:[%s166 + $0x190] sm:$0xf]
      %v276 = vld [vmem:[%s166 + $0x194] sm:$0xf]
      %v277 = vld [vmem:[%s166 + $0x198] sm:$0xf]
      %v278 = vld [vmem:[%s166 + $0x19c] sm:$0xf]
      %v279 = vld [vmem:[%s166 + $0x1a0] sm:$0xf]
      %v280 = vld [vmem:[%s166 + $0x1a4] sm:$0xf]
      %v281 = vld [vmem:[%s166 + $0x1a8] sm:$0xf]
      %v282 = vld [vmem:[%s166 + $0x1ac] sm:$0xf]
      %v283 = vld [vmem:[%s166 + $0x1b0] sm:$0xf]
      %v284 = vld [vmem:[%s166 + $0x1b4] sm:$0xf]
      %v285 = vld [vmem:[%s166 + $0x1b8] sm:$0xf]
      %v286 = vld [vmem:[%s166 + $0x1bc] sm:$0xf]
      %v287 = vld [vmem:[%s1] sm:$0xf]
      %v288 = vld [vmem:[%s1 + $0x4] sm:$0xf]
      %v289 = vld [vmem:[%s1 + $0x8] sm:$0xf]
      %v290 = vld [vmem:[%s1 + $0xc] sm:$0x3]
      %v291 = vld [vmem:[%s2] sm:$0x1]
      %v293 = vlaneseq
      %v294 = vshrl.u32 %v293, 7
      %v295 = vsub.s32 0, %v294
      %v296 = vrot.slane %v291, %v295
      %v410 = vunpack.c.l.b16 %v175
      %v411 = vunpack.c.l.b16 %v176
      %v412 = vunpack.c.l.b16 %v177
      %v413 = vunpack.c.l.b16 %v178
      %v414 = vunpack.c.l.b16 %v179
      %v415 = vunpack.c.l.b16 %v180
      %v416 = vunpack.c.l.b16 %v181
      %v417 = vunpack.c.l.b16 %v182
      %v418 = vunpack.c.l.b16 %v183
      %v419 = vunpack.c.l.b16 %v184
      %v420 = vunpack.c.l.b16 %v185
      %v421 = vunpack.c.l.b16 %v186
      %v422 = vunpack.c.l.b16 %v187
      %v423 = vunpack.c.l.b16 %v188
      %v424 = vunpack.c.l.b16 %v189
      %v425 = vunpack.c.l.b16 %v190
      %v426 = vunpack.c.l.b16 %v191
      %v427 = vunpack.c.l.b16 %v192
      %v428 = vunpack.c.l.b16 %v193
      %v429 = vunpack.c.l.b16 %v194
      %v430 = vunpack.c.l.b16 %v195
      %v431 = vunpack.c.l.b16 %v196
      %v432 = vunpack.c.l.b16 %v197
      %v433 = vunpack.c.l.b16 %v198
      %v434 = vunpack.c.l.b16 %v199
      %v435 = vunpack.c.l.b16 %v200
      %v436 = vunpack.c.l.b16 %v201
      %v437 = vunpack.c.l.b16 %v202
      %v438 = vunpack.c.l.b16 %v203
      %v439 = vunpack.c.l.b16 %v204
      %v440 = vunpack.c.l.b16 %v205
      %v441 = vunpack.c.l.b16 %v206
      %v442 = vunpack.c.l.b16 %v207
      %v443 = vunpack.c.l.b16 %v208
      %v444 = vunpack.c.l.b16 %v209
      %v445 = vunpack.c.l.b16 %v210
      %v446 = vunpack.c.l.b16 %v211
      %v447 = vunpack.c.l.b16 %v212
      %v448 = vunpack.c.l.b16 %v213
      %v449 = vunpack.c.l.b16 %v214
      %v450 = vunpack.c.l.b16 %v215
      %v451 = vunpack.c.l.b16 %v216
      %v452 = vunpack.c.l.b16 %v217
      %v453 = vunpack.c.l.b16 %v218
      %v454 = vunpack.c.l.b16 %v219
      %v455 = vunpack.c.l.b16 %v220
      %v456 = vunpack.c.l.b16 %v221
      %v457 = vunpack.c.l.b16 %v222
      %v458 = vunpack.c.l.b16 %v223
      %v459 = vunpack.c.l.b16 %v224
      %v460 = vunpack.c.l.b16 %v225
      %v461 = vunpack.c.l.b16 %v226
      %v462 = vunpack.c.l.b16 %v227
      %v463 = vunpack.c.l.b16 %v228
      %v464 = vunpack.c.l.b16 %v229
      %v465 = vunpack.c.l.b16 %v230
      %v466 = vunpack.c.l.b16 %v231
      %v467 = vunpack.c.l.b16 %v232
      %v468 = vunpack.c.l.b16 %v233
      %v469 = vunpack.c.l.b16 %v234
      %v470 = vunpack.c.l.b16 %v235
      %v471 = vunpack.c.l.b16 %v236
      %v472 = vunpack.c.l.b16 %v237
      %v473 = vunpack.c.l.b16 %v238
      %v474 = vunpack.c.l.b16 %v239
      %v475 = vunpack.c.l.b16 %v240
      %v476 = vunpack.c.l.b16 %v241
      %v477 = vunpack.c.l.b16 %v242
      %v478 = vunpack.c.l.b16 %v243
      %v479 = vunpack.c.l.b16 %v244
      %v480 = vunpack.c.l.b16 %v245
      %v481 = vunpack.c.l.b16 %v246
      %v482 = vunpack.c.l.b16 %v247
      %v483 = vunpack.c.l.b16 %v248
      %v484 = vunpack.c.l.b16 %v249
      %v485 = vunpack.c.l.b16 %v250
      %v486 = vunpack.c.l.b16 %v251
      %v487 = vunpack.c.l.b16 %v252
      %v488 = vunpack.c.l.b16 %v253
      %v489 = vunpack.c.l.b16 %v254
      %v490 = vunpack.c.l.b16 %v255
      %v491 = vunpack.c.l.b16 %v256
      %v492 = vunpack.c.l.b16 %v257
      %v493 = vunpack.c.l.b16 %v258
      %v494 = vunpack.c.l.b16 %v259
      %v495 = vunpack.c.l.b16 %v260
      %v496 = vunpack.c.l.b16 %v261
      %v497 = vunpack.c.l.b16 %v262
      %v498 = vunpack.c.l.b16 %v263
      %v499 = vunpack.c.l.b16 %v264
      %v500 = vunpack.c.l.b16 %v265
      %v501 = vunpack.c.l.b16 %v266
      %v502 = vunpack.c.l.b16 %v267
      %v503 = vunpack.c.l.b16 %v268
      %v504 = vunpack.c.l.b16 %v269
      %v505 = vunpack.c.l.b16 %v270
      %v506 = vunpack.c.l.b16 %v271
      %v507 = vunpack.c.l.b16 %v272
      %v508 = vunpack.c.l.b16 %v273
      %v509 = vunpack.c.l.b16 %v274
      %v510 = vunpack.c.l.b16 %v275
      %v511 = vunpack.c.l.b16 %v276
      %v512 = vunpack.c.l.b16 %v277
      %v513 = vunpack.c.l.b16 %v278
      %v514 = vunpack.c.l.b16 %v279
      %v515 = vunpack.c.l.b16 %v280
      %v516 = vunpack.c.l.b16 %v281
      %v517 = vunpack.c.l.b16 %v282
      %v518 = vunpack.c.l.b16 %v283
      %v519 = vunpack.c.l.b16 %v284
      %v520 = vunpack.c.l.b16 %v285
      %v521 = vunpack.c.l.b16 %v286
      %v522 = vpack.c.b16 %v411, %v410
      %v523 = vpack.c.b16 %v413, %v412
      %v524 = vpack.c.b16 %v415, %v414
      %v525 = vpack.c.b16 %v417, %v416
      %v526 = vpack.c.b16 %v419, %v418
      %v527 = vpack.c.b16 %v421, %v420
      %v528 = vpack.c.b16 %v423, %v422
      %v529 = vpack.c.b16 %v425, %v424
      %v530 = vpack.c.b16 %v427, %v426
      %v531 = vpack.c.b16 %v429, %v428
      %v532 = vpack.c.b16 %v431, %v430
      %v533 = vpack.c.b16 %v433, %v432
      %v534 = vpack.c.b16 %v435, %v434
      %v535 = vpack.c.b16 %v437, %v436
      %v536 = vpack.c.b16 %v439, %v438
      %v537 = vpack.c.b16 %v441, %v440
      %v538 = vpack.c.b16 %v443, %v442
      %v539 = vpack.c.b16 %v445, %v444
      %v540 = vpack.c.b16 %v447, %v446
      %v541 = vpack.c.b16 %v449, %v448
      %v542 = vpack.c.b16 %v451, %v450
      %v543 = vpack.c.b16 %v453, %v452
      %v544 = vpack.c.b16 %v455, %v454
      %v545 = vpack.c.b16 %v457, %v456
      %v546 = vpack.c.b16 %v459, %v458
      %v547 = vpack.c.b16 %v461, %v460
      %v548 = vpack.c.b16 %v463, %v462
      %v549 = vpack.c.b16 %v465, %v464
      %v550 = vpack.c.b16 %v467, %v466
      %v551 = vpack.c.b16 %v469, %v468
      %v552 = vpack.c.b16 %v471, %v470
      %v553 = vpack.c.b16 %v473, %v472
      %v554 = vpack.c.b16 %v475, %v474
      %v555 = vpack.c.b16 %v477, %v476
      %v556 = vpack.c.b16 %v479, %v478
      %v557 = vpack.c.b16 %v481, %v480
      %v558 = vpack.c.b16 %v483, %v482
      %v559 = vpack.c.b16 %v485, %v484
      %v560 = vpack.c.b16 %v487, %v486
      %v561 = vpack.c.b16 %v489, %v488
      %v562 = vpack.c.b16 %v491, %v490
      %v563 = vpack.c.b16 %v493, %v492
      %v564 = vpack.c.b16 %v495, %v494
      %v565 = vpack.c.b16 %v497, %v496
      %v566 = vpack.c.b16 %v499, %v498
      %v567 = vpack.c.b16 %v501, %v500
      %v568 = vpack.c.b16 %v503, %v502
      %v569 = vpack.c.b16 %v505, %v504
      %v570 = vpack.c.b16 %v507, %v506
      %v571 = vpack.c.b16 %v509, %v508
      %v572 = vpack.c.b16 %v511, %v510
      %v573 = vpack.c.b16 %v513, %v512
      %v574 = vpack.c.b16 %v515, %v514
      %v575 = vpack.c.b16 %v517, %v516
      %v576 = vpack.c.b16 %v519, %v518
      %v577 = vpack.c.b16 %v521, %v520
      %v582 = vunpack.c.l.b16 %v287
      %v583 = vunpack.c.l.b16 %v288
      %v584 = vunpack.c.l.b16 %v289
      %v585 = vunpack.c.l.b16 %v290
      %v586 = vpack.c.b16 %v583, %v582
      %v587 = vpack.c.b16 %v585, %v584
      %vm589 = vcmask 220160
      %v591 = vsel %vm589, %v522, 0
      %v594 = vsel %vm589, %v523, 0
      %v597 = vsel %vm589, %v524, 0
      %v600 = vsel %vm589, %v525, 0
      %v603 = vsel %vm589, %v526, 0
      %v606 = vsel %vm589, %v527, 0
      %v609 = vsel %vm589, %v528, 0
      %v612 = vsel %vm589, %v529, 0
      %v615 = vsel %vm589, %v530, 0
      %v618 = vsel %vm589, %v531, 0
      %v621 = vsel %vm589, %v532, 0
      %v624 = vsel %vm589, %v533, 0
      %v627 = vsel %vm589, %v534, 0
      %v630 = vsel %vm589, %v535, 0
      %v633 = vsel %vm589, %v536, 0
      %v636 = vsel %vm589, %v537, 0
      %v639 = vsel %vm589, %v538, 0
      %v642 = vsel %vm589, %v539, 0
      %v645 = vsel %vm589, %v540, 0
      %v648 = vsel %vm589, %v541, 0
      %v651 = vsel %vm589, %v542, 0
      %v654 = vsel %vm589, %v543, 0
      %v657 = vsel %vm589, %v544, 0
      %v660 = vsel %vm589, %v545, 0
      %v663 = vsel %vm589, %v546, 0
      %v666 = vsel %vm589, %v547, 0
      %v669 = vsel %vm589, %v548, 0
      %v672 = vsel %vm589, %v549, 0
      %v675 = vsel %vm589, %v550, 0
      %v678 = vsel %vm589, %v551, 0
      %v681 = vsel %vm589, %v552, 0
      %v684 = vsel %vm589, %v553, 0
      %v687 = vsel %vm589, %v554, 0
      %v690 = vsel %vm589, %v555, 0
      %v693 = vsel %vm589, %v556, 0
      %v696 = vsel %vm589, %v557, 0
      %v699 = vsel %vm589, %v558, 0
      %v702 = vsel %vm589, %v559, 0
      %v705 = vsel %vm589, %v560, 0
      %v708 = vsel %vm589, %v561, 0
      %v711 = vsel %vm589, %v562, 0
      %v714 = vsel %vm589, %v563, 0
      %v717 = vsel %vm589, %v564, 0
      %v720 = vsel %vm589, %v565, 0
      %v723 = vsel %vm589, %v566, 0
      %v726 = vsel %vm589, %v567, 0
      %v729 = vsel %vm589, %v568, 0
      %v732 = vsel %vm589, %v569, 0
      %v735 = vsel %vm589, %v570, 0
      %v738 = vsel %vm589, %v571, 0
      %v741 = vsel %vm589, %v572, 0
      %v744 = vsel %vm589, %v573, 0
      %v747 = vsel %vm589, %v574, 0
      %v750 = vsel %vm589, %v575, 0
      %v753 = vsel %vm589, %v576, 0
      %v756 = vsel %vm589, %v577, 0
      %vm758 = vcmask 1044480
      %vm759 = vcmask 1045504
      %v760 = vsel %vm758, 4294967295, 65535
      %v761 = vsel %vm759, %v760, 0
      %v763 = vand.u32 %v587, %v761
      %765 = vmatprep.subr.bf16.mxu0 0
      %766 = vmatpush1.bf16.msra.mxu0 %v586
      %767 = vmatprep.subr.bf16.mxu0 0
      %768 = vmatpush1.bf16.msra.mxu0 %v763
      %769 = vmatprep.subr.bf16.mxu0 0
      %770 = vmatpush1.bf16.msra.mxu0 0
      %771 = vmatprep.subr.bf16.mxu0 0
      %772 = vmatpush1.bf16.msra.mxu0 0
      %773 = vmatprep.subr.bf16.mxu0 0
      %774 = vmatpush1.bf16.msra.mxu0 0
      %775 = vmatprep.subr.bf16.mxu0 0
      %776 = vmatpush1.bf16.msra.mxu0 0
      %777 = vmatprep.subr.bf16.mxu0 0
      %778 = vmatpush1.bf16.msra.mxu0 0
      %779 = vmatprep.subr.bf16.mxu0 0
      %780 = vmatpush1.bf16.msra.mxu0 0
      %781 = vmatprep.subr.bf16.mxu0 0
      %782 = vmatpush1.bf16.msra.mxu0 0
      %783 = vmatprep.subr.bf16.mxu0 0
      %784 = vmatpush1.bf16.msra.mxu0 0
      %785 = vmatprep.subr.bf16.mxu0 0
      %786 = vmatpush1.bf16.msra.mxu0 0
      %787 = vmatprep.subr.bf16.mxu0 0
      %788 = vmatpush1.bf16.msra.mxu0 0
      %789 = vmatprep.subr.bf16.mxu0 0
      %790 = vmatpush1.bf16.msra.mxu0 0
      %791 = vmatprep.subr.bf16.mxu0 0
      %792 = vmatpush1.bf16.msra.mxu0 0
      %793 = vmatprep.subr.bf16.mxu0 0
      %794 = vmatpush1.bf16.msra.mxu0 0
      %795 = vmatprep.subr.bf16.mxu0 0
      %796 = vmatpush1.bf16.msra.mxu0 0
      %797 = vmatprep.mubr.bf16.mxu0 0
      %798 = vmatmul.mubr.bf16.gmra.mrb[0].mxu0 %v591
      %v799 = vpop.f32.mrb[0].mxu0
      %v800 = vadd.f32 %v296, %v799
      %v801 = vpop.f32.mrb[0].mxu0
      %v802 = vpop.f32.mrb[0].mxu0
      %v803 = vadd.f32 %v296, %v802
      %v804 = vpop.f32.mrb[0].mxu0
      %805 = vmatprep.mubr.bf16.mxu0 0
      %806 = vmatmul.mubr.bf16.gmra.mrb[0].mxu0 %v594
      %v807 = vpop.f32.mrb[0].mxu0
      %v808 = vadd.f32 %v296, %v807
      %v809 = vpop.f32.mrb[0].mxu0
      %v810 = vpop.f32.mrb[0].mxu0
      %v811 = vadd.f32 %v296, %v810
      %v812 = vpop.f32.mrb[0].mxu0
      %813 = vmatprep.mubr.bf16.mxu0 0
      %814 = vmatmul.mubr.bf16.gmra.mrb[0].mxu0 %v597
      %v815 = vpop.f32.mrb[0].mxu0
      %v816 = vadd.f32 %v296, %v815
      %v817 = vpop.f32.mrb[0].mxu0
      %v818 = vpop.f32.mrb[0].mxu0
      %v819 = vadd.f32 %v296, %v818
      %v820 = vpop.f32.mrb[0].mxu0
      %821 = vmatprep.mubr.bf16.mxu0 0
      %822 = vmatmul.mubr.bf16.gmra.mrb[0].mxu0 %v600
      %v823 = vpop.f32.mrb[0].mxu0
      %v824 = vadd.f32 %v296, %v823
      %v825 = vpop.f32.mrb[0].mxu0
      %v826 = vpop.f32.mrb[0].mxu0
      %v827 = vadd.f32 %v296, %v826
      %v828 = vpop.f32.mrb[0].mxu0
      %829 = vmatprep.mubr.bf16.mxu0 0
      %830 = vmatmul.mubr.bf16.gmra.mrb[0].mxu0 %v603
      %v831 = vpop.f32.mrb[0].mxu0
      %v832 = vadd.f32 %v296, %v831
      %v833 = vpop.f32.mrb[0].mxu0
      %v834 = vpop.f32.mrb[0].mxu0
      %v835 = vadd.f32 %v296, %v834
      %v836 = vpop.f32.mrb[0].mxu0
      %837 = vmatprep.mubr.bf16.mxu0 0
      %838 = vmatmul.mubr.bf16.gmra.mrb[0].mxu0 %v606
      %v839 = vpop.f32.mrb[0].mxu0
      %v840 = vadd.f32 %v296, %v839
      %v841 = vpop.f32.mrb[0].mxu0
      %v842 = vpop.f32.mrb[0].mxu0
      %v843 = vadd.f32 %v296, %v842
      %v844 = vpop.f32.mrb[0].mxu0
      %845 = vmatprep.mubr.bf16.mxu0 0
      %846 = vmatmul.mubr.bf16.gmra.mrb[0].mxu0 %v609
      %v847 = vpop.f32.mrb[0].mxu0
      %v848 = vadd.f32 %v296, %v847
      %v849 = vpop.f32.mrb[0].mxu0
      %v850 = vpop.f32.mrb[0].mxu0
      %v851 = vadd.f32 %v296, %v850
      %v852 = vpop.f32.mrb[0].mxu0
      %853 = vmatprep.mubr.bf16.mxu0 0
      %854 = vmatmul.mubr.bf16.gmra.mrb[0].mxu0 %v612
      %v855 = vpop.f32.mrb[0].mxu0
      %v856 = vadd.f32 %v296, %v855
      %v857 = vpop.f32.mrb[0].mxu0
      %v858 = vpop.f32.mrb[0].mxu0
      %v859 = vadd.f32 %v296, %v858
      %v860 = vpop.f32.mrb[0].mxu0
      %861 = vmatprep.mubr.bf16.mxu0 0
      %862 = vmatmul.mubr.bf16.gmra.mrb[0].mxu0 %v615
      %v863 = vpop.f32.mrb[0].mxu0
      %v864 = vadd.f32 %v296, %v863
      %v865 = vpop.f32.mrb[0].mxu0
      %v866 = vpop.f32.mrb[0].mxu0
      %v867 = vadd.f32 %v296, %v866
      %v868 = vpop.f32.mrb[0].mxu0
      %869 = vmatprep.mubr.bf16.mxu0 0
      %870 = vmatmul.mubr.bf16.gmra.mrb[0].mxu0 %v618
      %v871 = vpop.f32.mrb[0].mxu0
      %v872 = vadd.f32 %v296, %v871
      %v873 = vpop.f32.mrb[0].mxu0
      %v874 = vpop.f32.mrb[0].mxu0
      %v875 = vadd.f32 %v296, %v874
      %v876 = vpop.f32.mrb[0].mxu0
      %877 = vmatprep.mubr.bf16.mxu0 0
      %878 = vmatmul.mubr.bf16.gmra.mrb[0].mxu0 %v621
      %v879 = vpop.f32.mrb[0].mxu0
      %v880 = vadd.f32 %v296, %v879
      %v881 = vpop.f32.mrb[0].mxu0
      %v882 = vpop.f32.mrb[0].mxu0
      %v883 = vadd.f32 %v296, %v882
      %v884 = vpop.f32.mrb[0].mxu0
      %885 = vmatprep.mubr.bf16.mxu0 0
      %886 = vmatmul.mubr.bf16.gmra.mrb[0].mxu0 %v624
      %v887 = vpop.f32.mrb[0].mxu0
      %v888 = vadd.f32 %v296, %v887
      %v889 = vpop.f32.mrb[0].mxu0
      %v890 = vpop.f32.mrb[0].mxu0
      %v891 = vadd.f32 %v296, %v890
      %v892 = vpop.f32.mrb[0].mxu0
      %893 = vmatprep.mubr.bf16.mxu0 0
      %894 = vmatmul.mubr.bf16.gmra.mrb[0].mxu0 %v627
      %v895 = vpop.f32.mrb[0].mxu0
      %v896 = vadd.f32 %v296, %v895
      %v897 = vpop.f32.mrb[0].mxu0
      %v898 = vpop.f32.mrb[0].mxu0
      %v899 = vadd.f32 %v296, %v898
      %v900 = vpop.f32.mrb[0].mxu0
      %901 = vmatprep.mubr.bf16.mxu0 0
      %902 = vmatmul.mubr.bf16.gmra.mrb[0].mxu0 %v630
      %v903 = vpop.f32.mrb[0].mxu0
      %v904 = vadd.f32 %v296, %v903
      %v905 = vpop.f32.mrb[0].mxu0
      %v906 = vpop.f32.mrb[0].mxu0
      %v907 = vadd.f32 %v296, %v906
      %v908 = vpop.f32.mrb[0].mxu0
      %909 = vmatprep.mubr.bf16.mxu0 0
      %910 = vmatmul.mubr.bf16.gmra.mrb[0].mxu0 %v633
      %v911 = vpop.f32.mrb[0].mxu0
      %v912 = vadd.f32 %v296, %v911
      %v913 = vpop.f32.mrb[0].mxu0
      %v914 = vpop.f32.mrb[0].mxu0
      %v915 = vadd.f32 %v296, %v914
      %v916 = vpop.f32.mrb[0].mxu0
      %917 = vmatprep.mubr.bf16.mxu0 0
      %918 = vmatmul.mubr.bf16.gmra.mrb[0].mxu0 %v636
      %v919 = vpop.f32.mrb[0].mxu0
      %v920 = vadd.f32 %v296, %v919
      %v921 = vpop.f32.mrb[0].mxu0
      %v922 = vpop.f32.mrb[0].mxu0
      %v923 = vadd.f32 %v296, %v922
      %v924 = vpop.f32.mrb[0].mxu0
      %925 = vmatprep.mubr.bf16.mxu0 0
      %926 = vmatmul.mubr.bf16.gmra.mrb[0].mxu0 %v639
      %v927 = vpop.f32.mrb[0].mxu0
      %v928 = vadd.f32 %v296, %v927
      %v929 = vpop.f32.mrb[0].mxu0
      %v930 = vpop.f32.mrb[0].mxu0
      %v931 = vadd.f32 %v296, %v930
      %v932 = vpop.f32.mrb[0].mxu0
      %933 = vmatprep.mubr.bf16.mxu0 0
      %934 = vmatmul.mubr.bf16.gmra.mrb[0].mxu0 %v642
      %v935 = vpop.f32.mrb[0].mxu0
      %v936 = vadd.f32 %v296, %v935
      %v937 = vpop.f32.mrb[0].mxu0
      %v938 = vpop.f32.mrb[0].mxu0
      %v939 = vadd.f32 %v296, %v938
      %v940 = vpop.f32.mrb[0].mxu0
      %941 = vmatprep.mubr.bf16.mxu0 0
      %942 = vmatmul.mubr.bf16.gmra.mrb[0].mxu0 %v645
      %v943 = vpop.f32.mrb[0].mxu0
      %v944 = vadd.f32 %v296, %v943
      %v945 = vpop.f32.mrb[0].mxu0
      %v946 = vpop.f32.mrb[0].mxu0
      %v947 = vadd.f32 %v296, %v946
      %v948 = vpop.f32.mrb[0].mxu0
      %949 = vmatprep.mubr.bf16.mxu0 0
      %950 = vmatmul.mubr.bf16.gmra.mrb[0].mxu0 %v648
      %v951 = vpop.f32.mrb[0].mxu0
      %v952 = vadd.f32 %v296, %v951
      %v953 = vpop.f32.mrb[0].mxu0
      %v954 = vpop.f32.mrb[0].mxu0
      %v955 = vadd.f32 %v296, %v954
      %v956 = vpop.f32.mrb[0].mxu0
      %957 = vmatprep.mubr.bf16.mxu0 0
      %958 = vmatmul.mubr.bf16.gmra.mrb[0].mxu0 %v651
      %v959 = vpop.f32.mrb[0].mxu0
      %v960 = vadd.f32 %v296, %v959
      %v961 = vpop.f32.mrb[0].mxu0
      %v962 = vpop.f32.mrb[0].mxu0
      %v963 = vadd.f32 %v296, %v962
      %v964 = vpop.f32.mrb[0].mxu0
      %965 = vmatprep.mubr.bf16.mxu0 0
      %966 = vmatmul.mubr.bf16.gmra.mrb[0].mxu0 %v654
      %v967 = vpop.f32.mrb[0].mxu0
      %v968 = vadd.f32 %v296, %v967
      %v969 = vpop.f32.mrb[0].mxu0
      %v970 = vpop.f32.mrb[0].mxu0
      %v971 = vadd.f32 %v296, %v970
      %v972 = vpop.f32.mrb[0].mxu0
      %973 = vmatprep.mubr.bf16.mxu0 0
      %974 = vmatmul.mubr.bf16.gmra.mrb[0].mxu0 %v657
      %v975 = vpop.f32.mrb[0].mxu0
      %v976 = vadd.f32 %v296, %v975
      %v977 = vpop.f32.mrb[0].mxu0
      %v978 = vpop.f32.mrb[0].mxu0
      %v979 = vadd.f32 %v296, %v978
      %v980 = vpop.f32.mrb[0].mxu0
      %981 = vmatprep.mubr.bf16.mxu0 0
      %982 = vmatmul.mubr.bf16.gmra.mrb[0].mxu0 %v660
      %v983 = vpop.f32.mrb[0].mxu0
      %v984 = vadd.f32 %v296, %v983
      %v985 = vpop.f32.mrb[0].mxu0
      %v986 = vpop.f32.mrb[0].mxu0
      %v987 = vadd.f32 %v296, %v986
      %v988 = vpop.f32.mrb[0].mxu0
      %989 = vmatprep.mubr.bf16.mxu0 0
      %990 = vmatmul.mubr.bf16.gmra.mrb[0].mxu0 %v663
      %v991 = vpop.f32.mrb[0].mxu0
      %v992 = vadd.f32 %v296, %v991
      %v993 = vpop.f32.mrb[0].mxu0
      %v994 = vpop.f32.mrb[0].mxu0
      %v995 = vadd.f32 %v296, %v994
      %v996 = vpop.f32.mrb[0].mxu0
      %997 = vmatprep.mubr.bf16.mxu0 0
      %998 = vmatmul.mubr.bf16.gmra.mrb[0].mxu0 %v666
      %v999 = vpop.f32.mrb[0].mxu0
      %v1000 = vadd.f32 %v296, %v999
      %v1001 = vpop.f32.mrb[0].mxu0
      %v1002 = vpop.f32.mrb[0].mxu0
      %v1003 = vadd.f32 %v296, %v1002
      %v1004 = vpop.f32.mrb[0].mxu0
      %1005 = vmatprep.mubr.bf16.mxu0 0
      %1006 = vmatmul.mubr.bf16.gmra.mrb[0].mxu0 %v669
      %v1007 = vpop.f32.mrb[0].mxu0
      %v1008 = vadd.f32 %v296, %v1007
      %v1009 = vpop.f32.mrb[0].mxu0
      %v1010 = vpop.f32.mrb[0].mxu0
      %v1011 = vadd.f32 %v296, %v1010
      %v1012 = vpop.f32.mrb[0].mxu0
      %1013 = vmatprep.mubr.bf16.mxu0 0
      %1014 = vmatmul.mubr.bf16.gmra.mrb[0].mxu0 %v672
      %v1015 = vpop.f32.mrb[0].mxu0
      %v1016 = vadd.f32 %v296, %v1015
      %v1017 = vpop.f32.mrb[0].mxu0
      %v1018 = vpop.f32.mrb[0].mxu0
      %v1019 = vadd.f32 %v296, %v1018
      %v1020 = vpop.f32.mrb[0].mxu0
      %1021 = vmatprep.mubr.bf16.mxu0 0
      %1022 = vmatmul.mubr.bf16.gmra.mrb[0].mxu0 %v675
      %v1023 = vpop.f32.mrb[0].mxu0
      %v1024 = vadd.f32 %v296, %v1023
      %v1025 = vpop.f32.mrb[0].mxu0
      %v1026 = vpop.f32.mrb[0].mxu0
      %v1027 = vadd.f32 %v296, %v1026
      %v1028 = vpop.f32.mrb[0].mxu0
      %1029 = vmatprep.mubr.bf16.mxu0 0
      %1030 = vmatmul.mubr.bf16.gmra.mrb[0].mxu0 %v678
      %v1031 = vpop.f32.mrb[0].mxu0
      %v1032 = vadd.f32 %v296, %v1031
      %v1033 = vpop.f32.mrb[0].mxu0
      %v1034 = vpop.f32.mrb[0].mxu0
      %v1035 = vadd.f32 %v296, %v1034
      %v1036 = vpop.f32.mrb[0].mxu0
      %1037 = vmatprep.mubr.bf16.mxu0 0
      %1038 = vmatmul.mubr.bf16.gmra.mrb[0].mxu0 %v681
      %v1039 = vpop.f32.mrb[0].mxu0
      %v1040 = vadd.f32 %v296, %v1039
      %v1041 = vpop.f32.mrb[0].mxu0
      %v1042 = vpop.f32.mrb[0].mxu0
      %v1043 = vadd.f32 %v296, %v1042
      %v1044 = vpop.f32.mrb[0].mxu0
      %1045 = vmatprep.mubr.bf16.mxu0 0
      %1046 = vmatmul.mubr.bf16.gmra.mrb[0].mxu0 %v684
      %v1047 = vpop.f32.mrb[0].mxu0
      %v1048 = vadd.f32 %v296, %v1047
      %v1049 = vpop.f32.mrb[0].mxu0
      %v1050 = vpop.f32.mrb[0].mxu0
      %v1051 = vadd.f32 %v296, %v1050
      %v1052 = vpop.f32.mrb[0].mxu0
      %1053 = vmatprep.mubr.bf16.mxu0 0
      %1054 = vmatmul.mubr.bf16.gmra.mrb[0].mxu0 %v687
      %v1055 = vpop.f32.mrb[0].mxu0
      %v1056 = vadd.f32 %v296, %v1055
      %v1057 = vpop.f32.mrb[0].mxu0
      %v1058 = vpop.f32.mrb[0].mxu0
      %v1059 = vadd.f32 %v296, %v1058
      %v1060 = vpop.f32.mrb[0].mxu0
      %1061 = vmatprep.mubr.bf16.mxu0 0
      %1062 = vmatmul.mubr.bf16.gmra.mrb[0].mxu0 %v690
      %v1063 = vpop.f32.mrb[0].mxu0
      %v1064 = vadd.f32 %v296, %v1063
      %v1065 = vpop.f32.mrb[0].mxu0
      %v1066 = vpop.f32.mrb[0].mxu0
      %v1067 = vadd.f32 %v296, %v1066
      %v1068 = vpop.f32.mrb[0].mxu0
      %1069 = vmatprep.mubr.bf16.mxu0 0
      %1070 = vmatmul.mubr.bf16.gmra.mrb[0].mxu0 %v693
      %v1071 = vpop.f32.mrb[0].mxu0
      %v1072 = vadd.f32 %v296, %v1071
      %v1073 = vpop.f32.mrb[0].mxu0
      %v1074 = vpop.f32.mrb[0].mxu0
      %v1075 = vadd.f32 %v296, %v1074
      %v1076 = vpop.f32.mrb[0].mxu0
      %1077 = vmatprep.mubr.bf16.mxu0 0
      %1078 = vmatmul.mubr.bf16.gmra.mrb[0].mxu0 %v696
      %v1079 = vpop.f32.mrb[0].mxu0
      %v1080 = vadd.f32 %v296, %v1079
      %v1081 = vpop.f32.mrb[0].mxu0
      %v1082 = vpop.f32.mrb[0].mxu0
      %v1083 = vadd.f32 %v296, %v1082
      %v1084 = vpop.f32.mrb[0].mxu0
      %1085 = vmatprep.mubr.bf16.mxu0 0
      %1086 = vmatmul.mubr.bf16.gmra.mrb[0].mxu0 %v699
      %v1087 = vpop.f32.mrb[0].mxu0
      %v1088 = vadd.f32 %v296, %v1087
      %v1089 = vpop.f32.mrb[0].mxu0
      %v1090 = vpop.f32.mrb[0].mxu0
      %v1091 = vadd.f32 %v296, %v1090
      %v1092 = vpop.f32.mrb[0].mxu0
      %1093 = vmatprep.mubr.bf16.mxu0 0
      %1094 = vmatmul.mubr.bf16.gmra.mrb[0].mxu0 %v702
      %v1095 = vpop.f32.mrb[0].mxu0
      %v1096 = vadd.f32 %v296, %v1095
      %v1097 = vpop.f32.mrb[0].mxu0
      %v1098 = vpop.f32.mrb[0].mxu0
      %v1099 = vadd.f32 %v296, %v1098
      %v1100 = vpop.f32.mrb[0].mxu0
      %1101 = vmatprep.mubr.bf16.mxu0 0
      %1102 = vmatmul.mubr.bf16.gmra.mrb[0].mxu0 %v705
      %v1103 = vpop.f32.mrb[0].mxu0
      %v1104 = vadd.f32 %v296, %v1103
      %v1105 = vpop.f32.mrb[0].mxu0
      %v1106 = vpop.f32.mrb[0].mxu0
      %v1107 = vadd.f32 %v296, %v1106
      %v1108 = vpop.f32.mrb[0].mxu0
      %1109 = vmatprep.mubr.bf16.mxu0 0
      %1110 = vmatmul.mubr.bf16.gmra.mrb[0].mxu0 %v708
      %v1111 = vpop.f32.mrb[0].mxu0
      %v1112 = vadd.f32 %v296, %v1111
      %v1113 = vpop.f32.mrb[0].mxu0
      %v1114 = vpop.f32.mrb[0].mxu0
      %v1115 = vadd.f32 %v296, %v1114
      %v1116 = vpop.f32.mrb[0].mxu0
      %1117 = vmatprep.mubr.bf16.mxu0 0
      %1118 = vmatmul.mubr.bf16.gmra.mrb[0].mxu0 %v711
      %v1119 = vpop.f32.mrb[0].mxu0
      %v1120 = vadd.f32 %v296, %v1119
      %v1121 = vpop.f32.mrb[0].mxu0
      %v1122 = vpop.f32.mrb[0].mxu0
      %v1123 = vadd.f32 %v296, %v1122
      %v1124 = vpop.f32.mrb[0].mxu0
      %1125 = vmatprep.mubr.bf16.mxu0 0
      %1126 = vmatmul.mubr.bf16.gmra.mrb[0].mxu0 %v714
      %v1127 = vpop.f32.mrb[0].mxu0
      %v1128 = vadd.f32 %v296, %v1127
      %v1129 = vpop.f32.mrb[0].mxu0
      %v1130 = vpop.f32.mrb[0].mxu0
      %v1131 = vadd.f32 %v296, %v1130
      %v1132 = vpop.f32.mrb[0].mxu0
      %1133 = vmatprep.mubr.bf16.mxu0 0
      %1134 = vmatmul.mubr.bf16.gmra.mrb[0].mxu0 %v717
      %v1135 = vpop.f32.mrb[0].mxu0
      %v1136 = vadd.f32 %v296, %v1135
      %v1137 = vpop.f32.mrb[0].mxu0
      %v1138 = vpop.f32.mrb[0].mxu0
      %v1139 = vadd.f32 %v296, %v1138
      %v1140 = vpop.f32.mrb[0].mxu0
      %1141 = vmatprep.mubr.bf16.mxu0 0
      %1142 = vmatmul.mubr.bf16.gmra.mrb[0].mxu0 %v720
      %v1143 = vpop.f32.mrb[0].mxu0
      %v1144 = vadd.f32 %v296, %v1143
      %v1145 = vpop.f32.mrb[0].mxu0
      %v1146 = vpop.f32.mrb[0].mxu0
      %v1147 = vadd.f32 %v296, %v1146
      %v1148 = vpop.f32.mrb[0].mxu0
      %1149 = vmatprep.mubr.bf16.mxu0 0
      %1150 = vmatmul.mubr.bf16.gmra.mrb[0].mxu0 %v723
      %v1151 = vpop.f32.mrb[0].mxu0
      %v1152 = vadd.f32 %v296, %v1151
      %v1153 = vpop.f32.mrb[0].mxu0
      %v1154 = vpop.f32.mrb[0].mxu0
      %v1155 = vadd.f32 %v296, %v1154
      %v1156 = vpop.f32.mrb[0].mxu0
      %1157 = vmatprep.mubr.bf16.mxu0 0
      %1158 = vmatmul.mubr.bf16.gmra.mrb[0].mxu0 %v726
      %v1159 = vpop.f32.mrb[0].mxu0
      %v1160 = vadd.f32 %v296, %v1159
      %v1161 = vpop.f32.mrb[0].mxu0
      %v1162 = vpop.f32.mrb[0].mxu0
      %v1163 = vadd.f32 %v296, %v1162
      %v1164 = vpop.f32.mrb[0].mxu0
      %1165 = vmatprep.mubr.bf16.mxu0 0
      %1166 = vmatmul.mubr.bf16.gmra.mrb[0].mxu0 %v729
      %v1167 = vpop.f32.mrb[0].mxu0
      %v1168 = vadd.f32 %v296, %v1167
      %v1169 = vpop.f32.mrb[0].mxu0
      %v1170 = vpop.f32.mrb[0].mxu0
      %v1171 = vadd.f32 %v296, %v1170
      %v1172 = vpop.f32.mrb[0].mxu0
      %1173 = vmatprep.mubr.bf16.mxu0 0
      %1174 = vmatmul.mubr.bf16.gmra.mrb[0].mxu0 %v732
      %v1175 = vpop.f32.mrb[0].mxu0
      %v1176 = vadd.f32 %v296, %v1175
      %v1177 = vpop.f32.mrb[0].mxu0
      %v1178 = vpop.f32.mrb[0].mxu0
      %v1179 = vadd.f32 %v296, %v1178
      %v1180 = vpop.f32.mrb[0].mxu0
      %1181 = vmatprep.mubr.bf16.mxu0 0
      %1182 = vmatmul.mubr.bf16.gmra.mrb[0].mxu0 %v735
      %v1183 = vpop.f32.mrb[0].mxu0
      %v1184 = vadd.f32 %v296, %v1183
      %v1185 = vpop.f32.mrb[0].mxu0
      %v1186 = vpop.f32.mrb[0].mxu0
      %v1187 = vadd.f32 %v296, %v1186
      %v1188 = vpop.f32.mrb[0].mxu0
      %1189 = vmatprep.mubr.bf16.mxu0 0
      %1190 = vmatmul.mubr.bf16.gmra.mrb[0].mxu0 %v738
      %v1191 = vpop.f32.mrb[0].mxu0
      %v1192 = vadd.f32 %v296, %v1191
      %v1193 = vpop.f32.mrb[0].mxu0
      %v1194 = vpop.f32.mrb[0].mxu0
      %v1195 = vadd.f32 %v296, %v1194
      %v1196 = vpop.f32.mrb[0].mxu0
      %1197 = vmatprep.mubr.bf16.mxu0 0
      %1198 = vmatmul.mubr.bf16.gmra.mrb[0].mxu0 %v741
      %v1199 = vpop.f32.mrb[0].mxu0
      %v1200 = vadd.f32 %v296, %v1199
      %v1201 = vpop.f32.mrb[0].mxu0
      %v1202 = vpop.f32.mrb[0].mxu0
      %v1203 = vadd.f32 %v296, %v1202
      %v1204 = vpop.f32.mrb[0].mxu0
      %1205 = vmatprep.mubr.bf16.mxu0 0
      %1206 = vmatmul.mubr.bf16.gmra.mrb[0].mxu0 %v744
      %v1207 = vpop.f32.mrb[0].mxu0
      %v1208 = vadd.f32 %v296, %v1207
      %v1209 = vpop.f32.mrb[0].mxu0
      %v1210 = vpop.f32.mrb[0].mxu0
      %v1211 = vadd.f32 %v296, %v1210
      %v1212 = vpop.f32.mrb[0].mxu0
      %1213 = vmatprep.mubr.bf16.mxu0 0
      %1214 = vmatmul.mubr.bf16.gmra.mrb[0].mxu0 %v747
      %v1215 = vpop.f32.mrb[0].mxu0
      %v1216 = vadd.f32 %v296, %v1215
      %v1217 = vpop.f32.mrb[0].mxu0
      %v1218 = vpop.f32.mrb[0].mxu0
      %v1219 = vadd.f32 %v296, %v1218
      %v1220 = vpop.f32.mrb[0].mxu0
      %1221 = vmatprep.mubr.bf16.mxu0 0
      %1222 = vmatmul.mubr.bf16.gmra.mrb[0].mxu0 %v750
      %v1223 = vpop.f32.mrb[0].mxu0
      %v1224 = vadd.f32 %v296, %v1223
      %v1225 = vpop.f32.mrb[0].mxu0
      %v1226 = vpop.f32.mrb[0].mxu0
      %v1227 = vadd.f32 %v296, %v1226
      %v1228 = vpop.f32.mrb[0].mxu0
      %1229 = vmatprep.mubr.bf16.mxu0 0
      %1230 = vmatmul.mubr.bf16.gmra.mrb[0].mxu0 %v753
      %v1231 = vpop.f32.mrb[0].mxu0
      %v1232 = vadd.f32 %v296, %v1231
      %v1233 = vpop.f32.mrb[0].mxu0
      %v1234 = vpop.f32.mrb[0].mxu0
      %v1235 = vadd.f32 %v296, %v1234
      %v1236 = vpop.f32.mrb[0].mxu0
      %1237 = vmatprep.mubr.bf16.mxu0 0
      %1238 = vmatmul.mubr.bf16.gmra.mrb[0].mxu0 %v756
      %v1239 = vpop.f32.mrb[0].mxu0
      %v1240 = vadd.f32 %v296, %v1239
      %v1241 = vpop.f32.mrb[0].mxu0
      %v1242 = vpop.f32.mrb[0].mxu0
      %v1243 = vadd.f32 %v296, %v1242
      %v1244 = vpop.f32.mrb[0].mxu0
      %1245 = vdwg.mxu0
      %v1246 = vmax.f32 %v800, 0.0
      %v1247 = vmax.f32 %v803, 0.0
      %v1248 = vmax.f32 %v808, 0.0
      %v1249 = vmax.f32 %v811, 0.0
      %v1250 = vmax.f32 %v816, 0.0
      %v1251 = vmax.f32 %v819, 0.0
      %v1252 = vmax.f32 %v824, 0.0
      %v1253 = vmax.f32 %v827, 0.0
      %v1254 = vmax.f32 %v832, 0.0
      %v1255 = vmax.f32 %v835, 0.0
      %v1256 = vmax.f32 %v840, 0.0
      %v1257 = vmax.f32 %v843, 0.0
      %v1258 = vmax.f32 %v848, 0.0
      %v1259 = vmax.f32 %v851, 0.0
      %v1260 = vmax.f32 %v856, 0.0
      %v1261 = vmax.f32 %v859, 0.0
      %v1262 = vmax.f32 %v864, 0.0
      %v1263 = vmax.f32 %v867, 0.0
      %v1264 = vmax.f32 %v872, 0.0
      %v1265 = vmax.f32 %v875, 0.0
      %v1266 = vmax.f32 %v880, 0.0
      %v1267 = vmax.f32 %v883, 0.0
      %v1268 = vmax.f32 %v888, 0.0
      %v1269 = vmax.f32 %v891, 0.0
      %v1270 = vmax.f32 %v896, 0.0
      %v1271 = vmax.f32 %v899, 0.0
      %v1272 = vmax.f32 %v904, 0.0
      %v1273 = vmax.f32 %v907, 0.0
      %v1274 = vmax.f32 %v912, 0.0
      %v1275 = vmax.f32 %v915, 0.0
      %v1276 = vmax.f32 %v920, 0.0
      %v1277 = vmax.f32 %v923, 0.0
      %v1278 = vmax.f32 %v928, 0.0
      %v1279 = vmax.f32 %v931, 0.0
      %v1280 = vmax.f32 %v936, 0.0
      %v1281 = vmax.f32 %v939, 0.0
      %v1282 = vmax.f32 %v944, 0.0
      %v1283 = vmax.f32 %v947, 0.0
      %v1284 = vmax.f32 %v952, 0.0
      %v1285 = vmax.f32 %v955, 0.0
      %v1286 = vmax.f32 %v960, 0.0
      %v1287 = vmax.f32 %v963, 0.0
      %v1288 = vmax.f32 %v968, 0.0
      %v1289 = vmax.f32 %v971, 0.0
      %v1290 = vmax.f32 %v976, 0.0
      %v1291 = vmax.f32 %v979, 0.0
      %v1292 = vmax.f32 %v984, 0.0
      %v1293 = vmax.f32 %v987, 0.0
      %v1294 = vmax.f32 %v992, 0.0
      %v1295 = vmax.f32 %v995, 0.0
      %v1296 = vmax.f32 %v1000, 0.0
      %v1297 = vmax.f32 %v1003, 0.0
      %v1298 = vmax.f32 %v1008, 0.0
      %v1299 = vmax.f32 %v1011, 0.0
      %v1300 = vmax.f32 %v1016, 0.0
      %v1301 = vmax.f32 %v1019, 0.0
      %v1302 = vmax.f32 %v1024, 0.0
      %v1303 = vmax.f32 %v1027, 0.0
      %v1304 = vmax.f32 %v1032, 0.0
      %v1305 = vmax.f32 %v1035, 0.0
      %v1306 = vmax.f32 %v1040, 0.0
      %v1307 = vmax.f32 %v1043, 0.0
      %v1308 = vmax.f32 %v1048, 0.0
      %v1309 = vmax.f32 %v1051, 0.0
      %v1310 = vmax.f32 %v1056, 0.0
      %v1311 = vmax.f32 %v1059, 0.0
      %v1312 = vmax.f32 %v1064, 0.0
      %v1313 = vmax.f32 %v1067, 0.0
      %v1314 = vmax.f32 %v1072, 0.0
      %v1315 = vmax.f32 %v1075, 0.0
      %v1316 = vmax.f32 %v1080, 0.0
      %v1317 = vmax.f32 %v1083, 0.0
      %v1318 = vmax.f32 %v1088, 0.0
      %v1319 = vmax.f32 %v1091, 0.0
      %v1320 = vmax.f32 %v1096, 0.0
      %v1321 = vmax.f32 %v1099, 0.0
      %v1322 = vmax.f32 %v1104, 0.0
      %v1323 = vmax.f32 %v1107, 0.0
      %v1324 = vmax.f32 %v1112, 0.0
      %v1325 = vmax.f32 %v1115, 0.0
      %v1326 = vmax.f32 %v1120, 0.0
      %v1327 = vmax.f32 %v1123, 0.0
      %v1328 = vmax.f32 %v1128, 0.0
      %v1329 = vmax.f32 %v1131, 0.0
      %v1330 = vmax.f32 %v1136, 0.0
      %v1331 = vmax.f32 %v1139, 0.0
      %v1332 = vmax.f32 %v1144, 0.0
      %v1333 = vmax.f32 %v1147, 0.0
      %v1334 = vmax.f32 %v1152, 0.0
      %v1335 = vmax.f32 %v1155, 0.0
      %v1336 = vmax.f32 %v1160, 0.0
      %v1337 = vmax.f32 %v1163, 0.0
      %v1338 = vmax.f32 %v1168, 0.0
      %v1339 = vmax.f32 %v1171, 0.0
      %v1340 = vmax.f32 %v1176, 0.0
      %v1341 = vmax.f32 %v1179, 0.0
      %v1342 = vmax.f32 %v1184, 0.0
      %v1343 = vmax.f32 %v1187, 0.0
      %v1344 = vmax.f32 %v1192, 0.0
      %v1345 = vmax.f32 %v1195, 0.0
      %v1346 = vmax.f32 %v1200, 0.0
      %v1347 = vmax.f32 %v1203, 0.0
      %v1348 = vmax.f32 %v1208, 0.0
      %v1349 = vmax.f32 %v1211, 0.0
      %v1350 = vmax.f32 %v1216, 0.0
      %v1351 = vmax.f32 %v1219, 0.0
      %v1352 = vmax.f32 %v1224, 0.0
      %v1353 = vmax.f32 %v1227, 0.0
      %v1354 = vmax.f32 %v1232, 0.0
      %v1355 = vmax.f32 %v1235, 0.0
      %v1356 = vmax.f32 %v1240, 0.0
      %v1357 = vmax.f32 %v1243, 0.0
      %vm1358 = vcmask 64512
      %1359 = vst.msk [vmem:[%s172] sm:$0xff] %vm1358, %v1246
      %1360 = vst.msk [vmem:[%s172 + $0x8] sm:$0xff] %vm1358, %v1247
      %1361 = vst.msk [vmem:[%s172 + $0x10] sm:$0xff] %vm1358, %v1248
      %1362 = vst.msk [vmem:[%s172 + $0x18] sm:$0xff] %vm1358, %v1249
      %1363 = vst.msk [vmem:[%s172 + $0x20] sm:$0xff] %vm1358, %v1250
      %1364 = vst.msk [vmem:[%s172 + $0x28] sm:$0xff] %vm1358, %v1251
      %1365 = vst.msk [vmem:[%s172 + $0x30] sm:$0xff] %vm1358, %v1252
      %1366 = vst.msk [vmem:[%s172 + $0x38] sm:$0xff] %vm1358, %v1253
      %1367 = vst.msk [vmem:[%s172 + $0x40] sm:$0xff] %vm1358, %v1254
      %1368 = vst.msk [vmem:[%s172 + $0x48] sm:$0xff] %vm1358, %v1255
      %1369 = vst.msk [vmem:[%s172 + $0x50] sm:$0xff] %vm1358, %v1256
      %1370 = vst.msk [vmem:[%s172 + $0x58] sm:$0xff] %vm1358, %v1257
      %1371 = vst.msk [vmem:[%s172 + $0x60] sm:$0xff] %vm1358, %v1258
      %1372 = vst.msk [vmem:[%s172 + $0x68] sm:$0xff] %vm1358, %v1259
      %1373 = vst.msk [vmem:[%s172 + $0x70] sm:$0xff] %vm1358, %v1260
      %1374 = vst.msk [vmem:[%s172 + $0x78] sm:$0xff] %vm1358, %v1261
      %1375 = vst.msk [vmem:[%s172 + $0x80] sm:$0xff] %vm1358, %v1262
      %1376 = vst.msk [vmem:[%s172 + $0x88] sm:$0xff] %vm1358, %v1263
      %1377 = vst.msk [vmem:[%s172 + $0x90] sm:$0xff] %vm1358, %v1264
      %1378 = vst.msk [vmem:[%s172 + $0x98] sm:$0xff] %vm1358, %v1265
      %1379 = vst.msk [vmem:[%s172 + $0xa0] sm:$0xff] %vm1358, %v1266
      %1380 = vst.msk [vmem:[%s172 + $0xa8] sm:$0xff] %vm1358, %v1267
      %1381 = vst.msk [vmem:[%s172 + $0xb0] sm:$0xff] %vm1358, %v1268
      %1382 = vst.msk [vmem:[%s172 + $0xb8] sm:$0xff] %vm1358, %v1269
      %1383 = vst.msk [vmem:[%s172 + $0xc0] sm:$0xff] %vm1358, %v1270
      %1384 = vst.msk [vmem:[%s172 + $0xc8] sm:$0xff] %vm1358, %v1271
      %1385 = vst.msk [vmem:[%s172 + $0xd0] sm:$0xff] %vm1358, %v1272
      %1386 = vst.msk [vmem:[%s172 + $0xd8] sm:$0xff] %vm1358, %v1273
      %1387 = vst.msk [vmem:[%s172 + $0xe0] sm:$0xff] %vm1358, %v1274
      %1388 = vst.msk [vmem:[%s172 + $0xe8] sm:$0xff] %vm1358, %v1275
      %1389 = vst.msk [vmem:[%s172 + $0xf0] sm:$0xff] %vm1358, %v1276
      %1390 = vst.msk [vmem:[%s172 + $0xf8] sm:$0xff] %vm1358, %v1277
      %1391 = vst.msk [vmem:[%s172 + $0x100] sm:$0xff] %vm1358, %v1278
      %1392 = vst.msk [vmem:[%s172 + $0x108] sm:$0xff] %vm1358, %v1279
      %1393 = vst.msk [vmem:[%s172 + $0x110] sm:$0xff] %vm1358, %v1280
      %1394 = vst.msk [vmem:[%s172 + $0x118] sm:$0xff] %vm1358, %v1281
      %1395 = vst.msk [vmem:[%s172 + $0x120] sm:$0xff] %vm1358, %v1282
      %1396 = vst.msk [vmem:[%s172 + $0x128] sm:$0xff] %vm1358, %v1283
      %1397 = vst.msk [vmem:[%s172 + $0x130] sm:$0xff] %vm1358, %v1284
      %1398 = vst.msk [vmem:[%s172 + $0x138] sm:$0xff] %vm1358, %v1285
      %1399 = vst.msk [vmem:[%s172 + $0x140] sm:$0xff] %vm1358, %v1286
      %1400 = vst.msk [vmem:[%s172 + $0x148] sm:$0xff] %vm1358, %v1287
      %1401 = vst.msk [vmem:[%s172 + $0x150] sm:$0xff] %vm1358, %v1288
      %1402 = vst.msk [vmem:[%s172 + $0x158] sm:$0xff] %vm1358, %v1289
      %1403 = vst.msk [vmem:[%s172 + $0x160] sm:$0xff] %vm1358, %v1290
      %1404 = vst.msk [vmem:[%s172 + $0x168] sm:$0xff] %vm1358, %v1291
      %1405 = vst.msk [vmem:[%s172 + $0x170] sm:$0xff] %vm1358, %v1292
      %1406 = vst.msk [vmem:[%s172 + $0x178] sm:$0xff] %vm1358, %v1293
      %1407 = vst.msk [vmem:[%s172 + $0x180] sm:$0xff] %vm1358, %v1294
      %1408 = vst.msk [vmem:[%s172 + $0x188] sm:$0xff] %vm1358, %v1295
      %1409 = vst.msk [vmem:[%s172 + $0x190] sm:$0xff] %vm1358, %v1296
      %1410 = vst.msk [vmem:[%s172 + $0x198] sm:$0xff] %vm1358, %v1297
      %1411 = vst.msk [vmem:[%s172 + $0x1a0] sm:$0xff] %vm1358, %v1298
      %1412 = vst.msk [vmem:[%s172 + $0x1a8] sm:$0xff] %vm1358, %v1299
      %1413 = vst.msk [vmem:[%s172 + $0x1b0] sm:$0xff] %vm1358, %v1300
      %1414 = vst.msk [vmem:[%s172 + $0x1b8] sm:$0xff] %vm1358, %v1301
      %1415 = vst.msk [vmem:[%s172 + $0x1c0] sm:$0xff] %vm1358, %v1302
      %1416 = vst.msk [vmem:[%s172 + $0x1c8] sm:$0xff] %vm1358, %v1303
      %1417 = vst.msk [vmem:[%s172 + $0x1d0] sm:$0xff] %vm1358, %v1304
      %1418 = vst.msk [vmem:[%s172 + $0x1d8] sm:$0xff] %vm1358, %v1305
      %1419 = vst.msk [vmem:[%s172 + $0x1e0] sm:$0xff] %vm1358, %v1306
      %1420 = vst.msk [vmem:[%s172 + $0x1e8] sm:$0xff] %vm1358, %v1307
      %1421 = vst.msk [vmem:[%s172 + $0x1f0] sm:$0xff] %vm1358, %v1308
      %1422 = vst.msk [vmem:[%s172 + $0x1f8] sm:$0xff] %vm1358, %v1309
      %1423 = vst.msk [vmem:[%s172 + $0x200] sm:$0xff] %vm1358, %v1310
      %1424 = vst.msk [vmem:[%s172 + $0x208] sm:$0xff] %vm1358, %v1311
      %1425 = vst.msk [vmem:[%s172 + $0x210] sm:$0xff] %vm1358, %v1312
      %1426 = vst.msk [vmem:[%s172 + $0x218] sm:$0xff] %vm1358, %v1313
      %1427 = vst.msk [vmem:[%s172 + $0x220] sm:$0xff] %vm1358, %v1314
      %1428 = vst.msk [vmem:[%s172 + $0x228] sm:$0xff] %vm1358, %v1315
      %1429 = vst.msk [vmem:[%s172 + $0x230] sm:$0xff] %vm1358, %v1316
      %1430 = vst.msk [vmem:[%s172 + $0x238] sm:$0xff] %vm1358, %v1317
      %1431 = vst.msk [vmem:[%s172 + $0x240] sm:$0xff] %vm1358, %v1318
      %1432 = vst.msk [vmem:[%s172 + $0x248] sm:$0xff] %vm1358, %v1319
      %1433 = vst.msk [vmem:[%s172 + $0x250] sm:$0xff] %vm1358, %v1320
      %1434 = vst.msk [vmem:[%s172 + $0x258] sm:$0xff] %vm1358, %v1321
      %1435 = vst.msk [vmem:[%s172 + $0x260] sm:$0xff] %vm1358, %v1322
      %1436 = vst.msk [vmem:[%s172 + $0x268] sm:$0xff] %vm1358, %v1323
      %1437 = vst.msk [vmem:[%s172 + $0x270] sm:$0xff] %vm1358, %v1324
      %1438 = vst.msk [vmem:[%s172 + $0x278] sm:$0xff] %vm1358, %v1325
      %1439 = vst.msk [vmem:[%s172 + $0x280] sm:$0xff] %vm1358, %v1326
      %1440 = vst.msk [vmem:[%s172 + $0x288] sm:$0xff] %vm1358, %v1327
      %1441 = vst.msk [vmem:[%s172 + $0x290] sm:$0xff] %vm1358, %v1328
      %1442 = vst.msk [vmem:[%s172 + $0x298] sm:$0xff] %vm1358, %v1329
      %1443 = vst.msk [vmem:[%s172 + $0x2a0] sm:$0xff] %vm1358, %v1330
      %1444 = vst.msk [vmem:[%s172 + $0x2a8] sm:$0xff] %vm1358, %v1331
      %1445 = vst.msk [vmem:[%s172 + $0x2b0] sm:$0xff] %vm1358, %v1332
      %1446 = vst.msk [vmem:[%s172 + $0x2b8] sm:$0xff] %vm1358, %v1333
      %1447 = vst.msk [vmem:[%s172 + $0x2c0] sm:$0xff] %vm1358, %v1334
      %1448 = vst.msk [vmem:[%s172 + $0x2c8] sm:$0xff] %vm1358, %v1335
      %1449 = vst.msk [vmem:[%s172 + $0x2d0] sm:$0xff] %vm1358, %v1336
      %1450 = vst.msk [vmem:[%s172 + $0x2d8] sm:$0xff] %vm1358, %v1337
      %1451 = vst.msk [vmem:[%s172 + $0x2e0] sm:$0xff] %vm1358, %v1338
      %1452 = vst.msk [vmem:[%s172 + $0x2e8] sm:$0xff] %vm1358, %v1339
      %1453 = vst.msk [vmem:[%s172 + $0x2f0] sm:$0xff] %vm1358, %v1340
      %1454 = vst.msk [vmem:[%s172 + $0x2f8] sm:$0xff] %vm1358, %v1341
      %1455 = vst.msk [vmem:[%s172 + $0x300] sm:$0xff] %vm1358, %v1342
      %1456 = vst.msk [vmem:[%s172 + $0x308] sm:$0xff] %vm1358, %v1343
      %1457 = vst.msk [vmem:[%s172 + $0x310] sm:$0xff] %vm1358, %v1344
      %1458 = vst.msk [vmem:[%s172 + $0x318] sm:$0xff] %vm1358, %v1345
      %1459 = vst.msk [vmem:[%s172 + $0x320] sm:$0xff] %vm1358, %v1346
      %1460 = vst.msk [vmem:[%s172 + $0x328] sm:$0xff] %vm1358, %v1347
      %1461 = vst.msk [vmem:[%s172 + $0x330] sm:$0xff] %vm1358, %v1348
      %1462 = vst.msk [vmem:[%s172 + $0x338] sm:$0xff] %vm1358, %v1349
      %1463 = vst.msk [vmem:[%s172 + $0x340] sm:$0xff] %vm1358, %v1350
      %1464 = vst.msk [vmem:[%s172 + $0x348] sm:$0xff] %vm1358, %v1351
      %1465 = vst.msk [vmem:[%s172 + $0x350] sm:$0xff] %vm1358, %v1352
      %1466 = vst.msk [vmem:[%s172 + $0x358] sm:$0xff] %vm1358, %v1353
      %1467 = vst.msk [vmem:[%s172 + $0x360] sm:$0xff] %vm1358, %v1354
      %1468 = vst.msk [vmem:[%s172 + $0x368] sm:$0xff] %vm1358, %v1355
      %1469 = vst.msk [vmem:[%s172 + $0x370] sm:$0xff] %vm1358, %v1356
      %1470 = vst.msk [vmem:[%s172 + $0x378] sm:$0xff] %vm1358, %v1357
      %s1471 = smul.u32 112, %s14
      %p1472 = scmp.lt.s32.totalorder %s1471, 783
      %s1473 = scalar_select %p1472, %s1471, 783
      %s1474 = smul.addr %s1473, 8
      %s1475 = scalar_lea.vmem %s3, %s1474
      // Predicated region
      $region33: #{_lambda_.5} parent=31 // pred_check
        %p1476 = pneg %p100
      $region34: #{_lambda_.5} parent=31 // pred_check_branch
        %1478 = sbr.rel (%p1476) target = $region36
      $region35: #{_lambda_.5} parent=31 // pred_region
        %s1479 = smul.u32 112, %s14
      $region36: #{_lambda_.5} parent=31 // pred_fallthru
        _
    $region32: #{_lambda_.5} parent=5 // pred_fallthru
      _
    %p1480 = scmp.le.s32.totalorder 2, %s9
    // Predicated region
    $region37: #{_lambda_.5} parent=5 // pred_check
      %p1481 = pneg %p1480
    $region38: #{_lambda_.5} parent=5 // pred_check_branch
      %1483 = sbr.rel (%p1481) target = $region40
    $region39: #{_lambda_.5} parent=5 // pred_region
      %s1484 = ssub.s32 %s9, 2
      // Predicated region
      $region41: #{_lambda_.5} parent=39 // pred_check
        %p1485 = pneg %p106
      $region42: #{_lambda_.5} parent=39 // pred_check_branch
        %1487 = sbr.rel (%p1485) target = $region44
      $region43: #{_lambda_.5} parent=39 // pred_region
        %s1488 = smul.u32 112, %s15
        %p1489 = scmp.lt.s32.totalorder %s1488, 783
        %s1490 = scalar_select %p1489, %s1488, 783
        %s1491 = smul.addr %s1490, 8
        %s1492 = scalar_lea.vmem %s3, %s1491
      $region44: #{_lambda_.5} parent=39 // pred_fallthru
        _
    $region40: #{_lambda_.5} parent=5 // pred_fallthru
      _
  $region6: #{_lambda_.5} parent=0 // loop_footer
    %s13 = sadd.s32 1, %s9
  $region7: #{_lambda_.5} parent=0 // loop_footer_branch
    %8 = sbr.rel target = $region3
  $region8: #{_lambda_.5} parent=0 // loop_exit
    _

// kernel: _lambda_.6
$region0: #{_lambda_.6}
  #allocation0 [shape = 'u32[]', space=smem, size = 0x4, offset = 0x4, fixed_abs, tag = 'smem constant byte address 0x4 - core index']
  #allocation1 [shape = 'u32[144,128]{1,0:T(1,128)}', space=vmem, size = 0x12000, scoped, tag = 'internal scratch']
  %s0 = inlined_call_operand.vmem [shape: bf16[1568,72], index: 0, kind: input, shape index: {}]
  %s1 = inlined_call_operand.vmem [shape: bf16[72,16], index: 1, kind: input, shape index: {}]
  %s2 = inlined_call_operand.vmem [shape: f32[1,16], index: 2, kind: input, shape index: {}]
  %s3 = inlined_call_operand.vmem [shape: f32[1568,16], index: 3, kind: output, shape index: {}]
  %s4 = sld [smem:[#allocation0]]
  $region45: #{_lambda_.6} parent=0
    _
  %s6 = ssub.s32 1, %s4
  %s7 = scalar_select 0, %s6, %s4
  loop: start=0, step=1, limit=4
  $region2: #{_lambda_.6} parent=0 // loop_pre_header
    _
  $region3: #{_lambda_.6} parent=0 // loop_header
    %s9 = sphi 0, %s13
    %p10 = scmp.ge.s32.totalorder %s9, 4
    %s19 = sphi 0, %s21
    %s22 = sphi 0, %s19
    %s23 = sphi 0, %s22
    %s39 = sphi 0, %s23
    %s43 = sphi 0, %s43
    %s45 = sphi 0, %s43
    %s46 = sphi 0, %s45
    %s60 = sphi 0, %s46
    %s64 = sphi 0, %s64
    %s66 = sphi 0, %s64
    %s67 = sphi 0, %s66
    %s81 = sphi 0, %s67
    %s87 = sphi 0, %s89
    %s90 = sphi 0, %s87
    %s91 = sphi 0, %s90
    %s107 = sphi 0, %s91
  $region4: #{_lambda_.6} parent=0 // loop_header_branch
    %12 = sbr.rel (%p10) target = $region8
  $region5: #{_lambda_.6} parent=0 // loop_body
    %s14 = ssub.s32 %s9, 1
    %s15 = ssub.s32 %s9, 2
    %s16 = sadd.s32 %s9, 1
    %s17 = ssub.s32 %s9, %s16
    %p18 = scmp.eq.s32.totalorder %s17, 0
    %s20 = sadd.s32 %s19, 1
    %s21 = scalar_select %p18, %s19, %s20
    %p24 = pneg %p18
    %p25 = scmp.eq.s32.totalorder %s9, 1
    %p26 = por %p24, %p25
    %p27 = scmp.ne.s32.totalorder %s19, %s22
    %p28 = scmp.eq.s32.totalorder %s9, 0
    %p29 = por %p27, %p28
    %p30 = scmp.ne.s32.totalorder %s19, %s22
    %p31 = scmp.eq.s32.totalorder %s14, 1
    %p32 = por %p30, %p31
    %p33 = scmp.ne.s32.totalorder %s22, %s23
    %p34 = scmp.eq.s32.totalorder %s14, 0
    %p35 = por %p33, %p34
    %p36 = scmp.ne.s32.totalorder %s22, %s23
    %p37 = scmp.eq.s32.totalorder %s15, 1
    %p38 = por %p36, %p37
    %p40 = scmp.ne.s32.totalorder %s23, %s39
    %p41 = scmp.eq.s32.totalorder %s15, 0
    %p42 = por %p40, %p41
    %s44 = sadd.s32 %s43, 1
    %p47 = scmp.eq.s32.totalorder %s9, 1
    %p48 = scmp.ne.s32.totalorder %s43, %s45
    %p49 = scmp.eq.s32.totalorder %s9, 0
    %p50 = por %p48, %p49
    %p51 = scmp.ne.s32.totalorder %s43, %s45
    %p52 = scmp.eq.s32.totalorder %s14, 1
    %p53 = por %p51, %p52
    %p54 = scmp.ne.s32.totalorder %s45, %s46
    %p55 = scmp.eq.s32.totalorder %s14, 0
    %p56 = por %p54, %p55
    %p57 = scmp.ne.s32.totalorder %s45, %s46
    %p58 = scmp.eq.s32.totalorder %s15, 1
    %p59 = por %p57, %p58
    %p61 = scmp.ne.s32.totalorder %s46, %s60
    %p62 = scmp.eq.s32.totalorder %s15, 0
    %p63 = por %p61, %p62
    %s65 = sadd.s32 %s64, 1
    %p68 = scmp.eq.s32.totalorder %s9, 1
    %p69 = scmp.ne.s32.totalorder %s64, %s66
    %p70 = scmp.eq.s32.totalorder %s9, 0
    %p71 = por %p69, %p70
    %p72 = scmp.ne.s32.totalorder %s64, %s66
    %p73 = scmp.eq.s32.totalorder %s14, 1
    %p74 = por %p72, %p73
    %p75 = scmp.ne.s32.totalorder %s66, %s67
    %p76 = scmp.eq.s32.totalorder %s14, 0
    %p77 = por %p75, %p76
    %p78 = scmp.ne.s32.totalorder %s66, %s67
    %p79 = scmp.eq.s32.totalorder %s15, 1
    %p80 = por %p78, %p79
    %p82 = scmp.ne.s32.totalorder %s67, %s81
    %p83 = scmp.eq.s32.totalorder %s15, 0
    %p84 = por %p82, %p83
    %s85 = ssub.s32 %s9, %s16
    %p86 = scmp.eq.s32.totalorder %s85, 0
    %s88 = sadd.s32 %s87, 1
    %s89 = scalar_select %p86, %s87, %s88
    %p92 = pneg %p86
    %p93 = scmp.eq.s32.totalorder %s9, 1
    %p94 = por %p92, %p93
    %p95 = scmp.ne.s32.totalorder %s87, %s90
    %p96 = scmp.eq.s32.totalorder %s9, 0
    %p97 = por %p95, %p96
    %p98 = scmp.ne.s32.totalorder %s87, %s90
    %p99 = scmp.eq.s32.totalorder %s14, 1
    %p100 = por %p98, %p99
    %p101 = scmp.ne.s32.totalorder %s90, %s91
    %p102 = scmp.eq.s32.totalorder %s14, 0
    %p103 = por %p101, %p102
    %p104 = scmp.ne.s32.totalorder %s90, %s91
    %p105 = scmp.eq.s32.totalorder %s15, 1
    %p106 = por %p104, %p105
    %p108 = scmp.ne.s32.totalorder %s91, %s107
    %p109 = scmp.eq.s32.totalorder %s15, 0
    %p110 = por %p108, %p109
    %p111 = scmp.le.s32.totalorder 1, %s9
    %p112 = scmp.lt.s32.totalorder %s9, 3
    %p113 = pnand %p111, %p112
    %p114 = pneg %p113
    // Predicated region
    $region9: #{_lambda_.6} parent=5 // pred_check
      _
    $region10: #{_lambda_.6} parent=5 // pred_check_branch
      %116 = sbr.rel (%p113) target = $region12
    $region11: #{_lambda_.6} parent=5 // pred_region
      %s117 = ssub.s32 %s9, 1
      // Predicated region
      $region13: #{_lambda_.6} parent=11 // pred_check
        %p118 = pneg %p56
      $region14: #{_lambda_.6} parent=11 // pred_check_branch
        %120 = sbr.rel (%p118) target = $region16
      $region15: #{_lambda_.6} parent=11 // pred_region
        _
      $region16: #{_lambda_.6} parent=11 // pred_fallthru
        _
      // Predicated region
      $region17: #{_lambda_.6} parent=11 // pred_check
        %p121 = pneg %p77
      $region18: #{_lambda_.6} parent=11 // pred_check_branch
        %123 = sbr.rel (%p121) target = $region20
      $region19: #{_lambda_.6} parent=11 // pred_region
        _
      $region20: #{_lambda_.6} parent=11 // pred_fallthru
        _
    $region12: #{_lambda_.6} parent=5 // pred_fallthru
      _
    %p124 = scmp.lt.s32.totalorder %s9, 2
    // Predicated region
    $region21: #{_lambda_.6} parent=5 // pred_check
      %p125 = pneg %p124
    $region22: #{_lambda_.6} parent=5 // pred_check_branch
      %127 = sbr.rel (%p125) target = $region24
    $region23: #{_lambda_.6} parent=5 // pred_region
      // Predicated region
      $region25: #{_lambda_.6} parent=23 // pred_check
        %p128 = pneg %p29
      $region26: #{_lambda_.6} parent=23 // pred_check_branch
        %130 = sbr.rel (%p128) target = $region28
      $region27: #{_lambda_.6} parent=23 // pred_region
        %s131 = smul.u32 98, %s9
        %p132 = scmp.lt.s32.totalorder %s131, 195
        %s133 = scalar_select %p132, %s131, 195
        %s134 = smul.addr %s133, 4
        %s135 = scalar_lea.vmem %s0, %s134
        %s136 = smul.u32 98, %s9
      $region28: #{_lambda_.6} parent=23 // pred_fallthru
        _
    $region24: #{_lambda_.6} parent=5 // pred_fallthru
      _
    %p137 = scmp.le.s32.totalorder 1, %s9
    %p138 = scmp.lt.s32.totalorder %s9, 3
    %p139 = pnand %p137, %p138
    %p140 = pneg %p139
    // Predicated region
    $region29: #{_lambda_.6} parent=5 // pred_check
      _
    $region30: #{_lambda_.6} parent=5 // pred_check_branch
      %142 = sbr.rel (%p139) target = $region32
    $region31: #{_lambda_.6} parent=5 // pred_region
      %s143 = ssub.s32 %s9, 1
      %s144 = smul.u32 98, %s14
      %p145 = scmp.lt.s32.totalorder %s144, 195
      %s146 = scalar_select %p145, %s144, 195
      %s147 = smul.addr %s146, 4
      %s148 = scalar_lea.vmem %s0, %s147
      %p149 = pneg %p35
      %p150 = pneg %p32
      %p151 = pneg %p56
      %p152 = pneg %p53
      %p153 = pneg %p77
      %p154 = pneg %p74
      %p155 = pneg %p103
      %p156 = pneg %p100
      %s157 = smul.u32 98, %s14
      %p158 = scmp.lt.s32.totalorder %s157, 195
      %s159 = scalar_select %p158, %s157, 195
      %s160 = smul.addr %s159, 8
      %s161 = scalar_lea.vmem %s3, %s160
      %s162 = smul.u32 98, %s14
      %p163 = scmp.lt.s32.totalorder %s162, 195
      %s164 = scalar_select %p163, %s162, 195
      %s165 = smul.addr %s164, 4
      %s166 = scalar_lea.vmem %s0, %s165
      %s167 = smul.u32 98, %s14
      %s168 = smul.u32 98, %s14
      %p169 = scmp.lt.s32.totalorder %s168, 195
      %s170 = scalar_select %p169, %s168, 195
      %s171 = smul.addr %s170, 8
      %s172 = scalar_lea.vmem %s3, %s171
      %s173 = smul.u32 98, %s14
      %v175 = vld [vmem:[%s166] sm:$0xf]
      %v176 = vld [vmem:[%s166 + $0x4] sm:$0xf]
      %v177 = vld [vmem:[%s166 + $0x8] sm:$0xf]
      %v178 = vld [vmem:[%s166 + $0xc] sm:$0xf]
      %v179 = vld [vmem:[%s166 + $0x10] sm:$0xf]
      %v180 = vld [vmem:[%s166 + $0x14] sm:$0xf]
      %v181 = vld [vmem:[%s166 + $0x18] sm:$0xf]
      %v182 = vld [vmem:[%s166 + $0x1c] sm:$0xf]
      %v183 = vld [vmem:[%s166 + $0x20] sm:$0xf]
      %v184 = vld [vmem:[%s166 + $0x24] sm:$0xf]
      %v185 = vld [vmem:[%s166 + $0x28] sm:$0xf]
      %v186 = vld [vmem:[%s166 + $0x2c] sm:$0xf]
      %v187 = vld [vmem:[%s166 + $0x30] sm:$0xf]
      %v188 = vld [vmem:[%s166 + $0x34] sm:$0xf]
      %v189 = vld [vmem:[%s166 + $0x38] sm:$0xf]
      %v190 = vld [vmem:[%s166 + $0x3c] sm:$0xf]
      %v191 = vld [vmem:[%s166 + $0x40] sm:$0xf]
      %v192 = vld [vmem:[%s166 + $0x44] sm:$0xf]
      %v193 = vld [vmem:[%s166 + $0x48] sm:$0xf]
      %v194 = vld [vmem:[%s166 + $0x4c] sm:$0xf]
      %v195 = vld [vmem:[%s166 + $0x50] sm:$0xf]
      %v196 = vld [vmem:[%s166 + $0x54] sm:$0xf]
      %v197 = vld [vmem:[%s166 + $0x58] sm:$0xf]
      %v198 = vld [vmem:[%s166 + $0x5c] sm:$0xf]
      %v199 = vld [vmem:[%s166 + $0x60] sm:$0xf]
      %v200 = vld [vmem:[%s166 + $0x64] sm:$0xf]
      %v201 = vld [vmem:[%s166 + $0x68] sm:$0xf]
      %v202 = vld [vmem:[%s166 + $0x6c] sm:$0xf]
      %v203 = vld [vmem:[%s166 + $0x70] sm:$0xf]
      %v204 = vld [vmem:[%s166 + $0x74] sm:$0xf]
      %v205 = vld [vmem:[%s166 + $0x78] sm:$0xf]
      %v206 = vld [vmem:[%s166 + $0x7c] sm:$0xf]
      %v207 = vld [vmem:[%s166 + $0x80] sm:$0xf]
      %v208 = vld [vmem:[%s166 + $0x84] sm:$0xf]
      %v209 = vld [vmem:[%s166 + $0x88] sm:$0xf]
      %v210 = vld [vmem:[%s166 + $0x8c] sm:$0xf]
      %v211 = vld [vmem:[%s166 + $0x90] sm:$0xf]
      %v212 = vld [vmem:[%s166 + $0x94] sm:$0xf]
      %v213 = vld [vmem:[%s166 + $0x98] sm:$0xf]
      %v214 = vld [vmem:[%s166 + $0x9c] sm:$0xf]
      %v215 = vld [vmem:[%s166 + $0xa0] sm:$0xf]
      %v216 = vld [vmem:[%s166 + $0xa4] sm:$0xf]
      %v217 = vld [vmem:[%s166 + $0xa8] sm:$0xf]
      %v218 = vld [vmem:[%s166 + $0xac] sm:$0xf]
      %v219 = vld [vmem:[%s166 + $0xb0] sm:$0xf]
      %v220 = vld [vmem:[%s166 + $0xb4] sm:$0xf]
      %v221 = vld [vmem:[%s166 + $0xb8] sm:$0xf]
      %v222 = vld [vmem:[%s166 + $0xbc] sm:$0xf]
      %v223 = vld [vmem:[%s166 + $0xc0] sm:$0xf]
      %v224 = vld [vmem:[%s166 + $0xc4] sm:$0xf]
      %v225 = vld [vmem:[%s166 + $0xc8] sm:$0xf]
      %v226 = vld [vmem:[%s166 + $0xcc] sm:$0xf]
      %v227 = vld [vmem:[%s166 + $0xd0] sm:$0xf]
      %v228 = vld [vmem:[%s166 + $0xd4] sm:$0xf]
      %v229 = vld [vmem:[%s166 + $0xd8] sm:$0xf]
      %v230 = vld [vmem:[%s166 + $0xdc] sm:$0xf]
      %v231 = vld [vmem:[%s166 + $0xe0] sm:$0xf]
      %v232 = vld [vmem:[%s166 + $0xe4] sm:$0xf]
      %v233 = vld [vmem:[%s166 + $0xe8] sm:$0xf]
      %v234 = vld [vmem:[%s166 + $0xec] sm:$0xf]
      %v235 = vld [vmem:[%s166 + $0xf0] sm:$0xf]
      %v236 = vld [vmem:[%s166 + $0xf4] sm:$0xf]
      %v237 = vld [vmem:[%s166 + $0xf8] sm:$0xf]
      %v238 = vld [vmem:[%s166 + $0xfc] sm:$0xf]
      %v239 = vld [vmem:[%s166 + $0x100] sm:$0xf]
      %v240 = vld [vmem:[%s166 + $0x104] sm:$0xf]
      %v241 = vld [vmem:[%s166 + $0x108] sm:$0xf]
      %v242 = vld [vmem:[%s166 + $0x10c] sm:$0xf]
      %v243 = vld [vmem:[%s166 + $0x110] sm:$0xf]
      %v244 = vld [vmem:[%s166 + $0x114] sm:$0xf]
      %v245 = vld [vmem:[%s166 + $0x118] sm:$0xf]
      %v246 = vld [vmem:[%s166 + $0x11c] sm:$0xf]
      %v247 = vld [vmem:[%s166 + $0x120] sm:$0xf]
      %v248 = vld [vmem:[%s166 + $0x124] sm:$0xf]
      %v249 = vld [vmem:[%s166 + $0x128] sm:$0xf]
      %v250 = vld [vmem:[%s166 + $0x12c] sm:$0xf]
      %v251 = vld [vmem:[%s166 + $0x130] sm:$0xf]
      %v252 = vld [vmem:[%s166 + $0x134] sm:$0xf]
      %v253 = vld [vmem:[%s166 + $0x138] sm:$0xf]
      %v254 = vld [vmem:[%s166 + $0x13c] sm:$0xf]
      %v255 = vld [vmem:[%s166 + $0x140] sm:$0xf]
      %v256 = vld [vmem:[%s166 + $0x144] sm:$0xf]
      %v257 = vld [vmem:[%s166 + $0x148] sm:$0xf]
      %v258 = vld [vmem:[%s166 + $0x14c] sm:$0xf]
      %v259 = vld [vmem:[%s166 + $0x150] sm:$0xf]
      %v260 = vld [vmem:[%s166 + $0x154] sm:$0xf]
      %v261 = vld [vmem:[%s166 + $0x158] sm:$0xf]
      %v262 = vld [vmem:[%s166 + $0x15c] sm:$0xf]
      %v263 = vld [vmem:[%s166 + $0x160] sm:$0xf]
      %v264 = vld [vmem:[%s166 + $0x164] sm:$0xf]
      %v265 = vld [vmem:[%s166 + $0x168] sm:$0xf]
      %v266 = vld [vmem:[%s166 + $0x16c] sm:$0xf]
      %v267 = vld [vmem:[%s166 + $0x170] sm:$0xf]
      %v268 = vld [vmem:[%s166 + $0x174] sm:$0xf]
      %v269 = vld [vmem:[%s166 + $0x178] sm:$0xf]
      %v270 = vld [vmem:[%s166 + $0x17c] sm:$0xf]
      %v271 = vld [vmem:[%s166 + $0x180] sm:$0xf]
      %v272 = vld [vmem:[%s166 + $0x184] sm:$0xf]
      %v273 = vld [vmem:[%s1] sm:$0xf]
      %v274 = vld [vmem:[%s1 + $0x4] sm:$0xf]
      %v275 = vld [vmem:[%s1 + $0x8] sm:$0xf]
      %v276 = vld [vmem:[%s1 + $0xc] sm:$0xf]
      %v277 = vld [vmem:[%s1 + $0x10] sm:$0xf]
      %v278 = vld [vmem:[%s1 + $0x14] sm:$0xf]
      %v279 = vld [vmem:[%s1 + $0x18] sm:$0xf]
      %v280 = vld [vmem:[%s1 + $0x1c] sm:$0xf]
      %v281 = vld [vmem:[%s1 + $0x20] sm:$0xf]
      %v282 = vld [vmem:[%s2] sm:$0x1]
      %v284 = vlaneseq
      %v285 = vshrl.u32 %v284, 7
      %v286 = vsub.s32 0, %v285
      %v287 = vrot.slane %v282, %v286
      %v387 = vunpack.c.l.b16 %v175
      %v388 = vunpack.c.l.b16 %v176
      %v389 = vunpack.c.l.b16 %v177
      %v390 = vunpack.c.l.b16 %v178
      %v391 = vunpack.c.l.b16 %v179
      %v392 = vunpack.c.l.b16 %v180
      %v393 = vunpack.c.l.b16 %v181
      %v394 = vunpack.c.l.b16 %v182
      %v395 = vunpack.c.l.b16 %v183
      %v396 = vunpack.c.l.b16 %v184
      %v397 = vunpack.c.l.b16 %v185
      %v398 = vunpack.c.l.b16 %v186
      %v399 = vunpack.c.l.b16 %v187
      %v400 = vunpack.c.l.b16 %v188
      %v401 = vunpack.c.l.b16 %v189
      %v402 = vunpack.c.l.b16 %v190
      %v403 = vunpack.c.l.b16 %v191
      %v404 = vunpack.c.l.b16 %v192
      %v405 = vunpack.c.l.b16 %v193
      %v406 = vunpack.c.l.b16 %v194
      %v407 = vunpack.c.l.b16 %v195
      %v408 = vunpack.c.l.b16 %v196
      %v409 = vunpack.c.l.b16 %v197
      %v410 = vunpack.c.l.b16 %v198
      %v411 = vunpack.c.l.b16 %v199
      %v412 = vunpack.c.l.b16 %v200
      %v413 = vunpack.c.l.b16 %v201
      %v414 = vunpack.c.l.b16 %v202
      %v415 = vunpack.c.l.b16 %v203
      %v416 = vunpack.c.l.b16 %v204
      %v417 = vunpack.c.l.b16 %v205
      %v418 = vunpack.c.l.b16 %v206
      %v419 = vunpack.c.l.b16 %v207
      %v420 = vunpack.c.l.b16 %v208
      %v421 = vunpack.c.l.b16 %v209
      %v422 = vunpack.c.l.b16 %v210
      %v423 = vunpack.c.l.b16 %v211
      %v424 = vunpack.c.l.b16 %v212
      %v425 = vunpack.c.l.b16 %v213
      %v426 = vunpack.c.l.b16 %v214
      %v427 = vunpack.c.l.b16 %v215
      %v428 = vunpack.c.l.b16 %v216
      %v429 = vunpack.c.l.b16 %v217
      %v430 = vunpack.c.l.b16 %v218
      %v431 = vunpack.c.l.b16 %v219
      %v432 = vunpack.c.l.b16 %v220
      %v433 = vunpack.c.l.b16 %v221
      %v434 = vunpack.c.l.b16 %v222
      %v435 = vunpack.c.l.b16 %v223
      %v436 = vunpack.c.l.b16 %v224
      %v437 = vunpack.c.l.b16 %v225
      %v438 = vunpack.c.l.b16 %v226
      %v439 = vunpack.c.l.b16 %v227
      %v440 = vunpack.c.l.b16 %v228
      %v441 = vunpack.c.l.b16 %v229
      %v442 = vunpack.c.l.b16 %v230
      %v443 = vunpack.c.l.b16 %v231
      %v444 = vunpack.c.l.b16 %v232
      %v445 = vunpack.c.l.b16 %v233
      %v446 = vunpack.c.l.b16 %v234
      %v447 = vunpack.c.l.b16 %v235
      %v448 = vunpack.c.l.b16 %v236
      %v449 = vunpack.c.l.b16 %v237
      %v450 = vunpack.c.l.b16 %v238
      %v451 = vunpack.c.l.b16 %v239
      %v452 = vunpack.c.l.b16 %v240
      %v453 = vunpack.c.l.b16 %v241
      %v454 = vunpack.c.l.b16 %v242
      %v455 = vunpack.c.l.b16 %v243
      %v456 = vunpack.c.l.b16 %v244
      %v457 = vunpack.c.l.b16 %v245
      %v458 = vunpack.c.l.b16 %v246
      %v459 = vunpack.c.l.b16 %v247
      %v460 = vunpack.c.l.b16 %v248
      %v461 = vunpack.c.l.b16 %v249
      %v462 = vunpack.c.l.b16 %v250
      %v463 = vunpack.c.l.b16 %v251
      %v464 = vunpack.c.l.b16 %v252
      %v465 = vunpack.c.l.b16 %v253
      %v466 = vunpack.c.l.b16 %v254
      %v467 = vunpack.c.l.b16 %v255
      %v468 = vunpack.c.l.b16 %v256
      %v469 = vunpack.c.l.b16 %v257
      %v470 = vunpack.c.l.b16 %v258
      %v471 = vunpack.c.l.b16 %v259
      %v472 = vunpack.c.l.b16 %v260
      %v473 = vunpack.c.l.b16 %v261
      %v474 = vunpack.c.l.b16 %v262
      %v475 = vunpack.c.l.b16 %v263
      %v476 = vunpack.c.l.b16 %v264
      %v477 = vunpack.c.l.b16 %v265
      %v478 = vunpack.c.l.b16 %v266
      %v479 = vunpack.c.l.b16 %v267
      %v480 = vunpack.c.l.b16 %v268
      %v481 = vunpack.c.l.b16 %v269
      %v482 = vunpack.c.l.b16 %v270
      %v483 = vunpack.c.l.b16 %v271
      %v484 = vunpack.c.l.b16 %v272
      %v485 = vpack.c.b16 %v388, %v387
      %v486 = vpack.c.b16 %v390, %v389
      %v487 = vpack.c.b16 %v392, %v391
      %v488 = vpack.c.b16 %v394, %v393
      %v489 = vpack.c.b16 %v396, %v395
      %v490 = vpack.c.b16 %v398, %v397
      %v491 = vpack.c.b16 %v400, %v399
      %v492 = vpack.c.b16 %v402, %v401
      %v493 = vpack.c.b16 %v404, %v403
      %v494 = vpack.c.b16 %v406, %v405
      %v495 = vpack.c.b16 %v408, %v407
      %v496 = vpack.c.b16 %v410, %v409
      %v497 = vpack.c.b16 %v412, %v411
      %v498 = vpack.c.b16 %v414, %v413
      %v499 = vpack.c.b16 %v416, %v415
      %v500 = vpack.c.b16 %v418, %v417
      %v501 = vpack.c.b16 %v420, %v419
      %v502 = vpack.c.b16 %v422, %v421
      %v503 = vpack.c.b16 %v424, %v423
      %v504 = vpack.c.b16 %v426, %v425
      %v505 = vpack.c.b16 %v428, %v427
      %v506 = vpack.c.b16 %v430, %v429
      %v507 = vpack.c.b16 %v432, %v431
      %v508 = vpack.c.b16 %v434, %v433
      %v509 = vpack.c.b16 %v436, %v435
      %v510 = vpack.c.b16 %v438, %v437
      %v511 = vpack.c.b16 %v440, %v439
      %v512 = vpack.c.b16 %v442, %v441
      %v513 = vpack.c.b16 %v444, %v443
      %v514 = vpack.c.b16 %v446, %v445
      %v515 = vpack.c.b16 %v448, %v447
      %v516 = vpack.c.b16 %v450, %v449
      %v517 = vpack.c.b16 %v452, %v451
      %v518 = vpack.c.b16 %v454, %v453
      %v519 = vpack.c.b16 %v456, %v455
      %v520 = vpack.c.b16 %v458, %v457
      %v521 = vpack.c.b16 %v460, %v459
      %v522 = vpack.c.b16 %v462, %v461
      %v523 = vpack.c.b16 %v464, %v463
      %v524 = vpack.c.b16 %v466, %v465
      %v525 = vpack.c.b16 %v468, %v467
      %v526 = vpack.c.b16 %v470, %v469
      %v527 = vpack.c.b16 %v472, %v471
      %v528 = vpack.c.b16 %v474, %v473
      %v529 = vpack.c.b16 %v476, %v475
      %v530 = vpack.c.b16 %v478, %v477
      %v531 = vpack.c.b16 %v480, %v479
      %v532 = vpack.c.b16 %v482, %v481
      %v533 = vpack.c.b16 %v484, %v483
      %v543 = vunpack.c.l.b16 %v273
      %v544 = vunpack.c.l.b16 %v274
      %v545 = vunpack.c.l.b16 %v275
      %v546 = vunpack.c.l.b16 %v276
      %v547 = vunpack.c.l.b16 %v277
      %v548 = vunpack.c.l.b16 %v278
      %v549 = vunpack.c.l.b16 %v279
      %v550 = vunpack.c.l.b16 %v280
      %v551 = vunpack.c.l.b16 %v281
      %v552 = vpack.c.b16 %v544, %v543
      %v553 = vpack.c.b16 %v546, %v545
      %v554 = vpack.c.b16 %v548, %v547
      %v555 = vpack.c.b16 %v550, %v549
      %v556 = vpack.c.b16 %v551, %v551
      %vm561 = vcmask 588800
      %v563 = vsel %vm561, %v485, 0
      %v566 = vsel %vm561, %v486, 0
      %v569 = vsel %vm561, %v487, 0
      %v572 = vsel %vm561, %v488, 0
      %v575 = vsel %vm561, %v489, 0
      %v578 = vsel %vm561, %v490, 0
      %v581 = vsel %vm561, %v491, 0
      %v584 = vsel %vm561, %v492, 0
      %v587 = vsel %vm561, %v493, 0
      %v590 = vsel %vm561, %v494, 0
      %v593 = vsel %vm561, %v495, 0
      %v596 = vsel %vm561, %v496, 0
      %v599 = vsel %vm561, %v497, 0
      %v602 = vsel %vm561, %v498, 0
      %v605 = vsel %vm561, %v499, 0
      %v608 = vsel %vm561, %v500, 0
      %v611 = vsel %vm561, %v501, 0
      %v614 = vsel %vm561, %v502, 0
      %v617 = vsel %vm561, %v503, 0
      %v620 = vsel %vm561, %v504, 0
      %v623 = vsel %vm561, %v505, 0
      %v626 = vsel %vm561, %v506, 0
      %v629 = vsel %vm561, %v507, 0
      %v632 = vsel %vm561, %v508, 0
      %v635 = vsel %vm561, %v509, 0
      %v638 = vsel %vm561, %v510, 0
      %v641 = vsel %vm561, %v511, 0
      %v644 = vsel %vm561, %v512, 0
      %v647 = vsel %vm561, %v513, 0
      %v650 = vsel %vm561, %v514, 0
      %v653 = vsel %vm561, %v515, 0
      %v656 = vsel %vm561, %v516, 0
      %v659 = vsel %vm561, %v517, 0
      %v662 = vsel %vm561, %v518, 0
      %v665 = vsel %vm561, %v519, 0
      %v668 = vsel %vm561, %v520, 0
      %v671 = vsel %vm561, %v521, 0
      %v674 = vsel %vm561, %v522, 0
      %v677 = vsel %vm561, %v523, 0
      %v680 = vsel %vm561, %v524, 0
      %v683 = vsel %vm561, %v525, 0
      %v686 = vsel %vm561, %v526, 0
      %v689 = vsel %vm561, %v527, 0
      %v692 = vsel %vm561, %v528, 0
      %v695 = vsel %vm561, %v529, 0
      %v698 = vsel %vm561, %v530, 0
      %v701 = vsel %vm561, %v531, 0
      %v704 = vsel %vm561, %v532, 0
      %v707 = vsel %vm561, %v533, 0
      %vm709 = vcmask 1043456
      %v711 = vsel %vm709, %v556, 0
      %713 = vmatprep.subr.bf16.mxu0 0
      %714 = vmatpush1.bf16.msra.mxu0 %v552
      %715 = vmatprep.subr.bf16.mxu0 0
      %716 = vmatpush1.bf16.msra.mxu0 %v553
      %717 = vmatprep.subr.bf16.mxu0 0
      %718 = vmatpush1.bf16.msra.mxu0 %v554
      %719 = vmatprep.subr.bf16.mxu0 0
      %720 = vmatpush1.bf16.msra.mxu0 %v555
      %721 = vmatprep.subr.bf16.mxu0 0
      %722 = vmatpush1.bf16.msra.mxu0 %v711
      %723 = vmatprep.subr.bf16.mxu0 0
      %724 = vmatpush1.bf16.msra.mxu0 0
      %725 = vmatprep.subr.bf16.mxu0 0
      %726 = vmatpush1.bf16.msra.mxu0 0
      %727 = vmatprep.subr.bf16.mxu0 0
      %728 = vmatpush1.bf16.msra.mxu0 0
      %729 = vmatprep.subr.bf16.mxu0 0
      %730 = vmatpush1.bf16.msra.mxu0 0
      %731 = vmatprep.subr.bf16.mxu0 0
      %732 = vmatpush1.bf16.msra.mxu0 0
      %733 = vmatprep.subr.bf16.mxu0 0
      %734 = vmatpush1.bf16.msra.mxu0 0
      %735 = vmatprep.subr.bf16.mxu0 0
      %736 = vmatpush1.bf16.msra.mxu0 0
      %737 = vmatprep.subr.bf16.mxu0 0
      %738 = vmatpush1.bf16.msra.mxu0 0
      %739 = vmatprep.subr.bf16.mxu0 0
      %740 = vmatpush1.bf16.msra.mxu0 0
      %741 = vmatprep.subr.bf16.mxu0 0
      %742 = vmatpush1.bf16.msra.mxu0 0
      %743 = vmatprep.subr.bf16.mxu0 0
      %744 = vmatpush1.bf16.msra.mxu0 0
      %745 = vmatprep.mubr.bf16.mxu0 0
      %746 = vmatmul.mubr.bf16.gmra.mrb[0].mxu0 %v563
      %v747 = vpop.f32.mrb[0].mxu0
      %v748 = vadd.f32 %v287, %v747
      %v749 = vpop.f32.mrb[0].mxu0
      %v750 = vpop.f32.mrb[0].mxu0
      %v751 = vadd.f32 %v287, %v750
      %v752 = vpop.f32.mrb[0].mxu0
      %753 = vmatprep.mubr.bf16.mxu0 0
      %754 = vmatmul.mubr.bf16.gmra.mrb[0].mxu0 %v566
      %v755 = vpop.f32.mrb[0].mxu0
      %v756 = vadd.f32 %v287, %v755
      %v757 = vpop.f32.mrb[0].mxu0
      %v758 = vpop.f32.mrb[0].mxu0
      %v759 = vadd.f32 %v287, %v758
      %v760 = vpop.f32.mrb[0].mxu0
      %761 = vmatprep.mubr.bf16.mxu0 0
      %762 = vmatmul.mubr.bf16.gmra.mrb[0].mxu0 %v569
      %v763 = vpop.f32.mrb[0].mxu0
      %v764 = vadd.f32 %v287, %v763
      %v765 = vpop.f32.mrb[0].mxu0
      %v766 = vpop.f32.mrb[0].mxu0
      %v767 = vadd.f32 %v287, %v766
      %v768 = vpop.f32.mrb[0].mxu0
      %769 = vmatprep.mubr.bf16.mxu0 0
      %770 = vmatmul.mubr.bf16.gmra.mrb[0].mxu0 %v572
      %v771 = vpop.f32.mrb[0].mxu0
      %v772 = vadd.f32 %v287, %v771
      %v773 = vpop.f32.mrb[0].mxu0
      %v774 = vpop.f32.mrb[0].mxu0
      %v775 = vadd.f32 %v287, %v774
      %v776 = vpop.f32.mrb[0].mxu0
      %777 = vmatprep.mubr.bf16.mxu0 0
      %778 = vmatmul.mubr.bf16.gmra.mrb[0].mxu0 %v575
      %v779 = vpop.f32.mrb[0].mxu0
      %v780 = vadd.f32 %v287, %v779
      %v781 = vpop.f32.mrb[0].mxu0
      %v782 = vpop.f32.mrb[0].mxu0
      %v783 = vadd.f32 %v287, %v782
      %v784 = vpop.f32.mrb[0].mxu0
      %785 = vmatprep.mubr.bf16.mxu0 0
      %786 = vmatmul.mubr.bf16.gmra.mrb[0].mxu0 %v578
      %v787 = vpop.f32.mrb[0].mxu0
      %v788 = vadd.f32 %v287, %v787
      %v789 = vpop.f32.mrb[0].mxu0
      %v790 = vpop.f32.mrb[0].mxu0
      %v791 = vadd.f32 %v287, %v790
      %v792 = vpop.f32.mrb[0].mxu0
      %793 = vmatprep.mubr.bf16.mxu0 0
      %794 = vmatmul.mubr.bf16.gmra.mrb[0].mxu0 %v581
      %v795 = vpop.f32.mrb[0].mxu0
      %v796 = vadd.f32 %v287, %v795
      %v797 = vpop.f32.mrb[0].mxu0
      %v798 = vpop.f32.mrb[0].mxu0
      %v799 = vadd.f32 %v287, %v798
      %v800 = vpop.f32.mrb[0].mxu0
      %801 = vmatprep.mubr.bf16.mxu0 0
      %802 = vmatmul.mubr.bf16.gmra.mrb[0].mxu0 %v584
      %v803 = vpop.f32.mrb[0].mxu0
      %v804 = vadd.f32 %v287, %v803
      %v805 = vpop.f32.mrb[0].mxu0
      %v806 = vpop.f32.mrb[0].mxu0
      %v807 = vadd.f32 %v287, %v806
      %v808 = vpop.f32.mrb[0].mxu0
      %809 = vmatprep.mubr.bf16.mxu0 0
      %810 = vmatmul.mubr.bf16.gmra.mrb[0].mxu0 %v587
      %v811 = vpop.f32.mrb[0].mxu0
      %v812 = vadd.f32 %v287, %v811
      %v813 = vpop.f32.mrb[0].mxu0
      %v814 = vpop.f32.mrb[0].mxu0
      %v815 = vadd.f32 %v287, %v814
      %v816 = vpop.f32.mrb[0].mxu0
      %817 = vmatprep.mubr.bf16.mxu0 0
      %818 = vmatmul.mubr.bf16.gmra.mrb[0].mxu0 %v590
      %v819 = vpop.f32.mrb[0].mxu0
      %v820 = vadd.f32 %v287, %v819
      %v821 = vpop.f32.mrb[0].mxu0
      %v822 = vpop.f32.mrb[0].mxu0
      %v823 = vadd.f32 %v287, %v822
      %v824 = vpop.f32.mrb[0].mxu0
      %825 = vmatprep.mubr.bf16.mxu0 0
      %826 = vmatmul.mubr.bf16.gmra.mrb[0].mxu0 %v593
      %v827 = vpop.f32.mrb[0].mxu0
      %v828 = vadd.f32 %v287, %v827
      %v829 = vpop.f32.mrb[0].mxu0
      %v830 = vpop.f32.mrb[0].mxu0
      %v831 = vadd.f32 %v287, %v830
      %v832 = vpop.f32.mrb[0].mxu0
      %833 = vmatprep.mubr.bf16.mxu0 0
      %834 = vmatmul.mubr.bf16.gmra.mrb[0].mxu0 %v596
      %v835 = vpop.f32.mrb[0].mxu0
      %v836 = vadd.f32 %v287, %v835
      %v837 = vpop.f32.mrb[0].mxu0
      %v838 = vpop.f32.mrb[0].mxu0
      %v839 = vadd.f32 %v287, %v838
      %v840 = vpop.f32.mrb[0].mxu0
      %841 = vmatprep.mubr.bf16.mxu0 0
      %842 = vmatmul.mubr.bf16.gmra.mrb[0].mxu0 %v599
      %v843 = vpop.f32.mrb[0].mxu0
      %v844 = vadd.f32 %v287, %v843
      %v845 = vpop.f32.mrb[0].mxu0
      %v846 = vpop.f32.mrb[0].mxu0
      %v847 = vadd.f32 %v287, %v846
      %v848 = vpop.f32.mrb[0].mxu0
      %849 = vmatprep.mubr.bf16.mxu0 0
      %850 = vmatmul.mubr.bf16.gmra.mrb[0].mxu0 %v602
      %v851 = vpop.f32.mrb[0].mxu0
      %v852 = vadd.f32 %v287, %v851
      %v853 = vpop.f32.mrb[0].mxu0
      %v854 = vpop.f32.mrb[0].mxu0
      %v855 = vadd.f32 %v287, %v854
      %v856 = vpop.f32.mrb[0].mxu0
      %857 = vmatprep.mubr.bf16.mxu0 0
      %858 = vmatmul.mubr.bf16.gmra.mrb[0].mxu0 %v605
      %v859 = vpop.f32.mrb[0].mxu0
      %v860 = vadd.f32 %v287, %v859
      %v861 = vpop.f32.mrb[0].mxu0
      %v862 = vpop.f32.mrb[0].mxu0
      %v863 = vadd.f32 %v287, %v862
      %v864 = vpop.f32.mrb[0].mxu0
      %865 = vmatprep.mubr.bf16.mxu0 0
      %866 = vmatmul.mubr.bf16.gmra.mrb[0].mxu0 %v608
      %v867 = vpop.f32.mrb[0].mxu0
      %v868 = vadd.f32 %v287, %v867
      %v869 = vpop.f32.mrb[0].mxu0
      %v870 = vpop.f32.mrb[0].mxu0
      %v871 = vadd.f32 %v287, %v870
      %v872 = vpop.f32.mrb[0].mxu0
      %873 = vmatprep.mubr.bf16.mxu0 0
      %874 = vmatmul.mubr.bf16.gmra.mrb[0].mxu0 %v611
      %v875 = vpop.f32.mrb[0].mxu0
      %v876 = vadd.f32 %v287, %v875
      %v877 = vpop.f32.mrb[0].mxu0
      %v878 = vpop.f32.mrb[0].mxu0
      %v879 = vadd.f32 %v287, %v878
      %v880 = vpop.f32.mrb[0].mxu0
      %881 = vmatprep.mubr.bf16.mxu0 0
      %882 = vmatmul.mubr.bf16.gmra.mrb[0].mxu0 %v614
      %v883 = vpop.f32.mrb[0].mxu0
      %v884 = vadd.f32 %v287, %v883
      %v885 = vpop.f32.mrb[0].mxu0
      %v886 = vpop.f32.mrb[0].mxu0
      %v887 = vadd.f32 %v287, %v886
      %v888 = vpop.f32.mrb[0].mxu0
      %889 = vmatprep.mubr.bf16.mxu0 0
      %890 = vmatmul.mubr.bf16.gmra.mrb[0].mxu0 %v617
      %v891 = vpop.f32.mrb[0].mxu0
      %v892 = vadd.f32 %v287, %v891
      %v893 = vpop.f32.mrb[0].mxu0
      %v894 = vpop.f32.mrb[0].mxu0
      %v895 = vadd.f32 %v287, %v894
      %v896 = vpop.f32.mrb[0].mxu0
      %897 = vmatprep.mubr.bf16.mxu0 0
      %898 = vmatmul.mubr.bf16.gmra.mrb[0].mxu0 %v620
      %v899 = vpop.f32.mrb[0].mxu0
      %v900 = vadd.f32 %v287, %v899
      %v901 = vpop.f32.mrb[0].mxu0
      %v902 = vpop.f32.mrb[0].mxu0
      %v903 = vadd.f32 %v287, %v902
      %v904 = vpop.f32.mrb[0].mxu0
      %905 = vmatprep.mubr.bf16.mxu0 0
      %906 = vmatmul.mubr.bf16.gmra.mrb[0].mxu0 %v623
      %v907 = vpop.f32.mrb[0].mxu0
      %v908 = vadd.f32 %v287, %v907
      %v909 = vpop.f32.mrb[0].mxu0
      %v910 = vpop.f32.mrb[0].mxu0
      %v911 = vadd.f32 %v287, %v910
      %v912 = vpop.f32.mrb[0].mxu0
      %913 = vmatprep.mubr.bf16.mxu0 0
      %914 = vmatmul.mubr.bf16.gmra.mrb[0].mxu0 %v626
      %v915 = vpop.f32.mrb[0].mxu0
      %v916 = vadd.f32 %v287, %v915
      %v917 = vpop.f32.mrb[0].mxu0
      %v918 = vpop.f32.mrb[0].mxu0
      %v919 = vadd.f32 %v287, %v918
      %v920 = vpop.f32.mrb[0].mxu0
      %921 = vmatprep.mubr.bf16.mxu0 0
      %922 = vmatmul.mubr.bf16.gmra.mrb[0].mxu0 %v629
      %v923 = vpop.f32.mrb[0].mxu0
      %v924 = vadd.f32 %v287, %v923
      %v925 = vpop.f32.mrb[0].mxu0
      %v926 = vpop.f32.mrb[0].mxu0
      %v927 = vadd.f32 %v287, %v926
      %v928 = vpop.f32.mrb[0].mxu0
      %929 = vmatprep.mubr.bf16.mxu0 0
      %930 = vmatmul.mubr.bf16.gmra.mrb[0].mxu0 %v632
      %v931 = vpop.f32.mrb[0].mxu0
      %v932 = vadd.f32 %v287, %v931
      %v933 = vpop.f32.mrb[0].mxu0
      %v934 = vpop.f32.mrb[0].mxu0
      %v935 = vadd.f32 %v287, %v934
      %v936 = vpop.f32.mrb[0].mxu0
      %937 = vmatprep.mubr.bf16.mxu0 0
      %938 = vmatmul.mubr.bf16.gmra.mrb[0].mxu0 %v635
      %v939 = vpop.f32.mrb[0].mxu0
      %v940 = vadd.f32 %v287, %v939
      %v941 = vpop.f32.mrb[0].mxu0
      %v942 = vpop.f32.mrb[0].mxu0
      %v943 = vadd.f32 %v287, %v942
      %v944 = vpop.f32.mrb[0].mxu0
      %945 = vmatprep.mubr.bf16.mxu0 0
      %946 = vmatmul.mubr.bf16.gmra.mrb[0].mxu0 %v638
      %v947 = vpop.f32.mrb[0].mxu0
      %v948 = vadd.f32 %v287, %v947
      %v949 = vpop.f32.mrb[0].mxu0
      %v950 = vpop.f32.mrb[0].mxu0
      %v951 = vadd.f32 %v287, %v950
      %v952 = vpop.f32.mrb[0].mxu0
      %953 = vmatprep.mubr.bf16.mxu0 0
      %954 = vmatmul.mubr.bf16.gmra.mrb[0].mxu0 %v641
      %v955 = vpop.f32.mrb[0].mxu0
      %v956 = vadd.f32 %v287, %v955
      %v957 = vpop.f32.mrb[0].mxu0
      %v958 = vpop.f32.mrb[0].mxu0
      %v959 = vadd.f32 %v287, %v958
      %v960 = vpop.f32.mrb[0].mxu0
      %961 = vmatprep.mubr.bf16.mxu0 0
      %962 = vmatmul.mubr.bf16.gmra.mrb[0].mxu0 %v644
      %v963 = vpop.f32.mrb[0].mxu0
      %v964 = vadd.f32 %v287, %v963
      %v965 = vpop.f32.mrb[0].mxu0
      %v966 = vpop.f32.mrb[0].mxu0
      %v967 = vadd.f32 %v287, %v966
      %v968 = vpop.f32.mrb[0].mxu0
      %969 = vmatprep.mubr.bf16.mxu0 0
      %970 = vmatmul.mubr.bf16.gmra.mrb[0].mxu0 %v647
      %v971 = vpop.f32.mrb[0].mxu0
      %v972 = vadd.f32 %v287, %v971
      %v973 = vpop.f32.mrb[0].mxu0
      %v974 = vpop.f32.mrb[0].mxu0
      %v975 = vadd.f32 %v287, %v974
      %v976 = vpop.f32.mrb[0].mxu0
      %977 = vmatprep.mubr.bf16.mxu0 0
      %978 = vmatmul.mubr.bf16.gmra.mrb[0].mxu0 %v650
      %v979 = vpop.f32.mrb[0].mxu0
      %v980 = vadd.f32 %v287, %v979
      %v981 = vpop.f32.mrb[0].mxu0
      %v982 = vpop.f32.mrb[0].mxu0
      %v983 = vadd.f32 %v287, %v982
      %v984 = vpop.f32.mrb[0].mxu0
      %985 = vmatprep.mubr.bf16.mxu0 0
      %986 = vmatmul.mubr.bf16.gmra.mrb[0].mxu0 %v653
      %v987 = vpop.f32.mrb[0].mxu0
      %v988 = vadd.f32 %v287, %v987
      %v989 = vpop.f32.mrb[0].mxu0
      %v990 = vpop.f32.mrb[0].mxu0
      %v991 = vadd.f32 %v287, %v990
      %v992 = vpop.f32.mrb[0].mxu0
      %993 = vmatprep.mubr.bf16.mxu0 0
      %994 = vmatmul.mubr.bf16.gmra.mrb[0].mxu0 %v656
      %v995 = vpop.f32.mrb[0].mxu0
      %v996 = vadd.f32 %v287, %v995
      %v997 = vpop.f32.mrb[0].mxu0
      %v998 = vpop.f32.mrb[0].mxu0
      %v999 = vadd.f32 %v287, %v998
      %v1000 = vpop.f32.mrb[0].mxu0
      %1001 = vmatprep.mubr.bf16.mxu0 0
      %1002 = vmatmul.mubr.bf16.gmra.mrb[0].mxu0 %v659
      %v1003 = vpop.f32.mrb[0].mxu0
      %v1004 = vadd.f32 %v287, %v1003
      %v1005 = vpop.f32.mrb[0].mxu0
      %v1006 = vpop.f32.mrb[0].mxu0
      %v1007 = vadd.f32 %v287, %v1006
      %v1008 = vpop.f32.mrb[0].mxu0
      %1009 = vmatprep.mubr.bf16.mxu0 0
      %1010 = vmatmul.mubr.bf16.gmra.mrb[0].mxu0 %v662
      %v1011 = vpop.f32.mrb[0].mxu0
      %v1012 = vadd.f32 %v287, %v1011
      %v1013 = vpop.f32.mrb[0].mxu0
      %v1014 = vpop.f32.mrb[0].mxu0
      %v1015 = vadd.f32 %v287, %v1014
      %v1016 = vpop.f32.mrb[0].mxu0
      %1017 = vmatprep.mubr.bf16.mxu0 0
      %1018 = vmatmul.mubr.bf16.gmra.mrb[0].mxu0 %v665
      %v1019 = vpop.f32.mrb[0].mxu0
      %v1020 = vadd.f32 %v287, %v1019
      %v1021 = vpop.f32.mrb[0].mxu0
      %v1022 = vpop.f32.mrb[0].mxu0
      %v1023 = vadd.f32 %v287, %v1022
      %v1024 = vpop.f32.mrb[0].mxu0
      %1025 = vmatprep.mubr.bf16.mxu0 0
      %1026 = vmatmul.mubr.bf16.gmra.mrb[0].mxu0 %v668
      %v1027 = vpop.f32.mrb[0].mxu0
      %v1028 = vadd.f32 %v287, %v1027
      %v1029 = vpop.f32.mrb[0].mxu0
      %v1030 = vpop.f32.mrb[0].mxu0
      %v1031 = vadd.f32 %v287, %v1030
      %v1032 = vpop.f32.mrb[0].mxu0
      %1033 = vmatprep.mubr.bf16.mxu0 0
      %1034 = vmatmul.mubr.bf16.gmra.mrb[0].mxu0 %v671
      %v1035 = vpop.f32.mrb[0].mxu0
      %v1036 = vadd.f32 %v287, %v1035
      %v1037 = vpop.f32.mrb[0].mxu0
      %v1038 = vpop.f32.mrb[0].mxu0
      %v1039 = vadd.f32 %v287, %v1038
      %v1040 = vpop.f32.mrb[0].mxu0
      %1041 = vmatprep.mubr.bf16.mxu0 0
      %1042 = vmatmul.mubr.bf16.gmra.mrb[0].mxu0 %v674
      %v1043 = vpop.f32.mrb[0].mxu0
      %v1044 = vadd.f32 %v287, %v1043
      %v1045 = vpop.f32.mrb[0].mxu0
      %v1046 = vpop.f32.mrb[0].mxu0
      %v1047 = vadd.f32 %v287, %v1046
      %v1048 = vpop.f32.mrb[0].mxu0
      %1049 = vmatprep.mubr.bf16.mxu0 0
      %1050 = vmatmul.mubr.bf16.gmra.mrb[0].mxu0 %v677
      %v1051 = vpop.f32.mrb[0].mxu0
      %v1052 = vadd.f32 %v287, %v1051
      %v1053 = vpop.f32.mrb[0].mxu0
      %v1054 = vpop.f32.mrb[0].mxu0
      %v1055 = vadd.f32 %v287, %v1054
      %v1056 = vpop.f32.mrb[0].mxu0
      %1057 = vmatprep.mubr.bf16.mxu0 0
      %1058 = vmatmul.mubr.bf16.gmra.mrb[0].mxu0 %v680
      %v1059 = vpop.f32.mrb[0].mxu0
      %v1060 = vadd.f32 %v287, %v1059
      %v1061 = vpop.f32.mrb[0].mxu0
      %v1062 = vpop.f32.mrb[0].mxu0
      %v1063 = vadd.f32 %v287, %v1062
      %v1064 = vpop.f32.mrb[0].mxu0
      %1065 = vmatprep.mubr.bf16.mxu0 0
      %1066 = vmatmul.mubr.bf16.gmra.mrb[0].mxu0 %v683
      %v1067 = vpop.f32.mrb[0].mxu0
      %v1068 = vadd.f32 %v287, %v1067
      %v1069 = vpop.f32.mrb[0].mxu0
      %v1070 = vpop.f32.mrb[0].mxu0
      %v1071 = vadd.f32 %v287, %v1070
      %v1072 = vpop.f32.mrb[0].mxu0
      %1073 = vmatprep.mubr.bf16.mxu0 0
      %1074 = vmatmul.mubr.bf16.gmra.mrb[0].mxu0 %v686
      %v1075 = vpop.f32.mrb[0].mxu0
      %v1076 = vadd.f32 %v287, %v1075
      %v1077 = vpop.f32.mrb[0].mxu0
      %v1078 = vpop.f32.mrb[0].mxu0
      %v1079 = vadd.f32 %v287, %v1078
      %v1080 = vpop.f32.mrb[0].mxu0
      %1081 = vmatprep.mubr.bf16.mxu0 0
      %1082 = vmatmul.mubr.bf16.gmra.mrb[0].mxu0 %v689
      %v1083 = vpop.f32.mrb[0].mxu0
      %v1084 = vadd.f32 %v287, %v1083
      %v1085 = vpop.f32.mrb[0].mxu0
      %v1086 = vpop.f32.mrb[0].mxu0
      %v1087 = vadd.f32 %v287, %v1086
      %v1088 = vpop.f32.mrb[0].mxu0
      %1089 = vmatprep.mubr.bf16.mxu0 0
      %1090 = vmatmul.mubr.bf16.gmra.mrb[0].mxu0 %v692
      %v1091 = vpop.f32.mrb[0].mxu0
      %v1092 = vadd.f32 %v287, %v1091
      %v1093 = vpop.f32.mrb[0].mxu0
      %v1094 = vpop.f32.mrb[0].mxu0
      %v1095 = vadd.f32 %v287, %v1094
      %v1096 = vpop.f32.mrb[0].mxu0
      %1097 = vmatprep.mubr.bf16.mxu0 0
      %1098 = vmatmul.mubr.bf16.gmra.mrb[0].mxu0 %v695
      %v1099 = vpop.f32.mrb[0].mxu0
      %v1100 = vadd.f32 %v287, %v1099
      %v1101 = vpop.f32.mrb[0].mxu0
      %v1102 = vpop.f32.mrb[0].mxu0
      %v1103 = vadd.f32 %v287, %v1102
      %v1104 = vpop.f32.mrb[0].mxu0
      %1105 = vmatprep.mubr.bf16.mxu0 0
      %1106 = vmatmul.mubr.bf16.gmra.mrb[0].mxu0 %v698
      %v1107 = vpop.f32.mrb[0].mxu0
      %v1108 = vadd.f32 %v287, %v1107
      %v1109 = vpop.f32.mrb[0].mxu0
      %v1110 = vpop.f32.mrb[0].mxu0
      %v1111 = vadd.f32 %v287, %v1110
      %v1112 = vpop.f32.mrb[0].mxu0
      %1113 = vmatprep.mubr.bf16.mxu0 0
      %1114 = vmatmul.mubr.bf16.gmra.mrb[0].mxu0 %v701
      %v1115 = vpop.f32.mrb[0].mxu0
      %v1116 = vadd.f32 %v287, %v1115
      %v1117 = vpop.f32.mrb[0].mxu0
      %v1118 = vpop.f32.mrb[0].mxu0
      %v1119 = vadd.f32 %v287, %v1118
      %v1120 = vpop.f32.mrb[0].mxu0
      %1121 = vmatprep.mubr.bf16.mxu0 0
      %1122 = vmatmul.mubr.bf16.gmra.mrb[0].mxu0 %v704
      %v1123 = vpop.f32.mrb[0].mxu0
      %v1124 = vadd.f32 %v287, %v1123
      %v1125 = vpop.f32.mrb[0].mxu0
      %v1126 = vpop.f32.mrb[0].mxu0
      %v1127 = vadd.f32 %v287, %v1126
      %v1128 = vpop.f32.mrb[0].mxu0
      %1129 = vmatprep.mubr.bf16.mxu0 0
      %1130 = vmatmul.mubr.bf16.gmra.mrb[0].mxu0 %v707
      %v1131 = vpop.f32.mrb[0].mxu0
      %v1132 = vadd.f32 %v287, %v1131
      %v1133 = vpop.f32.mrb[0].mxu0
      %v1134 = vpop.f32.mrb[0].mxu0
      %v1135 = vadd.f32 %v287, %v1134
      %v1136 = vpop.f32.mrb[0].mxu0
      %1137 = vdwg.mxu0
      %vm1138 = vcmask 130048
      %1139 = vst.msk [vmem:[%s172] sm:$0xff] %vm1138, %v748
      %1140 = vst.msk [vmem:[%s172 + $0x8] sm:$0xff] %vm1138, %v751
      %1141 = vst.msk [vmem:[%s172 + $0x10] sm:$0xff] %vm1138, %v756
      %1142 = vst.msk [vmem:[%s172 + $0x18] sm:$0xff] %vm1138, %v759
      %1143 = vst.msk [vmem:[%s172 + $0x20] sm:$0xff] %vm1138, %v764
      %1144 = vst.msk [vmem:[%s172 + $0x28] sm:$0xff] %vm1138, %v767
      %1145 = vst.msk [vmem:[%s172 + $0x30] sm:$0xff] %vm1138, %v772
      %1146 = vst.msk [vmem:[%s172 + $0x38] sm:$0xff] %vm1138, %v775
      %1147 = vst.msk [vmem:[%s172 + $0x40] sm:$0xff] %vm1138, %v780
      %1148 = vst.msk [vmem:[%s172 + $0x48] sm:$0xff] %vm1138, %v783
      %1149 = vst.msk [vmem:[%s172 + $0x50] sm:$0xff] %vm1138, %v788
      %1150 = vst.msk [vmem:[%s172 + $0x58] sm:$0xff] %vm1138, %v791
      %1151 = vst.msk [vmem:[%s172 + $0x60] sm:$0xff] %vm1138, %v796
      %1152 = vst.msk [vmem:[%s172 + $0x68] sm:$0xff] %vm1138, %v799
      %1153 = vst.msk [vmem:[%s172 + $0x70] sm:$0xff] %vm1138, %v804
      %1154 = vst.msk [vmem:[%s172 + $0x78] sm:$0xff] %vm1138, %v807
      %1155 = vst.msk [vmem:[%s172 + $0x80] sm:$0xff] %vm1138, %v812
      %1156 = vst.msk [vmem:[%s172 + $0x88] sm:$0xff] %vm1138, %v815
      %1157 = vst.msk [vmem:[%s172 + $0x90] sm:$0xff] %vm1138, %v820
      %1158 = vst.msk [vmem:[%s172 + $0x98] sm:$0xff] %vm1138, %v823
      %1159 = vst.msk [vmem:[%s172 + $0xa0] sm:$0xff] %vm1138, %v828
      %1160 = vst.msk [vmem:[%s172 + $0xa8] sm:$0xff] %vm1138, %v831
      %1161 = vst.msk [vmem:[%s172 + $0xb0] sm:$0xff] %vm1138, %v836
      %1162 = vst.msk [vmem:[%s172 + $0xb8] sm:$0xff] %vm1138, %v839
      %1163 = vst.msk [vmem:[%s172 + $0xc0] sm:$0xff] %vm1138, %v844
      %1164 = vst.msk [vmem:[%s172 + $0xc8] sm:$0xff] %vm1138, %v847
      %1165 = vst.msk [vmem:[%s172 + $0xd0] sm:$0xff] %vm1138, %v852
      %1166 = vst.msk [vmem:[%s172 + $0xd8] sm:$0xff] %vm1138, %v855
      %1167 = vst.msk [vmem:[%s172 + $0xe0] sm:$0xff] %vm1138, %v860
      %1168 = vst.msk [vmem:[%s172 + $0xe8] sm:$0xff] %vm1138, %v863
      %1169 = vst.msk [vmem:[%s172 + $0xf0] sm:$0xff] %vm1138, %v868
      %1170 = vst.msk [vmem:[%s172 + $0xf8] sm:$0xff] %vm1138, %v871
      %1171 = vst.msk [vmem:[%s172 + $0x100] sm:$0xff] %vm1138, %v876
      %1172 = vst.msk [vmem:[%s172 + $0x108] sm:$0xff] %vm1138, %v879
      %1173 = vst.msk [vmem:[%s172 + $0x110] sm:$0xff] %vm1138, %v884
      %1174 = vst.msk [vmem:[%s172 + $0x118] sm:$0xff] %vm1138, %v887
      %1175 = vst.msk [vmem:[%s172 + $0x120] sm:$0xff] %vm1138, %v892
      %1176 = vst.msk [vmem:[%s172 + $0x128] sm:$0xff] %vm1138, %v895
      %1177 = vst.msk [vmem:[%s172 + $0x130] sm:$0xff] %vm1138, %v900
      %1178 = vst.msk [vmem:[%s172 + $0x138] sm:$0xff] %vm1138, %v903
      %1179 = vst.msk [vmem:[%s172 + $0x140] sm:$0xff] %vm1138, %v908
      %1180 = vst.msk [vmem:[%s172 + $0x148] sm:$0xff] %vm1138, %v911
      %1181 = vst.msk [vmem:[%s172 + $0x150] sm:$0xff] %vm1138, %v916
      %1182 = vst.msk [vmem:[%s172 + $0x158] sm:$0xff] %vm1138, %v919
      %1183 = vst.msk [vmem:[%s172 + $0x160] sm:$0xff] %vm1138, %v924
      %1184 = vst.msk [vmem:[%s172 + $0x168] sm:$0xff] %vm1138, %v927
      %1185 = vst.msk [vmem:[%s172 + $0x170] sm:$0xff] %vm1138, %v932
      %1186 = vst.msk [vmem:[%s172 + $0x178] sm:$0xff] %vm1138, %v935
      %1187 = vst.msk [vmem:[%s172 + $0x180] sm:$0xff] %vm1138, %v940
      %1188 = vst.msk [vmem:[%s172 + $0x188] sm:$0xff] %vm1138, %v943
      %1189 = vst.msk [vmem:[%s172 + $0x190] sm:$0xff] %vm1138, %v948
      %1190 = vst.msk [vmem:[%s172 + $0x198] sm:$0xff] %vm1138, %v951
      %1191 = vst.msk [vmem:[%s172 + $0x1a0] sm:$0xff] %vm1138, %v956
      %1192 = vst.msk [vmem:[%s172 + $0x1a8] sm:$0xff] %vm1138, %v959
      %1193 = vst.msk [vmem:[%s172 + $0x1b0] sm:$0xff] %vm1138, %v964
      %1194 = vst.msk [vmem:[%s172 + $0x1b8] sm:$0xff] %vm1138, %v967
      %1195 = vst.msk [vmem:[%s172 + $0x1c0] sm:$0xff] %vm1138, %v972
      %1196 = vst.msk [vmem:[%s172 + $0x1c8] sm:$0xff] %vm1138, %v975
      %1197 = vst.msk [vmem:[%s172 + $0x1d0] sm:$0xff] %vm1138, %v980
      %1198 = vst.msk [vmem:[%s172 + $0x1d8] sm:$0xff] %vm1138, %v983
      %1199 = vst.msk [vmem:[%s172 + $0x1e0] sm:$0xff] %vm1138, %v988
      %1200 = vst.msk [vmem:[%s172 + $0x1e8] sm:$0xff] %vm1138, %v991
      %1201 = vst.msk [vmem:[%s172 + $0x1f0] sm:$0xff] %vm1138, %v996
      %1202 = vst.msk [vmem:[%s172 + $0x1f8] sm:$0xff] %vm1138, %v999
      %1203 = vst.msk [vmem:[%s172 + $0x200] sm:$0xff] %vm1138, %v1004
      %1204 = vst.msk [vmem:[%s172 + $0x208] sm:$0xff] %vm1138, %v1007
      %1205 = vst.msk [vmem:[%s172 + $0x210] sm:$0xff] %vm1138, %v1012
      %1206 = vst.msk [vmem:[%s172 + $0x218] sm:$0xff] %vm1138, %v1015
      %1207 = vst.msk [vmem:[%s172 + $0x220] sm:$0xff] %vm1138, %v1020
      %1208 = vst.msk [vmem:[%s172 + $0x228] sm:$0xff] %vm1138, %v1023
      %1209 = vst.msk [vmem:[%s172 + $0x230] sm:$0xff] %vm1138, %v1028
      %1210 = vst.msk [vmem:[%s172 + $0x238] sm:$0xff] %vm1138, %v1031
      %1211 = vst.msk [vmem:[%s172 + $0x240] sm:$0xff] %vm1138, %v1036
      %1212 = vst.msk [vmem:[%s172 + $0x248] sm:$0xff] %vm1138, %v1039
      %1213 = vst.msk [vmem:[%s172 + $0x250] sm:$0xff] %vm1138, %v1044
      %1214 = vst.msk [vmem:[%s172 + $0x258] sm:$0xff] %vm1138, %v1047
      %1215 = vst.msk [vmem:[%s172 + $0x260] sm:$0xff] %vm1138, %v1052
      %1216 = vst.msk [vmem:[%s172 + $0x268] sm:$0xff] %vm1138, %v1055
      %1217 = vst.msk [vmem:[%s172 + $0x270] sm:$0xff] %vm1138, %v1060
      %1218 = vst.msk [vmem:[%s172 + $0x278] sm:$0xff] %vm1138, %v1063
      %1219 = vst.msk [vmem:[%s172 + $0x280] sm:$0xff] %vm1138, %v1068
      %1220 = vst.msk [vmem:[%s172 + $0x288] sm:$0xff] %vm1138, %v1071
      %1221 = vst.msk [vmem:[%s172 + $0x290] sm:$0xff] %vm1138, %v1076
      %1222 = vst.msk [vmem:[%s172 + $0x298] sm:$0xff] %vm1138, %v1079
      %1223 = vst.msk [vmem:[%s172 + $0x2a0] sm:$0xff] %vm1138, %v1084
      %1224 = vst.msk [vmem:[%s172 + $0x2a8] sm:$0xff] %vm1138, %v1087
      %1225 = vst.msk [vmem:[%s172 + $0x2b0] sm:$0xff] %vm1138, %v1092
      %1226 = vst.msk [vmem:[%s172 + $0x2b8] sm:$0xff] %vm1138, %v1095
      %1227 = vst.msk [vmem:[%s172 + $0x2c0] sm:$0xff] %vm1138, %v1100
      %1228 = vst.msk [vmem:[%s172 + $0x2c8] sm:$0xff] %vm1138, %v1103
      %1229 = vst.msk [vmem:[%s172 + $0x2d0] sm:$0xff] %vm1138, %v1108
      %1230 = vst.msk [vmem:[%s172 + $0x2d8] sm:$0xff] %vm1138, %v1111
      %1231 = vst.msk [vmem:[%s172 + $0x2e0] sm:$0xff] %vm1138, %v1116
      %1232 = vst.msk [vmem:[%s172 + $0x2e8] sm:$0xff] %vm1138, %v1119
      %1233 = vst.msk [vmem:[%s172 + $0x2f0] sm:$0xff] %vm1138, %v1124
      %1234 = vst.msk [vmem:[%s172 + $0x2f8] sm:$0xff] %vm1138, %v1127
      %1235 = vst.msk [vmem:[%s172 + $0x300] sm:$0xff] %vm1138, %v1132
      %1236 = vst.msk [vmem:[%s172 + $0x308] sm:$0xff] %vm1138, %v1135
      %s1237 = smul.u32 98, %s14
      %p1238 = scmp.lt.s32.totalorder %s1237, 195
      %s1239 = scalar_select %p1238, %s1237, 195
      %s1240 = smul.addr %s1239, 8
      %s1241 = scalar_lea.vmem %s3, %s1240
      // Predicated region
      $region33: #{_lambda_.6} parent=31 // pred_check
        %p1242 = pneg %p100
      $region34: #{_lambda_.6} parent=31 // pred_check_branch
        %1244 = sbr.rel (%p1242) target = $region36
      $region35: #{_lambda_.6} parent=31 // pred_region
        %s1245 = smul.u32 98, %s14
      $region36: #{_lambda_.6} parent=31 // pred_fallthru
        _
    $region32: #{_lambda_.6} parent=5 // pred_fallthru
      _
    %p1246 = scmp.le.s32.totalorder 2, %s9
    // Predicated region
    $region37: #{_lambda_.6} parent=5 // pred_check
      %p1247 = pneg %p1246
    $region38: #{_lambda_.6} parent=5 // pred_check_branch
      %1249 = sbr.rel (%p1247) target = $region40
    $region39: #{_lambda_.6} parent=5 // pred_region
      %s1250 = ssub.s32 %s9, 2
      // Predicated region
      $region41: #{_lambda_.6} parent=39 // pred_check
        %p1251 = pneg %p106
      $region42: #{_lambda_.6} parent=39 // pred_check_branch
        %1253 = sbr.rel (%p1251) target = $region44
      $region43: #{_lambda_.6} parent=39 // pred_region
        %s1254 = smul.u32 98, %s15
        %p1255 = scmp.lt.s32.totalorder %s1254, 195
        %s1256 = scalar_select %p1255, %s1254, 195
        %s1257 = smul.addr %s1256, 8
        %s1258 = scalar_lea.vmem %s3, %s1257
      $region44: #{_lambda_.6} parent=39 // pred_fallthru
        _
    $region40: #{_lambda_.6} parent=5 // pred_fallthru
      _
  $region6: #{_lambda_.6} parent=0 // loop_footer
    %s13 = sadd.s32 1, %s9
  $region7: #{_lambda_.6} parent=0 // loop_footer_branch
    %8 = sbr.rel target = $region3
  $region8: #{_lambda_.6} parent=0 // loop_exit
    _

// kernel: _lambda_.7
$region0: #{_lambda_.7}
  #allocation0 [shape = 'u32[]', space=smem, size = 0x4, offset = 0x4, fixed_abs, tag = 'smem constant byte address 0x4 - core index']
  #allocation1 [shape = 'u32[144,128]{1,0:T(1,128)}', space=vmem, size = 0x12000, scoped, tag = 'internal scratch']
  %s0 = inlined_call_operand.vmem [shape: bf16[392,144], index: 0, kind: input, shape index: {}]
  %s1 = inlined_call_operand.vmem [shape: bf16[144,16], index: 1, kind: input, shape index: {}]
  %s2 = inlined_call_operand.vmem [shape: f32[1,16], index: 2, kind: input, shape index: {}]
  %s3 = inlined_call_operand.vmem [shape: f32[392,16], index: 3, kind: output, shape index: {}]
  %s4 = sld [smem:[#allocation0]]
  $region22: #{_lambda_.7} parent=0
    _
  %s6 = ssub.s32 1, %s4
  %s7 = scalar_select 0, %s6, %s4
  // Predicated region
  $region2: #{_lambda_.7} parent=0 // pred_check
    _
  $region3: #{_lambda_.7} parent=0 // pred_check_branch
    %9 = sbr.rel (0) target = $region5
  $region4: #{_lambda_.7} parent=0 // pred_region
    _
  $region5: #{_lambda_.7} parent=0 // pred_fallthru
    _
  // Predicated region
  $region6: #{_lambda_.7} parent=0 // pred_check
    _
  $region7: #{_lambda_.7} parent=0 // pred_check_branch
    %11 = sbr.rel (0) target = $region9
  $region8: #{_lambda_.7} parent=0 // pred_region
    _
  $region9: #{_lambda_.7} parent=0 // pred_fallthru
    _
  // Predicated region
  $region10: #{_lambda_.7} parent=0 // pred_check
    _
  $region11: #{_lambda_.7} parent=0 // pred_check_branch
    %13 = sbr.rel (0) target = $region13
  $region12: #{_lambda_.7} parent=0 // pred_region
    _
  $region13: #{_lambda_.7} parent=0 // pred_fallthru
    _
  %v15 = vld [vmem:[%s0] sm:$0xff]
  %v16 = vld [vmem:[%s0 + $0x8] sm:$0xff]
  %v17 = vld [vmem:[%s0 + $0x10] sm:$0xff]
  %v18 = vld [vmem:[%s0 + $0x18] sm:$0xff]
  %v19 = vld [vmem:[%s0 + $0x20] sm:$0xff]
  %v20 = vld [vmem:[%s0 + $0x28] sm:$0xff]
  %v21 = vld [vmem:[%s0 + $0x30] sm:$0xff]
  %v22 = vld [vmem:[%s0 + $0x38] sm:$0xff]
  %v23 = vld [vmem:[%s0 + $0x40] sm:$0xff]
  %v24 = vld [vmem:[%s0 + $0x48] sm:$0xff]
  %v25 = vld [vmem:[%s0 + $0x50] sm:$0xff]
  %v26 = vld [vmem:[%s0 + $0x58] sm:$0xff]
  %v27 = vld [vmem:[%s0 + $0x60] sm:$0xff]
  %v28 = vld [vmem:[%s0 + $0x68] sm:$0xff]
  %v29 = vld [vmem:[%s0 + $0x70] sm:$0xff]
  %v30 = vld [vmem:[%s0 + $0x78] sm:$0xff]
  %v31 = vld [vmem:[%s0 + $0x80] sm:$0xff]
  %v32 = vld [vmem:[%s0 + $0x88] sm:$0xff]
  %v33 = vld [vmem:[%s0 + $0x90] sm:$0xff]
  %v34 = vld [vmem:[%s0 + $0x98] sm:$0xff]
  %v35 = vld [vmem:[%s0 + $0xa0] sm:$0xff]
  %v36 = vld [vmem:[%s0 + $0xa8] sm:$0xff]
  %v37 = vld [vmem:[%s0 + $0xb0] sm:$0xff]
  %v38 = vld [vmem:[%s0 + $0xb8] sm:$0xff]
  %v39 = vld [vmem:[%s0 + $0xc0] sm:$0xff]
  %v40 = vld [vmem:[%s0 + $0xc8] sm:$0xff]
  %v41 = vld [vmem:[%s0 + $0xd0] sm:$0xff]
  %v42 = vld [vmem:[%s0 + $0xd8] sm:$0xff]
  %v43 = vld [vmem:[%s0 + $0xe0] sm:$0xff]
  %v44 = vld [vmem:[%s0 + $0xe8] sm:$0xff]
  %v45 = vld [vmem:[%s0 + $0xf0] sm:$0xff]
  %v46 = vld [vmem:[%s0 + $0xf8] sm:$0xff]
  %v47 = vld [vmem:[%s0 + $0x100] sm:$0xff]
  %v48 = vld [vmem:[%s0 + $0x108] sm:$0xff]
  %v49 = vld [vmem:[%s0 + $0x110] sm:$0xff]
  %v50 = vld [vmem:[%s0 + $0x118] sm:$0xff]
  %v51 = vld [vmem:[%s0 + $0x120] sm:$0xff]
  %v52 = vld [vmem:[%s0 + $0x128] sm:$0xff]
  %v53 = vld [vmem:[%s0 + $0x130] sm:$0xff]
  %v54 = vld [vmem:[%s0 + $0x138] sm:$0xff]
  %v55 = vld [vmem:[%s0 + $0x140] sm:$0xff]
  %v56 = vld [vmem:[%s0 + $0x148] sm:$0xff]
  %v57 = vld [vmem:[%s0 + $0x150] sm:$0xff]
  %v58 = vld [vmem:[%s0 + $0x158] sm:$0xff]
  %v59 = vld [vmem:[%s0 + $0x160] sm:$0xff]
  %v60 = vld [vmem:[%s0 + $0x168] sm:$0xff]
  %v61 = vld [vmem:[%s0 + $0x170] sm:$0xff]
  %v62 = vld [vmem:[%s0 + $0x178] sm:$0xff]
  %v63 = vld [vmem:[%s0 + $0x180] sm:$0xff]
  %v64 = vmax.bf16 %v15, 0
  %v65 = vmax.bf16 %v16, 0
  %v66 = vmax.bf16 %v17, 0
  %v67 = vmax.bf16 %v18, 0
  %v68 = vmax.bf16 %v19, 0
  %v69 = vmax.bf16 %v20, 0
  %v70 = vmax.bf16 %v21, 0
  %v71 = vmax.bf16 %v22, 0
  %v72 = vmax.bf16 %v23, 0
  %v73 = vmax.bf16 %v24, 0
  %v74 = vmax.bf16 %v25, 0
  %v75 = vmax.bf16 %v26, 0
  %v76 = vmax.bf16 %v27, 0
  %v77 = vmax.bf16 %v28, 0
  %v78 = vmax.bf16 %v29, 0
  %v79 = vmax.bf16 %v30, 0
  %v80 = vmax.bf16 %v31, 0
  %v81 = vmax.bf16 %v32, 0
  %v82 = vmax.bf16 %v33, 0
  %v83 = vmax.bf16 %v34, 0
  %v84 = vmax.bf16 %v35, 0
  %v85 = vmax.bf16 %v36, 0
  %v86 = vmax.bf16 %v37, 0
  %v87 = vmax.bf16 %v38, 0
  %v88 = vmax.bf16 %v39, 0
  %v89 = vmax.bf16 %v40, 0
  %v90 = vmax.bf16 %v41, 0
  %v91 = vmax.bf16 %v42, 0
  %v92 = vmax.bf16 %v43, 0
  %v93 = vmax.bf16 %v44, 0
  %v94 = vmax.bf16 %v45, 0
  %v95 = vmax.bf16 %v46, 0
  %v96 = vmax.bf16 %v47, 0
  %v97 = vmax.bf16 %v48, 0
  %v98 = vmax.bf16 %v49, 0
  %v99 = vmax.bf16 %v50, 0
  %v100 = vmax.bf16 %v51, 0
  %v101 = vmax.bf16 %v52, 0
  %v102 = vmax.bf16 %v53, 0
  %v103 = vmax.bf16 %v54, 0
  %v104 = vmax.bf16 %v55, 0
  %v105 = vmax.bf16 %v56, 0
  %v106 = vmax.bf16 %v57, 0
  %v107 = vmax.bf16 %v58, 0
  %v108 = vmax.bf16 %v59, 0
  %v109 = vmax.bf16 %v60, 0
  %v110 = vmax.bf16 %v61, 0
  %v111 = vmax.bf16 %v62, 0
  %v112 = vmax.bf16 %v63, 0
  %v113 = vld [vmem:[%s1] sm:$0xf]
  %v114 = vld [vmem:[%s1 + $0x4] sm:$0xf]
  %v115 = vld [vmem:[%s1 + $0x8] sm:$0xf]
  %v116 = vld [vmem:[%s1 + $0xc] sm:$0xf]
  %v117 = vld [vmem:[%s1 + $0x10] sm:$0xf]
  %v118 = vld [vmem:[%s1 + $0x14] sm:$0xf]
  %v119 = vld [vmem:[%s1 + $0x18] sm:$0xf]
  %v120 = vld [vmem:[%s1 + $0x1c] sm:$0xf]
  %v121 = vld [vmem:[%s1 + $0x20] sm:$0xf]
  %v122 = vld [vmem:[%s1 + $0x24] sm:$0xf]
  %v123 = vld [vmem:[%s1 + $0x28] sm:$0xf]
  %v124 = vld [vmem:[%s1 + $0x2c] sm:$0xf]
  %v125 = vld [vmem:[%s1 + $0x30] sm:$0xf]
  %v126 = vld [vmem:[%s1 + $0x34] sm:$0xf]
  %v127 = vld [vmem:[%s1 + $0x38] sm:$0xf]
  %v128 = vld [vmem:[%s1 + $0x3c] sm:$0xf]
  %v129 = vld [vmem:[%s1 + $0x40] sm:$0xf]
  %v130 = vld [vmem:[%s1 + $0x44] sm:$0xf]
  %v131 = vld [vmem:[%s2] sm:$0x1]
  %v133 = vlaneseq
  %v134 = vshrl.u32 %v133, 7
  %v135 = vsub.s32 0, %v134
  %v136 = vrot.slane %v131, %v135
  %v187 = vunpack.c.l.b16 %v64
  %v188 = vunpack.c.h.b16 %v64
  %v189 = vunpack.c.l.b16 %v65
  %v190 = vunpack.c.h.b16 %v65
  %v191 = vunpack.c.l.b16 %v66
  %v192 = vunpack.c.h.b16 %v66
  %v193 = vunpack.c.l.b16 %v67
  %v194 = vunpack.c.h.b16 %v67
  %v195 = vunpack.c.l.b16 %v68
  %v196 = vunpack.c.h.b16 %v68
  %v197 = vunpack.c.l.b16 %v69
  %v198 = vunpack.c.h.b16 %v69
  %v199 = vunpack.c.l.b16 %v70
  %v200 = vunpack.c.h.b16 %v70
  %v201 = vunpack.c.l.b16 %v71
  %v202 = vunpack.c.h.b16 %v71
  %v203 = vunpack.c.l.b16 %v72
  %v204 = vunpack.c.h.b16 %v72
  %v205 = vunpack.c.l.b16 %v73
  %v206 = vunpack.c.h.b16 %v73
  %v207 = vunpack.c.l.b16 %v74
  %v208 = vunpack.c.h.b16 %v74
  %v209 = vunpack.c.l.b16 %v75
  %v210 = vunpack.c.h.b16 %v75
  %v211 = vunpack.c.l.b16 %v76
  %v212 = vunpack.c.h.b16 %v76
  %v213 = vunpack.c.l.b16 %v77
  %v214 = vunpack.c.h.b16 %v77
  %v215 = vunpack.c.l.b16 %v78
  %v216 = vunpack.c.h.b16 %v78
  %v217 = vunpack.c.l.b16 %v79
  %v218 = vunpack.c.h.b16 %v79
  %v219 = vunpack.c.l.b16 %v80
  %v220 = vunpack.c.h.b16 %v80
  %v221 = vunpack.c.l.b16 %v81
  %v222 = vunpack.c.h.b16 %v81
  %v223 = vunpack.c.l.b16 %v82
  %v224 = vunpack.c.h.b16 %v82
  %v225 = vunpack.c.l.b16 %v83
  %v226 = vunpack.c.h.b16 %v83
  %v227 = vunpack.c.l.b16 %v84
  %v228 = vunpack.c.h.b16 %v84
  %v229 = vunpack.c.l.b16 %v85
  %v230 = vunpack.c.h.b16 %v85
  %v231 = vunpack.c.l.b16 %v86
  %v232 = vunpack.c.h.b16 %v86
  %v233 = vunpack.c.l.b16 %v87
  %v234 = vunpack.c.h.b16 %v87
  %v235 = vunpack.c.l.b16 %v88
  %v236 = vunpack.c.h.b16 %v88
  %v237 = vunpack.c.l.b16 %v89
  %v238 = vunpack.c.h.b16 %v89
  %v239 = vunpack.c.l.b16 %v90
  %v240 = vunpack.c.h.b16 %v90
  %v241 = vunpack.c.l.b16 %v91
  %v242 = vunpack.c.h.b16 %v91
  %v243 = vunpack.c.l.b16 %v92
  %v244 = vunpack.c.h.b16 %v92
  %v245 = vunpack.c.l.b16 %v93
  %v246 = vunpack.c.h.b16 %v93
  %v247 = vunpack.c.l.b16 %v94
  %v248 = vunpack.c.h.b16 %v94
  %v249 = vunpack.c.l.b16 %v95
  %v250 = vunpack.c.h.b16 %v95
  %v251 = vunpack.c.l.b16 %v96
  %v252 = vunpack.c.h.b16 %v96
  %v253 = vunpack.c.l.b16 %v97
  %v254 = vunpack.c.h.b16 %v97
  %v255 = vunpack.c.l.b16 %v98
  %v256 = vunpack.c.h.b16 %v98
  %v257 = vunpack.c.l.b16 %v99
  %v258 = vunpack.c.h.b16 %v99
  %v259 = vunpack.c.l.b16 %v100
  %v260 = vunpack.c.h.b16 %v100
  %v261 = vunpack.c.l.b16 %v101
  %v262 = vunpack.c.h.b16 %v101
  %v263 = vunpack.c.l.b16 %v102
  %v264 = vunpack.c.h.b16 %v102
  %v265 = vunpack.c.l.b16 %v103
  %v266 = vunpack.c.h.b16 %v103
  %v267 = vunpack.c.l.b16 %v104
  %v268 = vunpack.c.h.b16 %v104
  %v269 = vunpack.c.l.b16 %v105
  %v270 = vunpack.c.h.b16 %v105
  %v271 = vunpack.c.l.b16 %v106
  %v272 = vunpack.c.h.b16 %v106
  %v273 = vunpack.c.l.b16 %v107
  %v274 = vunpack.c.h.b16 %v107
  %v275 = vunpack.c.l.b16 %v108
  %v276 = vunpack.c.h.b16 %v108
  %v277 = vunpack.c.l.b16 %v109
  %v278 = vunpack.c.h.b16 %v109
  %v279 = vunpack.c.l.b16 %v110
  %v280 = vunpack.c.h.b16 %v110
  %v281 = vunpack.c.l.b16 %v111
  %v282 = vunpack.c.h.b16 %v111
  %v283 = vunpack.c.l.b16 %v112
  %v284 = vunpack.c.h.b16 %v112
  %v285 = vpack.c.b16 %v189, %v187
  %v286 = vpack.c.b16 %v190, %v188
  %v287 = vpack.c.b16 %v193, %v191
  %v288 = vpack.c.b16 %v194, %v192
  %v289 = vpack.c.b16 %v197, %v195
  %v290 = vpack.c.b16 %v198, %v196
  %v291 = vpack.c.b16 %v201, %v199
  %v292 = vpack.c.b16 %v202, %v200
  %v293 = vpack.c.b16 %v205, %v203
  %v294 = vpack.c.b16 %v206, %v204
  %v295 = vpack.c.b16 %v209, %v207
  %v296 = vpack.c.b16 %v210, %v208
  %v297 = vpack.c.b16 %v213, %v211
  %v298 = vpack.c.b16 %v214, %v212
  %v299 = vpack.c.b16 %v217, %v215
  %v300 = vpack.c.b16 %v218, %v216
  %v301 = vpack.c.b16 %v221, %v219
  %v302 = vpack.c.b16 %v222, %v220
  %v303 = vpack.c.b16 %v225, %v223
  %v304 = vpack.c.b16 %v226, %v224
  %v305 = vpack.c.b16 %v229, %v227
  %v306 = vpack.c.b16 %v230, %v228
  %v307 = vpack.c.b16 %v233, %v231
  %v308 = vpack.c.b16 %v234, %v232
  %v309 = vpack.c.b16 %v237, %v235
  %v310 = vpack.c.b16 %v238, %v236
  %v311 = vpack.c.b16 %v241, %v239
  %v312 = vpack.c.b16 %v242, %v240
  %v313 = vpack.c.b16 %v245, %v243
  %v314 = vpack.c.b16 %v246, %v244
  %v315 = vpack.c.b16 %v249, %v247
  %v316 = vpack.c.b16 %v250, %v248
  %v317 = vpack.c.b16 %v253, %v251
  %v318 = vpack.c.b16 %v254, %v252
  %v319 = vpack.c.b16 %v257, %v255
  %v320 = vpack.c.b16 %v258, %v256
  %v321 = vpack.c.b16 %v261, %v259
  %v322 = vpack.c.b16 %v262, %v260
  %v323 = vpack.c.b16 %v265, %v263
  %v324 = vpack.c.b16 %v266, %v264
  %v325 = vpack.c.b16 %v269, %v267
  %v326 = vpack.c.b16 %v270, %v268
  %v327 = vpack.c.b16 %v273, %v271
  %v328 = vpack.c.b16 %v274, %v272
  %v329 = vpack.c.b16 %v277, %v275
  %v330 = vpack.c.b16 %v278, %v276
  %v331 = vpack.c.b16 %v281, %v279
  %v332 = vpack.c.b16 %v282, %v280
  %v333 = vpack.c.b16 %v283, %v283
  %v334 = vpack.c.b16 %v284, %v284
  %v378 = vunpack.c.l.b16 %v113
  %v379 = vunpack.c.l.b16 %v114
  %v380 = vunpack.c.l.b16 %v115
  %v381 = vunpack.c.l.b16 %v116
  %v382 = vunpack.c.l.b16 %v117
  %v383 = vunpack.c.l.b16 %v118
  %v384 = vunpack.c.l.b16 %v119
  %v385 = vunpack.c.l.b16 %v120
  %v386 = vunpack.c.l.b16 %v121
  %v387 = vunpack.c.l.b16 %v122
  %v388 = vunpack.c.l.b16 %v123
  %v389 = vunpack.c.l.b16 %v124
  %v390 = vunpack.c.l.b16 %v125
  %v391 = vunpack.c.l.b16 %v126
  %v392 = vunpack.c.l.b16 %v127
  %v393 = vunpack.c.l.b16 %v128
  %v394 = vunpack.c.l.b16 %v129
  %v395 = vunpack.c.l.b16 %v130
  %v396 = vpack.c.b16 %v379, %v378
  %v397 = vpack.c.b16 %v381, %v380
  %v398 = vpack.c.b16 %v383, %v382
  %v399 = vpack.c.b16 %v385, %v384
  %v400 = vpack.c.b16 %v387, %v386
  %v401 = vpack.c.b16 %v389, %v388
  %v402 = vpack.c.b16 %v391, %v390
  %v403 = vpack.c.b16 %v393, %v392
  %v404 = vpack.c.b16 %v395, %v394
  %vm414 = vcmask 130048
  %v416 = vsel %vm414, %v286, 0
  %v419 = vsel %vm414, %v288, 0
  %v422 = vsel %vm414, %v290, 0
  %v425 = vsel %vm414, %v292, 0
  %v428 = vsel %vm414, %v294, 0
  %v431 = vsel %vm414, %v296, 0
  %v434 = vsel %vm414, %v298, 0
  %v437 = vsel %vm414, %v300, 0
  %v440 = vsel %vm414, %v302, 0
  %v443 = vsel %vm414, %v304, 0
  %v446 = vsel %vm414, %v306, 0
  %v449 = vsel %vm414, %v308, 0
  %v452 = vsel %vm414, %v310, 0
  %v455 = vsel %vm414, %v312, 0
  %v458 = vsel %vm414, %v314, 0
  %v461 = vsel %vm414, %v316, 0
  %v464 = vsel %vm414, %v318, 0
  %v467 = vsel %vm414, %v320, 0
  %v470 = vsel %vm414, %v322, 0
  %v473 = vsel %vm414, %v324, 0
  %v476 = vsel %vm414, %v326, 0
  %v479 = vsel %vm414, %v328, 0
  %v482 = vsel %vm414, %v330, 0
  %v485 = vsel %vm414, %v332, 0
  %v488 = vsel %vm414, %v334, 0
  %490 = vmatprep.subr.bf16.mxu0 0
  %491 = vmatpush1.bf16.msra.mxu0 %v396
  %492 = vmatprep.subr.bf16.mxu0 0
  %493 = vmatpush1.bf16.msra.mxu0 %v397
  %494 = vmatprep.subr.bf16.mxu0 0
  %495 = vmatpush1.bf16.msra.mxu0 %v398
  %496 = vmatprep.subr.bf16.mxu0 0
  %497 = vmatpush1.bf16.msra.mxu0 %v399
  %498 = vmatprep.subr.bf16.mxu0 0
  %499 = vmatpush1.bf16.msra.mxu0 %v400
  %500 = vmatprep.subr.bf16.mxu0 0
  %501 = vmatpush1.bf16.msra.mxu0 %v401
  %502 = vmatprep.subr.bf16.mxu0 0
  %503 = vmatpush1.bf16.msra.mxu0 %v402
  %504 = vmatprep.subr.bf16.mxu0 0
  %505 = vmatpush1.bf16.msra.mxu0 %v403
  %506 = vmatprep.subr.bf16.mxu0 0
  %507 = vmatpush1.bf16.msra.mxu0 %v404
  %508 = vmatprep.subr.bf16.mxu0 0
  %509 = vmatpush1.bf16.msra.mxu0 0
  %510 = vmatprep.subr.bf16.mxu0 0
  %511 = vmatpush1.bf16.msra.mxu0 0
  %512 = vmatprep.subr.bf16.mxu0 0
  %513 = vmatpush1.bf16.msra.mxu0 0
  %514 = vmatprep.subr.bf16.mxu0 0
  %515 = vmatpush1.bf16.msra.mxu0 0
  %516 = vmatprep.subr.bf16.mxu0 0
  %517 = vmatpush1.bf16.msra.mxu0 0
  %518 = vmatprep.subr.bf16.mxu0 0
  %519 = vmatpush1.bf16.msra.mxu0 0
  %520 = vmatprep.subr.bf16.mxu0 0
  %521 = vmatpush1.bf16.msra.mxu0 0
  %522 = vmatprep.mubr.bf16.mxu0 %v416
  %523 = vmatmul.mubr.bf16.gmra.mrb[0].mxu0 %v285
  %v524 = vpop.f32.mrb[0].mxu0
  %v525 = vadd.f32 %v136, %v524
  %v526 = vpop.f32.mrb[0].mxu0
  %v527 = vpop.f32.mrb[0].mxu0
  %v528 = vadd.f32 %v136, %v527
  %v529 = vpop.f32.mrb[0].mxu0
  %530 = vmatprep.mubr.bf16.mxu0 %v419
  %531 = vmatmul.mubr.bf16.gmra.mrb[0].mxu0 %v287
  %v532 = vpop.f32.mrb[0].mxu0
  %v533 = vadd.f32 %v136, %v532
  %v534 = vpop.f32.mrb[0].mxu0
  %v535 = vpop.f32.mrb[0].mxu0
  %v536 = vadd.f32 %v136, %v535
  %v537 = vpop.f32.mrb[0].mxu0
  %538 = vmatprep.mubr.bf16.mxu0 %v422
  %539 = vmatmul.mubr.bf16.gmra.mrb[0].mxu0 %v289
  %v540 = vpop.f32.mrb[0].mxu0
  %v541 = vadd.f32 %v136, %v540
  %v542 = vpop.f32.mrb[0].mxu0
  %v543 = vpop.f32.mrb[0].mxu0
  %v544 = vadd.f32 %v136, %v543
  %v545 = vpop.f32.mrb[0].mxu0
  %546 = vmatprep.mubr.bf16.mxu0 %v425
  %547 = vmatmul.mubr.bf16.gmra.mrb[0].mxu0 %v291
  %v548 = vpop.f32.mrb[0].mxu0
  %v549 = vadd.f32 %v136, %v548
  %v550 = vpop.f32.mrb[0].mxu0
  %v551 = vpop.f32.mrb[0].mxu0
  %v552 = vadd.f32 %v136, %v551
  %v553 = vpop.f32.mrb[0].mxu0
  %554 = vmatprep.mubr.bf16.mxu0 %v428
  %555 = vmatmul.mubr.bf16.gmra.mrb[0].mxu0 %v293
  %v556 = vpop.f32.mrb[0].mxu0
  %v557 = vadd.f32 %v136, %v556
  %v558 = vpop.f32.mrb[0].mxu0
  %v559 = vpop.f32.mrb[0].mxu0
  %v560 = vadd.f32 %v136, %v559
  %v561 = vpop.f32.mrb[0].mxu0
  %562 = vmatprep.mubr.bf16.mxu0 %v431
  %563 = vmatmul.mubr.bf16.gmra.mrb[0].mxu0 %v295
  %v564 = vpop.f32.mrb[0].mxu0
  %v565 = vadd.f32 %v136, %v564
  %v566 = vpop.f32.mrb[0].mxu0
  %v567 = vpop.f32.mrb[0].mxu0
  %v568 = vadd.f32 %v136, %v567
  %v569 = vpop.f32.mrb[0].mxu0
  %570 = vmatprep.mubr.bf16.mxu0 %v434
  %571 = vmatmul.mubr.bf16.gmra.mrb[0].mxu0 %v297
  %v572 = vpop.f32.mrb[0].mxu0
  %v573 = vadd.f32 %v136, %v572
  %v574 = vpop.f32.mrb[0].mxu0
  %v575 = vpop.f32.mrb[0].mxu0
  %v576 = vadd.f32 %v136, %v575
  %v577 = vpop.f32.mrb[0].mxu0
  %578 = vmatprep.mubr.bf16.mxu0 %v437
  %579 = vmatmul.mubr.bf16.gmra.mrb[0].mxu0 %v299
  %v580 = vpop.f32.mrb[0].mxu0
  %v581 = vadd.f32 %v136, %v580
  %v582 = vpop.f32.mrb[0].mxu0
  %v583 = vpop.f32.mrb[0].mxu0
  %v584 = vadd.f32 %v136, %v583
  %v585 = vpop.f32.mrb[0].mxu0
  %586 = vmatprep.mubr.bf16.mxu0 %v440
  %587 = vmatmul.mubr.bf16.gmra.mrb[0].mxu0 %v301
  %v588 = vpop.f32.mrb[0].mxu0
  %v589 = vadd.f32 %v136, %v588
  %v590 = vpop.f32.mrb[0].mxu0
  %v591 = vpop.f32.mrb[0].mxu0
  %v592 = vadd.f32 %v136, %v591
  %v593 = vpop.f32.mrb[0].mxu0
  %594 = vmatprep.mubr.bf16.mxu0 %v443
  %595 = vmatmul.mubr.bf16.gmra.mrb[0].mxu0 %v303
  %v596 = vpop.f32.mrb[0].mxu0
  %v597 = vadd.f32 %v136, %v596
  %v598 = vpop.f32.mrb[0].mxu0
  %v599 = vpop.f32.mrb[0].mxu0
  %v600 = vadd.f32 %v136, %v599
  %v601 = vpop.f32.mrb[0].mxu0
  %602 = vmatprep.mubr.bf16.mxu0 %v446
  %603 = vmatmul.mubr.bf16.gmra.mrb[0].mxu0 %v305
  %v604 = vpop.f32.mrb[0].mxu0
  %v605 = vadd.f32 %v136, %v604
  %v606 = vpop.f32.mrb[0].mxu0
  %v607 = vpop.f32.mrb[0].mxu0
  %v608 = vadd.f32 %v136, %v607
  %v609 = vpop.f32.mrb[0].mxu0
  %610 = vmatprep.mubr.bf16.mxu0 %v449
  %611 = vmatmul.mubr.bf16.gmra.mrb[0].mxu0 %v307
  %v612 = vpop.f32.mrb[0].mxu0
  %v613 = vadd.f32 %v136, %v612
  %v614 = vpop.f32.mrb[0].mxu0
  %v615 = vpop.f32.mrb[0].mxu0
  %v616 = vadd.f32 %v136, %v615
  %v617 = vpop.f32.mrb[0].mxu0
  %618 = vmatprep.mubr.bf16.mxu0 %v452
  %619 = vmatmul.mubr.bf16.gmra.mrb[0].mxu0 %v309
  %v620 = vpop.f32.mrb[0].mxu0
  %v621 = vadd.f32 %v136, %v620
  %v622 = vpop.f32.mrb[0].mxu0
  %v623 = vpop.f32.mrb[0].mxu0
  %v624 = vadd.f32 %v136, %v623
  %v625 = vpop.f32.mrb[0].mxu0
  %626 = vmatprep.mubr.bf16.mxu0 %v455
  %627 = vmatmul.mubr.bf16.gmra.mrb[0].mxu0 %v311
  %v628 = vpop.f32.mrb[0].mxu0
  %v629 = vadd.f32 %v136, %v628
  %v630 = vpop.f32.mrb[0].mxu0
  %v631 = vpop.f32.mrb[0].mxu0
  %v632 = vadd.f32 %v136, %v631
  %v633 = vpop.f32.mrb[0].mxu0
  %634 = vmatprep.mubr.bf16.mxu0 %v458
  %635 = vmatmul.mubr.bf16.gmra.mrb[0].mxu0 %v313
  %v636 = vpop.f32.mrb[0].mxu0
  %v637 = vadd.f32 %v136, %v636
  %v638 = vpop.f32.mrb[0].mxu0
  %v639 = vpop.f32.mrb[0].mxu0
  %v640 = vadd.f32 %v136, %v639
  %v641 = vpop.f32.mrb[0].mxu0
  %642 = vmatprep.mubr.bf16.mxu0 %v461
  %643 = vmatmul.mubr.bf16.gmra.mrb[0].mxu0 %v315
  %v644 = vpop.f32.mrb[0].mxu0
  %v645 = vadd.f32 %v136, %v644
  %v646 = vpop.f32.mrb[0].mxu0
  %v647 = vpop.f32.mrb[0].mxu0
  %v648 = vadd.f32 %v136, %v647
  %v649 = vpop.f32.mrb[0].mxu0
  %650 = vmatprep.mubr.bf16.mxu0 %v464
  %651 = vmatmul.mubr.bf16.gmra.mrb[0].mxu0 %v317
  %v652 = vpop.f32.mrb[0].mxu0
  %v653 = vadd.f32 %v136, %v652
  %v654 = vpop.f32.mrb[0].mxu0
  %v655 = vpop.f32.mrb[0].mxu0
  %v656 = vadd.f32 %v136, %v655
  %v657 = vpop.f32.mrb[0].mxu0
  %658 = vmatprep.mubr.bf16.mxu0 %v467
  %659 = vmatmul.mubr.bf16.gmra.mrb[0].mxu0 %v319
  %v660 = vpop.f32.mrb[0].mxu0
  %v661 = vadd.f32 %v136, %v660
  %v662 = vpop.f32.mrb[0].mxu0
  %v663 = vpop.f32.mrb[0].mxu0
  %v664 = vadd.f32 %v136, %v663
  %v665 = vpop.f32.mrb[0].mxu0
  %666 = vmatprep.mubr.bf16.mxu0 %v470
  %667 = vmatmul.mubr.bf16.gmra.mrb[0].mxu0 %v321
  %v668 = vpop.f32.mrb[0].mxu0
  %v669 = vadd.f32 %v136, %v668
  %v670 = vpop.f32.mrb[0].mxu0
  %v671 = vpop.f32.mrb[0].mxu0
  %v672 = vadd.f32 %v136, %v671
  %v673 = vpop.f32.mrb[0].mxu0
  %674 = vmatprep.mubr.bf16.mxu0 %v473
  %675 = vmatmul.mubr.bf16.gmra.mrb[0].mxu0 %v323
  %v676 = vpop.f32.mrb[0].mxu0
  %v677 = vadd.f32 %v136, %v676
  %v678 = vpop.f32.mrb[0].mxu0
  %v679 = vpop.f32.mrb[0].mxu0
  %v680 = vadd.f32 %v136, %v679
  %v681 = vpop.f32.mrb[0].mxu0
  %682 = vmatprep.mubr.bf16.mxu0 %v476
  %683 = vmatmul.mubr.bf16.gmra.mrb[0].mxu0 %v325
  %v684 = vpop.f32.mrb[0].mxu0
  %v685 = vadd.f32 %v136, %v684
  %v686 = vpop.f32.mrb[0].mxu0
  %v687 = vpop.f32.mrb[0].mxu0
  %v688 = vadd.f32 %v136, %v687
  %v689 = vpop.f32.mrb[0].mxu0
  %690 = vmatprep.mubr.bf16.mxu0 %v479
  %691 = vmatmul.mubr.bf16.gmra.mrb[0].mxu0 %v327
  %v692 = vpop.f32.mrb[0].mxu0
  %v693 = vadd.f32 %v136, %v692
  %v694 = vpop.f32.mrb[0].mxu0
  %v695 = vpop.f32.mrb[0].mxu0
  %v696 = vadd.f32 %v136, %v695
  %v697 = vpop.f32.mrb[0].mxu0
  %698 = vmatprep.mubr.bf16.mxu0 %v482
  %699 = vmatmul.mubr.bf16.gmra.mrb[0].mxu0 %v329
  %v700 = vpop.f32.mrb[0].mxu0
  %v701 = vadd.f32 %v136, %v700
  %v702 = vpop.f32.mrb[0].mxu0
  %v703 = vpop.f32.mrb[0].mxu0
  %v704 = vadd.f32 %v136, %v703
  %v705 = vpop.f32.mrb[0].mxu0
  %706 = vmatprep.mubr.bf16.mxu0 %v485
  %707 = vmatmul.mubr.bf16.gmra.mrb[0].mxu0 %v331
  %v708 = vpop.f32.mrb[0].mxu0
  %v709 = vadd.f32 %v136, %v708
  %v710 = vpop.f32.mrb[0].mxu0
  %v711 = vpop.f32.mrb[0].mxu0
  %v712 = vadd.f32 %v136, %v711
  %v713 = vpop.f32.mrb[0].mxu0
  %714 = vmatprep.mubr.bf16.mxu0 %v488
  %715 = vmatmul.mubr.bf16.gmra.mrb[0].mxu0 %v333
  %v716 = vpop.f32.mrb[0].mxu0
  %v717 = vadd.f32 %v136, %v716
  %v718 = vpop.f32.mrb[0].mxu0
  %v719 = vpop.f32.mrb[0].mxu0
  %v720 = vpop.f32.mrb[0].mxu0
  %721 = vdwg.mxu0
  %722 = vst.msk [vmem:[%s3] sm:$0xff] %vm414, %v525
  %723 = vst.msk [vmem:[%s3 + $0x8] sm:$0xff] %vm414, %v528
  %724 = vst.msk [vmem:[%s3 + $0x10] sm:$0xff] %vm414, %v533
  %725 = vst.msk [vmem:[%s3 + $0x18] sm:$0xff] %vm414, %v536
  %726 = vst.msk [vmem:[%s3 + $0x20] sm:$0xff] %vm414, %v541
  %727 = vst.msk [vmem:[%s3 + $0x28] sm:$0xff] %vm414, %v544
  %728 = vst.msk [vmem:[%s3 + $0x30] sm:$0xff] %vm414, %v549
  %729 = vst.msk [vmem:[%s3 + $0x38] sm:$0xff] %vm414, %v552
  %730 = vst.msk [vmem:[%s3 + $0x40] sm:$0xff] %vm414, %v557
  %731 = vst.msk [vmem:[%s3 + $0x48] sm:$0xff] %vm414, %v560
  %732 = vst.msk [vmem:[%s3 + $0x50] sm:$0xff] %vm414, %v565
  %733 = vst.msk [vmem:[%s3 + $0x58] sm:$0xff] %vm414, %v568
  %734 = vst.msk [vmem:[%s3 + $0x60] sm:$0xff] %vm414, %v573
  %735 = vst.msk [vmem:[%s3 + $0x68] sm:$0xff] %vm414, %v576
  %736 = vst.msk [vmem:[%s3 + $0x70] sm:$0xff] %vm414, %v581
  %737 = vst.msk [vmem:[%s3 + $0x78] sm:$0xff] %vm414, %v584
  %738 = vst.msk [vmem:[%s3 + $0x80] sm:$0xff] %vm414, %v589
  %739 = vst.msk [vmem:[%s3 + $0x88] sm:$0xff] %vm414, %v592
  %740 = vst.msk [vmem:[%s3 + $0x90] sm:$0xff] %vm414, %v597
  %741 = vst.msk [vmem:[%s3 + $0x98] sm:$0xff] %vm414, %v600
  %742 = vst.msk [vmem:[%s3 + $0xa0] sm:$0xff] %vm414, %v605
  %743 = vst.msk [vmem:[%s3 + $0xa8] sm:$0xff] %vm414, %v608
  %744 = vst.msk [vmem:[%s3 + $0xb0] sm:$0xff] %vm414, %v613
  %745 = vst.msk [vmem:[%s3 + $0xb8] sm:$0xff] %vm414, %v616
  %746 = vst.msk [vmem:[%s3 + $0xc0] sm:$0xff] %vm414, %v621
  %747 = vst.msk [vmem:[%s3 + $0xc8] sm:$0xff] %vm414, %v624
  %748 = vst.msk [vmem:[%s3 + $0xd0] sm:$0xff] %vm414, %v629
  %749 = vst.msk [vmem:[%s3 + $0xd8] sm:$0xff] %vm414, %v632
  %750 = vst.msk [vmem:[%s3 + $0xe0] sm:$0xff] %vm414, %v637
  %751 = vst.msk [vmem:[%s3 + $0xe8] sm:$0xff] %vm414, %v640
  %752 = vst.msk [vmem:[%s3 + $0xf0] sm:$0xff] %vm414, %v645
  %753 = vst.msk [vmem:[%s3 + $0xf8] sm:$0xff] %vm414, %v648
  %754 = vst.msk [vmem:[%s3 + $0x100] sm:$0xff] %vm414, %v653
  %755 = vst.msk [vmem:[%s3 + $0x108] sm:$0xff] %vm414, %v656
  %756 = vst.msk [vmem:[%s3 + $0x110] sm:$0xff] %vm414, %v661
  %757 = vst.msk [vmem:[%s3 + $0x118] sm:$0xff] %vm414, %v664
  %758 = vst.msk [vmem:[%s3 + $0x120] sm:$0xff] %vm414, %v669
  %759 = vst.msk [vmem:[%s3 + $0x128] sm:$0xff] %vm414, %v672
  %760 = vst.msk [vmem:[%s3 + $0x130] sm:$0xff] %vm414, %v677
  %761 = vst.msk [vmem:[%s3 + $0x138] sm:$0xff] %vm414, %v680
  %762 = vst.msk [vmem:[%s3 + $0x140] sm:$0xff] %vm414, %v685
  %763 = vst.msk [vmem:[%s3 + $0x148] sm:$0xff] %vm414, %v688
  %764 = vst.msk [vmem:[%s3 + $0x150] sm:$0xff] %vm414, %v693
  %765 = vst.msk [vmem:[%s3 + $0x158] sm:$0xff] %vm414, %v696
  %766 = vst.msk [vmem:[%s3 + $0x160] sm:$0xff] %vm414, %v701
  %767 = vst.msk [vmem:[%s3 + $0x168] sm:$0xff] %vm414, %v704
  %768 = vst.msk [vmem:[%s3 + $0x170] sm:$0xff] %vm414, %v709
  %769 = vst.msk [vmem:[%s3 + $0x178] sm:$0xff] %vm414, %v712
  %770 = vst.msk [vmem:[%s3 + $0x180] sm:$0xff] %vm414, %v717
  // Predicated region
  $region14: #{_lambda_.7} parent=0 // pred_check
    _
  $region15: #{_lambda_.7} parent=0 // pred_check_branch
    %772 = sbr.rel (0) target = $region17
  $region16: #{_lambda_.7} parent=0 // pred_region
    _
  $region17: #{_lambda_.7} parent=0 // pred_fallthru
    _
  // Predicated region
  $region18: #{_lambda_.7} parent=0 // pred_check
    _
  $region19: #{_lambda_.7} parent=0 // pred_check_branch
    %774 = sbr.rel (0) target = $region21
  $region20: #{_lambda_.7} parent=0 // pred_region
    _
  $region21: #{_lambda_.7} parent=0 // pred_fallthru
    _

// kernel: _lambda_.8
$region0: #{_lambda_.8}
  #allocation0 [shape = 'u32[]', space=smem, size = 0x4, offset = 0x4, fixed_abs, tag = 'smem constant byte address 0x4 - core index']
  #allocation1 [shape = 'u32[144,128]{1,0:T(1,128)}', space=vmem, size = 0x12000, scoped, tag = 'internal scratch']
  %s0 = inlined_call_operand.vmem [shape: bf16[392,48], index: 0, kind: input, shape index: {}]
  %s1 = inlined_call_operand.vmem [shape: bf16[48,64], index: 1, kind: input, shape index: {}]
  %s2 = inlined_call_operand.vmem [shape: f32[1,64], index: 2, kind: input, shape index: {}]
  %s3 = inlined_call_operand.vmem [shape: f32[392,64], index: 3, kind: output, shape index: {}]
  %s4 = sld [smem:[#allocation0]]
  $region22: #{_lambda_.8} parent=0
    _
  %s6 = ssub.s32 1, %s4
  %s7 = scalar_select 0, %s6, %s4
  // Predicated region
  $region2: #{_lambda_.8} parent=0 // pred_check
    _
  $region3: #{_lambda_.8} parent=0 // pred_check_branch
    %9 = sbr.rel (0) target = $region5
  $region4: #{_lambda_.8} parent=0 // pred_region
    _
  $region5: #{_lambda_.8} parent=0 // pred_fallthru
    _
  // Predicated region
  $region6: #{_lambda_.8} parent=0 // pred_check
    _
  $region7: #{_lambda_.8} parent=0 // pred_check_branch
    %11 = sbr.rel (0) target = $region9
  $region8: #{_lambda_.8} parent=0 // pred_region
    _
  $region9: #{_lambda_.8} parent=0 // pred_fallthru
    _
  // Predicated region
  $region10: #{_lambda_.8} parent=0 // pred_check
    _
  $region11: #{_lambda_.8} parent=0 // pred_check_branch
    %13 = sbr.rel (0) target = $region13
  $region12: #{_lambda_.8} parent=0 // pred_region
    _
  $region13: #{_lambda_.8} parent=0 // pred_fallthru
    _
  %v15 = vld [vmem:[%s0] sm:$0xf]
  %v16 = vld [vmem:[%s0 + $0x4] sm:$0xf]
  %v17 = vld [vmem:[%s0 + $0x8] sm:$0xf]
  %v18 = vld [vmem:[%s0 + $0xc] sm:$0xf]
  %v19 = vld [vmem:[%s0 + $0x10] sm:$0xf]
  %v20 = vld [vmem:[%s0 + $0x14] sm:$0xf]
  %v21 = vld [vmem:[%s0 + $0x18] sm:$0xf]
  %v22 = vld [vmem:[%s0 + $0x1c] sm:$0xf]
  %v23 = vld [vmem:[%s0 + $0x20] sm:$0xf]
  %v24 = vld [vmem:[%s0 + $0x24] sm:$0xf]
  %v25 = vld [vmem:[%s0 + $0x28] sm:$0xf]
  %v26 = vld [vmem:[%s0 + $0x2c] sm:$0xf]
  %v27 = vld [vmem:[%s0 + $0x30] sm:$0xf]
  %v28 = vld [vmem:[%s0 + $0x34] sm:$0xf]
  %v29 = vld [vmem:[%s0 + $0x38] sm:$0xf]
  %v30 = vld [vmem:[%s0 + $0x3c] sm:$0xf]
  %v31 = vld [vmem:[%s0 + $0x40] sm:$0xf]
  %v32 = vld [vmem:[%s0 + $0x44] sm:$0xf]
  %v33 = vld [vmem:[%s0 + $0x48] sm:$0xf]
  %v34 = vld [vmem:[%s0 + $0x4c] sm:$0xf]
  %v35 = vld [vmem:[%s0 + $0x50] sm:$0xf]
  %v36 = vld [vmem:[%s0 + $0x54] sm:$0xf]
  %v37 = vld [vmem:[%s0 + $0x58] sm:$0xf]
  %v38 = vld [vmem:[%s0 + $0x5c] sm:$0xf]
  %v39 = vld [vmem:[%s0 + $0x60] sm:$0xf]
  %v40 = vld [vmem:[%s0 + $0x64] sm:$0xf]
  %v41 = vld [vmem:[%s0 + $0x68] sm:$0xf]
  %v42 = vld [vmem:[%s0 + $0x6c] sm:$0xf]
  %v43 = vld [vmem:[%s0 + $0x70] sm:$0xf]
  %v44 = vld [vmem:[%s0 + $0x74] sm:$0xf]
  %v45 = vld [vmem:[%s0 + $0x78] sm:$0xf]
  %v46 = vld [vmem:[%s0 + $0x7c] sm:$0xf]
  %v47 = vld [vmem:[%s0 + $0x80] sm:$0xf]
  %v48 = vld [vmem:[%s0 + $0x84] sm:$0xf]
  %v49 = vld [vmem:[%s0 + $0x88] sm:$0xf]
  %v50 = vld [vmem:[%s0 + $0x8c] sm:$0xf]
  %v51 = vld [vmem:[%s0 + $0x90] sm:$0xf]
  %v52 = vld [vmem:[%s0 + $0x94] sm:$0xf]
  %v53 = vld [vmem:[%s0 + $0x98] sm:$0xf]
  %v54 = vld [vmem:[%s0 + $0x9c] sm:$0xf]
  %v55 = vld [vmem:[%s0 + $0xa0] sm:$0xf]
  %v56 = vld [vmem:[%s0 + $0xa4] sm:$0xf]
  %v57 = vld [vmem:[%s0 + $0xa8] sm:$0xf]
  %v58 = vld [vmem:[%s0 + $0xac] sm:$0xf]
  %v59 = vld [vmem:[%s0 + $0xb0] sm:$0xf]
  %v60 = vld [vmem:[%s0 + $0xb4] sm:$0xf]
  %v61 = vld [vmem:[%s0 + $0xb8] sm:$0xf]
  %v62 = vld [vmem:[%s0 + $0xbc] sm:$0xf]
  %v63 = vld [vmem:[%s0 + $0xc0] sm:$0xf]
  %v64 = vmax.bf16 %v15, 0
  %v65 = vmax.bf16 %v16, 0
  %v66 = vmax.bf16 %v17, 0
  %v67 = vmax.bf16 %v18, 0
  %v68 = vmax.bf16 %v19, 0
  %v69 = vmax.bf16 %v20, 0
  %v70 = vmax.bf16 %v21, 0
  %v71 = vmax.bf16 %v22, 0
  %v72 = vmax.bf16 %v23, 0
  %v73 = vmax.bf16 %v24, 0
  %v74 = vmax.bf16 %v25, 0
  %v75 = vmax.bf16 %v26, 0
  %v76 = vmax.bf16 %v27, 0
  %v77 = vmax.bf16 %v28, 0
  %v78 = vmax.bf16 %v29, 0
  %v79 = vmax.bf16 %v30, 0
  %v80 = vmax.bf16 %v31, 0
  %v81 = vmax.bf16 %v32, 0
  %v82 = vmax.bf16 %v33, 0
  %v83 = vmax.bf16 %v34, 0
  %v84 = vmax.bf16 %v35, 0
  %v85 = vmax.bf16 %v36, 0
  %v86 = vmax.bf16 %v37, 0
  %v87 = vmax.bf16 %v38, 0
  %v88 = vmax.bf16 %v39, 0
  %v89 = vmax.bf16 %v40, 0
  %v90 = vmax.bf16 %v41, 0
  %v91 = vmax.bf16 %v42, 0
  %v92 = vmax.bf16 %v43, 0
  %v93 = vmax.bf16 %v44, 0
  %v94 = vmax.bf16 %v45, 0
  %v95 = vmax.bf16 %v46, 0
  %v96 = vmax.bf16 %v47, 0
  %v97 = vmax.bf16 %v48, 0
  %v98 = vmax.bf16 %v49, 0
  %v99 = vmax.bf16 %v50, 0
  %v100 = vmax.bf16 %v51, 0
  %v101 = vmax.bf16 %v52, 0
  %v102 = vmax.bf16 %v53, 0
  %v103 = vmax.bf16 %v54, 0
  %v104 = vmax.bf16 %v55, 0
  %v105 = vmax.bf16 %v56, 0
  %v106 = vmax.bf16 %v57, 0
  %v107 = vmax.bf16 %v58, 0
  %v108 = vmax.bf16 %v59, 0
  %v109 = vmax.bf16 %v60, 0
  %v110 = vmax.bf16 %v61, 0
  %v111 = vmax.bf16 %v62, 0
  %v112 = vmax.bf16 %v63, 0
  %v113 = vld [vmem:[%s1] sm:$0xf]
  %v114 = vld [vmem:[%s1 + $0x4] sm:$0xf]
  %v115 = vld [vmem:[%s1 + $0x8] sm:$0xf]
  %v116 = vld [vmem:[%s1 + $0xc] sm:$0xf]
  %v117 = vld [vmem:[%s1 + $0x10] sm:$0xf]
  %v118 = vld [vmem:[%s1 + $0x14] sm:$0xf]
  %v119 = vld [vmem:[%s2] sm:$0x1]
  %v121 = vlaneseq
  %v122 = vshrl.u32 %v121, 7
  %v123 = vsub.s32 0, %v122
  %v124 = vrot.slane %v119, %v123
  %v175 = vunpack.c.l.b16 %v64
  %v176 = vunpack.c.l.b16 %v65
  %v177 = vunpack.c.l.b16 %v66
  %v178 = vunpack.c.l.b16 %v67
  %v179 = vunpack.c.l.b16 %v68
  %v180 = vunpack.c.l.b16 %v69
  %v181 = vunpack.c.l.b16 %v70
  %v182 = vunpack.c.l.b16 %v71
  %v183 = vunpack.c.l.b16 %v72
  %v184 = vunpack.c.l.b16 %v73
  %v185 = vunpack.c.l.b16 %v74
  %v186 = vunpack.c.l.b16 %v75
  %v187 = vunpack.c.l.b16 %v76
  %v188 = vunpack.c.l.b16 %v77
  %v189 = vunpack.c.l.b16 %v78
  %v190 = vunpack.c.l.b16 %v79
  %v191 = vunpack.c.l.b16 %v80
  %v192 = vunpack.c.l.b16 %v81
  %v193 = vunpack.c.l.b16 %v82
  %v194 = vunpack.c.l.b16 %v83
  %v195 = vunpack.c.l.b16 %v84
  %v196 = vunpack.c.l.b16 %v85
  %v197 = vunpack.c.l.b16 %v86
  %v198 = vunpack.c.l.b16 %v87
  %v199 = vunpack.c.l.b16 %v88
  %v200 = vunpack.c.l.b16 %v89
  %v201 = vunpack.c.l.b16 %v90
  %v202 = vunpack.c.l.b16 %v91
  %v203 = vunpack.c.l.b16 %v92
  %v204 = vunpack.c.l.b16 %v93
  %v205 = vunpack.c.l.b16 %v94
  %v206 = vunpack.c.l.b16 %v95
  %v207 = vunpack.c.l.b16 %v96
  %v208 = vunpack.c.l.b16 %v97
  %v209 = vunpack.c.l.b16 %v98
  %v210 = vunpack.c.l.b16 %v99
  %v211 = vunpack.c.l.b16 %v100
  %v212 = vunpack.c.l.b16 %v101
  %v213 = vunpack.c.l.b16 %v102
  %v214 = vunpack.c.l.b16 %v103
  %v215 = vunpack.c.l.b16 %v104
  %v216 = vunpack.c.l.b16 %v105
  %v217 = vunpack.c.l.b16 %v106
  %v218 = vunpack.c.l.b16 %v107
  %v219 = vunpack.c.l.b16 %v108
  %v220 = vunpack.c.l.b16 %v109
  %v221 = vunpack.c.l.b16 %v110
  %v222 = vunpack.c.l.b16 %v111
  %v223 = vunpack.c.l.b16 %v112
  %v224 = vpack.c.b16 %v176, %v175
  %v225 = vpack.c.b16 %v178, %v177
  %v226 = vpack.c.b16 %v180, %v179
  %v227 = vpack.c.b16 %v182, %v181
  %v228 = vpack.c.b16 %v184, %v183
  %v229 = vpack.c.b16 %v186, %v185
  %v230 = vpack.c.b16 %v188, %v187
  %v231 = vpack.c.b16 %v190, %v189
  %v232 = vpack.c.b16 %v192, %v191
  %v233 = vpack.c.b16 %v194, %v193
  %v234 = vpack.c.b16 %v196, %v195
  %v235 = vpack.c.b16 %v198, %v197
  %v236 = vpack.c.b16 %v200, %v199
  %v237 = vpack.c.b16 %v202, %v201
  %v238 = vpack.c.b16 %v204, %v203
  %v239 = vpack.c.b16 %v206, %v205
  %v240 = vpack.c.b16 %v208, %v207
  %v241 = vpack.c.b16 %v210, %v209
  %v242 = vpack.c.b16 %v212, %v211
  %v243 = vpack.c.b16 %v214, %v213
  %v244 = vpack.c.b16 %v216, %v215
  %v245 = vpack.c.b16 %v218, %v217
  %v246 = vpack.c.b16 %v220, %v219
  %v247 = vpack.c.b16 %v222, %v221
  %v248 = vpack.c.b16 %v223, %v223
  %v255 = vunpack.c.l.b16 %v113
  %v256 = vunpack.c.l.b16 %v114
  %v257 = vunpack.c.l.b16 %v115
  %v258 = vunpack.c.l.b16 %v116
  %v259 = vunpack.c.l.b16 %v117
  %v260 = vunpack.c.l.b16 %v118
  %v261 = vpack.c.b16 %v256, %v255
  %v262 = vpack.c.b16 %v258, %v257
  %v263 = vpack.c.b16 %v260, %v259
  %vm267 = vcmask 392192
  %v269 = vsel %vm267, %v224, 0
  %v272 = vsel %vm267, %v225, 0
  %v275 = vsel %vm267, %v226, 0
  %v278 = vsel %vm267, %v227, 0
  %v281 = vsel %vm267, %v228, 0
  %v284 = vsel %vm267, %v229, 0
  %v287 = vsel %vm267, %v230, 0
  %v290 = vsel %vm267, %v231, 0
  %v293 = vsel %vm267, %v232, 0
  %v296 = vsel %vm267, %v233, 0
  %v299 = vsel %vm267, %v234, 0
  %v302 = vsel %vm267, %v235, 0
  %v305 = vsel %vm267, %v236, 0
  %v308 = vsel %vm267, %v237, 0
  %v311 = vsel %vm267, %v238, 0
  %v314 = vsel %vm267, %v239, 0
  %v317 = vsel %vm267, %v240, 0
  %v320 = vsel %vm267, %v241, 0
  %v323 = vsel %vm267, %v242, 0
  %v326 = vsel %vm267, %v243, 0
  %v329 = vsel %vm267, %v244, 0
  %v332 = vsel %vm267, %v245, 0
  %v335 = vsel %vm267, %v246, 0
  %v338 = vsel %vm267, %v247, 0
  %v341 = vsel %vm267, %v248, 0
  %343 = vmatprep.subr.bf16.mxu0 0
  %344 = vmatpush1.bf16.msra.mxu0 %v261
  %345 = vmatprep.subr.bf16.mxu0 0
  %346 = vmatpush1.bf16.msra.mxu0 %v262
  %347 = vmatprep.subr.bf16.mxu0 0
  %348 = vmatpush1.bf16.msra.mxu0 %v263
  %349 = vmatprep.subr.bf16.mxu0 0
  %350 = vmatpush1.bf16.msra.mxu0 0
  %351 = vmatprep.subr.bf16.mxu0 0
  %352 = vmatpush1.bf16.msra.mxu0 0
  %353 = vmatprep.subr.bf16.mxu0 0
  %354 = vmatpush1.bf16.msra.mxu0 0
  %355 = vmatprep.subr.bf16.mxu0 0
  %356 = vmatpush1.bf16.msra.mxu0 0
  %357 = vmatprep.subr.bf16.mxu0 0
  %358 = vmatpush1.bf16.msra.mxu0 0
  %359 = vmatprep.subr.bf16.mxu0 0
  %360 = vmatpush1.bf16.msra.mxu0 0
  %361 = vmatprep.subr.bf16.mxu0 0
  %362 = vmatpush1.bf16.msra.mxu0 0
  %363 = vmatprep.subr.bf16.mxu0 0
  %364 = vmatpush1.bf16.msra.mxu0 0
  %365 = vmatprep.subr.bf16.mxu0 0
  %366 = vmatpush1.bf16.msra.mxu0 0
  %367 = vmatprep.subr.bf16.mxu0 0
  %368 = vmatpush1.bf16.msra.mxu0 0
  %369 = vmatprep.subr.bf16.mxu0 0
  %370 = vmatpush1.bf16.msra.mxu0 0
  %371 = vmatprep.subr.bf16.mxu0 0
  %372 = vmatpush1.bf16.msra.mxu0 0
  %373 = vmatprep.subr.bf16.mxu0 0
  %374 = vmatpush1.bf16.msra.mxu0 0
  %375 = vmatprep.mubr.bf16.mxu0 0
  %376 = vmatmul.mubr.bf16.gmra.mrb[0].mxu0 %v269
  %v377 = vpop.f32.mrb[0].mxu0
  %v378 = vadd.f32 %v124, %v377
  %v379 = vpop.f32.mrb[0].mxu0
  %v380 = vpop.f32.mrb[0].mxu0
  %v381 = vadd.f32 %v124, %v380
  %v382 = vpop.f32.mrb[0].mxu0
  %383 = vmatprep.mubr.bf16.mxu0 0
  %384 = vmatmul.mubr.bf16.gmra.mrb[0].mxu0 %v272
  %v385 = vpop.f32.mrb[0].mxu0
  %v386 = vadd.f32 %v124, %v385
  %v387 = vpop.f32.mrb[0].mxu0
  %v388 = vpop.f32.mrb[0].mxu0
  %v389 = vadd.f32 %v124, %v388
  %v390 = vpop.f32.mrb[0].mxu0
  %391 = vmatprep.mubr.bf16.mxu0 0
  %392 = vmatmul.mubr.bf16.gmra.mrb[0].mxu0 %v275
  %v393 = vpop.f32.mrb[0].mxu0
  %v394 = vadd.f32 %v124, %v393
  %v395 = vpop.f32.mrb[0].mxu0
  %v396 = vpop.f32.mrb[0].mxu0
  %v397 = vadd.f32 %v124, %v396
  %v398 = vpop.f32.mrb[0].mxu0
  %399 = vmatprep.mubr.bf16.mxu0 0
  %400 = vmatmul.mubr.bf16.gmra.mrb[0].mxu0 %v278
  %v401 = vpop.f32.mrb[0].mxu0
  %v402 = vadd.f32 %v124, %v401
  %v403 = vpop.f32.mrb[0].mxu0
  %v404 = vpop.f32.mrb[0].mxu0
  %v405 = vadd.f32 %v124, %v404
  %v406 = vpop.f32.mrb[0].mxu0
  %407 = vmatprep.mubr.bf16.mxu0 0
  %408 = vmatmul.mubr.bf16.gmra.mrb[0].mxu0 %v281
  %v409 = vpop.f32.mrb[0].mxu0
  %v410 = vadd.f32 %v124, %v409
  %v411 = vpop.f32.mrb[0].mxu0
  %v412 = vpop.f32.mrb[0].mxu0
  %v413 = vadd.f32 %v124, %v412
  %v414 = vpop.f32.mrb[0].mxu0
  %415 = vmatprep.mubr.bf16.mxu0 0
  %416 = vmatmul.mubr.bf16.gmra.mrb[0].mxu0 %v284
  %v417 = vpop.f32.mrb[0].mxu0
  %v418 = vadd.f32 %v124, %v417
  %v419 = vpop.f32.mrb[0].mxu0
  %v420 = vpop.f32.mrb[0].mxu0
  %v421 = vadd.f32 %v124, %v420
  %v422 = vpop.f32.mrb[0].mxu0
  %423 = vmatprep.mubr.bf16.mxu0 0
  %424 = vmatmul.mubr.bf16.gmra.mrb[0].mxu0 %v287
  %v425 = vpop.f32.mrb[0].mxu0
  %v426 = vadd.f32 %v124, %v425
  %v427 = vpop.f32.mrb[0].mxu0
  %v428 = vpop.f32.mrb[0].mxu0
  %v429 = vadd.f32 %v124, %v428
  %v430 = vpop.f32.mrb[0].mxu0
  %431 = vmatprep.mubr.bf16.mxu0 0
  %432 = vmatmul.mubr.bf16.gmra.mrb[0].mxu0 %v290
  %v433 = vpop.f32.mrb[0].mxu0
  %v434 = vadd.f32 %v124, %v433
  %v435 = vpop.f32.mrb[0].mxu0
  %v436 = vpop.f32.mrb[0].mxu0
  %v437 = vadd.f32 %v124, %v436
  %v438 = vpop.f32.mrb[0].mxu0
  %439 = vmatprep.mubr.bf16.mxu0 0
  %440 = vmatmul.mubr.bf16.gmra.mrb[0].mxu0 %v293
  %v441 = vpop.f32.mrb[0].mxu0
  %v442 = vadd.f32 %v124, %v441
  %v443 = vpop.f32.mrb[0].mxu0
  %v444 = vpop.f32.mrb[0].mxu0
  %v445 = vadd.f32 %v124, %v444
  %v446 = vpop.f32.mrb[0].mxu0
  %447 = vmatprep.mubr.bf16.mxu0 0
  %448 = vmatmul.mubr.bf16.gmra.mrb[0].mxu0 %v296
  %v449 = vpop.f32.mrb[0].mxu0
  %v450 = vadd.f32 %v124, %v449
  %v451 = vpop.f32.mrb[0].mxu0
  %v452 = vpop.f32.mrb[0].mxu0
  %v453 = vadd.f32 %v124, %v452
  %v454 = vpop.f32.mrb[0].mxu0
  %455 = vmatprep.mubr.bf16.mxu0 0
  %456 = vmatmul.mubr.bf16.gmra.mrb[0].mxu0 %v299
  %v457 = vpop.f32.mrb[0].mxu0
  %v458 = vadd.f32 %v124, %v457
  %v459 = vpop.f32.mrb[0].mxu0
  %v460 = vpop.f32.mrb[0].mxu0
  %v461 = vadd.f32 %v124, %v460
  %v462 = vpop.f32.mrb[0].mxu0
  %463 = vmatprep.mubr.bf16.mxu0 0
  %464 = vmatmul.mubr.bf16.gmra.mrb[0].mxu0 %v302
  %v465 = vpop.f32.mrb[0].mxu0
  %v466 = vadd.f32 %v124, %v465
  %v467 = vpop.f32.mrb[0].mxu0
  %v468 = vpop.f32.mrb[0].mxu0
  %v469 = vadd.f32 %v124, %v468
  %v470 = vpop.f32.mrb[0].mxu0
  %471 = vmatprep.mubr.bf16.mxu0 0
  %472 = vmatmul.mubr.bf16.gmra.mrb[0].mxu0 %v305
  %v473 = vpop.f32.mrb[0].mxu0
  %v474 = vadd.f32 %v124, %v473
  %v475 = vpop.f32.mrb[0].mxu0
  %v476 = vpop.f32.mrb[0].mxu0
  %v477 = vadd.f32 %v124, %v476
  %v478 = vpop.f32.mrb[0].mxu0
  %479 = vmatprep.mubr.bf16.mxu0 0
  %480 = vmatmul.mubr.bf16.gmra.mrb[0].mxu0 %v308
  %v481 = vpop.f32.mrb[0].mxu0
  %v482 = vadd.f32 %v124, %v481
  %v483 = vpop.f32.mrb[0].mxu0
  %v484 = vpop.f32.mrb[0].mxu0
  %v485 = vadd.f32 %v124, %v484
  %v486 = vpop.f32.mrb[0].mxu0
  %487 = vmatprep.mubr.bf16.mxu0 0
  %488 = vmatmul.mubr.bf16.gmra.mrb[0].mxu0 %v311
  %v489 = vpop.f32.mrb[0].mxu0
  %v490 = vadd.f32 %v124, %v489
  %v491 = vpop.f32.mrb[0].mxu0
  %v492 = vpop.f32.mrb[0].mxu0
  %v493 = vadd.f32 %v124, %v492
  %v494 = vpop.f32.mrb[0].mxu0
  %495 = vmatprep.mubr.bf16.mxu0 0
  %496 = vmatmul.mubr.bf16.gmra.mrb[0].mxu0 %v314
  %v497 = vpop.f32.mrb[0].mxu0
  %v498 = vadd.f32 %v124, %v497
  %v499 = vpop.f32.mrb[0].mxu0
  %v500 = vpop.f32.mrb[0].mxu0
  %v501 = vadd.f32 %v124, %v500
  %v502 = vpop.f32.mrb[0].mxu0
  %503 = vmatprep.mubr.bf16.mxu0 0
  %504 = vmatmul.mubr.bf16.gmra.mrb[0].mxu0 %v317
  %v505 = vpop.f32.mrb[0].mxu0
  %v506 = vadd.f32 %v124, %v505
  %v507 = vpop.f32.mrb[0].mxu0
  %v508 = vpop.f32.mrb[0].mxu0
  %v509 = vadd.f32 %v124, %v508
  %v510 = vpop.f32.mrb[0].mxu0
  %511 = vmatprep.mubr.bf16.mxu0 0
  %512 = vmatmul.mubr.bf16.gmra.mrb[0].mxu0 %v320
  %v513 = vpop.f32.mrb[0].mxu0
  %v514 = vadd.f32 %v124, %v513
  %v515 = vpop.f32.mrb[0].mxu0
  %v516 = vpop.f32.mrb[0].mxu0
  %v517 = vadd.f32 %v124, %v516
  %v518 = vpop.f32.mrb[0].mxu0
  %519 = vmatprep.mubr.bf16.mxu0 0
  %520 = vmatmul.mubr.bf16.gmra.mrb[0].mxu0 %v323
  %v521 = vpop.f32.mrb[0].mxu0
  %v522 = vadd.f32 %v124, %v521
  %v523 = vpop.f32.mrb[0].mxu0
  %v524 = vpop.f32.mrb[0].mxu0
  %v525 = vadd.f32 %v124, %v524
  %v526 = vpop.f32.mrb[0].mxu0
  %527 = vmatprep.mubr.bf16.mxu0 0
  %528 = vmatmul.mubr.bf16.gmra.mrb[0].mxu0 %v326
  %v529 = vpop.f32.mrb[0].mxu0
  %v530 = vadd.f32 %v124, %v529
  %v531 = vpop.f32.mrb[0].mxu0
  %v532 = vpop.f32.mrb[0].mxu0
  %v533 = vadd.f32 %v124, %v532
  %v534 = vpop.f32.mrb[0].mxu0
  %535 = vmatprep.mubr.bf16.mxu0 0
  %536 = vmatmul.mubr.bf16.gmra.mrb[0].mxu0 %v329
  %v537 = vpop.f32.mrb[0].mxu0
  %v538 = vadd.f32 %v124, %v537
  %v539 = vpop.f32.mrb[0].mxu0
  %v540 = vpop.f32.mrb[0].mxu0
  %v541 = vadd.f32 %v124, %v540
  %v542 = vpop.f32.mrb[0].mxu0
  %543 = vmatprep.mubr.bf16.mxu0 0
  %544 = vmatmul.mubr.bf16.gmra.mrb[0].mxu0 %v332
  %v545 = vpop.f32.mrb[0].mxu0
  %v546 = vadd.f32 %v124, %v545
  %v547 = vpop.f32.mrb[0].mxu0
  %v548 = vpop.f32.mrb[0].mxu0
  %v549 = vadd.f32 %v124, %v548
  %v550 = vpop.f32.mrb[0].mxu0
  %551 = vmatprep.mubr.bf16.mxu0 0
  %552 = vmatmul.mubr.bf16.gmra.mrb[0].mxu0 %v335
  %v553 = vpop.f32.mrb[0].mxu0
  %v554 = vadd.f32 %v124, %v553
  %v555 = vpop.f32.mrb[0].mxu0
  %v556 = vpop.f32.mrb[0].mxu0
  %v557 = vadd.f32 %v124, %v556
  %v558 = vpop.f32.mrb[0].mxu0
  %559 = vmatprep.mubr.bf16.mxu0 0
  %560 = vmatmul.mubr.bf16.gmra.mrb[0].mxu0 %v338
  %v561 = vpop.f32.mrb[0].mxu0
  %v562 = vadd.f32 %v124, %v561
  %v563 = vpop.f32.mrb[0].mxu0
  %v564 = vpop.f32.mrb[0].mxu0
  %v565 = vadd.f32 %v124, %v564
  %v566 = vpop.f32.mrb[0].mxu0
  %567 = vmatprep.mubr.bf16.mxu0 0
  %568 = vmatmul.mubr.bf16.gmra.mrb[0].mxu0 %v341
  %v569 = vpop.f32.mrb[0].mxu0
  %v570 = vadd.f32 %v124, %v569
  %v571 = vpop.f32.mrb[0].mxu0
  %v572 = vpop.f32.mrb[0].mxu0
  %v573 = vpop.f32.mrb[0].mxu0
  %574 = vdwg.mxu0
  %vm575 = vcmask 523264
  %576 = vst.msk [vmem:[%s3] sm:$0xff] %vm575, %v378
  %577 = vst.msk [vmem:[%s3 + $0x8] sm:$0xff] %vm575, %v381
  %578 = vst.msk [vmem:[%s3 + $0x10] sm:$0xff] %vm575, %v386
  %579 = vst.msk [vmem:[%s3 + $0x18] sm:$0xff] %vm575, %v389
  %580 = vst.msk [vmem:[%s3 + $0x20] sm:$0xff] %vm575, %v394
  %581 = vst.msk [vmem:[%s3 + $0x28] sm:$0xff] %vm575, %v397
  %582 = vst.msk [vmem:[%s3 + $0x30] sm:$0xff] %vm575, %v402
  %583 = vst.msk [vmem:[%s3 + $0x38] sm:$0xff] %vm575, %v405
  %584 = vst.msk [vmem:[%s3 + $0x40] sm:$0xff] %vm575, %v410
  %585 = vst.msk [vmem:[%s3 + $0x48] sm:$0xff] %vm575, %v413
  %586 = vst.msk [vmem:[%s3 + $0x50] sm:$0xff] %vm575, %v418
  %587 = vst.msk [vmem:[%s3 + $0x58] sm:$0xff] %vm575, %v421
  %588 = vst.msk [vmem:[%s3 + $0x60] sm:$0xff] %vm575, %v426
  %589 = vst.msk [vmem:[%s3 + $0x68] sm:$0xff] %vm575, %v429
  %590 = vst.msk [vmem:[%s3 + $0x70] sm:$0xff] %vm575, %v434
  %591 = vst.msk [vmem:[%s3 + $0x78] sm:$0xff] %vm575, %v437
  %592 = vst.msk [vmem:[%s3 + $0x80] sm:$0xff] %vm575, %v442
  %593 = vst.msk [vmem:[%s3 + $0x88] sm:$0xff] %vm575, %v445
  %594 = vst.msk [vmem:[%s3 + $0x90] sm:$0xff] %vm575, %v450
  %595 = vst.msk [vmem:[%s3 + $0x98] sm:$0xff] %vm575, %v453
  %596 = vst.msk [vmem:[%s3 + $0xa0] sm:$0xff] %vm575, %v458
  %597 = vst.msk [vmem:[%s3 + $0xa8] sm:$0xff] %vm575, %v461
  %598 = vst.msk [vmem:[%s3 + $0xb0] sm:$0xff] %vm575, %v466
  %599 = vst.msk [vmem:[%s3 + $0xb8] sm:$0xff] %vm575, %v469
  %600 = vst.msk [vmem:[%s3 + $0xc0] sm:$0xff] %vm575, %v474
  %601 = vst.msk [vmem:[%s3 + $0xc8] sm:$0xff] %vm575, %v477
  %602 = vst.msk [vmem:[%s3 + $0xd0] sm:$0xff] %vm575, %v482
  %603 = vst.msk [vmem:[%s3 + $0xd8] sm:$0xff] %vm575, %v485
  %604 = vst.msk [vmem:[%s3 + $0xe0] sm:$0xff] %vm575, %v490
  %605 = vst.msk [vmem:[%s3 + $0xe8] sm:$0xff] %vm575, %v493
  %606 = vst.msk [vmem:[%s3 + $0xf0] sm:$0xff] %vm575, %v498
  %607 = vst.msk [vmem:[%s3 + $0xf8] sm:$0xff] %vm575, %v501
  %608 = vst.msk [vmem:[%s3 + $0x100] sm:$0xff] %vm575, %v506
  %609 = vst.msk [vmem:[%s3 + $0x108] sm:$0xff] %vm575, %v509
  %610 = vst.msk [vmem:[%s3 + $0x110] sm:$0xff] %vm575, %v514
  %611 = vst.msk [vmem:[%s3 + $0x118] sm:$0xff] %vm575, %v517
  %612 = vst.msk [vmem:[%s3 + $0x120] sm:$0xff] %vm575, %v522
  %613 = vst.msk [vmem:[%s3 + $0x128] sm:$0xff] %vm575, %v525
  %614 = vst.msk [vmem:[%s3 + $0x130] sm:$0xff] %vm575, %v530
  %615 = vst.msk [vmem:[%s3 + $0x138] sm:$0xff] %vm575, %v533
  %616 = vst.msk [vmem:[%s3 + $0x140] sm:$0xff] %vm575, %v538
  %617 = vst.msk [vmem:[%s3 + $0x148] sm:$0xff] %vm575, %v541
  %618 = vst.msk [vmem:[%s3 + $0x150] sm:$0xff] %vm575, %v546
  %619 = vst.msk [vmem:[%s3 + $0x158] sm:$0xff] %vm575, %v549
  %620 = vst.msk [vmem:[%s3 + $0x160] sm:$0xff] %vm575, %v554
  %621 = vst.msk [vmem:[%s3 + $0x168] sm:$0xff] %vm575, %v557
  %622 = vst.msk [vmem:[%s3 + $0x170] sm:$0xff] %vm575, %v562
  %623 = vst.msk [vmem:[%s3 + $0x178] sm:$0xff] %vm575, %v565
  %624 = vst.msk [vmem:[%s3 + $0x180] sm:$0xff] %vm575, %v570
  // Predicated region
  $region14: #{_lambda_.8} parent=0 // pred_check
    _
  $region15: #{_lambda_.8} parent=0 // pred_check_branch
    %626 = sbr.rel (0) target = $region17
  $region16: #{_lambda_.8} parent=0 // pred_region
    _
  $region17: #{_lambda_.8} parent=0 // pred_fallthru
    _
  // Predicated region
  $region18: #{_lambda_.8} parent=0 // pred_check
    _
  $region19: #{_lambda_.8} parent=0 // pred_check_branch
    %628 = sbr.rel (0) target = $region21
  $region20: #{_lambda_.8} parent=0 // pred_region
    _
  $region21: #{_lambda_.8} parent=0 // pred_fallthru
    _

// kernel: _lambda_.9
$region0: #{_lambda_.9}
  #allocation0 [shape = 'u32[]', space=smem, size = 0x4, offset = 0x4, fixed_abs, tag = 'smem constant byte address 0x4 - core index']
  #allocation1 [shape = 'u32[144,128]{1,0:T(1,128)}', space=vmem, size = 0x12000, scoped, tag = 'internal scratch']
  #allocation2 [shape = 'f32[7,7,32]{2,1,0:T(8,128)}', space=vmem, size = 0x7000, scoped, tag = 'scratch operand']
  #allocation3 [shape = 'f32[7,7,32]{2,1,0:T(8,128)}', space=vmem, size = 0x7000, scoped, tag = 'scratch operand']
  %s0 = inlined_call_operand.vmem [shape: f32[8,7,7,64], index: 0, kind: input, shape index: {}]
  %s1 = inlined_call_operand.vmem [shape: f32[5,32], index: 1, kind: input, shape index: {}]
  %s2 = inlined_call_operand.vmem [shape: f32[5,32], index: 2, kind: input, shape index: {}]
  %s3 = inlined_call_operand.vmem [shape: f32[1,64,32], index: 3, kind: input, shape index: {}]
  %s4 = inlined_call_operand.vmem [shape: f32[1,32], index: 4, kind: input, shape index: {}]
  %s5 = inlined_call_operand.vmem [shape: f32[128,10], index: 5, kind: input, shape index: {}]
  %s6 = inlined_call_operand.vmem [shape: f32[1,10], index: 6, kind: input, shape index: {}]
  %s7 = inlined_call_operand.hbm [shape: f32[2,1,10], index: 7, kind: output, shape index: {}]
  %s8 = sld [smem:[#allocation0]]
  $region61: #{_lambda_.9} parent=0
    _
  %s10 = ssub.s32 1, %s8
  %s11 = scalar_select 0, %s10, %s8
  $region1: #{_lambda_.9} parent=0
    #allocation4 [shape = 'u8[1024]{0}', space=vmem, size = 0x400, scoped, tag = 'output window, operand 0']
    #allocation5 [shape = 's32[2]{0}', space=sflag, size = 0x8, scoped, tag = 'scoped memory for _lambda_.9']
    %12 = vsyncpa [#allocation5], 0
    %s13 = scalar_lea.sflag [#allocation5], 1
    %14 = vsyncpa %s13, 0
    loop: start=0, step=1, limit=4
    $region2: #{_lambda_.9} parent=1 // loop_pre_header
      _
    $region3: #{_lambda_.9} parent=1 // loop_header
      %s16 = sphi 0, %s20
      %p17 = scmp.ge.s32.totalorder %s16, 4
      %s26 = sphi 0, %s28
      %s29 = sphi 0, %s26
      %s30 = sphi 0, %s29
      %s46 = sphi 0, %s30
      %s50 = sphi 0, %s50
      %s52 = sphi 0, %s50
      %s53 = sphi 0, %s52
      %s67 = sphi 0, %s53
      %s71 = sphi 0, %s71
      %s73 = sphi 0, %s71
      %s74 = sphi 0, %s73
      %s88 = sphi 0, %s74
      %s92 = sphi 0, %s92
      %s94 = sphi 0, %s92
      %s95 = sphi 0, %s94
      %s109 = sphi 0, %s95
      %s113 = sphi 0, %s113
      %s115 = sphi 0, %s113
      %s116 = sphi 0, %s115
      %s130 = sphi 0, %s116
      %s134 = sphi 0, %s134
      %s136 = sphi 0, %s134
      %s137 = sphi 0, %s136
      %s151 = sphi 0, %s137
      %s155 = sphi 0, %s155
      %s157 = sphi 0, %s155
      %s158 = sphi 0, %s157
      %s172 = sphi 0, %s158
      %s178 = sphi 0, %s180
      %s181 = sphi 0, %s178
      %s182 = sphi 0, %s181
      %s198 = sphi 0, %s182
    $region4: #{_lambda_.9} parent=1 // loop_header_branch
      %19 = sbr.rel (%p17) target = $region8
    $region5: #{_lambda_.9} parent=1 // loop_body
      %s21 = ssub.s32 %s16, 1
      %s22 = ssub.s32 %s16, 2
      %s23 = sadd.s32 %s16, 1
      %s24 = ssub.s32 %s16, %s23
      %p25 = scmp.eq.s32.totalorder %s24, 0
      %s27 = sadd.s32 %s26, 1
      %s28 = scalar_select %p25, %s26, %s27
      %p31 = pneg %p25
      %p32 = scmp.eq.s32.totalorder %s16, 1
      %p33 = por %p31, %p32
      %p34 = scmp.ne.s32.totalorder %s26, %s29
      %p35 = scmp.eq.s32.totalorder %s16, 0
      %p36 = por %p34, %p35
      %p37 = scmp.ne.s32.totalorder %s26, %s29
      %p38 = scmp.eq.s32.totalorder %s21, 1
      %p39 = por %p37, %p38
      %p40 = scmp.ne.s32.totalorder %s29, %s30
      %p41 = scmp.eq.s32.totalorder %s21, 0
      %p42 = por %p40, %p41
      %p43 = scmp.ne.s32.totalorder %s29, %s30
      %p44 = scmp.eq.s32.totalorder %s22, 1
      %p45 = por %p43, %p44
      %p47 = scmp.ne.s32.totalorder %s30, %s46
      %p48 = scmp.eq.s32.totalorder %s22, 0
      %p49 = por %p47, %p48
      %s51 = sadd.s32 %s50, 1
      %p54 = scmp.eq.s32.totalorder %s16, 1
      %p55 = scmp.ne.s32.totalorder %s50, %s52
      %p56 = scmp.eq.s32.totalorder %s16, 0
      %p57 = por %p55, %p56
      %p58 = scmp.ne.s32.totalorder %s50, %s52
      %p59 = scmp.eq.s32.totalorder %s21, 1
      %p60 = por %p58, %p59
      %p61 = scmp.ne.s32.totalorder %s52, %s53
      %p62 = scmp.eq.s32.totalorder %s21, 0
      %p63 = por %p61, %p62
      %p64 = scmp.ne.s32.totalorder %s52, %s53
      %p65 = scmp.eq.s32.totalorder %s22, 1
      %p66 = por %p64, %p65
      %p68 = scmp.ne.s32.totalorder %s53, %s67
      %p69 = scmp.eq.s32.totalorder %s22, 0
      %p70 = por %p68, %p69
      %s72 = sadd.s32 %s71, 1
      %p75 = scmp.eq.s32.totalorder %s16, 1
      %p76 = scmp.ne.s32.totalorder %s71, %s73
      %p77 = scmp.eq.s32.totalorder %s16, 0
      %p78 = por %p76, %p77
      %p79 = scmp.ne.s32.totalorder %s71, %s73
      %p80 = scmp.eq.s32.totalorder %s21, 1
      %p81 = por %p79, %p80
      %p82 = scmp.ne.s32.totalorder %s73, %s74
      %p83 = scmp.eq.s32.totalorder %s21, 0
      %p84 = por %p82, %p83
      %p85 = scmp.ne.s32.totalorder %s73, %s74
      %p86 = scmp.eq.s32.totalorder %s22, 1
      %p87 = por %p85, %p86
      %p89 = scmp.ne.s32.totalorder %s74, %s88
      %p90 = scmp.eq.s32.totalorder %s22, 0
      %p91 = por %p89, %p90
      %s93 = sadd.s32 %s92, 1
      %p96 = scmp.eq.s32.totalorder %s16, 1
      %p97 = scmp.ne.s32.totalorder %s92, %s94
      %p98 = scmp.eq.s32.totalorder %s16, 0
      %p99 = por %p97, %p98
      %p100 = scmp.ne.s32.totalorder %s92, %s94
      %p101 = scmp.eq.s32.totalorder %s21, 1
      %p102 = por %p100, %p101
      %p103 = scmp.ne.s32.totalorder %s94, %s95
      %p104 = scmp.eq.s32.totalorder %s21, 0
      %p105 = por %p103, %p104
      %p106 = scmp.ne.s32.totalorder %s94, %s95
      %p107 = scmp.eq.s32.totalorder %s22, 1
      %p108 = por %p106, %p107
      %p110 = scmp.ne.s32.totalorder %s95, %s109
      %p111 = scmp.eq.s32.totalorder %s22, 0
      %p112 = por %p110, %p111
      %s114 = sadd.s32 %s113, 1
      %p117 = scmp.eq.s32.totalorder %s16, 1
      %p118 = scmp.ne.s32.totalorder %s113, %s115
      %p119 = scmp.eq.s32.totalorder %s16, 0
      %p120 = por %p118, %p119
      %p121 = scmp.ne.s32.totalorder %s113, %s115
      %p122 = scmp.eq.s32.totalorder %s21, 1
      %p123 = por %p121, %p122
      %p124 = scmp.ne.s32.totalorder %s115, %s116
      %p125 = scmp.eq.s32.totalorder %s21, 0
      %p126 = por %p124, %p125
      %p127 = scmp.ne.s32.totalorder %s115, %s116
      %p128 = scmp.eq.s32.totalorder %s22, 1
      %p129 = por %p127, %p128
      %p131 = scmp.ne.s32.totalorder %s116, %s130
      %p132 = scmp.eq.s32.totalorder %s22, 0
      %p133 = por %p131, %p132
      %s135 = sadd.s32 %s134, 1
      %p138 = scmp.eq.s32.totalorder %s16, 1
      %p139 = scmp.ne.s32.totalorder %s134, %s136
      %p140 = scmp.eq.s32.totalorder %s16, 0
      %p141 = por %p139, %p140
      %p142 = scmp.ne.s32.totalorder %s134, %s136
      %p143 = scmp.eq.s32.totalorder %s21, 1
      %p144 = por %p142, %p143
      %p145 = scmp.ne.s32.totalorder %s136, %s137
      %p146 = scmp.eq.s32.totalorder %s21, 0
      %p147 = por %p145, %p146
      %p148 = scmp.ne.s32.totalorder %s136, %s137
      %p149 = scmp.eq.s32.totalorder %s22, 1
      %p150 = por %p148, %p149
      %p152 = scmp.ne.s32.totalorder %s137, %s151
      %p153 = scmp.eq.s32.totalorder %s22, 0
      %p154 = por %p152, %p153
      %s156 = sadd.s32 %s155, 1
      %p159 = scmp.eq.s32.totalorder %s16, 1
      %p160 = scmp.ne.s32.totalorder %s155, %s157
      %p161 = scmp.eq.s32.totalorder %s16, 0
      %p162 = por %p160, %p161
      %p163 = scmp.ne.s32.totalorder %s155, %s157
      %p164 = scmp.eq.s32.totalorder %s21, 1
      %p165 = por %p163, %p164
      %p166 = scmp.ne.s32.totalorder %s157, %s158
      %p167 = scmp.eq.s32.totalorder %s21, 0
      %p168 = por %p166, %p167
      %p169 = scmp.ne.s32.totalorder %s157, %s158
      %p170 = scmp.eq.s32.totalorder %s22, 1
      %p171 = por %p169, %p170
      %p173 = scmp.ne.s32.totalorder %s158, %s172
      %p174 = scmp.eq.s32.totalorder %s22, 0
      %p175 = por %p173, %p174
      %s176 = ssub.s32 %s16, %s23
      %p177 = scmp.eq.s32.totalorder %s176, 0
      %s179 = sadd.s32 %s178, 1
      %s180 = scalar_select %p177, %s178, %s179
      %p183 = pneg %p177
      %p184 = scmp.eq.s32.totalorder %s16, 1
      %p185 = por %p183, %p184
      %p186 = scmp.ne.s32.totalorder %s178, %s181
      %p187 = scmp.eq.s32.totalorder %s16, 0
      %p188 = por %p186, %p187
      %p189 = scmp.ne.s32.totalorder %s178, %s181
      %p190 = scmp.eq.s32.totalorder %s21, 1
      %p191 = por %p189, %p190
      %p192 = scmp.ne.s32.totalorder %s181, %s182
      %p193 = scmp.eq.s32.totalorder %s21, 0
      %p194 = por %p192, %p193
      %p195 = scmp.ne.s32.totalorder %s181, %s182
      %p196 = scmp.eq.s32.totalorder %s22, 1
      %p197 = por %p195, %p196
      %p199 = scmp.ne.s32.totalorder %s182, %s198
      %p200 = scmp.eq.s32.totalorder %s22, 0
      %p201 = por %p199, %p200
      %p202 = scmp.le.s32.totalorder 1, %s16
      %p203 = scmp.lt.s32.totalorder %s16, 3
      %p204 = pnand %p202, %p203
      %p205 = pneg %p204
      // Predicated region
      $region9: #{_lambda_.9} parent=5 // pred_check
        _
      $region10: #{_lambda_.9} parent=5 // pred_check_branch
        %207 = sbr.rel (%p204) target = $region12
      $region11: #{_lambda_.9} parent=5 // pred_region
        %s208 = ssub.s32 %s16, 1
        // Predicated region
        $region13: #{_lambda_.9} parent=11 // pred_check
          %p209 = pneg %p63
        $region14: #{_lambda_.9} parent=11 // pred_check_branch
          %211 = sbr.rel (%p209) target = $region16
        $region15: #{_lambda_.9} parent=11 // pred_region
          _
        $region16: #{_lambda_.9} parent=11 // pred_fallthru
          _
        // Predicated region
        $region17: #{_lambda_.9} parent=11 // pred_check
          %p212 = pneg %p84
        $region18: #{_lambda_.9} parent=11 // pred_check_branch
          %214 = sbr.rel (%p212) target = $region20
        $region19: #{_lambda_.9} parent=11 // pred_region
          _
        $region20: #{_lambda_.9} parent=11 // pred_fallthru
          _
        // Predicated region
        $region21: #{_lambda_.9} parent=11 // pred_check
          %p215 = pneg %p105
        $region22: #{_lambda_.9} parent=11 // pred_check_branch
          %217 = sbr.rel (%p215) target = $region24
        $region23: #{_lambda_.9} parent=11 // pred_region
          _
        $region24: #{_lambda_.9} parent=11 // pred_fallthru
          _
        // Predicated region
        $region25: #{_lambda_.9} parent=11 // pred_check
          %p218 = pneg %p126
        $region26: #{_lambda_.9} parent=11 // pred_check_branch
          %220 = sbr.rel (%p218) target = $region28
        $region27: #{_lambda_.9} parent=11 // pred_region
          _
        $region28: #{_lambda_.9} parent=11 // pred_fallthru
          _
        // Predicated region
        $region29: #{_lambda_.9} parent=11 // pred_check
          %p221 = pneg %p147
        $region30: #{_lambda_.9} parent=11 // pred_check_branch
          %223 = sbr.rel (%p221) target = $region32
        $region31: #{_lambda_.9} parent=11 // pred_region
          _
        $region32: #{_lambda_.9} parent=11 // pred_fallthru
          _
        // Predicated region
        $region33: #{_lambda_.9} parent=11 // pred_check
          %p224 = pneg %p168
        $region34: #{_lambda_.9} parent=11 // pred_check_branch
          %226 = sbr.rel (%p224) target = $region36
        $region35: #{_lambda_.9} parent=11 // pred_region
          _
        $region36: #{_lambda_.9} parent=11 // pred_fallthru
          _
      $region12: #{_lambda_.9} parent=5 // pred_fallthru
        _
      %p227 = scmp.lt.s32.totalorder %s16, 2
      // Predicated region
      $region37: #{_lambda_.9} parent=5 // pred_check
        %p228 = pneg %p227
      $region38: #{_lambda_.9} parent=5 // pred_check_branch
        %230 = sbr.rel (%p228) target = $region40
      $region39: #{_lambda_.9} parent=5 // pred_region
        // Predicated region
        $region41: #{_lambda_.9} parent=39 // pred_check
          %p231 = pneg %p36
        $region42: #{_lambda_.9} parent=39 // pred_check_branch
          %233 = sbr.rel (%p231) target = $region44
        $region43: #{_lambda_.9} parent=39 // pred_region
          %s234 = smul.u32 4, %s16
          %p235 = scmp.lt.s32.totalorder %s234, 7
          %s236 = scalar_select %p235, %s234, 7
          %s237 = smul.addr %s236, 7
          %s238 = smul.addr %s237, 8
          %s239 = scalar_lea.vmem %s0, %s238
          %s240 = smul.u32 4, %s16
        $region44: #{_lambda_.9} parent=39 // pred_fallthru
          _
      $region40: #{_lambda_.9} parent=5 // pred_fallthru
        _
      %p241 = scmp.le.s32.totalorder 1, %s16
      %p242 = scmp.lt.s32.totalorder %s16, 3
      %p243 = pnand %p241, %p242
      %p244 = pneg %p243
      // Predicated region
      $region45: #{_lambda_.9} parent=5 // pred_check
        _
      $region46: #{_lambda_.9} parent=5 // pred_check_branch
        %246 = sbr.rel (%p243) target = $region48
      $region47: #{_lambda_.9} parent=5 // pred_region
        %s247 = ssub.s32 %s16, 1
        %s248 = smul.u32 4, %s21
        %p249 = scmp.lt.s32.totalorder %s248, 7
        %s250 = scalar_select %p249, %s248, 7
        %s251 = smul.addr %s250, 7
        %s252 = smul.addr %s251, 8
        %s253 = scalar_lea.vmem %s0, %s252
        %p254 = pneg %p42
        %p255 = pneg %p39
        %p256 = pneg %p63
        %p257 = pneg %p60
        %p258 = pneg %p84
        %p259 = pneg %p81
        %p260 = pneg %p105
        %p261 = pneg %p102
        %p262 = pneg %p126
        %p263 = pneg %p123
        %p264 = pneg %p147
        %p265 = pneg %p144
        %p266 = pneg %p168
        %p267 = pneg %p165
        %p268 = pneg %p194
        %p269 = pneg %p191
        %s270 = sand.u32 %s181, 1
        %s271 = scalar_lea.sflag [#allocation5], %s270
        %s272 = sand.u32 %s181, 1
        %s273 = scalar_lea.vmem [#allocation4], %s272
        %s274 = smul.u32 4, %s21
        %p275 = scmp.lt.s32.totalorder %s274, 7
        %s276 = scalar_select %p275, %s274, 7
        %s277 = smul.addr %s276, 7
        %s278 = smul.addr %s277, 8
        %s279 = scalar_lea.vmem %s0, %s278
        %s280 = smul.u32 4, %s21
        %v281 = vld [vmem:[%s279] sm:$0x7f]
        %v282 = vld [vmem:[%s279 + $0x8] sm:$0x7f]
        %v283 = vld [vmem:[%s279 + $0x10] sm:$0x7f]
        %v284 = vld [vmem:[%s279 + $0x18] sm:$0x7f]
        %v285 = vld [vmem:[%s279 + $0x20] sm:$0x7f]
        %v286 = vld [vmem:[%s279 + $0x28] sm:$0x7f]
        %v287 = vld [vmem:[%s279 + $0x30] sm:$0x7f]
        %s288 = scalar_lea.vmem %s279, 56
        %v289 = vld [vmem:[%s288] sm:$0x7f]
        %v290 = vld [vmem:[%s288 + $0x8] sm:$0x7f]
        %v291 = vld [vmem:[%s288 + $0x10] sm:$0x7f]
        %v292 = vld [vmem:[%s288 + $0x18] sm:$0x7f]
        %v293 = vld [vmem:[%s288 + $0x20] sm:$0x7f]
        %v294 = vld [vmem:[%s288 + $0x28] sm:$0x7f]
        %v295 = vld [vmem:[%s288 + $0x30] sm:$0x7f]
        %s296 = scalar_lea.vmem %s279, 112
        %v297 = vld [vmem:[%s296] sm:$0x7f]
        %v298 = vld [vmem:[%s296 + $0x8] sm:$0x7f]
        %v299 = vld [vmem:[%s296 + $0x10] sm:$0x7f]
        %v300 = vld [vmem:[%s296 + $0x18] sm:$0x7f]
        %v301 = vld [vmem:[%s296 + $0x20] sm:$0x7f]
        %v302 = vld [vmem:[%s296 + $0x28] sm:$0x7f]
        %v303 = vld [vmem:[%s296 + $0x30] sm:$0x7f]
        %s304 = scalar_lea.vmem %s279, 168
        %v305 = vld [vmem:[%s304] sm:$0x7f]
        %v306 = vld [vmem:[%s304 + $0x8] sm:$0x7f]
        %v307 = vld [vmem:[%s304 + $0x10] sm:$0x7f]
        %v308 = vld [vmem:[%s304 + $0x18] sm:$0x7f]
        %v309 = vld [vmem:[%s304 + $0x20] sm:$0x7f]
        %v310 = vld [vmem:[%s304 + $0x28] sm:$0x7f]
        %v311 = vld [vmem:[%s304 + $0x30] sm:$0x7f]
        %v312 = vld [vmem:[%s1] sm:$0x1]
        %v313 = vld [vmem:[%s2] sm:$0x1]
        %vm314 = vcmask 260096
        %315 = vst.msk [vmem:[#allocation2] sm:$0x7f] %vm314, %v281
        %316 = vst.msk [vmem:[#allocation2 + $0x8] sm:$0x7f] %vm314, %v282
        %317 = vst.msk [vmem:[#allocation2 + $0x10] sm:$0x7f] %vm314, %v283
        %318 = vst.msk [vmem:[#allocation2 + $0x18] sm:$0x7f] %vm314, %v284
        %319 = vst.msk [vmem:[#allocation2 + $0x20] sm:$0x7f] %vm314, %v285
        %320 = vst.msk [vmem:[#allocation2 + $0x28] sm:$0x7f] %vm314, %v286
        %321 = vst.msk [vmem:[#allocation2 + $0x30] sm:$0x7f] %vm314, %v287
        %s322 = scalar_lea.vmem [#allocation2], 8
        %v323 = vld [vmem:[%s322 + $0x1] sm:$0x3f]
        %v324 = vld [vmem:[%s322 + $0x9] sm:$0x3f]
        %v325 = vld [vmem:[%s322 + $0x11] sm:$0x3f]
        %v326 = vld [vmem:[%s322 + $0x19] sm:$0x3f]
        %v327 = vld [vmem:[%s322 + $0x21] sm:$0x3f]
        %v328 = vld [vmem:[%s322 + $0x29] sm:$0x3f]
        %v329 = vmax.f32 %v323, %v305
        %v330 = vmax.f32 %v324, %v306
        %v331 = vmax.f32 %v325, %v307
        %v332 = vmax.f32 %v326, %v308
        %v333 = vmax.f32 %v327, %v309
        %v334 = vmax.f32 %v328, %v310
        %vm335 = vcmask 259072
        %336 = vst.msk [vmem:[%s322 + $0x1] sm:$0x3f] %vm335, %v329
        %337 = vst.msk [vmem:[%s322 + $0x9] sm:$0x3f] %vm335, %v330
        %338 = vst.msk [vmem:[%s322 + $0x11] sm:$0x3f] %vm335, %v331
        %339 = vst.msk [vmem:[%s322 + $0x19] sm:$0x3f] %vm335, %v332
        %340 = vst.msk [vmem:[%s322 + $0x21] sm:$0x3f] %vm335, %v333
        %341 = vst.msk [vmem:[%s322 + $0x29] sm:$0x3f] %vm335, %v334
        %v342 = vld [vmem:[%s322] sm:$0x7f]
        %v343 = vld [vmem:[%s322 + $0x8] sm:$0x7f]
        %v344 = vld [vmem:[%s322 + $0x10] sm:$0x7f]
        %v345 = vld [vmem:[%s322 + $0x18] sm:$0x7f]
        %v346 = vld [vmem:[%s322 + $0x20] sm:$0x7f]
        %v347 = vld [vmem:[%s322 + $0x28] sm:$0x7f]
        %v348 = vmax.f32 %v342, %v297
        %v349 = vmax.f32 %v343, %v298
        %v350 = vmax.f32 %v344, %v299
        %v351 = vmax.f32 %v345, %v300
        %v352 = vmax.f32 %v346, %v301
        %v353 = vmax.f32 %v347, %v302
        %354 = vst.msk [vmem:[%s322] sm:$0x7f] %vm314, %v348
        %355 = vst.msk [vmem:[%s322 + $0x8] sm:$0x7f] %vm314, %v349
        %356 = vst.msk [vmem:[%s322 + $0x10] sm:$0x7f] %vm314, %v350
        %357 = vst.msk [vmem:[%s322 + $0x18] sm:$0x7f] %vm314, %v351
        %358 = vst.msk [vmem:[%s322 + $0x20] sm:$0x7f] %vm314, %v352
        %359 = vst.msk [vmem:[%s322 + $0x28] sm:$0x7f] %vm314, %v353
        %v360 = vld [vmem:[%s322] sm:$0x7f]
        %v361 = vld [vmem:[%s322 + $0x8] sm:$0x7f]
        %v362 = vld [vmem:[%s322 + $0x10] sm:$0x7f]
        %v363 = vld [vmem:[%s322 + $0x18] sm:$0x7f]
        %v364 = vld [vmem:[%s322 + $0x20] sm:$0x7f]
        %v365 = vld [vmem:[%s322 + $0x28] sm:$0x7f]
        %v366 = vmax.f32 %v360, %v305
        %v367 = vmax.f32 %v361, %v306
        %v368 = vmax.f32 %v362, %v307
        %v369 = vmax.f32 %v363, %v308
        %v370 = vmax.f32 %v364, %v309
        %v371 = vmax.f32 %v365, %v310
        %372 = vst.msk [vmem:[%s322] sm:$0x7f] %vm314, %v366
        %373 = vst.msk [vmem:[%s322 + $0x8] sm:$0x7f] %vm314, %v367
        %374 = vst.msk [vmem:[%s322 + $0x10] sm:$0x7f] %vm314, %v368
        %375 = vst.msk [vmem:[%s322 + $0x18] sm:$0x7f] %vm314, %v369
        %376 = vst.msk [vmem:[%s322 + $0x20] sm:$0x7f] %vm314, %v370
        %377 = vst.msk [vmem:[%s322 + $0x28] sm:$0x7f] %vm314, %v371
        %v378 = vld [vmem:[#allocation2 + $0x1] sm:$0x3f]
        %v379 = vld [vmem:[#allocation2 + $0x9] sm:$0x3f]
        %v380 = vld [vmem:[#allocation2 + $0x11] sm:$0x3f]
        %v381 = vld [vmem:[#allocation2 + $0x19] sm:$0x3f]
        %v382 = vld [vmem:[#allocation2 + $0x21] sm:$0x3f]
        %v383 = vld [vmem:[#allocation2 + $0x29] sm:$0x3f]
        %v384 = vld [vmem:[#allocation2 + $0x31] sm:$0x3f]
        %v385 = vmax.f32 %v378, %v289
        %v386 = vmax.f32 %v379, %v290
        %v387 = vmax.f32 %v380, %v291
        %v388 = vmax.f32 %v381, %v292
        %v389 = vmax.f32 %v382, %v293
        %v390 = vmax.f32 %v383, %v294
        %v391 = vmax.f32 %v384, %v295
        %392 = vst.msk [vmem:[#allocation2 + $0x1] sm:$0x3f] %vm335, %v385
        %393 = vst.msk [vmem:[#allocation2 + $0x9] sm:$0x3f] %vm335, %v386
        %394 = vst.msk [vmem:[#allocation2 + $0x11] sm:$0x3f] %vm335, %v387
        %395 = vst.msk [vmem:[#allocation2 + $0x19] sm:$0x3f] %vm335, %v388
        %396 = vst.msk [vmem:[#allocation2 + $0x21] sm:$0x3f] %vm335, %v389
        %397 = vst.msk [vmem:[#allocation2 + $0x29] sm:$0x3f] %vm335, %v390
        %398 = vst.msk [vmem:[#allocation2 + $0x31] sm:$0x3f] %vm335, %v391
        %v399 = vld [vmem:[#allocation2] sm:$0x7f]
        %v400 = vld [vmem:[#allocation2 + $0x8] sm:$0x7f]
        %v401 = vld [vmem:[#allocation2 + $0x10] sm:$0x7f]
        %v402 = vld [vmem:[#allocation2 + $0x18] sm:$0x7f]
        %v403 = vld [vmem:[#allocation2 + $0x20] sm:$0x7f]
        %v404 = vld [vmem:[#allocation2 + $0x28] sm:$0x7f]
        %v405 = vld [vmem:[#allocation2 + $0x30] sm:$0x7f]
        %v406 = vmax.f32 %v399, %v289
        %v407 = vmax.f32 %v400, %v290
        %v408 = vmax.f32 %v401, %v291
        %v409 = vmax.f32 %v402, %v292
        %v410 = vmax.f32 %v403, %v293
        %v411 = vmax.f32 %v404, %v294
        %v412 = vmax.f32 %v405, %v295
        %413 = vst.msk [vmem:[#allocation2] sm:$0x7f] %vm314, %v406
        %414 = vst.msk [vmem:[#allocation2 + $0x8] sm:$0x7f] %vm314, %v407
        %415 = vst.msk [vmem:[#allocation2 + $0x10] sm:$0x7f] %vm314, %v408
        %416 = vst.msk [vmem:[#allocation2 + $0x18] sm:$0x7f] %vm314, %v409
        %417 = vst.msk [vmem:[#allocation2 + $0x20] sm:$0x7f] %vm314, %v410
        %418 = vst.msk [vmem:[#allocation2 + $0x28] sm:$0x7f] %vm314, %v411
        %419 = vst.msk [vmem:[#allocation2 + $0x30] sm:$0x7f] %vm314, %v412
        %v420 = vld [vmem:[#allocation2 + $0x1] sm:$0x3f]
        %v421 = vld [vmem:[#allocation2 + $0x9] sm:$0x3f]
        %v422 = vld [vmem:[#allocation2 + $0x11] sm:$0x3f]
        %v423 = vld [vmem:[#allocation2 + $0x19] sm:$0x3f]
        %v424 = vld [vmem:[#allocation2 + $0x21] sm:$0x3f]
        %v425 = vld [vmem:[#allocation2 + $0x29] sm:$0x3f]
        %v426 = vld [vmem:[#allocation2 + $0x31] sm:$0x3f]
        %v427 = vmax.f32 %v420, %v305
        %v428 = vmax.f32 %v421, %v306
        %v429 = vmax.f32 %v422, %v307
        %v430 = vmax.f32 %v423, %v308
        %v431 = vmax.f32 %v424, %v309
        %v432 = vmax.f32 %v425, %v310
        %v433 = vmax.f32 %v426, %v311
        %434 = vst.msk [vmem:[#allocation2 + $0x1] sm:$0x3f] %vm335, %v427
        %435 = vst.msk [vmem:[#allocation2 + $0x9] sm:$0x3f] %vm335, %v428
        %436 = vst.msk [vmem:[#allocation2 + $0x11] sm:$0x3f] %vm335, %v429
        %437 = vst.msk [vmem:[#allocation2 + $0x19] sm:$0x3f] %vm335, %v430
        %438 = vst.msk [vmem:[#allocation2 + $0x21] sm:$0x3f] %vm335, %v431
        %439 = vst.msk [vmem:[#allocation2 + $0x29] sm:$0x3f] %vm335, %v432
        %440 = vst.msk [vmem:[#allocation2 + $0x31] sm:$0x3f] %vm335, %v433
        %v441 = vld [vmem:[#allocation2] sm:$0x7f]
        %v442 = vld [vmem:[#allocation2 + $0x8] sm:$0x7f]
        %v443 = vld [vmem:[#allocation2 + $0x10] sm:$0x7f]
        %v444 = vld [vmem:[#allocation2 + $0x18] sm:$0x7f]
        %v445 = vld [vmem:[#allocation2 + $0x20] sm:$0x7f]
        %v446 = vld [vmem:[#allocation2 + $0x28] sm:$0x7f]
        %v447 = vld [vmem:[#allocation2 + $0x30] sm:$0x7f]
        %v448 = vmax.f32 %v441, %v297
        %v449 = vmax.f32 %v442, %v298
        %v450 = vmax.f32 %v443, %v299
        %v451 = vmax.f32 %v444, %v300
        %v452 = vmax.f32 %v445, %v301
        %v453 = vmax.f32 %v446, %v302
        %v454 = vmax.f32 %v447, %v303
        %455 = vst.msk [vmem:[#allocation2] sm:$0x7f] %vm314, %v448
        %456 = vst.msk [vmem:[#allocation2 + $0x8] sm:$0x7f] %vm314, %v449
        %457 = vst.msk [vmem:[#allocation2 + $0x10] sm:$0x7f] %vm314, %v450
        %458 = vst.msk [vmem:[#allocation2 + $0x18] sm:$0x7f] %vm314, %v451
        %459 = vst.msk [vmem:[#allocation2 + $0x20] sm:$0x7f] %vm314, %v452
        %460 = vst.msk [vmem:[#allocation2 + $0x28] sm:$0x7f] %vm314, %v453
        %461 = vst.msk [vmem:[#allocation2 + $0x30] sm:$0x7f] %vm314, %v454
        %v462 = vld [vmem:[#allocation2] sm:$0x7f]
        %v463 = vld [vmem:[#allocation2 + $0x8] sm:$0x7f]
        %v464 = vld [vmem:[#allocation2 + $0x10] sm:$0x7f]
        %v465 = vld [vmem:[#allocation2 + $0x18] sm:$0x7f]
        %v466 = vld [vmem:[#allocation2 + $0x20] sm:$0x7f]
        %v467 = vld [vmem:[#allocation2 + $0x28] sm:$0x7f]
        %v468 = vld [vmem:[#allocation2 + $0x30] sm:$0x7f]
        %v469 = vmax.f32 %v462, %v305
        %v470 = vmax.f32 %v463, %v306
        %v471 = vmax.f32 %v464, %v307
        %v472 = vmax.f32 %v465, %v308
        %v473 = vmax.f32 %v466, %v309
        %v474 = vmax.f32 %v467, %v310
        %v475 = vmax.f32 %v468, %v311
        %476 = vst.msk [vmem:[#allocation2] sm:$0x7f] %vm314, %v469
        %477 = vst.msk [vmem:[#allocation2 + $0x8] sm:$0x7f] %vm314, %v470
        %478 = vst.msk [vmem:[#allocation2 + $0x10] sm:$0x7f] %vm314, %v471
        %479 = vst.msk [vmem:[#allocation2 + $0x18] sm:$0x7f] %vm314, %v472
        %480 = vst.msk [vmem:[#allocation2 + $0x20] sm:$0x7f] %vm314, %v473
        %481 = vst.msk [vmem:[#allocation2 + $0x28] sm:$0x7f] %vm314, %v474
        %482 = vst.msk [vmem:[#allocation2 + $0x30] sm:$0x7f] %vm314, %v475
        %v483 = vld [vmem:[#allocation2] sm:$0x7f]
        %v484 = vld [vmem:[#allocation2 + $0x8] sm:$0x7f]
        %v485 = vld [vmem:[#allocation2 + $0x10] sm:$0x7f]
        %v486 = vld [vmem:[#allocation2 + $0x18] sm:$0x7f]
        %v487 = vld [vmem:[#allocation2 + $0x20] sm:$0x7f]
        %v488 = vld [vmem:[#allocation2 + $0x28] sm:$0x7f]
        %v489 = vld [vmem:[#allocation2 + $0x30] sm:$0x7f]
        %v490 = vlaneseq
        %v491 = vshrl.u32 %v490, 7
        %v492 = vsub.s32 0, %v491
        %v493 = vrot.slane %v312, %v492
        %v494 = vmul.f32 %v483, %v493
        %v495 = vmul.f32 %v484, %v493
        %v496 = vmul.f32 %v485, %v493
        %v497 = vmul.f32 %v486, %v493
        %v498 = vmul.f32 %v487, %v493
        %v499 = vmul.f32 %v488, %v493
        %v500 = vmul.f32 %v489, %v493
        %v501 = vlaneseq
        %v502 = vshrl.u32 %v501, 7
        %v503 = vsub.s32 0, %v502
        %v504 = vrot.slane %v313, %v503
        %v505 = vadd.f32 %v494, %v504
        %v506 = vadd.f32 %v495, %v504
        %v507 = vadd.f32 %v496, %v504
        %v508 = vadd.f32 %v497, %v504
        %v509 = vadd.f32 %v498, %v504
        %v510 = vadd.f32 %v499, %v504
        %v511 = vadd.f32 %v500, %v504
        %v512 = vld [vmem:[%s1 + $0x1] sm:$0x1]
        %v513 = vld [vmem:[%s2 + $0x1] sm:$0x1]
        %521 = vrot.lane.b32.xlu0 %v281, 96
        %v522 = vpop.permute.xlu0 %521
        %523 = vrot.lane.b32.xlu0 %v282, 96
        %v524 = vpop.permute.xlu0 %523
        %525 = vrot.lane.b32.xlu0 %v283, 96
        %v526 = vpop.permute.xlu0 %525
        %527 = vrot.lane.b32.xlu0 %v284, 96
        %v528 = vpop.permute.xlu0 %527
        %529 = vrot.lane.b32.xlu0 %v285, 96
        %v530 = vpop.permute.xlu0 %529
        %531 = vrot.lane.b32.xlu0 %v286, 96
        %v532 = vpop.permute.xlu0 %531
        %533 = vrot.lane.b32.xlu0 %v287, 96
        %v534 = vpop.permute.xlu0 %533
        %542 = vst.msk [vmem:[#allocation2] sm:$0x7f] %vm314, %v522
        %543 = vst.msk [vmem:[#allocation2 + $0x8] sm:$0x7f] %vm314, %v524
        %544 = vst.msk [vmem:[#allocation2 + $0x10] sm:$0x7f] %vm314, %v526
        %545 = vst.msk [vmem:[#allocation2 + $0x18] sm:$0x7f] %vm314, %v528
        %546 = vst.msk [vmem:[#allocation2 + $0x20] sm:$0x7f] %vm314, %v530
        %547 = vst.msk [vmem:[#allocation2 + $0x28] sm:$0x7f] %vm314, %v532
        %548 = vst.msk [vmem:[#allocation2 + $0x30] sm:$0x7f] %vm314, %v534
        %v549 = vld [vmem:[%s322 + $0x1] sm:$0x3f]
        %v550 = vld [vmem:[%s322 + $0x9] sm:$0x3f]
        %v551 = vld [vmem:[%s322 + $0x11] sm:$0x3f]
        %v552 = vld [vmem:[%s322 + $0x19] sm:$0x3f]
        %v553 = vld [vmem:[%s322 + $0x21] sm:$0x3f]
        %v554 = vld [vmem:[%s322 + $0x29] sm:$0x3f]
        %561 = vrot.lane.b32.xlu0 %v305, 96
        %v562 = vpop.permute.xlu0 %561
        %563 = vrot.lane.b32.xlu0 %v306, 96
        %v564 = vpop.permute.xlu0 %563
        %565 = vrot.lane.b32.xlu0 %v307, 96
        %v566 = vpop.permute.xlu0 %565
        %567 = vrot.lane.b32.xlu0 %v308, 96
        %v568 = vpop.permute.xlu0 %567
        %569 = vrot.lane.b32.xlu0 %v309, 96
        %v570 = vpop.permute.xlu0 %569
        %571 = vrot.lane.b32.xlu0 %v310, 96
        %v572 = vpop.permute.xlu0 %571
        %v579 = vadd.f32 %v549, %v562
        %v580 = vadd.f32 %v550, %v564
        %v581 = vadd.f32 %v551, %v566
        %v582 = vadd.f32 %v552, %v568
        %v583 = vadd.f32 %v553, %v570
        %v584 = vadd.f32 %v554, %v572
        %585 = vst.msk [vmem:[%s322 + $0x1] sm:$0x3f] %vm335, %v579
        %586 = vst.msk [vmem:[%s322 + $0x9] sm:$0x3f] %vm335, %v580
        %587 = vst.msk [vmem:[%s322 + $0x11] sm:$0x3f] %vm335, %v581
        %588 = vst.msk [vmem:[%s322 + $0x19] sm:$0x3f] %vm335, %v582
        %589 = vst.msk [vmem:[%s322 + $0x21] sm:$0x3f] %vm335, %v583
        %590 = vst.msk [vmem:[%s322 + $0x29] sm:$0x3f] %vm335, %v584
        %v591 = vld [vmem:[%s322] sm:$0x7f]
        %v592 = vld [vmem:[%s322 + $0x8] sm:$0x7f]
        %v593 = vld [vmem:[%s322 + $0x10] sm:$0x7f]
        %v594 = vld [vmem:[%s322 + $0x18] sm:$0x7f]
        %v595 = vld [vmem:[%s322 + $0x20] sm:$0x7f]
        %v596 = vld [vmem:[%s322 + $0x28] sm:$0x7f]
        %603 = vrot.lane.b32.xlu0 %v297, 96
        %v604 = vpop.permute.xlu0 %603
        %605 = vrot.lane.b32.xlu0 %v298, 96
        %v606 = vpop.permute.xlu0 %605
        %607 = vrot.lane.b32.xlu0 %v299, 96
        %v608 = vpop.permute.xlu0 %607
        %609 = vrot.lane.b32.xlu0 %v300, 96
        %v610 = vpop.permute.xlu0 %609
        %611 = vrot.lane.b32.xlu0 %v301, 96
        %v612 = vpop.permute.xlu0 %611
        %613 = vrot.lane.b32.xlu0 %v302, 96
        %v614 = vpop.permute.xlu0 %613
        %v621 = vadd.f32 %v591, %v604
        %v622 = vadd.f32 %v592, %v606
        %v623 = vadd.f32 %v593, %v608
        %v624 = vadd.f32 %v594, %v610
        %v625 = vadd.f32 %v595, %v612
        %v626 = vadd.f32 %v596, %v614
        %627 = vst.msk [vmem:[%s322] sm:$0x7f] %vm314, %v621
        %628 = vst.msk [vmem:[%s322 + $0x8] sm:$0x7f] %vm314, %v622
        %629 = vst.msk [vmem:[%s322 + $0x10] sm:$0x7f] %vm314, %v623
        %630 = vst.msk [vmem:[%s322 + $0x18] sm:$0x7f] %vm314, %v624
        %631 = vst.msk [vmem:[%s322 + $0x20] sm:$0x7f] %vm314, %v625
        %632 = vst.msk [vmem:[%s322 + $0x28] sm:$0x7f] %vm314, %v626
        %v633 = vld [vmem:[%s322] sm:$0x7f]
        %v634 = vld [vmem:[%s322 + $0x8] sm:$0x7f]
        %v635 = vld [vmem:[%s322 + $0x10] sm:$0x7f]
        %v636 = vld [vmem:[%s322 + $0x18] sm:$0x7f]
        %v637 = vld [vmem:[%s322 + $0x20] sm:$0x7f]
        %v638 = vld [vmem:[%s322 + $0x28] sm:$0x7f]
        %v639 = vadd.f32 %v633, %v562
        %v640 = vadd.f32 %v634, %v564
        %v641 = vadd.f32 %v635, %v566
        %v642 = vadd.f32 %v636, %v568
        %v643 = vadd.f32 %v637, %v570
        %v644 = vadd.f32 %v638, %v572
        %645 = vst.msk [vmem:[%s322] sm:$0x7f] %vm314, %v639
        %646 = vst.msk [vmem:[%s322 + $0x8] sm:$0x7f] %vm314, %v640
        %647 = vst.msk [vmem:[%s322 + $0x10] sm:$0x7f] %vm314, %v641
        %648 = vst.msk [vmem:[%s322 + $0x18] sm:$0x7f] %vm314, %v642
        %649 = vst.msk [vmem:[%s322 + $0x20] sm:$0x7f] %vm314, %v643
        %650 = vst.msk [vmem:[%s322 + $0x28] sm:$0x7f] %vm314, %v644
        %v651 = vld [vmem:[#allocation2 + $0x1] sm:$0x3f]
        %v652 = vld [vmem:[#allocation2 + $0x9] sm:$0x3f]
        %v653 = vld [vmem:[#allocation2 + $0x11] sm:$0x3f]
        %v654 = vld [vmem:[#allocation2 + $0x19] sm:$0x3f]
        %v655 = vld [vmem:[#allocation2 + $0x21] sm:$0x3f]
        %v656 = vld [vmem:[#allocation2 + $0x29] sm:$0x3f]
        %v657 = vld [vmem:[#allocation2 + $0x31] sm:$0x3f]
        %665 = vrot.lane.b32.xlu0 %v289, 96
        %v666 = vpop.permute.xlu0 %665
        %667 = vrot.lane.b32.xlu0 %v290, 96
        %v668 = vpop.permute.xlu0 %667
        %669 = vrot.lane.b32.xlu0 %v291, 96
        %v670 = vpop.permute.xlu0 %669
        %671 = vrot.lane.b32.xlu0 %v292, 96
        %v672 = vpop.permute.xlu0 %671
        %673 = vrot.lane.b32.xlu0 %v293, 96
        %v674 = vpop.permute.xlu0 %673
        %675 = vrot.lane.b32.xlu0 %v294, 96
        %v676 = vpop.permute.xlu0 %675
        %677 = vrot.lane.b32.xlu0 %v295, 96
        %v678 = vpop.permute.xlu0 %677
        %v686 = vadd.f32 %v651, %v666
        %v687 = vadd.f32 %v652, %v668
        %v688 = vadd.f32 %v653, %v670
        %v689 = vadd.f32 %v654, %v672
        %v690 = vadd.f32 %v655, %v674
        %v691 = vadd.f32 %v656, %v676
        %v692 = vadd.f32 %v657, %v678
        %693 = vst.msk [vmem:[#allocation2 + $0x1] sm:$0x3f] %vm335, %v686
        %694 = vst.msk [vmem:[#allocation2 + $0x9] sm:$0x3f] %vm335, %v687
        %695 = vst.msk [vmem:[#allocation2 + $0x11] sm:$0x3f] %vm335, %v688
        %696 = vst.msk [vmem:[#allocation2 + $0x19] sm:$0x3f] %vm335, %v689
        %697 = vst.msk [vmem:[#allocation2 + $0x21] sm:$0x3f] %vm335, %v690
        %698 = vst.msk [vmem:[#allocation2 + $0x29] sm:$0x3f] %vm335, %v691
        %699 = vst.msk [vmem:[#allocation2 + $0x31] sm:$0x3f] %vm335, %v692
        %v700 = vld [vmem:[#allocation2] sm:$0x7f]
        %v701 = vld [vmem:[#allocation2 + $0x8] sm:$0x7f]
        %v702 = vld [vmem:[#allocation2 + $0x10] sm:$0x7f]
        %v703 = vld [vmem:[#allocation2 + $0x18] sm:$0x7f]
        %v704 = vld [vmem:[#allocation2 + $0x20] sm:$0x7f]
        %v705 = vld [vmem:[#allocation2 + $0x28] sm:$0x7f]
        %v706 = vld [vmem:[#allocation2 + $0x30] sm:$0x7f]
        %v707 = vadd.f32 %v700, %v666
        %v708 = vadd.f32 %v701, %v668
        %v709 = vadd.f32 %v702, %v670
        %v710 = vadd.f32 %v703, %v672
        %v711 = vadd.f32 %v704, %v674
        %v712 = vadd.f32 %v705, %v676
        %v713 = vadd.f32 %v706, %v678
        %714 = vst.msk [vmem:[#allocation2] sm:$0x7f] %vm314, %v707
        %715 = vst.msk [vmem:[#allocation2 + $0x8] sm:$0x7f] %vm314, %v708
        %716 = vst.msk [vmem:[#allocation2 + $0x10] sm:$0x7f] %vm314, %v709
        %717 = vst.msk [vmem:[#allocation2 + $0x18] sm:$0x7f] %vm314, %v710
        %718 = vst.msk [vmem:[#allocation2 + $0x20] sm:$0x7f] %vm314, %v711
        %719 = vst.msk [vmem:[#allocation2 + $0x28] sm:$0x7f] %vm314, %v712
        %720 = vst.msk [vmem:[#allocation2 + $0x30] sm:$0x7f] %vm314, %v713
        %v721 = vld [vmem:[#allocation2 + $0x1] sm:$0x3f]
        %v722 = vld [vmem:[#allocation2 + $0x9] sm:$0x3f]
        %v723 = vld [vmem:[#allocation2 + $0x11] sm:$0x3f]
        %v724 = vld [vmem:[#allocation2 + $0x19] sm:$0x3f]
        %v725 = vld [vmem:[#allocation2 + $0x21] sm:$0x3f]
        %v726 = vld [vmem:[#allocation2 + $0x29] sm:$0x3f]
        %v727 = vld [vmem:[#allocation2 + $0x31] sm:$0x3f]
        %729 = vrot.lane.b32.xlu0 %v311, 96
        %v730 = vpop.permute.xlu0 %729
        %v732 = vadd.f32 %v721, %v562
        %v733 = vadd.f32 %v722, %v564
        %v734 = vadd.f32 %v723, %v566
        %v735 = vadd.f32 %v724, %v568
        %v736 = vadd.f32 %v725, %v570
        %v737 = vadd.f32 %v726, %v572
        %v738 = vadd.f32 %v727, %v730
        %739 = vst.msk [vmem:[#allocation2 + $0x1] sm:$0x3f] %vm335, %v732
        %740 = vst.msk [vmem:[#allocation2 + $0x9] sm:$0x3f] %vm335, %v733
        %741 = vst.msk [vmem:[#allocation2 + $0x11] sm:$0x3f] %vm335, %v734
        %742 = vst.msk [vmem:[#allocation2 + $0x19] sm:$0x3f] %vm335, %v735
        %743 = vst.msk [vmem:[#allocation2 + $0x21] sm:$0x3f] %vm335, %v736
        %744 = vst.msk [vmem:[#allocation2 + $0x29] sm:$0x3f] %vm335, %v737
        %745 = vst.msk [vmem:[#allocation2 + $0x31] sm:$0x3f] %vm335, %v738
        %v746 = vld [vmem:[#allocation2] sm:$0x7f]
        %v747 = vld [vmem:[#allocation2 + $0x8] sm:$0x7f]
        %v748 = vld [vmem:[#allocation2 + $0x10] sm:$0x7f]
        %v749 = vld [vmem:[#allocation2 + $0x18] sm:$0x7f]
        %v750 = vld [vmem:[#allocation2 + $0x20] sm:$0x7f]
        %v751 = vld [vmem:[#allocation2 + $0x28] sm:$0x7f]
        %v752 = vld [vmem:[#allocation2 + $0x30] sm:$0x7f]
        %754 = vrot.lane.b32.xlu0 %v303, 96
        %v755 = vpop.permute.xlu0 %754
        %v757 = vadd.f32 %v746, %v604
        %v758 = vadd.f32 %v747, %v606
        %v759 = vadd.f32 %v748, %v608
        %v760 = vadd.f32 %v749, %v610
        %v761 = vadd.f32 %v750, %v612
        %v762 = vadd.f32 %v751, %v614
        %v763 = vadd.f32 %v752, %v755
        %764 = vst.msk [vmem:[#allocation2] sm:$0x7f] %vm314, %v757
        %765 = vst.msk [vmem:[#allocation2 + $0x8] sm:$0x7f] %vm314, %v758
        %766 = vst.msk [vmem:[#allocation2 + $0x10] sm:$0x7f] %vm314, %v759
        %767 = vst.msk [vmem:[#allocation2 + $0x18] sm:$0x7f] %vm314, %v760
        %768 = vst.msk [vmem:[#allocation2 + $0x20] sm:$0x7f] %vm314, %v761
        %769 = vst.msk [vmem:[#allocation2 + $0x28] sm:$0x7f] %vm314, %v762
        %770 = vst.msk [vmem:[#allocation2 + $0x30] sm:$0x7f] %vm314, %v763
        %v771 = vld [vmem:[#allocation2] sm:$0x7f]
        %v772 = vld [vmem:[#allocation2 + $0x8] sm:$0x7f]
        %v773 = vld [vmem:[#allocation2 + $0x10] sm:$0x7f]
        %v774 = vld [vmem:[#allocation2 + $0x18] sm:$0x7f]
        %v775 = vld [vmem:[#allocation2 + $0x20] sm:$0x7f]
        %v776 = vld [vmem:[#allocation2 + $0x28] sm:$0x7f]
        %v777 = vld [vmem:[#allocation2 + $0x30] sm:$0x7f]
        %v778 = vadd.f32 %v771, %v562
        %v779 = vadd.f32 %v772, %v564
        %v780 = vadd.f32 %v773, %v566
        %v781 = vadd.f32 %v774, %v568
        %v782 = vadd.f32 %v775, %v570
        %v783 = vadd.f32 %v776, %v572
        %v784 = vadd.f32 %v777, %v730
        %785 = vst.msk [vmem:[#allocation2] sm:$0x7f] %vm314, %v778
        %786 = vst.msk [vmem:[#allocation2 + $0x8] sm:$0x7f] %vm314, %v779
        %787 = vst.msk [vmem:[#allocation2 + $0x10] sm:$0x7f] %vm314, %v780
        %788 = vst.msk [vmem:[#allocation2 + $0x18] sm:$0x7f] %vm314, %v781
        %789 = vst.msk [vmem:[#allocation2 + $0x20] sm:$0x7f] %vm314, %v782
        %790 = vst.msk [vmem:[#allocation2 + $0x28] sm:$0x7f] %vm314, %v783
        %791 = vst.msk [vmem:[#allocation2 + $0x30] sm:$0x7f] %vm314, %v784
        %v792 = vld [vmem:[#allocation2] sm:$0x7f]
        %v793 = vld [vmem:[#allocation2 + $0x8] sm:$0x7f]
        %v794 = vld [vmem:[#allocation2 + $0x10] sm:$0x7f]
        %v795 = vld [vmem:[#allocation2 + $0x18] sm:$0x7f]
        %v796 = vld [vmem:[#allocation2 + $0x20] sm:$0x7f]
        %v797 = vld [vmem:[#allocation2 + $0x28] sm:$0x7f]
        %v798 = vld [vmem:[#allocation2 + $0x30] sm:$0x7f]
        %v799 = vlaneseq
        %v800 = vshrl.u32 %v799, 7
        %vm801 = vcmp.eq.s32.totalorder %v800, 0
        %v802 = vsel %vm801, 0.5, 0.33333334
        %v803 = vmul.f32 %v802, 0.5
        %v804 = vmul.f32 %v802, 0.33333334
        %v805 = vmul.f32 %v792, %v803
        %v806 = vmul.f32 %v793, %v804
        %v807 = vmul.f32 %v794, %v804
        %v808 = vmul.f32 %v795, %v804
        %v809 = vmul.f32 %v796, %v804
        %v810 = vmul.f32 %v797, %v804
        %v811 = vmul.f32 %v798, %v804
        %v812 = vlaneseq
        %v813 = vshrl.u32 %v812, 7
        %v814 = vsub.s32 0, %v813
        %v815 = vrot.slane %v512, %v814
        %v816 = vmul.f32 %v805, %v815
        %v817 = vmul.f32 %v806, %v815
        %v818 = vmul.f32 %v807, %v815
        %v819 = vmul.f32 %v808, %v815
        %v820 = vmul.f32 %v809, %v815
        %v821 = vmul.f32 %v810, %v815
        %v822 = vmul.f32 %v811, %v815
        %v823 = vlaneseq
        %v824 = vshrl.u32 %v823, 7
        %v825 = vsub.s32 0, %v824
        %v826 = vrot.slane %v513, %v825
        %v827 = vadd.f32 %v816, %v826
        %v828 = vadd.f32 %v817, %v826
        %v829 = vadd.f32 %v818, %v826
        %v830 = vadd.f32 %v819, %v826
        %v831 = vadd.f32 %v820, %v826
        %v832 = vadd.f32 %v821, %v826
        %v833 = vadd.f32 %v822, %v826
        %v834 = vadd.f32 %v505, %v827
        %v835 = vadd.f32 %v506, %v828
        %v836 = vadd.f32 %v507, %v829
        %v837 = vadd.f32 %v508, %v830
        %v838 = vadd.f32 %v509, %v831
        %v839 = vadd.f32 %v510, %v832
        %v840 = vadd.f32 %v511, %v833
        %v841 = vld [vmem:[%s3] sm:$0xff]
        %v842 = vld [vmem:[%s3 + $0x8] sm:$0xff]
        %v843 = vld [vmem:[%s3 + $0x10] sm:$0xff]
        %v844 = vld [vmem:[%s3 + $0x18] sm:$0xff]
        %v845 = vld [vmem:[%s3 + $0x20] sm:$0xff]
        %v846 = vld [vmem:[%s3 + $0x28] sm:$0xff]
        %v847 = vld [vmem:[%s3 + $0x30] sm:$0xff]
        %v848 = vld [vmem:[%s3 + $0x38] sm:$0xff]
        %v849 = vld [vmem:[%s4] sm:$0x1]
        %v850 = vmax.f32 %v281, 0.0
        %v851 = vmax.f32 %v305, 0.0
        %853 = vrot.lane.b32.xlu0 %v851, 32
        %v854 = vpop.permute.xlu0 %853
        %vm856 = vcmask 261120
        %v857 = vsel %vm856, %v850, %v854
        %v859 = vlaneseq
        %v860 = vshrl.u32 %v859, 7
        %v861 = vsub.s32 0, %v860
        %v862 = vrot.slane %v849, %v861
        %vm864 = vcmask 523264
        %v866 = vsel %vm864, %v857, 0
        %868 = vmatprep.subr.mxu0 0.0
        %869 = vmatpush1.msra.mxu0 %v841
        %870 = vmatprep.subr.mxu0 0.0
        %871 = vmatpush1.msra.mxu0 %v842
        %872 = vmatprep.subr.mxu0 0.0
        %873 = vmatpush1.msra.mxu0 %v843
        %874 = vmatprep.subr.mxu0 0.0
        %875 = vmatpush1.msra.mxu0 %v844
        %876 = vmatprep.subr.mxu0 0.0
        %877 = vmatpush1.msra.mxu0 %v845
        %878 = vmatprep.subr.mxu0 0.0
        %879 = vmatpush1.msra.mxu0 %v846
        %880 = vmatprep.subr.mxu0 0.0
        %881 = vmatpush1.msra.mxu0 %v847
        %882 = vmatprep.subr.mxu0 0.0
        %883 = vmatpush1.msra.mxu0 %v848
        %884 = vmatprep.subr.mxu0 0.0
        %885 = vmatpush1.msra.mxu0 0.0
        %886 = vmatprep.subr.mxu0 0.0
        %887 = vmatpush1.msra.mxu0 0.0
        %888 = vmatprep.subr.mxu0 0.0
        %889 = vmatpush1.msra.mxu0 0.0
        %890 = vmatprep.subr.mxu0 0.0
        %891 = vmatpush1.msra.mxu0 0.0
        %892 = vmatprep.subr.mxu0 0.0
        %893 = vmatpush1.msra.mxu0 0.0
        %894 = vmatprep.subr.mxu0 0.0
        %895 = vmatpush1.msra.mxu0 0.0
        %896 = vmatprep.subr.mxu0 0.0
        %897 = vmatpush1.msra.mxu0 0.0
        %898 = vmatprep.subr.mxu0 0.0
        %899 = vmatpush1.msra.mxu0 0.0
        %900 = vmatprep.subr.mxu0 0.0
        %901 = vmatpush1.msra.mxu0 0.0
        %902 = vmatprep.subr.mxu0 0.0
        %903 = vmatpush1.msra.mxu0 0.0
        %904 = vmatprep.subr.mxu0 0.0
        %905 = vmatpush1.msra.mxu0 0.0
        %906 = vmatprep.subr.mxu0 0.0
        %907 = vmatpush1.msra.mxu0 0.0
        %908 = vmatprep.subr.mxu0 0.0
        %909 = vmatpush1.msra.mxu0 0.0
        %910 = vmatprep.subr.mxu0 0.0
        %911 = vmatpush1.msra.mxu0 0.0
        %912 = vmatprep.subr.mxu0 0.0
        %913 = vmatpush1.msra.mxu0 0.0
        %914 = vmatprep.subr.mxu0 0.0
        %915 = vmatpush1.msra.mxu0 0.0
        %916 = vmatprep.subr.mxu0 0.0
        %917 = vmatpush1.msra.mxu0 0.0
        %918 = vmatprep.subr.mxu0 0.0
        %919 = vmatpush1.msra.mxu0 0.0
        %920 = vmatprep.subr.mxu0 0.0
        %921 = vmatpush1.msra.mxu0 0.0
        %922 = vmatprep.subr.mxu0 0.0
        %923 = vmatpush1.msra.mxu0 0.0
        %924 = vmatprep.subr.mxu0 0.0
        %925 = vmatpush1.msra.mxu0 0.0
        %926 = vmatprep.subr.mxu0 0.0
        %927 = vmatpush1.msra.mxu0 0.0
        %928 = vmatprep.subr.mxu0 0.0
        %929 = vmatpush1.msra.mxu0 0.0
        %930 = vmatprep.subr.mxu0 0.0
        %931 = vmatpush1.msra.mxu0 0.0
        %932 = vmatprep.mubr.f32.mxu0 0.0
        %933 = vmatmul.mubr.f32.gmra.mrb[0].mxu0 %v866
        %v934 = vpop.f32.mrb[0].mxu0
        %v935 = vadd.f32 %v862, %v934
        %v936 = vpop.f32.mrb[0].mxu0
        %937 = vdwg.mxu0
        %938 = vst.msk [vmem:[#allocation3] sm:$0x7f] %vm314, %v935
        %v939 = vmax.f32 %v282, 0.0
        %v940 = vmax.f32 %v306, 0.0
        %942 = vrot.lane.b32.xlu0 %v940, 32
        %v943 = vpop.permute.xlu0 %942
        %v945 = vsel %vm856, %v939, %v943
        %v947 = vsel %vm864, %v945, 0
        %949 = vmatprep.subr.mxu0 0.0
        %950 = vmatpush1.msra.mxu0 %v841
        %951 = vmatprep.subr.mxu0 0.0
        %952 = vmatpush1.msra.mxu0 %v842
        %953 = vmatprep.subr.mxu0 0.0
        %954 = vmatpush1.msra.mxu0 %v843
        %955 = vmatprep.subr.mxu0 0.0
        %956 = vmatpush1.msra.mxu0 %v844
        %957 = vmatprep.subr.mxu0 0.0
        %958 = vmatpush1.msra.mxu0 %v845
        %959 = vmatprep.subr.mxu0 0.0
        %960 = vmatpush1.msra.mxu0 %v846
        %961 = vmatprep.subr.mxu0 0.0
        %962 = vmatpush1.msra.mxu0 %v847
        %963 = vmatprep.subr.mxu0 0.0
        %964 = vmatpush1.msra.mxu0 %v848
        %965 = vmatprep.subr.mxu0 0.0
        %966 = vmatpush1.msra.mxu0 0.0
        %967 = vmatprep.subr.mxu0 0.0
        %968 = vmatpush1.msra.mxu0 0.0
        %969 = vmatprep.subr.mxu0 0.0
        %970 = vmatpush1.msra.mxu0 0.0
        %971 = vmatprep.subr.mxu0 0.0
        %972 = vmatpush1.msra.mxu0 0.0
        %973 = vmatprep.subr.mxu0 0.0
        %974 = vmatpush1.msra.mxu0 0.0
        %975 = vmatprep.subr.mxu0 0.0
        %976 = vmatpush1.msra.mxu0 0.0
        %977 = vmatprep.subr.mxu0 0.0
        %978 = vmatpush1.msra.mxu0 0.0
        %979 = vmatprep.subr.mxu0 0.0
        %980 = vmatpush1.msra.mxu0 0.0
        %981 = vmatprep.subr.mxu0 0.0
        %982 = vmatpush1.msra.mxu0 0.0
        %983 = vmatprep.subr.mxu0 0.0
        %984 = vmatpush1.msra.mxu0 0.0
        %985 = vmatprep.subr.mxu0 0.0
        %986 = vmatpush1.msra.mxu0 0.0
        %987 = vmatprep.subr.mxu0 0.0
        %988 = vmatpush1.msra.mxu0 0.0
        %989 = vmatprep.subr.mxu0 0.0
        %990 = vmatpush1.msra.mxu0 0.0
        %991 = vmatprep.subr.mxu0 0.0
        %992 = vmatpush1.msra.mxu0 0.0
        %993 = vmatprep.subr.mxu0 0.0
        %994 = vmatpush1.msra.mxu0 0.0
        %995 = vmatprep.subr.mxu0 0.0
        %996 = vmatpush1.msra.mxu0 0.0
        %997 = vmatprep.subr.mxu0 0.0
        %998 = vmatpush1.msra.mxu0 0.0
        %999 = vmatprep.subr.mxu0 0.0
        %1000 = vmatpush1.msra.mxu0 0.0
        %1001 = vmatprep.subr.mxu0 0.0
        %1002 = vmatpush1.msra.mxu0 0.0
        %1003 = vmatprep.subr.mxu0 0.0
        %1004 = vmatpush1.msra.mxu0 0.0
        %1005 = vmatprep.subr.mxu0 0.0
        %1006 = vmatpush1.msra.mxu0 0.0
        %1007 = vmatprep.subr.mxu0 0.0
        %1008 = vmatpush1.msra.mxu0 0.0
        %1009 = vmatprep.subr.mxu0 0.0
        %1010 = vmatpush1.msra.mxu0 0.0
        %1011 = vmatprep.subr.mxu0 0.0
        %1012 = vmatpush1.msra.mxu0 0.0
        %1013 = vmatprep.mubr.f32.mxu0 0.0
        %1014 = vmatmul.mubr.f32.gmra.mrb[0].mxu0 %v947
        %v1015 = vpop.f32.mrb[0].mxu0
        %v1016 = vadd.f32 %v862, %v1015
        %v1017 = vpop.f32.mrb[0].mxu0
        %1018 = vdwg.mxu0
        %s1019 = scalar_lea.vmem [#allocation3], 8
        %1020 = vst.msk [vmem:[%s1019] sm:$0x7f] %vm314, %v1016
        %v1021 = vmax.f32 %v283, 0.0
        %v1022 = vmax.f32 %v307, 0.0
        %1024 = vrot.lane.b32.xlu0 %v1022, 32
        %v1025 = vpop.permute.xlu0 %1024
        %v1027 = vsel %vm856, %v1021, %v1025
        %v1029 = vsel %vm864, %v1027, 0
        %1031 = vmatprep.subr.mxu0 0.0
        %1032 = vmatpush1.msra.mxu0 %v841
        %1033 = vmatprep.subr.mxu0 0.0
        %1034 = vmatpush1.msra.mxu0 %v842
        %1035 = vmatprep.subr.mxu0 0.0
        %1036 = vmatpush1.msra.mxu0 %v843
        %1037 = vmatprep.subr.mxu0 0.0
        %1038 = vmatpush1.msra.mxu0 %v844
        %1039 = vmatprep.subr.mxu0 0.0
        %1040 = vmatpush1.msra.mxu0 %v845
        %1041 = vmatprep.subr.mxu0 0.0
        %1042 = vmatpush1.msra.mxu0 %v846
        %1043 = vmatprep.subr.mxu0 0.0
        %1044 = vmatpush1.msra.mxu0 %v847
        %1045 = vmatprep.subr.mxu0 0.0
        %1046 = vmatpush1.msra.mxu0 %v848
        %1047 = vmatprep.subr.mxu0 0.0
        %1048 = vmatpush1.msra.mxu0 0.0
        %1049 = vmatprep.subr.mxu0 0.0
        %1050 = vmatpush1.msra.mxu0 0.0
        %1051 = vmatprep.subr.mxu0 0.0
        %1052 = vmatpush1.msra.mxu0 0.0
        %1053 = vmatprep.subr.mxu0 0.0
        %1054 = vmatpush1.msra.mxu0 0.0
        %1055 = vmatprep.subr.mxu0 0.0
        %1056 = vmatpush1.msra.mxu0 0.0
        %1057 = vmatprep.subr.mxu0 0.0
        %1058 = vmatpush1.msra.mxu0 0.0
        %1059 = vmatprep.subr.mxu0 0.0
        %1060 = vmatpush1.msra.mxu0 0.0
        %1061 = vmatprep.subr.mxu0 0.0
        %1062 = vmatpush1.msra.mxu0 0.0
        %1063 = vmatprep.subr.mxu0 0.0
        %1064 = vmatpush1.msra.mxu0 0.0
        %1065 = vmatprep.subr.mxu0 0.0
        %1066 = vmatpush1.msra.mxu0 0.0
        %1067 = vmatprep.subr.mxu0 0.0
        %1068 = vmatpush1.msra.mxu0 0.0
        %1069 = vmatprep.subr.mxu0 0.0
        %1070 = vmatpush1.msra.mxu0 0.0
        %1071 = vmatprep.subr.mxu0 0.0
        %1072 = vmatpush1.msra.mxu0 0.0
        %1073 = vmatprep.subr.mxu0 0.0
        %1074 = vmatpush1.msra.mxu0 0.0
        %1075 = vmatprep.subr.mxu0 0.0
        %1076 = vmatpush1.msra.mxu0 0.0
        %1077 = vmatprep.subr.mxu0 0.0
        %1078 = vmatpush1.msra.mxu0 0.0
        %1079 = vmatprep.subr.mxu0 0.0
        %1080 = vmatpush1.msra.mxu0 0.0
        %1081 = vmatprep.subr.mxu0 0.0
        %1082 = vmatpush1.msra.mxu0 0.0
        %1083 = vmatprep.subr.mxu0 0.0
        %1084 = vmatpush1.msra.mxu0 0.0
        %1085 = vmatprep.subr.mxu0 0.0
        %1086 = vmatpush1.msra.mxu0 0.0
        %1087 = vmatprep.subr.mxu0 0.0
        %1088 = vmatpush1.msra.mxu0 0.0
        %1089 = vmatprep.subr.mxu0 0.0
        %1090 = vmatpush1.msra.mxu0 0.0
        %1091 = vmatprep.subr.mxu0 0.0
        %1092 = vmatpush1.msra.mxu0 0.0
        %1093 = vmatprep.subr.mxu0 0.0
        %1094 = vmatpush1.msra.mxu0 0.0
        %1095 = vmatprep.mubr.f32.mxu0 0.0
        %1096 = vmatmul.mubr.f32.gmra.mrb[0].mxu0 %v1029
        %v1097 = vpop.f32.mrb[0].mxu0
        %v1098 = vadd.f32 %v862, %v1097
        %v1099 = vpop.f32.mrb[0].mxu0
        %1100 = vdwg.mxu0
        %s1101 = scalar_lea.vmem [#allocation3], 16
        %1102 = vst.msk [vmem:[%s1101] sm:$0x7f] %vm314, %v1098
        %v1103 = vmax.f32 %v284, 0.0
        %v1104 = vmax.f32 %v308, 0.0
        %1106 = vrot.lane.b32.xlu0 %v1104, 32
        %v1107 = vpop.permute.xlu0 %1106
        %v1109 = vsel %vm856, %v1103, %v1107
        %v1111 = vsel %vm864, %v1109, 0
        %1113 = vmatprep.subr.mxu0 0.0
        %1114 = vmatpush1.msra.mxu0 %v841
        %1115 = vmatprep.subr.mxu0 0.0
        %1116 = vmatpush1.msra.mxu0 %v842
        %1117 = vmatprep.subr.mxu0 0.0
        %1118 = vmatpush1.msra.mxu0 %v843
        %1119 = vmatprep.subr.mxu0 0.0
        %1120 = vmatpush1.msra.mxu0 %v844
        %1121 = vmatprep.subr.mxu0 0.0
        %1122 = vmatpush1.msra.mxu0 %v845
        %1123 = vmatprep.subr.mxu0 0.0
        %1124 = vmatpush1.msra.mxu0 %v846
        %1125 = vmatprep.subr.mxu0 0.0
        %1126 = vmatpush1.msra.mxu0 %v847
        %1127 = vmatprep.subr.mxu0 0.0
        %1128 = vmatpush1.msra.mxu0 %v848
        %1129 = vmatprep.subr.mxu0 0.0
        %1130 = vmatpush1.msra.mxu0 0.0
        %1131 = vmatprep.subr.mxu0 0.0
        %1132 = vmatpush1.msra.mxu0 0.0
        %1133 = vmatprep.subr.mxu0 0.0
        %1134 = vmatpush1.msra.mxu0 0.0
        %1135 = vmatprep.subr.mxu0 0.0
        %1136 = vmatpush1.msra.mxu0 0.0
        %1137 = vmatprep.subr.mxu0 0.0
        %1138 = vmatpush1.msra.mxu0 0.0
        %1139 = vmatprep.subr.mxu0 0.0
        %1140 = vmatpush1.msra.mxu0 0.0
        %1141 = vmatprep.subr.mxu0 0.0
        %1142 = vmatpush1.msra.mxu0 0.0
        %1143 = vmatprep.subr.mxu0 0.0
        %1144 = vmatpush1.msra.mxu0 0.0
        %1145 = vmatprep.subr.mxu0 0.0
        %1146 = vmatpush1.msra.mxu0 0.0
        %1147 = vmatprep.subr.mxu0 0.0
        %1148 = vmatpush1.msra.mxu0 0.0
        %1149 = vmatprep.subr.mxu0 0.0
        %1150 = vmatpush1.msra.mxu0 0.0
        %1151 = vmatprep.subr.mxu0 0.0
        %1152 = vmatpush1.msra.mxu0 0.0
        %1153 = vmatprep.subr.mxu0 0.0
        %1154 = vmatpush1.msra.mxu0 0.0
        %1155 = vmatprep.subr.mxu0 0.0
        %1156 = vmatpush1.msra.mxu0 0.0
        %1157 = vmatprep.subr.mxu0 0.0
        %1158 = vmatpush1.msra.mxu0 0.0
        %1159 = vmatprep.subr.mxu0 0.0
        %1160 = vmatpush1.msra.mxu0 0.0
        %1161 = vmatprep.subr.mxu0 0.0
        %1162 = vmatpush1.msra.mxu0 0.0
        %1163 = vmatprep.subr.mxu0 0.0
        %1164 = vmatpush1.msra.mxu0 0.0
        %1165 = vmatprep.subr.mxu0 0.0
        %1166 = vmatpush1.msra.mxu0 0.0
        %1167 = vmatprep.subr.mxu0 0.0
        %1168 = vmatpush1.msra.mxu0 0.0
        %1169 = vmatprep.subr.mxu0 0.0
        %1170 = vmatpush1.msra.mxu0 0.0
        %1171 = vmatprep.subr.mxu0 0.0
        %1172 = vmatpush1.msra.mxu0 0.0
        %1173 = vmatprep.subr.mxu0 0.0
        %1174 = vmatpush1.msra.mxu0 0.0
        %1175 = vmatprep.subr.mxu0 0.0
        %1176 = vmatpush1.msra.mxu0 0.0
        %1177 = vmatprep.mubr.f32.mxu0 0.0
        %1178 = vmatmul.mubr.f32.gmra.mrb[0].mxu0 %v1111
        %v1179 = vpop.f32.mrb[0].mxu0
        %v1180 = vadd.f32 %v862, %v1179
        %v1181 = vpop.f32.mrb[0].mxu0
        %1182 = vdwg.mxu0
        %s1183 = scalar_lea.vmem [#allocation3], 24
        %1184 = vst.msk [vmem:[%s1183] sm:$0x7f] %vm314, %v1180
        %v1185 = vmax.f32 %v285, 0.0
        %v1186 = vmax.f32 %v309, 0.0
        %1188 = vrot.lane.b32.xlu0 %v1186, 32
        %v1189 = vpop.permute.xlu0 %1188
        %v1191 = vsel %vm856, %v1185, %v1189
        %v1193 = vsel %vm864, %v1191, 0
        %1195 = vmatprep.subr.mxu0 0.0
        %1196 = vmatpush1.msra.mxu0 %v841
        %1197 = vmatprep.subr.mxu0 0.0
        %1198 = vmatpush1.msra.mxu0 %v842
        %1199 = vmatprep.subr.mxu0 0.0
        %1200 = vmatpush1.msra.mxu0 %v843
        %1201 = vmatprep.subr.mxu0 0.0
        %1202 = vmatpush1.msra.mxu0 %v844
        %1203 = vmatprep.subr.mxu0 0.0
        %1204 = vmatpush1.msra.mxu0 %v845
        %1205 = vmatprep.subr.mxu0 0.0
        %1206 = vmatpush1.msra.mxu0 %v846
        %1207 = vmatprep.subr.mxu0 0.0
        %1208 = vmatpush1.msra.mxu0 %v847
        %1209 = vmatprep.subr.mxu0 0.0
        %1210 = vmatpush1.msra.mxu0 %v848
        %1211 = vmatprep.subr.mxu0 0.0
        %1212 = vmatpush1.msra.mxu0 0.0
        %1213 = vmatprep.subr.mxu0 0.0
        %1214 = vmatpush1.msra.mxu0 0.0
        %1215 = vmatprep.subr.mxu0 0.0
        %1216 = vmatpush1.msra.mxu0 0.0
        %1217 = vmatprep.subr.mxu0 0.0
        %1218 = vmatpush1.msra.mxu0 0.0
        %1219 = vmatprep.subr.mxu0 0.0
        %1220 = vmatpush1.msra.mxu0 0.0
        %1221 = vmatprep.subr.mxu0 0.0
        %1222 = vmatpush1.msra.mxu0 0.0
        %1223 = vmatprep.subr.mxu0 0.0
        %1224 = vmatpush1.msra.mxu0 0.0
        %1225 = vmatprep.subr.mxu0 0.0
        %1226 = vmatpush1.msra.mxu0 0.0
        %1227 = vmatprep.subr.mxu0 0.0
        %1228 = vmatpush1.msra.mxu0 0.0
        %1229 = vmatprep.subr.mxu0 0.0
        %1230 = vmatpush1.msra.mxu0 0.0
        %1231 = vmatprep.subr.mxu0 0.0
        %1232 = vmatpush1.msra.mxu0 0.0
        %1233 = vmatprep.subr.mxu0 0.0
        %1234 = vmatpush1.msra.mxu0 0.0
        %1235 = vmatprep.subr.mxu0 0.0
        %1236 = vmatpush1.msra.mxu0 0.0
        %1237 = vmatprep.subr.mxu0 0.0
        %1238 = vmatpush1.msra.mxu0 0.0
        %1239 = vmatprep.subr.mxu0 0.0
        %1240 = vmatpush1.msra.mxu0 0.0
        %1241 = vmatprep.subr.mxu0 0.0
        %1242 = vmatpush1.msra.mxu0 0.0
        %1243 = vmatprep.subr.mxu0 0.0
        %1244 = vmatpush1.msra.mxu0 0.0
        %1245 = vmatprep.subr.mxu0 0.0
        %1246 = vmatpush1.msra.mxu0 0.0
        %1247 = vmatprep.subr.mxu0 0.0
        %1248 = vmatpush1.msra.mxu0 0.0
        %1249 = vmatprep.subr.mxu0 0.0
        %1250 = vmatpush1.msra.mxu0 0.0
        %1251 = vmatprep.subr.mxu0 0.0
        %1252 = vmatpush1.msra.mxu0 0.0
        %1253 = vmatprep.subr.mxu0 0.0
        %1254 = vmatpush1.msra.mxu0 0.0
        %1255 = vmatprep.subr.mxu0 0.0
        %1256 = vmatpush1.msra.mxu0 0.0
        %1257 = vmatprep.subr.mxu0 0.0
        %1258 = vmatpush1.msra.mxu0 0.0
        %1259 = vmatprep.mubr.f32.mxu0 0.0
        %1260 = vmatmul.mubr.f32.gmra.mrb[0].mxu0 %v1193
        %v1261 = vpop.f32.mrb[0].mxu0
        %v1262 = vadd.f32 %v862, %v1261
        %v1263 = vpop.f32.mrb[0].mxu0
        %1264 = vdwg.mxu0
        %s1265 = scalar_lea.vmem [#allocation3], 32
        %1266 = vst.msk [vmem:[%s1265] sm:$0x7f] %vm314, %v1262
        %v1267 = vmax.f32 %v286, 0.0
        %v1268 = vmax.f32 %v310, 0.0
        %1270 = vrot.lane.b32.xlu0 %v1268, 32
        %v1271 = vpop.permute.xlu0 %1270
        %v1273 = vsel %vm856, %v1267, %v1271
        %v1275 = vsel %vm864, %v1273, 0
        %1277 = vmatprep.subr.mxu0 0.0
        %1278 = vmatpush1.msra.mxu0 %v841
        %1279 = vmatprep.subr.mxu0 0.0
        %1280 = vmatpush1.msra.mxu0 %v842
        %1281 = vmatprep.subr.mxu0 0.0
        %1282 = vmatpush1.msra.mxu0 %v843
        %1283 = vmatprep.subr.mxu0 0.0
        %1284 = vmatpush1.msra.mxu0 %v844
        %1285 = vmatprep.subr.mxu0 0.0
        %1286 = vmatpush1.msra.mxu0 %v845
        %1287 = vmatprep.subr.mxu0 0.0
        %1288 = vmatpush1.msra.mxu0 %v846
        %1289 = vmatprep.subr.mxu0 0.0
        %1290 = vmatpush1.msra.mxu0 %v847
        %1291 = vmatprep.subr.mxu0 0.0
        %1292 = vmatpush1.msra.mxu0 %v848
        %1293 = vmatprep.subr.mxu0 0.0
        %1294 = vmatpush1.msra.mxu0 0.0
        %1295 = vmatprep.subr.mxu0 0.0
        %1296 = vmatpush1.msra.mxu0 0.0
        %1297 = vmatprep.subr.mxu0 0.0
        %1298 = vmatpush1.msra.mxu0 0.0
        %1299 = vmatprep.subr.mxu0 0.0
        %1300 = vmatpush1.msra.mxu0 0.0
        %1301 = vmatprep.subr.mxu0 0.0
        %1302 = vmatpush1.msra.mxu0 0.0
        %1303 = vmatprep.subr.mxu0 0.0
        %1304 = vmatpush1.msra.mxu0 0.0
        %1305 = vmatprep.subr.mxu0 0.0
        %1306 = vmatpush1.msra.mxu0 0.0
        %1307 = vmatprep.subr.mxu0 0.0
        %1308 = vmatpush1.msra.mxu0 0.0
        %1309 = vmatprep.subr.mxu0 0.0
        %1310 = vmatpush1.msra.mxu0 0.0
        %1311 = vmatprep.subr.mxu0 0.0
        %1312 = vmatpush1.msra.mxu0 0.0
        %1313 = vmatprep.subr.mxu0 0.0
        %1314 = vmatpush1.msra.mxu0 0.0
        %1315 = vmatprep.subr.mxu0 0.0
        %1316 = vmatpush1.msra.mxu0 0.0
        %1317 = vmatprep.subr.mxu0 0.0
        %1318 = vmatpush1.msra.mxu0 0.0
        %1319 = vmatprep.subr.mxu0 0.0
        %1320 = vmatpush1.msra.mxu0 0.0
        %1321 = vmatprep.subr.mxu0 0.0
        %1322 = vmatpush1.msra.mxu0 0.0
        %1323 = vmatprep.subr.mxu0 0.0
        %1324 = vmatpush1.msra.mxu0 0.0
        %1325 = vmatprep.subr.mxu0 0.0
        %1326 = vmatpush1.msra.mxu0 0.0
        %1327 = vmatprep.subr.mxu0 0.0
        %1328 = vmatpush1.msra.mxu0 0.0
        %1329 = vmatprep.subr.mxu0 0.0
        %1330 = vmatpush1.msra.mxu0 0.0
        %1331 = vmatprep.subr.mxu0 0.0
        %1332 = vmatpush1.msra.mxu0 0.0
        %1333 = vmatprep.subr.mxu0 0.0
        %1334 = vmatpush1.msra.mxu0 0.0
        %1335 = vmatprep.subr.mxu0 0.0
        %1336 = vmatpush1.msra.mxu0 0.0
        %1337 = vmatprep.subr.mxu0 0.0
        %1338 = vmatpush1.msra.mxu0 0.0
        %1339 = vmatprep.subr.mxu0 0.0
        %1340 = vmatpush1.msra.mxu0 0.0
        %1341 = vmatprep.mubr.f32.mxu0 0.0
        %1342 = vmatmul.mubr.f32.gmra.mrb[0].mxu0 %v1275
        %v1343 = vpop.f32.mrb[0].mxu0
        %v1344 = vadd.f32 %v862, %v1343
        %v1345 = vpop.f32.mrb[0].mxu0
        %1346 = vdwg.mxu0
        %s1347 = scalar_lea.vmem [#allocation3], 40
        %1348 = vst.msk [vmem:[%s1347] sm:$0x7f] %vm314, %v1344
        %v1349 = vmax.f32 %v287, 0.0
        %v1350 = vmax.f32 %v311, 0.0
        %1352 = vrot.lane.b32.xlu0 %v1350, 32
        %v1353 = vpop.permute.xlu0 %1352
        %v1355 = vsel %vm856, %v1349, %v1353
        %v1357 = vsel %vm864, %v1355, 0
        %1359 = vmatprep.subr.mxu0 0.0
        %1360 = vmatpush1.msra.mxu0 %v841
        %1361 = vmatprep.subr.mxu0 0.0
        %1362 = vmatpush1.msra.mxu0 %v842
        %1363 = vmatprep.subr.mxu0 0.0
        %1364 = vmatpush1.msra.mxu0 %v843
        %1365 = vmatprep.subr.mxu0 0.0
        %1366 = vmatpush1.msra.mxu0 %v844
        %1367 = vmatprep.subr.mxu0 0.0
        %1368 = vmatpush1.msra.mxu0 %v845
        %1369 = vmatprep.subr.mxu0 0.0
        %1370 = vmatpush1.msra.mxu0 %v846
        %1371 = vmatprep.subr.mxu0 0.0
        %1372 = vmatpush1.msra.mxu0 %v847
        %1373 = vmatprep.subr.mxu0 0.0
        %1374 = vmatpush1.msra.mxu0 %v848
        %1375 = vmatprep.subr.mxu0 0.0
        %1376 = vmatpush1.msra.mxu0 0.0
        %1377 = vmatprep.subr.mxu0 0.0
        %1378 = vmatpush1.msra.mxu0 0.0
        %1379 = vmatprep.subr.mxu0 0.0
        %1380 = vmatpush1.msra.mxu0 0.0
        %1381 = vmatprep.subr.mxu0 0.0
        %1382 = vmatpush1.msra.mxu0 0.0
        %1383 = vmatprep.subr.mxu0 0.0
        %1384 = vmatpush1.msra.mxu0 0.0
        %1385 = vmatprep.subr.mxu0 0.0
        %1386 = vmatpush1.msra.mxu0 0.0
        %1387 = vmatprep.subr.mxu0 0.0
        %1388 = vmatpush1.msra.mxu0 0.0
        %1389 = vmatprep.subr.mxu0 0.0
        %1390 = vmatpush1.msra.mxu0 0.0
        %1391 = vmatprep.subr.mxu0 0.0
        %1392 = vmatpush1.msra.mxu0 0.0
        %1393 = vmatprep.subr.mxu0 0.0
        %1394 = vmatpush1.msra.mxu0 0.0
        %1395 = vmatprep.subr.mxu0 0.0
        %1396 = vmatpush1.msra.mxu0 0.0
        %1397 = vmatprep.subr.mxu0 0.0
        %1398 = vmatpush1.msra.mxu0 0.0
        %1399 = vmatprep.subr.mxu0 0.0
        %1400 = vmatpush1.msra.mxu0 0.0
        %1401 = vmatprep.subr.mxu0 0.0
        %1402 = vmatpush1.msra.mxu0 0.0
        %1403 = vmatprep.subr.mxu0 0.0
        %1404 = vmatpush1.msra.mxu0 0.0
        %1405 = vmatprep.subr.mxu0 0.0
        %1406 = vmatpush1.msra.mxu0 0.0
        %1407 = vmatprep.subr.mxu0 0.0
        %1408 = vmatpush1.msra.mxu0 0.0
        %1409 = vmatprep.subr.mxu0 0.0
        %1410 = vmatpush1.msra.mxu0 0.0
        %1411 = vmatprep.subr.mxu0 0.0
        %1412 = vmatpush1.msra.mxu0 0.0
        %1413 = vmatprep.subr.mxu0 0.0
        %1414 = vmatpush1.msra.mxu0 0.0
        %1415 = vmatprep.subr.mxu0 0.0
        %1416 = vmatpush1.msra.mxu0 0.0
        %1417 = vmatprep.subr.mxu0 0.0
        %1418 = vmatpush1.msra.mxu0 0.0
        %1419 = vmatprep.subr.mxu0 0.0
        %1420 = vmatpush1.msra.mxu0 0.0
        %1421 = vmatprep.subr.mxu0 0.0
        %1422 = vmatpush1.msra.mxu0 0.0
        %1423 = vmatprep.mubr.f32.mxu0 0.0
        %1424 = vmatmul.mubr.f32.gmra.mrb[0].mxu0 %v1357
        %v1425 = vpop.f32.mrb[0].mxu0
        %v1426 = vadd.f32 %v862, %v1425
        %v1427 = vpop.f32.mrb[0].mxu0
        %1428 = vdwg.mxu0
        %s1429 = scalar_lea.vmem [#allocation3], 48
        %1430 = vst.msk [vmem:[%s1429] sm:$0x7f] %vm314, %v1426
        %v1431 = vld [vmem:[#allocation3] sm:$0x7f]
        %v1432 = vld [vmem:[#allocation3 + $0x8] sm:$0x7f]
        %v1433 = vld [vmem:[#allocation3 + $0x10] sm:$0x7f]
        %v1434 = vld [vmem:[#allocation3 + $0x18] sm:$0x7f]
        %v1435 = vld [vmem:[#allocation3 + $0x20] sm:$0x7f]
        %v1436 = vld [vmem:[#allocation3 + $0x28] sm:$0x7f]
        %v1437 = vld [vmem:[#allocation3 + $0x30] sm:$0x7f]
        %v1438 = vld [vmem:[%s1 + $0x2] sm:$0x1]
        %v1439 = vld [vmem:[%s2 + $0x2] sm:$0x1]
        %1440 = vst.msk [vmem:[#allocation2] sm:$0x7f] %vm314, %v522
        %1441 = vst.msk [vmem:[#allocation2 + $0x8] sm:$0x7f] %vm314, %v524
        %1442 = vst.msk [vmem:[#allocation2 + $0x10] sm:$0x7f] %vm314, %v526
        %1443 = vst.msk [vmem:[#allocation2 + $0x18] sm:$0x7f] %vm314, %v528
        %1444 = vst.msk [vmem:[#allocation2 + $0x20] sm:$0x7f] %vm314, %v530
        %1445 = vst.msk [vmem:[#allocation2 + $0x28] sm:$0x7f] %vm314, %v532
        %1446 = vst.msk [vmem:[#allocation2 + $0x30] sm:$0x7f] %vm314, %v534
        %v1447 = vld [vmem:[%s322 + $0x1] sm:$0x3f]
        %v1448 = vld [vmem:[%s322 + $0x9] sm:$0x3f]
        %v1449 = vld [vmem:[%s322 + $0x11] sm:$0x3f]
        %v1450 = vld [vmem:[%s322 + $0x19] sm:$0x3f]
        %v1451 = vld [vmem:[%s322 + $0x21] sm:$0x3f]
        %v1452 = vld [vmem:[%s322 + $0x29] sm:$0x3f]
        %v1453 = vmax.f32 %v1447, %v562
        %v1454 = vmax.f32 %v1448, %v564
        %v1455 = vmax.f32 %v1449, %v566
        %v1456 = vmax.f32 %v1450, %v568
        %v1457 = vmax.f32 %v1451, %v570
        %v1458 = vmax.f32 %v1452, %v572
        %1459 = vst.msk [vmem:[%s322 + $0x1] sm:$0x3f] %vm335, %v1453
        %1460 = vst.msk [vmem:[%s322 + $0x9] sm:$0x3f] %vm335, %v1454
        %1461 = vst.msk [vmem:[%s322 + $0x11] sm:$0x3f] %vm335, %v1455
        %1462 = vst.msk [vmem:[%s322 + $0x19] sm:$0x3f] %vm335, %v1456
        %1463 = vst.msk [vmem:[%s322 + $0x21] sm:$0x3f] %vm335, %v1457
        %1464 = vst.msk [vmem:[%s322 + $0x29] sm:$0x3f] %vm335, %v1458
        %v1465 = vld [vmem:[%s322] sm:$0x7f]
        %v1466 = vld [vmem:[%s322 + $0x8] sm:$0x7f]
        %v1467 = vld [vmem:[%s322 + $0x10] sm:$0x7f]
        %v1468 = vld [vmem:[%s322 + $0x18] sm:$0x7f]
        %v1469 = vld [vmem:[%s322 + $0x20] sm:$0x7f]
        %v1470 = vld [vmem:[%s322 + $0x28] sm:$0x7f]
        %v1471 = vmax.f32 %v1465, %v604
        %v1472 = vmax.f32 %v1466, %v606
        %v1473 = vmax.f32 %v1467, %v608
        %v1474 = vmax.f32 %v1468, %v610
        %v1475 = vmax.f32 %v1469, %v612
        %v1476 = vmax.f32 %v1470, %v614
        %1477 = vst.msk [vmem:[%s322] sm:$0x7f] %vm314, %v1471
        %1478 = vst.msk [vmem:[%s322 + $0x8] sm:$0x7f] %vm314, %v1472
        %1479 = vst.msk [vmem:[%s322 + $0x10] sm:$0x7f] %vm314, %v1473
        %1480 = vst.msk [vmem:[%s322 + $0x18] sm:$0x7f] %vm314, %v1474
        %1481 = vst.msk [vmem:[%s322 + $0x20] sm:$0x7f] %vm314, %v1475
        %1482 = vst.msk [vmem:[%s322 + $0x28] sm:$0x7f] %vm314, %v1476
        %v1483 = vld [vmem:[%s322] sm:$0x7f]
        %v1484 = vld [vmem:[%s322 + $0x8] sm:$0x7f]
        %v1485 = vld [vmem:[%s322 + $0x10] sm:$0x7f]
        %v1486 = vld [vmem:[%s322 + $0x18] sm:$0x7f]
        %v1487 = vld [vmem:[%s322 + $0x20] sm:$0x7f]
        %v1488 = vld [vmem:[%s322 + $0x28] sm:$0x7f]
        %v1489 = vmax.f32 %v1483, %v562
        %v1490 = vmax.f32 %v1484, %v564
        %v1491 = vmax.f32 %v1485, %v566
        %v1492 = vmax.f32 %v1486, %v568
        %v1493 = vmax.f32 %v1487, %v570
        %v1494 = vmax.f32 %v1488, %v572
        %1495 = vst.msk [vmem:[%s322] sm:$0x7f] %vm314, %v1489
        %1496 = vst.msk [vmem:[%s322 + $0x8] sm:$0x7f] %vm314, %v1490
        %1497 = vst.msk [vmem:[%s322 + $0x10] sm:$0x7f] %vm314, %v1491
        %1498 = vst.msk [vmem:[%s322 + $0x18] sm:$0x7f] %vm314, %v1492
        %1499 = vst.msk [vmem:[%s322 + $0x20] sm:$0x7f] %vm314, %v1493
        %1500 = vst.msk [vmem:[%s322 + $0x28] sm:$0x7f] %vm314, %v1494
        %v1501 = vld [vmem:[#allocation2 + $0x1] sm:$0x3f]
        %v1502 = vld [vmem:[#allocation2 + $0x9] sm:$0x3f]
        %v1503 = vld [vmem:[#allocation2 + $0x11] sm:$0x3f]
        %v1504 = vld [vmem:[#allocation2 + $0x19] sm:$0x3f]
        %v1505 = vld [vmem:[#allocation2 + $0x21] sm:$0x3f]
        %v1506 = vld [vmem:[#allocation2 + $0x29] sm:$0x3f]
        %v1507 = vld [vmem:[#allocation2 + $0x31] sm:$0x3f]
        %v1508 = vmax.f32 %v1501, %v666
        %v1509 = vmax.f32 %v1502, %v668
        %v1510 = vmax.f32 %v1503, %v670
        %v1511 = vmax.f32 %v1504, %v672
        %v1512 = vmax.f32 %v1505, %v674
        %v1513 = vmax.f32 %v1506, %v676
        %v1514 = vmax.f32 %v1507, %v678
        %1515 = vst.msk [vmem:[#allocation2 + $0x1] sm:$0x3f] %vm335, %v1508
        %1516 = vst.msk [vmem:[#allocation2 + $0x9] sm:$0x3f] %vm335, %v1509
        %1517 = vst.msk [vmem:[#allocation2 + $0x11] sm:$0x3f] %vm335, %v1510
        %1518 = vst.msk [vmem:[#allocation2 + $0x19] sm:$0x3f] %vm335, %v1511
        %1519 = vst.msk [vmem:[#allocation2 + $0x21] sm:$0x3f] %vm335, %v1512
        %1520 = vst.msk [vmem:[#allocation2 + $0x29] sm:$0x3f] %vm335, %v1513
        %1521 = vst.msk [vmem:[#allocation2 + $0x31] sm:$0x3f] %vm335, %v1514
        %v1522 = vld [vmem:[#allocation2] sm:$0x7f]
        %v1523 = vld [vmem:[#allocation2 + $0x8] sm:$0x7f]
        %v1524 = vld [vmem:[#allocation2 + $0x10] sm:$0x7f]
        %v1525 = vld [vmem:[#allocation2 + $0x18] sm:$0x7f]
        %v1526 = vld [vmem:[#allocation2 + $0x20] sm:$0x7f]
        %v1527 = vld [vmem:[#allocation2 + $0x28] sm:$0x7f]
        %v1528 = vld [vmem:[#allocation2 + $0x30] sm:$0x7f]
        %v1529 = vmax.f32 %v1522, %v666
        %v1530 = vmax.f32 %v1523, %v668
        %v1531 = vmax.f32 %v1524, %v670
        %v1532 = vmax.f32 %v1525, %v672
        %v1533 = vmax.f32 %v1526, %v674
        %v1534 = vmax.f32 %v1527, %v676
        %v1535 = vmax.f32 %v1528, %v678
        %1536 = vst.msk [vmem:[#allocation2] sm:$0x7f] %vm314, %v1529
        %1537 = vst.msk [vmem:[#allocation2 + $0x8] sm:$0x7f] %vm314, %v1530
        %1538 = vst.msk [vmem:[#allocation2 + $0x10] sm:$0x7f] %vm314, %v1531
        %1539 = vst.msk [vmem:[#allocation2 + $0x18] sm:$0x7f] %vm314, %v1532
        %1540 = vst.msk [vmem:[#allocation2 + $0x20] sm:$0x7f] %vm314, %v1533
        %1541 = vst.msk [vmem:[#allocation2 + $0x28] sm:$0x7f] %vm314, %v1534
        %1542 = vst.msk [vmem:[#allocation2 + $0x30] sm:$0x7f] %vm314, %v1535
        %v1543 = vld [vmem:[#allocation2 + $0x1] sm:$0x3f]
        %v1544 = vld [vmem:[#allocation2 + $0x9] sm:$0x3f]
        %v1545 = vld [vmem:[#allocation2 + $0x11] sm:$0x3f]
        %v1546 = vld [vmem:[#allocation2 + $0x19] sm:$0x3f]
        %v1547 = vld [vmem:[#allocation2 + $0x21] sm:$0x3f]
        %v1548 = vld [vmem:[#allocation2 + $0x29] sm:$0x3f]
        %v1549 = vld [vmem:[#allocation2 + $0x31] sm:$0x3f]
        %v1550 = vmax.f32 %v1543, %v562
        %v1551 = vmax.f32 %v1544, %v564
        %v1552 = vmax.f32 %v1545, %v566
        %v1553 = vmax.f32 %v1546, %v568
        %v1554 = vmax.f32 %v1547, %v570
        %v1555 = vmax.f32 %v1548, %v572
        %v1556 = vmax.f32 %v1549, %v730
        %1557 = vst.msk [vmem:[#allocation2 + $0x1] sm:$0x3f] %vm335, %v1550
        %1558 = vst.msk [vmem:[#allocation2 + $0x9] sm:$0x3f] %vm335, %v1551
        %1559 = vst.msk [vmem:[#allocation2 + $0x11] sm:$0x3f] %vm335, %v1552
        %1560 = vst.msk [vmem:[#allocation2 + $0x19] sm:$0x3f] %vm335, %v1553
        %1561 = vst.msk [vmem:[#allocation2 + $0x21] sm:$0x3f] %vm335, %v1554
        %1562 = vst.msk [vmem:[#allocation2 + $0x29] sm:$0x3f] %vm335, %v1555
        %1563 = vst.msk [vmem:[#allocation2 + $0x31] sm:$0x3f] %vm335, %v1556
        %v1564 = vld [vmem:[#allocation2] sm:$0x7f]
        %v1565 = vld [vmem:[#allocation2 + $0x8] sm:$0x7f]
        %v1566 = vld [vmem:[#allocation2 + $0x10] sm:$0x7f]
        %v1567 = vld [vmem:[#allocation2 + $0x18] sm:$0x7f]
        %v1568 = vld [vmem:[#allocation2 + $0x20] sm:$0x7f]
        %v1569 = vld [vmem:[#allocation2 + $0x28] sm:$0x7f]
        %v1570 = vld [vmem:[#allocation2 + $0x30] sm:$0x7f]
        %v1571 = vmax.f32 %v1564, %v604
        %v1572 = vmax.f32 %v1565, %v606
        %v1573 = vmax.f32 %v1566, %v608
        %v1574 = vmax.f32 %v1567, %v610
        %v1575 = vmax.f32 %v1568, %v612
        %v1576 = vmax.f32 %v1569, %v614
        %v1577 = vmax.f32 %v1570, %v755
        %1578 = vst.msk [vmem:[#allocation2] sm:$0x7f] %vm314, %v1571
        %1579 = vst.msk [vmem:[#allocation2 + $0x8] sm:$0x7f] %vm314, %v1572
        %1580 = vst.msk [vmem:[#allocation2 + $0x10] sm:$0x7f] %vm314, %v1573
        %1581 = vst.msk [vmem:[#allocation2 + $0x18] sm:$0x7f] %vm314, %v1574
        %1582 = vst.msk [vmem:[#allocation2 + $0x20] sm:$0x7f] %vm314, %v1575
        %1583 = vst.msk [vmem:[#allocation2 + $0x28] sm:$0x7f] %vm314, %v1576
        %1584 = vst.msk [vmem:[#allocation2 + $0x30] sm:$0x7f] %vm314, %v1577
        %v1585 = vld [vmem:[#allocation2] sm:$0x7f]
        %v1586 = vld [vmem:[#allocation2 + $0x8] sm:$0x7f]
        %v1587 = vld [vmem:[#allocation2 + $0x10] sm:$0x7f]
        %v1588 = vld [vmem:[#allocation2 + $0x18] sm:$0x7f]
        %v1589 = vld [vmem:[#allocation2 + $0x20] sm:$0x7f]
        %v1590 = vld [vmem:[#allocation2 + $0x28] sm:$0x7f]
        %v1591 = vld [vmem:[#allocation2 + $0x30] sm:$0x7f]
        %v1592 = vmax.f32 %v1585, %v562
        %v1593 = vmax.f32 %v1586, %v564
        %v1594 = vmax.f32 %v1587, %v566
        %v1595 = vmax.f32 %v1588, %v568
        %v1596 = vmax.f32 %v1589, %v570
        %v1597 = vmax.f32 %v1590, %v572
        %v1598 = vmax.f32 %v1591, %v730
        %1599 = vst.msk [vmem:[#allocation2] sm:$0x7f] %vm314, %v1592
        %1600 = vst.msk [vmem:[#allocation2 + $0x8] sm:$0x7f] %vm314, %v1593
        %1601 = vst.msk [vmem:[#allocation2 + $0x10] sm:$0x7f] %vm314, %v1594
        %1602 = vst.msk [vmem:[#allocation2 + $0x18] sm:$0x7f] %vm314, %v1595
        %1603 = vst.msk [vmem:[#allocation2 + $0x20] sm:$0x7f] %vm314, %v1596
        %1604 = vst.msk [vmem:[#allocation2 + $0x28] sm:$0x7f] %vm314, %v1597
        %1605 = vst.msk [vmem:[#allocation2 + $0x30] sm:$0x7f] %vm314, %v1598
        %v1606 = vld [vmem:[#allocation2] sm:$0x7f]
        %v1607 = vld [vmem:[#allocation2 + $0x8] sm:$0x7f]
        %v1608 = vld [vmem:[#allocation2 + $0x10] sm:$0x7f]
        %v1609 = vld [vmem:[#allocation2 + $0x18] sm:$0x7f]
        %v1610 = vld [vmem:[#allocation2 + $0x20] sm:$0x7f]
        %v1611 = vld [vmem:[#allocation2 + $0x28] sm:$0x7f]
        %v1612 = vld [vmem:[#allocation2 + $0x30] sm:$0x7f]
        %v1613 = vlaneseq
        %v1614 = vshrl.u32 %v1613, 7
        %v1615 = vsub.s32 0, %v1614
        %v1616 = vrot.slane %v1438, %v1615
        %v1617 = vmul.f32 %v1606, %v1616
        %v1618 = vmul.f32 %v1607, %v1616
        %v1619 = vmul.f32 %v1608, %v1616
        %v1620 = vmul.f32 %v1609, %v1616
        %v1621 = vmul.f32 %v1610, %v1616
        %v1622 = vmul.f32 %v1611, %v1616
        %v1623 = vmul.f32 %v1612, %v1616
        %v1624 = vlaneseq
        %v1625 = vshrl.u32 %v1624, 7
        %v1626 = vsub.s32 0, %v1625
        %v1627 = vrot.slane %v1439, %v1626
        %v1628 = vadd.f32 %v1617, %v1627
        %v1629 = vadd.f32 %v1618, %v1627
        %v1630 = vadd.f32 %v1619, %v1627
        %v1631 = vadd.f32 %v1620, %v1627
        %v1632 = vadd.f32 %v1621, %v1627
        %v1633 = vadd.f32 %v1622, %v1627
        %v1634 = vadd.f32 %v1623, %v1627
        %v1635 = vadd.f32 %v1431, %v1628
        %v1636 = vadd.f32 %v1432, %v1629
        %v1637 = vadd.f32 %v1433, %v1630
        %v1638 = vadd.f32 %v1434, %v1631
        %v1639 = vadd.f32 %v1435, %v1632
        %v1640 = vadd.f32 %v1436, %v1633
        %v1641 = vadd.f32 %v1437, %v1634
        %v1642 = vld [vmem:[%s1 + $0x3] sm:$0x1]
        %v1643 = vld [vmem:[%s2 + $0x3] sm:$0x1]
        %v1644 = vlaneseq
        %v1645 = vshrl.u32 %v1644, 7
        %v1646 = vsub.s32 0, %v1645
        %v1647 = vrot.slane %v1642, %v1646
        %v1648 = vmul.f32 %v805, %v1647
        %v1649 = vmul.f32 %v806, %v1647
        %v1650 = vmul.f32 %v807, %v1647
        %v1651 = vmul.f32 %v808, %v1647
        %v1652 = vmul.f32 %v809, %v1647
        %v1653 = vmul.f32 %v810, %v1647
        %v1654 = vmul.f32 %v811, %v1647
        %v1655 = vlaneseq
        %v1656 = vshrl.u32 %v1655, 7
        %v1657 = vsub.s32 0, %v1656
        %v1658 = vrot.slane %v1643, %v1657
        %v1659 = vadd.f32 %v1648, %v1658
        %v1660 = vadd.f32 %v1649, %v1658
        %v1661 = vadd.f32 %v1650, %v1658
        %v1662 = vadd.f32 %v1651, %v1658
        %v1663 = vadd.f32 %v1652, %v1658
        %v1664 = vadd.f32 %v1653, %v1658
        %v1665 = vadd.f32 %v1654, %v1658
        %v1666 = vadd.f32 %v834, %v1659
        %v1667 = vadd.f32 %v835, %v1660
        %v1668 = vadd.f32 %v836, %v1661
        %v1669 = vadd.f32 %v837, %v1662
        %v1670 = vadd.f32 %v838, %v1663
        %v1671 = vadd.f32 %v839, %v1664
        %v1672 = vadd.f32 %v840, %v1665
        %v1673 = vld [vmem:[%s1 + $0x4] sm:$0x1]
        %v1674 = vld [vmem:[%s2 + $0x4] sm:$0x1]
        %v1675 = vlaneseq
        %v1676 = vshrl.u32 %v1675, 7
        %v1677 = vsub.s32 0, %v1676
        %v1678 = vrot.slane %v1673, %v1677
        %v1679 = vmul.f32 %v483, %v1678
        %v1680 = vmul.f32 %v484, %v1678
        %v1681 = vmul.f32 %v485, %v1678
        %v1682 = vmul.f32 %v486, %v1678
        %v1683 = vmul.f32 %v487, %v1678
        %v1684 = vmul.f32 %v488, %v1678
        %v1685 = vmul.f32 %v489, %v1678
        %v1686 = vlaneseq
        %v1687 = vshrl.u32 %v1686, 7
        %v1688 = vsub.s32 0, %v1687
        %v1689 = vrot.slane %v1674, %v1688
        %v1690 = vadd.f32 %v1679, %v1689
        %v1691 = vadd.f32 %v1680, %v1689
        %v1692 = vadd.f32 %v1681, %v1689
        %v1693 = vadd.f32 %v1682, %v1689
        %v1694 = vadd.f32 %v1683, %v1689
        %v1695 = vadd.f32 %v1684, %v1689
        %v1696 = vadd.f32 %v1685, %v1689
        %v1697 = vadd.f32 %v1635, %v1690
        %v1698 = vadd.f32 %v1636, %v1691
        %v1699 = vadd.f32 %v1637, %v1692
        %v1700 = vadd.f32 %v1638, %v1693
        %v1701 = vadd.f32 %v1639, %v1694
        %v1702 = vadd.f32 %v1640, %v1695
        %v1703 = vadd.f32 %v1641, %v1696
        %v1704 = vsel %vm314, %v834, 0.0
        %v1705 = vsel %vm314, %v835, 0.0
        %v1706 = vadd.f32 %v1704, %v1705
        %v1707 = vsel %vm314, %v836, 0.0
        %v1708 = vadd.f32 %v1706, %v1707
        %v1709 = vsel %vm314, %v837, 0.0
        %v1710 = vadd.f32 %v1708, %v1709
        %v1711 = vsel %vm314, %v838, 0.0
        %v1712 = vadd.f32 %v1710, %v1711
        %v1713 = vsel %vm314, %v839, 0.0
        %v1714 = vadd.f32 %v1712, %v1713
        %v1715 = vsel %vm314, %v840, 0.0
        %v1716 = vadd.f32 %v1714, %v1715
        %vm1717 = vcmask 56320
        %v1719 = vsel %vm1717, 1.0, 0
        %vm1721 = vcmask 1046528
        %v1723 = vsel %vm1721, %v1716, 0
        %1725 = vmatprep.subr.mxu0 0.0
        %1726 = vmatpush1.msra.mxu0 %v1723
        %1727 = vmatprep.subr.mxu0 0.0
        %1728 = vmatpush1.msra.mxu0 0.0
        %1729 = vmatprep.subr.mxu0 0.0
        %1730 = vmatpush1.msra.mxu0 0.0
        %1731 = vmatprep.subr.mxu0 0.0
        %1732 = vmatpush1.msra.mxu0 0.0
        %1733 = vmatprep.subr.mxu0 0.0
        %1734 = vmatpush1.msra.mxu0 0.0
        %1735 = vmatprep.subr.mxu0 0.0
        %1736 = vmatpush1.msra.mxu0 0.0
        %1737 = vmatprep.subr.mxu0 0.0
        %1738 = vmatpush1.msra.mxu0 0.0
        %1739 = vmatprep.subr.mxu0 0.0
        %1740 = vmatpush1.msra.mxu0 0.0
        %1741 = vmatprep.subr.mxu0 0.0
        %1742 = vmatpush1.msra.mxu0 0.0
        %1743 = vmatprep.subr.mxu0 0.0
        %1744 = vmatpush1.msra.mxu0 0.0
        %1745 = vmatprep.subr.mxu0 0.0
        %1746 = vmatpush1.msra.mxu0 0.0
        %1747 = vmatprep.subr.mxu0 0.0
        %1748 = vmatpush1.msra.mxu0 0.0
        %1749 = vmatprep.subr.mxu0 0.0
        %1750 = vmatpush1.msra.mxu0 0.0
        %1751 = vmatprep.subr.mxu0 0.0
        %1752 = vmatpush1.msra.mxu0 0.0
        %1753 = vmatprep.subr.mxu0 0.0
        %1754 = vmatpush1.msra.mxu0 0.0
        %1755 = vmatprep.subr.mxu0 0.0
        %1756 = vmatpush1.msra.mxu0 0.0
        %1757 = vmatprep.subr.mxu0 0.0
        %1758 = vmatpush1.msra.mxu0 0.0
        %1759 = vmatprep.subr.mxu0 0.0
        %1760 = vmatpush1.msra.mxu0 0.0
        %1761 = vmatprep.subr.mxu0 0.0
        %1762 = vmatpush1.msra.mxu0 0.0
        %1763 = vmatprep.subr.mxu0 0.0
        %1764 = vmatpush1.msra.mxu0 0.0
        %1765 = vmatprep.subr.mxu0 0.0
        %1766 = vmatpush1.msra.mxu0 0.0
        %1767 = vmatprep.subr.mxu0 0.0
        %1768 = vmatpush1.msra.mxu0 0.0
        %1769 = vmatprep.subr.mxu0 0.0
        %1770 = vmatpush1.msra.mxu0 0.0
        %1771 = vmatprep.subr.mxu0 0.0
        %1772 = vmatpush1.msra.mxu0 0.0
        %1773 = vmatprep.subr.mxu0 0.0
        %1774 = vmatpush1.msra.mxu0 0.0
        %1775 = vmatprep.subr.mxu0 0.0
        %1776 = vmatpush1.msra.mxu0 0.0
        %1777 = vmatprep.subr.mxu0 0.0
        %1778 = vmatpush1.msra.mxu0 0.0
        %1779 = vmatprep.subr.mxu0 0.0
        %1780 = vmatpush1.msra.mxu0 0.0
        %1781 = vmatprep.subr.mxu0 0.0
        %1782 = vmatpush1.msra.mxu0 0.0
        %1783 = vmatprep.subr.mxu0 0.0
        %1784 = vmatpush1.msra.mxu0 0.0
        %1785 = vmatprep.subr.mxu0 0.0
        %1786 = vmatpush1.msra.mxu0 0.0
        %1787 = vmatprep.subr.mxu0 0.0
        %1788 = vmatpush1.msra.mxu0 0.0
        %1789 = vmatprep.mubr.f32.mxu0 0.0
        %1790 = vmatmul.mubr.f32.gmra.mrb[0].mxu0 %v1719
        %v1791 = vpop.f32.mrb[0].mxu0
        %v1792 = vadd.f32 0.0, %v1791
        %v1793 = vpop.f32.mrb[0].mxu0
        %1794 = vdwg.mxu0
        %v1795 = vsel %vm314, %v1635, 0.0
        %v1796 = vsel %vm314, %v1636, 0.0
        %v1797 = vadd.f32 %v1795, %v1796
        %v1798 = vsel %vm314, %v1637, 0.0
        %v1799 = vadd.f32 %v1797, %v1798
        %v1800 = vsel %vm314, %v1638, 0.0
        %v1801 = vadd.f32 %v1799, %v1800
        %v1802 = vsel %vm314, %v1639, 0.0
        %v1803 = vadd.f32 %v1801, %v1802
        %v1804 = vsel %vm314, %v1640, 0.0
        %v1805 = vadd.f32 %v1803, %v1804
        %v1806 = vsel %vm314, %v1641, 0.0
        %v1807 = vadd.f32 %v1805, %v1806
        %v1809 = vsel %vm1721, %v1807, 0
        %1811 = vmatprep.subr.mxu0 0.0
        %1812 = vmatpush1.msra.mxu0 %v1809
        %1813 = vmatprep.subr.mxu0 0.0
        %1814 = vmatpush1.msra.mxu0 0.0
        %1815 = vmatprep.subr.mxu0 0.0
        %1816 = vmatpush1.msra.mxu0 0.0
        %1817 = vmatprep.subr.mxu0 0.0
        %1818 = vmatpush1.msra.mxu0 0.0
        %1819 = vmatprep.subr.mxu0 0.0
        %1820 = vmatpush1.msra.mxu0 0.0
        %1821 = vmatprep.subr.mxu0 0.0
        %1822 = vmatpush1.msra.mxu0 0.0
        %1823 = vmatprep.subr.mxu0 0.0
        %1824 = vmatpush1.msra.mxu0 0.0
        %1825 = vmatprep.subr.mxu0 0.0
        %1826 = vmatpush1.msra.mxu0 0.0
        %1827 = vmatprep.subr.mxu0 0.0
        %1828 = vmatpush1.msra.mxu0 0.0
        %1829 = vmatprep.subr.mxu0 0.0
        %1830 = vmatpush1.msra.mxu0 0.0
        %1831 = vmatprep.subr.mxu0 0.0
        %1832 = vmatpush1.msra.mxu0 0.0
        %1833 = vmatprep.subr.mxu0 0.0
        %1834 = vmatpush1.msra.mxu0 0.0
        %1835 = vmatprep.subr.mxu0 0.0
        %1836 = vmatpush1.msra.mxu0 0.0
        %1837 = vmatprep.subr.mxu0 0.0
        %1838 = vmatpush1.msra.mxu0 0.0
        %1839 = vmatprep.subr.mxu0 0.0
        %1840 = vmatpush1.msra.mxu0 0.0
        %1841 = vmatprep.subr.mxu0 0.0
        %1842 = vmatpush1.msra.mxu0 0.0
        %1843 = vmatprep.subr.mxu0 0.0
        %1844 = vmatpush1.msra.mxu0 0.0
        %1845 = vmatprep.subr.mxu0 0.0
        %1846 = vmatpush1.msra.mxu0 0.0
        %1847 = vmatprep.subr.mxu0 0.0
        %1848 = vmatpush1.msra.mxu0 0.0
        %1849 = vmatprep.subr.mxu0 0.0
        %1850 = vmatpush1.msra.mxu0 0.0
        %1851 = vmatprep.subr.mxu0 0.0
        %1852 = vmatpush1.msra.mxu0 0.0
        %1853 = vmatprep.subr.mxu0 0.0
        %1854 = vmatpush1.msra.mxu0 0.0
        %1855 = vmatprep.subr.mxu0 0.0
        %1856 = vmatpush1.msra.mxu0 0.0
        %1857 = vmatprep.subr.mxu0 0.0
        %1858 = vmatpush1.msra.mxu0 0.0
        %1859 = vmatprep.subr.mxu0 0.0
        %1860 = vmatpush1.msra.mxu0 0.0
        %1861 = vmatprep.subr.mxu0 0.0
        %1862 = vmatpush1.msra.mxu0 0.0
        %1863 = vmatprep.subr.mxu0 0.0
        %1864 = vmatpush1.msra.mxu0 0.0
        %1865 = vmatprep.subr.mxu0 0.0
        %1866 = vmatpush1.msra.mxu0 0.0
        %1867 = vmatprep.subr.mxu0 0.0
        %1868 = vmatpush1.msra.mxu0 0.0
        %1869 = vmatprep.subr.mxu0 0.0
        %1870 = vmatpush1.msra.mxu0 0.0
        %1871 = vmatprep.subr.mxu0 0.0
        %1872 = vmatpush1.msra.mxu0 0.0
        %1873 = vmatprep.subr.mxu0 0.0
        %1874 = vmatpush1.msra.mxu0 0.0
        %1875 = vmatprep.mubr.f32.mxu0 0.0
        %1876 = vmatmul.mubr.f32.gmra.mrb[0].mxu0 %v1719
        %v1877 = vpop.f32.mrb[0].mxu0
        %v1878 = vadd.f32 0.0, %v1877
        %v1879 = vpop.f32.mrb[0].mxu0
        %1880 = vdwg.mxu0
        %v1881 = vsel %vm314, %v1666, 0.0
        %v1882 = vsel %vm314, %v1667, 0.0
        %v1883 = vadd.f32 %v1881, %v1882
        %v1884 = vsel %vm314, %v1668, 0.0
        %v1885 = vadd.f32 %v1883, %v1884
        %v1886 = vsel %vm314, %v1669, 0.0
        %v1887 = vadd.f32 %v1885, %v1886
        %v1888 = vsel %vm314, %v1670, 0.0
        %v1889 = vadd.f32 %v1887, %v1888
        %v1890 = vsel %vm314, %v1671, 0.0
        %v1891 = vadd.f32 %v1889, %v1890
        %v1892 = vsel %vm314, %v1672, 0.0
        %v1893 = vadd.f32 %v1891, %v1892
        %v1895 = vsel %vm1721, %v1893, 0
        %1897 = vmatprep.subr.mxu0 0.0
        %1898 = vmatpush1.msra.mxu0 %v1895
        %1899 = vmatprep.subr.mxu0 0.0
        %1900 = vmatpush1.msra.mxu0 0.0
        %1901 = vmatprep.subr.mxu0 0.0
        %1902 = vmatpush1.msra.mxu0 0.0
        %1903 = vmatprep.subr.mxu0 0.0
        %1904 = vmatpush1.msra.mxu0 0.0
        %1905 = vmatprep.subr.mxu0 0.0
        %1906 = vmatpush1.msra.mxu0 0.0
        %1907 = vmatprep.subr.mxu0 0.0
        %1908 = vmatpush1.msra.mxu0 0.0
        %1909 = vmatprep.subr.mxu0 0.0
        %1910 = vmatpush1.msra.mxu0 0.0
        %1911 = vmatprep.subr.mxu0 0.0
        %1912 = vmatpush1.msra.mxu0 0.0
        %1913 = vmatprep.subr.mxu0 0.0
        %1914 = vmatpush1.msra.mxu0 0.0
        %1915 = vmatprep.subr.mxu0 0.0
        %1916 = vmatpush1.msra.mxu0 0.0
        %1917 = vmatprep.subr.mxu0 0.0
        %1918 = vmatpush1.msra.mxu0 0.0
        %1919 = vmatprep.subr.mxu0 0.0
        %1920 = vmatpush1.msra.mxu0 0.0
        %1921 = vmatprep.subr.mxu0 0.0
        %1922 = vmatpush1.msra.mxu0 0.0
        %1923 = vmatprep.subr.mxu0 0.0
        %1924 = vmatpush1.msra.mxu0 0.0
        %1925 = vmatprep.subr.mxu0 0.0
        %1926 = vmatpush1.msra.mxu0 0.0
        %1927 = vmatprep.subr.mxu0 0.0
        %1928 = vmatpush1.msra.mxu0 0.0
        %1929 = vmatprep.subr.mxu0 0.0
        %1930 = vmatpush1.msra.mxu0 0.0
        %1931 = vmatprep.subr.mxu0 0.0
        %1932 = vmatpush1.msra.mxu0 0.0
        %1933 = vmatprep.subr.mxu0 0.0
        %1934 = vmatpush1.msra.mxu0 0.0
        %1935 = vmatprep.subr.mxu0 0.0
        %1936 = vmatpush1.msra.mxu0 0.0
        %1937 = vmatprep.subr.mxu0 0.0
        %1938 = vmatpush1.msra.mxu0 0.0
        %1939 = vmatprep.subr.mxu0 0.0
        %1940 = vmatpush1.msra.mxu0 0.0
        %1941 = vmatprep.subr.mxu0 0.0
        %1942 = vmatpush1.msra.mxu0 0.0
        %1943 = vmatprep.subr.mxu0 0.0
        %1944 = vmatpush1.msra.mxu0 0.0
        %1945 = vmatprep.subr.mxu0 0.0
        %1946 = vmatpush1.msra.mxu0 0.0
        %1947 = vmatprep.subr.mxu0 0.0
        %1948 = vmatpush1.msra.mxu0 0.0
        %1949 = vmatprep.subr.mxu0 0.0
        %1950 = vmatpush1.msra.mxu0 0.0
        %1951 = vmatprep.subr.mxu0 0.0
        %1952 = vmatpush1.msra.mxu0 0.0
        %1953 = vmatprep.subr.mxu0 0.0
        %1954 = vmatpush1.msra.mxu0 0.0
        %1955 = vmatprep.subr.mxu0 0.0
        %1956 = vmatpush1.msra.mxu0 0.0
        %1957 = vmatprep.subr.mxu0 0.0
        %1958 = vmatpush1.msra.mxu0 0.0
        %1959 = vmatprep.subr.mxu0 0.0
        %1960 = vmatpush1.msra.mxu0 0.0
        %1961 = vmatprep.mubr.f32.mxu0 0.0
        %1962 = vmatmul.mubr.f32.gmra.mrb[0].mxu0 %v1719
        %v1963 = vpop.f32.mrb[0].mxu0
        %v1964 = vadd.f32 0.0, %v1963
        %v1965 = vpop.f32.mrb[0].mxu0
        %1966 = vdwg.mxu0
        %v1967 = vsel %vm314, %v1697, 0.0
        %v1968 = vsel %vm314, %v1698, 0.0
        %v1969 = vadd.f32 %v1967, %v1968
        %v1970 = vsel %vm314, %v1699, 0.0
        %v1971 = vadd.f32 %v1969, %v1970
        %v1972 = vsel %vm314, %v1700, 0.0
        %v1973 = vadd.f32 %v1971, %v1972
        %v1974 = vsel %vm314, %v1701, 0.0
        %v1975 = vadd.f32 %v1973, %v1974
        %v1976 = vsel %vm314, %v1702, 0.0
        %v1977 = vadd.f32 %v1975, %v1976
        %v1978 = vsel %vm314, %v1703, 0.0
        %v1979 = vadd.f32 %v1977, %v1978
        %v1981 = vsel %vm1721, %v1979, 0
        %1983 = vmatprep.subr.mxu0 0.0
        %1984 = vmatpush1.msra.mxu0 %v1981
        %1985 = vmatprep.subr.mxu0 0.0
        %1986 = vmatpush1.msra.mxu0 0.0
        %1987 = vmatprep.subr.mxu0 0.0
        %1988 = vmatpush1.msra.mxu0 0.0
        %1989 = vmatprep.subr.mxu0 0.0
        %1990 = vmatpush1.msra.mxu0 0.0
        %1991 = vmatprep.subr.mxu0 0.0
        %1992 = vmatpush1.msra.mxu0 0.0
        %1993 = vmatprep.subr.mxu0 0.0
        %1994 = vmatpush1.msra.mxu0 0.0
        %1995 = vmatprep.subr.mxu0 0.0
        %1996 = vmatpush1.msra.mxu0 0.0
        %1997 = vmatprep.subr.mxu0 0.0
        %1998 = vmatpush1.msra.mxu0 0.0
        %1999 = vmatprep.subr.mxu0 0.0
        %2000 = vmatpush1.msra.mxu0 0.0
        %2001 = vmatprep.subr.mxu0 0.0
        %2002 = vmatpush1.msra.mxu0 0.0
        %2003 = vmatprep.subr.mxu0 0.0
        %2004 = vmatpush1.msra.mxu0 0.0
        %2005 = vmatprep.subr.mxu0 0.0
        %2006 = vmatpush1.msra.mxu0 0.0
        %2007 = vmatprep.subr.mxu0 0.0
        %2008 = vmatpush1.msra.mxu0 0.0
        %2009 = vmatprep.subr.mxu0 0.0
        %2010 = vmatpush1.msra.mxu0 0.0
        %2011 = vmatprep.subr.mxu0 0.0
        %2012 = vmatpush1.msra.mxu0 0.0
        %2013 = vmatprep.subr.mxu0 0.0
        %2014 = vmatpush1.msra.mxu0 0.0
        %2015 = vmatprep.subr.mxu0 0.0
        %2016 = vmatpush1.msra.mxu0 0.0
        %2017 = vmatprep.subr.mxu0 0.0
        %2018 = vmatpush1.msra.mxu0 0.0
        %2019 = vmatprep.subr.mxu0 0.0
        %2020 = vmatpush1.msra.mxu0 0.0
        %2021 = vmatprep.subr.mxu0 0.0
        %2022 = vmatpush1.msra.mxu0 0.0
        %2023 = vmatprep.subr.mxu0 0.0
        %2024 = vmatpush1.msra.mxu0 0.0
        %2025 = vmatprep.subr.mxu0 0.0
        %2026 = vmatpush1.msra.mxu0 0.0
        %2027 = vmatprep.subr.mxu0 0.0
        %2028 = vmatpush1.msra.mxu0 0.0
        %2029 = vmatprep.subr.mxu0 0.0
        %2030 = vmatpush1.msra.mxu0 0.0
        %2031 = vmatprep.subr.mxu0 0.0
        %2032 = vmatpush1.msra.mxu0 0.0
        %2033 = vmatprep.subr.mxu0 0.0
        %2034 = vmatpush1.msra.mxu0 0.0
        %2035 = vmatprep.subr.mxu0 0.0
        %2036 = vmatpush1.msra.mxu0 0.0
        %2037 = vmatprep.subr.mxu0 0.0
        %2038 = vmatpush1.msra.mxu0 0.0
        %2039 = vmatprep.subr.mxu0 0.0
        %2040 = vmatpush1.msra.mxu0 0.0
        %2041 = vmatprep.subr.mxu0 0.0
        %2042 = vmatpush1.msra.mxu0 0.0
        %2043 = vmatprep.subr.mxu0 0.0
        %2044 = vmatpush1.msra.mxu0 0.0
        %2045 = vmatprep.subr.mxu0 0.0
        %2046 = vmatpush1.msra.mxu0 0.0
        %2047 = vmatprep.mubr.f32.mxu0 0.0
        %2048 = vmatmul.mubr.f32.gmra.mrb[0].mxu0 %v1719
        %v2049 = vpop.f32.mrb[0].mxu0
        %v2050 = vadd.f32 0.0, %v2049
        %v2051 = vpop.f32.mrb[0].mxu0
        %2052 = vdwg.mxu0
        %2054 = vrot.lane.b32.xlu0 %v1878, 32
        %v2055 = vpop.permute.xlu0 %2054
        %2058 = vrot.lane.b32.xlu0 %v1964, 64
        %v2059 = vpop.permute.xlu0 %2058
        %2062 = vrot.lane.b32.xlu0 %v2050, 96
        %v2063 = vpop.permute.xlu0 %2062
        %v2065 = vsel %vm856, %v1792, %v2055
        %v2066 = vsel %vm864, %v2065, %v2059
        %vm2067 = vcmask 785408
        %v2068 = vsel %vm2067, %v2066, %v2063
        %v2069 = vld [vmem:[%s5] sm:$0xff]
        %v2070 = vld [vmem:[%s5 + $0x8] sm:$0xff]
        %v2071 = vld [vmem:[%s5 + $0x10] sm:$0xff]
        %v2072 = vld [vmem:[%s5 + $0x18] sm:$0xff]
        %v2073 = vld [vmem:[%s5 + $0x20] sm:$0xff]
        %v2074 = vld [vmem:[%s5 + $0x28] sm:$0xff]
        %v2075 = vld [vmem:[%s5 + $0x30] sm:$0xff]
        %v2076 = vld [vmem:[%s5 + $0x38] sm:$0xff]
        %v2077 = vld [vmem:[%s5 + $0x40] sm:$0xff]
        %v2078 = vld [vmem:[%s5 + $0x48] sm:$0xff]
        %v2079 = vld [vmem:[%s5 + $0x50] sm:$0xff]
        %v2080 = vld [vmem:[%s5 + $0x58] sm:$0xff]
        %v2081 = vld [vmem:[%s5 + $0x60] sm:$0xff]
        %v2082 = vld [vmem:[%s5 + $0x68] sm:$0xff]
        %v2083 = vld [vmem:[%s5 + $0x70] sm:$0xff]
        %v2084 = vld [vmem:[%s5 + $0x78] sm:$0xff]
        %v2085 = vld [vmem:[%s6] sm:$0x1]
        %2086 = vmatprep.subr.mxu0 0.0
        %2087 = vmatpush1.msra.mxu0 %v2069
        %2088 = vmatprep.subr.mxu0 0.0
        %2089 = vmatpush1.msra.mxu0 %v2070
        %2090 = vmatprep.subr.mxu0 0.0
        %2091 = vmatpush1.msra.mxu0 %v2071
        %2092 = vmatprep.subr.mxu0 0.0
        %2093 = vmatpush1.msra.mxu0 %v2072
        %2094 = vmatprep.subr.mxu0 0.0
        %2095 = vmatpush1.msra.mxu0 %v2073
        %2096 = vmatprep.subr.mxu0 0.0
        %2097 = vmatpush1.msra.mxu0 %v2074
        %2098 = vmatprep.subr.mxu0 0.0
        %2099 = vmatpush1.msra.mxu0 %v2075
        %2100 = vmatprep.subr.mxu0 0.0
        %2101 = vmatpush1.msra.mxu0 %v2076
        %2102 = vmatprep.subr.mxu0 0.0
        %2103 = vmatpush1.msra.mxu0 %v2077
        %2104 = vmatprep.subr.mxu0 0.0
        %2105 = vmatpush1.msra.mxu0 %v2078
        %2106 = vmatprep.subr.mxu0 0.0
        %2107 = vmatpush1.msra.mxu0 %v2079
        %2108 = vmatprep.subr.mxu0 0.0
        %2109 = vmatpush1.msra.mxu0 %v2080
        %2110 = vmatprep.subr.mxu0 0.0
        %2111 = vmatpush1.msra.mxu0 %v2081
        %2112 = vmatprep.subr.mxu0 0.0
        %2113 = vmatpush1.msra.mxu0 %v2082
        %2114 = vmatprep.subr.mxu0 0.0
        %2115 = vmatpush1.msra.mxu0 %v2083
        %2116 = vmatprep.subr.mxu0 0.0
        %2117 = vmatpush1.msra.mxu0 %v2084
        %2118 = vmatprep.subr.mxu0 0.0
        %2119 = vmatpush1.msra.mxu0 0.0
        %2120 = vmatprep.subr.mxu0 0.0
        %2121 = vmatpush1.msra.mxu0 0.0
        %2122 = vmatprep.subr.mxu0 0.0
        %2123 = vmatpush1.msra.mxu0 0.0
        %2124 = vmatprep.subr.mxu0 0.0
        %2125 = vmatpush1.msra.mxu0 0.0
        %2126 = vmatprep.subr.mxu0 0.0
        %2127 = vmatpush1.msra.mxu0 0.0
        %2128 = vmatprep.subr.mxu0 0.0
        %2129 = vmatpush1.msra.mxu0 0.0
        %2130 = vmatprep.subr.mxu0 0.0
        %2131 = vmatpush1.msra.mxu0 0.0
        %2132 = vmatprep.subr.mxu0 0.0
        %2133 = vmatpush1.msra.mxu0 0.0
        %2134 = vmatprep.subr.mxu0 0.0
        %2135 = vmatpush1.msra.mxu0 0.0
        %2136 = vmatprep.subr.mxu0 0.0
        %2137 = vmatpush1.msra.mxu0 0.0
        %2138 = vmatprep.subr.mxu0 0.0
        %2139 = vmatpush1.msra.mxu0 0.0
        %2140 = vmatprep.subr.mxu0 0.0
        %2141 = vmatpush1.msra.mxu0 0.0
        %2142 = vmatprep.subr.mxu0 0.0
        %2143 = vmatpush1.msra.mxu0 0.0
        %2144 = vmatprep.subr.mxu0 0.0
        %2145 = vmatpush1.msra.mxu0 0.0
        %2146 = vmatprep.subr.mxu0 0.0
        %2147 = vmatpush1.msra.mxu0 0.0
        %2148 = vmatprep.subr.mxu0 0.0
        %2149 = vmatpush1.msra.mxu0 0.0
        %2150 = vmatprep.mubr.f32.mxu0 0.0
        %2151 = vmatmul.mubr.f32.gmra.mrb[0].mxu0 %v2068
        %v2152 = vpop.f32.mrb[0].mxu0
        %v2153 = vadd.f32 %v2085, %v2152
        %v2154 = vpop.f32.mrb[0].mxu0
        %2155 = vdwg.mxu0
        %vm2156 = vcmask 73728
        %2157 = vst.msk [vmem:[%s273] sm:$0x1] %vm2156, %v2153
        %s2158 = sand.u32 %s181, 1
        %s2159 = scalar_lea.sflag [#allocation5], %s2158
        %s2160 = sand.u32 %s181, 1
        %s2161 = scalar_lea.vmem [#allocation4], %s2160
        // Predicated region
        $region49: #{_lambda_.9} parent=47 // pred_check
          %p2162 = pneg %p191
        $region50: #{_lambda_.9} parent=47 // pred_check_branch
          %2164 = sbr.rel (%p2162) target = $region52
        $region51: #{_lambda_.9} parent=47 // pred_region
          %s2166 = ssub.s32 16, 16
          %2167 = vsyncadd %s2159, %s2166
          %s2168 = smul.addr %s21, 16
          %s2169 = scalar_lea.hbm %s7, %s2168
          %s2171 = sshll.u32 %s2161, 4
          %s2172 = int_to_ptr.vmem [resolvable:$true] %s2171
          %2174 = dma.vmem_to_hbm [thread:$0]  %s2172, 16, %s2169, %s2159
        $region52: #{_lambda_.9} parent=47 // pred_fallthru
          _
      $region48: #{_lambda_.9} parent=5 // pred_fallthru
        _
      %p2175 = scmp.le.s32.totalorder 2, %s16
      // Predicated region
      $region53: #{_lambda_.9} parent=5 // pred_check
        %p2176 = pneg %p2175
      $region54: #{_lambda_.9} parent=5 // pred_check_branch
        %2178 = sbr.rel (%p2176) target = $region56
      $region55: #{_lambda_.9} parent=5 // pred_region
        %s2179 = ssub.s32 %s16, 2
        // Predicated region
        $region57: #{_lambda_.9} parent=55 // pred_check
          %p2180 = pneg %p197
        $region58: #{_lambda_.9} parent=55 // pred_check_branch
          %2182 = sbr.rel (%p2180) target = $region60
        $region59: #{_lambda_.9} parent=55 // pred_region
          %s2183 = sand.u32 %s182, 1
          %s2184 = scalar_lea.sflag [#allocation5], %s2183
          %s2185 = sand.u32 %s182, 1
          %s2186 = scalar_lea.vmem [#allocation4], %s2185
          %2187 = dma.done %s2184, 16
        $region60: #{_lambda_.9} parent=55 // pred_fallthru
          _
      $region56: #{_lambda_.9} parent=5 // pred_fallthru
        _
    $region6: #{_lambda_.9} parent=1 // loop_footer
      %s20 = sadd.s32 1, %s16
    $region7: #{_lambda_.9} parent=1 // loop_footer_branch
      %15 = sbr.rel target = $region3
    $region8: #{_lambda_.9} parent=1 // loop_exit
      _
    %2188 = vsyncpa [#allocation5], 1
    %s2189 = scalar_lea.sflag [#allocation5], 1
    %2190 = vsyncpa %s2189, 1

</llo_original>
